<compile_context>
chip_gen: v7x
topology: tpu7x:2x2x1
jax: 0.10.0
libtpu: 0.0.40
codegen_flags: <defaults>
</compile_context>

<pallas_src>
import functools

import jax
import jax.numpy as jnp
from jax.experimental import pallas as pl
from jax.experimental.pallas import tpu as pltpu

# ----------------------------- configuration (small shapes) -----------------------------
BATCH = 2
BAG_DIM = 4            # module default 19, scaled down
IMG = 32               # module uses 256x256 single-channel patches, scaled down
WIDTH = 8              # ResNet stem width (torch uses 64); feature dim = 8*WIDTH
EMB_DIM = 8 * WIDTH    # resnet feature dim (module: 512)
PROJ_DIM = EMB_DIM     # projector output dim (module: 512)
NUM_LAYERS = 12        # TransformerEncoder num_hidden_layers
NUM_HEADS = 8
HEAD_DIM = PROJ_DIM // NUM_HEADS
INTER_DIM = PROJ_DIM   # module: intermediate_size = proj_dim
GRID_SHAPE = (28, 46)  # GridPositionEmbedder2d grid
CLS_PAD = 128          # classifier output padded to a full lane (real classes = 2)
LN_EPS = 1e-12
BN_EPS = 1e-5
ATTN_SCALE = HEAD_DIM ** -0.5


def _vmem():
    return pl.BlockSpec(memory_space=pltpu.MemorySpace.VMEM)


# ------------------------- conv path: XLA conv + fused Pallas epilogue -------------------
def _fused_add_act_kernel(*refs, act):
    """o = act(sum(inputs)); inputs are pre-flattened lane-dense 2-D slabs."""
    o_ref = refs[-1]
    v = refs[0][...]
    for r in refs[1:-1]:
        v = v + r[...]
    if act == "relu":
        v = jnp.maximum(v, 0.0)
    o_ref[...] = v


def fused_add_act(terms, act="relu"):
    """terms[0]: conv output (N,H,W,C); other terms: (N,H,W,C) residuals or (C,) biases.

    Everything is flattened to (N, H*W*C) so the Pallas output is lane-dense
    (>= 128 lanes for all but the last tiny block of this scaled-down config).
    """
    n, h, w, c = terms[0].shape
    flat = []
    for t in terms:
        if t.ndim == 1:                               # per-channel BN shift
            flat.append(jnp.tile(t, h * w).reshape(1, h * w * c).astype(jnp.float32))
        else:
            flat.append(t.reshape(n, h * w * c).astype(jnp.float32))
    out = pl.pallas_call(
        functools.partial(_fused_add_act_kernel, act=act),
        out_shape=jax.ShapeDtypeStruct((n, h * w * c), jnp.float32),
        in_specs=[_vmem()] * len(flat),
        out_specs=_vmem(),
    )(*flat)
    return out.reshape(n, h, w, c)


def conv_bn(x, p, stride, pad):
    """BN(eval) folded into the conv weight; returns (conv_out_f32, per-channel shift)."""
    scale = p["gamma"] * jax.lax.rsqrt(p["var"] + BN_EPS)          # (Cout,)
    w = (p["w"] * scale[None, None, None, :]).astype(jnp.bfloat16)  # HWIO, bf16 MXU
    shift = p["beta"] - p["mean"] * scale
    y = jax.lax.conv_general_dilated(
        x.astype(jnp.bfloat16), w,
        window_strides=(stride, stride),
        padding=[(pad, pad), (pad, pad)],
        dimension_numbers=("NHWC", "HWIO", "NHWC"),
        preferred_element_type=jnp.float32)
    return y, shift


def maxpool2d(x, k=3, stride=2, pad=1):
    return jax.lax.reduce_window(
        x, -jnp.inf, jax.lax.max,
        window_dimensions=(1, k, k, 1),
        window_strides=(1, stride, stride, 1),
        padding=[(0, 0), (pad, pad), (pad, pad), (0, 0)])


# --------------------------------------- ResNet-10 ---------------------------------------
def basic_block(x, p, stride):
    y1, s1 = conv_bn(x, p["conv1"], stride, 1)
    h1 = fused_add_act([y1, s1], act="relu")                        # conv1 + BN + relu
    y2, s2 = conv_bn(h1, p["conv2"], 1, 1)
    if p["down"] is not None:
        yd, sd = conv_bn(x, p["down"], stride, 0)
        return fused_add_act([y2, s2, yd, sd], act="relu")          # conv2 + BN + downsample + relu
    return fused_add_act([y2, s2, x], act="relu")                   # conv2 + BN + identity + relu


def resnet_forward(x, p):
    y, s = conv_bn(x, p["stem"], 2, 3)                              # 7x7 s2
    h = fused_add_act([y, s], act="relu")
    h = maxpool2d(h)                                                # 3x3 s2 p1
    for i, blk in enumerate(p["blocks"]):
        h = basic_block(h, blk, 1 if i == 0 else 2)
    return jnp.mean(h, axis=(1, 2))                                 # global avg pool (fc=Identity)


# --------------------- transformer head: ONE fused Pallas kernel -------------------------
def _layernorm(x, g, b):
    mu = jnp.mean(x, axis=-1, keepdims=True)
    xc = x - mu
    var = jnp.mean(xc * xc, axis=-1, keepdims=True)
    return xc * jax.lax.rsqrt(var + LN_EPS) * g + b


def _encoder_kernel(feat_ref, projw_ref, projb_ref, pos_ref,
                    wqkv_ref, bqkv_ref, wo_ref, bo_ref, ln1g_ref, ln1b_ref,
                    wi_ref, bi_ref, w2_ref, b2_ref, ln2g_ref, ln2b_ref,
                    clsw_ref, clsb_ref, out_ref, h_sc):
    # grid = (bag index [parallel], layer index [arbitrary]); tokens live in h_sc (VMEM).
    li = pl.program_id(1)
    d, dh = PROJ_DIM, HEAD_DIM

    @pl.when(li == 0)
    def _init():
        # projector + grid position embedding, computed once per bag
        h0 = jnp.dot(feat_ref[0], projw_ref[...], preferred_element_type=jnp.float32)
        h_sc[...] = h0 + projb_ref[...] + pos_ref[0]
        out_ref[...] = jnp.zeros_like(out_ref)

    h = h_sc[...]                                   # (S, D) f32 token state
    hb = h.astype(jnp.bfloat16)
    wo = wo_ref[0]                                  # (D, D) bf16

    # ---- self attention: fused QKV matmul, per-head attention entirely in VMEM ----
    qkv = jnp.dot(hb, wqkv_ref[0], preferred_element_type=jnp.float32) + bqkv_ref[0]
    attn = jnp.zeros((BAG_DIM, d), jnp.float32)
    for hd in range(NUM_HEADS):
        lo = hd * dh
        qh = qkv[:, lo:lo + dh].astype(jnp.bfloat16)
        kh = qkv[:, d + lo:d + lo + dh].astype(jnp.bfloat16)
        vh = qkv[:, 2 * d + lo:2 * d + lo + dh].astype(jnp.bfloat16)
        sc = jax.lax.dot_general(qh, kh, (((1,), (1,)), ((), ())),
                                 preferred_element_type=jnp.float32) * ATTN_SCALE
        sc = sc - jnp.max(sc, axis=-1, keepdims=True)
        p = jnp.exp(sc)
        p = p * pl.reciprocal(jnp.sum(p, axis=-1, keepdims=True), approx=True)
        ctx = jnp.dot(p.astype(jnp.bfloat16), vh, preferred_element_type=jnp.float32)
        # fold the head-merge directly into the output projection (no concat / transpose)
        attn = attn + jnp.dot(ctx.astype(jnp.bfloat16), wo[lo:lo + dh, :],
                              preferred_element_type=jnp.float32)
    attn = attn + bo_ref[0]

    # ---- residual + LayerNorm 1 (post-LN BERT) ----
    h1 = _layernorm(h + attn, ln1g_ref[0], ln1b_ref[0])

    # ---- FFN ----
    inter = jnp.dot(h1.astype(jnp.bfloat16), wi_ref[0],
                    preferred_element_type=jnp.float32) + bi_ref[0]
    # TODO(synk): HF BERT default act is exact erf-GELU; tanh approximation used (EUP friendly).
    inter = jax.nn.gelu(inter, approximate=True)
    ffn = jnp.dot(inter.astype(jnp.bfloat16), w2_ref[0],
                  preferred_element_type=jnp.float32) + b2_ref[0]
    h2 = _layernorm(h1 + ffn, ln2g_ref[0], ln2b_ref[0])
    h_sc[...] = h2

    @pl.when(li == NUM_LAYERS - 1)
    def _final():
        pooled = jnp.mean(h2, axis=0, keepdims=True)                # bag mean  (1, D)
        logits = jnp.dot(pooled.astype(jnp.bfloat16), clsw_ref[...],
                         preferred_element_type=jnp.float32) + clsb_ref[...]
        out_ref[0] = logits                                          # lane-dense (1, 128)


def transformer_head(feat, pos_emb, params):
    """feat: (B*S, EMB_DIM) f32; pos_emb: (S, PROJ_DIM) f32 -> logits (B, 2)."""
    b, s, e, d, it = BATCH, BAG_DIM, EMB_DIM, PROJ_DIM, INTER_DIM
    feat3 = feat.reshape(b, s, e).astype(jnp.bfloat16)
    pos3 = jnp.broadcast_to(pos_emb[None], (b, s, d)).astype(jnp.float32)
    st = params["encoder"]

    def lspec(shape):                      # per-layer stacked weights, streamed by layer
        nd = len(shape)
        return pl.BlockSpec((1,) + shape, lambda bi, li: (li,) + (0,) * nd)

    def bspec(shape):                      # per-bag operands
        nd = len(shape)
        return pl.BlockSpec((1,) + shape, lambda bi, li: (bi,) + (0,) * nd)

    def cspec(shape):                      # layer/bag independent operands (stay resident)
        nd = len(shape)
        return pl.BlockSpec(shape, lambda bi, li: (0,) * nd)

    out = pl.pallas_call(
        _encoder_kernel,
        out_shape=jax.ShapeDtypeStruct((b, 1, CLS_PAD), jnp.float32),
        grid_spec=pltpu.PrefetchScalarGridSpec(
            num_scalar_prefetch=0,
            grid=(b, NUM_LAYERS),
            in_specs=[
                bspec((s, e)),                       # resnet features
                cspec((e, d)),                       # projector weight (bf16)
                cspec((1, d)),                       # projector bias
                bspec((s, d)),                       # position embedding
                lspec((d, 3 * d)),                   # fused QKV weight (bf16)
                lspec((1, 3 * d)),                   # fused QKV bias
                lspec((d, d)),                       # attention output weight (bf16)
                lspec((1, d)),                       # attention output bias
                lspec((1, d)), lspec((1, d)),        # LN1 gamma / beta
                lspec((d, it)), lspec((1, it)),      # FFN intermediate weight / bias
                lspec((it, d)), lspec((1, d)),       # FFN output weight / bias
                lspec((1, d)), lspec((1, d)),        # LN2 gamma / beta
                cspec((d, CLS_PAD)),                 # classifier weight, padded to 128 lanes
                cspec((1, CLS_PAD)),                 # classifier bias, padded
            ],
            out_specs=pl.BlockSpec((1, 1, CLS_PAD), lambda bi, li: (bi, 0, 0)),
            scratch_shapes=[pltpu.VMEM((s, d), jnp.float32)]),       # resident token state
        compiler_params=pltpu.CompilerParams(
            dimension_semantics=("parallel", "arbitrary")),
    )(feat3, params["proj_w"], params["proj_b"], pos3,
      st["wqkv"], st["bqkv"], st["wo"], st["bo"], st["ln1g"], st["ln1b"],
      st["wi"], st["bi"], st["w2"], st["b2"], st["ln2g"], st["ln2b"],
      params["cls_w_pad"], params["cls_b_pad"])
    return out.reshape(b, CLS_PAD)[:, :2]


# -------------------------------------- full forward -------------------------------------
def trusformer_forward(bag, pos, params):
    # bag: (B, bag_dim, H, W) f32 ; pos: (bag_dim, 2) int32 grid coordinates
    b, s, hgt, wid = bag.shape
    x = bag.reshape(b * s, hgt, wid, 1)                      # unpack_bag, batched, NHWC
    feat = resnet_forward(x, params["resnet"])               # (B*bag_dim, EMB_DIM)
    pos_emb = params["pos_table"][pos[:, 0], pos[:, 1]]      # GridPositionEmbedder2d lookup
    return transformer_head(feat, pos_emb, params)           # projector ... classifier fused


# ------------------------------------ param builders -------------------------------------
def _normal(key, shape, scale):
    return scale * jax.random.normal(key, shape, jnp.float32)


def init_conv_bn(key, cin, cout, k):
    k1, k2, k3, k4, k5 = jax.random.split(key, 5)
    return dict(
        w=_normal(k1, (k, k, cin, cout), float(cin * k * k) ** -0.5),   # HWIO layout
        gamma=1.0 + 0.1 * jax.random.normal(k2, (cout,), jnp.float32),
        beta=0.1 * jax.random.normal(k3, (cout,), jnp.float32),
        mean=0.1 * jax.random.normal(k4, (cout,), jnp.float32),
        var=1.0 + 0.1 * jnp.abs(jax.random.normal(k5, (cout,), jnp.float32)),
    )


def init_resnet(key):
    ks = jax.random.split(key, 5)
    stem = init_conv_bn(ks[0], 1, WIDTH, 7)
    chans = [WIDTH, WIDTH, 2 * WIDTH, 4 * WIDTH, 8 * WIDTH]
    blocks = []
    for i in range(4):
        cin, cout = chans[i], chans[i + 1]
        stride = 1 if i == 0 else 2
        bks = jax.random.split(ks[i + 1], 3)
        down = init_conv_bn(bks[2], cin, cout, 1) if (stride != 1 or cin != cout) else None
        blocks.append(dict(conv1=init_conv_bn(bks[0], cin, cout, 3),
                           conv2=init_conv_bn(bks[1], cout, cout, 3),
                           down=down))
    return dict(stem=stem, blocks=blocks)


def init_encoder_layer(key):
    ks = jax.random.split(key, 12)

    def lin(kw, kb, din, dout):
        return _normal(kw, (din, dout), float(din) ** -0.5), \
               0.01 * jax.random.normal(kb, (1, dout), jnp.float32)

    wq, bq = lin(ks[0], ks[1], PROJ_DIM, PROJ_DIM)
    wk, bk = lin(ks[2], ks[3], PROJ_DIM, PROJ_DIM)
    wv, bv = lin(ks[4], ks[5], PROJ_DIM, PROJ_DIM)
    wo, bo = lin(ks[6], ks[7], PROJ_DIM, PROJ_DIM)
    wi, bi = lin(ks[8], ks[9], PROJ_DIM, INTER_DIM)
    w2, b2 = lin(ks[10], ks[11], INTER_DIM, PROJ_DIM)
    ones = jnp.ones((1, PROJ_DIM), jnp.float32)
    zeros = jnp.zeros((1, PROJ_DIM), jnp.float32)
    return dict(wqkv=jnp.concatenate([wq, wk, wv], axis=1),
                bqkv=jnp.concatenate([bq, bk, bv], axis=1),
                wo=wo, bo=bo, ln1g=ones, ln1b=zeros,
                wi=wi, bi=bi, w2=w2, b2=b2, ln2g=ones, ln2b=zeros)


def init_encoder_stack(key):
    layers = [init_encoder_layer(k) for k in jax.random.split(key, NUM_LAYERS)]

    def stack(name, dtype=jnp.float32):
        return jnp.stack([lp[name] for lp in layers]).astype(dtype)

    return dict(
        wqkv=stack("wqkv", jnp.bfloat16), bqkv=stack("bqkv"),
        wo=stack("wo", jnp.bfloat16), bo=stack("bo"),
        ln1g=stack("ln1g"), ln1b=stack("ln1b"),
        wi=stack("wi", jnp.bfloat16), bi=stack("bi"),
        w2=stack("w2", jnp.bfloat16), b2=stack("b2"),
        ln2g=stack("ln2g"), ln2b=stack("ln2b"),
    )


def init_params(key):
    ks = jax.random.split(key, 6)
    cls_w = _normal(ks[4], (PROJ_DIM, 2), float(PROJ_DIM) ** -0.5)
    cls_w_pad = jnp.zeros((PROJ_DIM, CLS_PAD), jnp.float32).at[:, :2].set(cls_w)
    return dict(
        resnet=init_resnet(ks[0]),
        proj_w=_normal(ks[1], (EMB_DIM, PROJ_DIM), float(EMB_DIM) ** -0.5).astype(jnp.bfloat16),
        proj_b=0.01 * jax.random.normal(ks[2], (1, PROJ_DIM), jnp.float32),
        encoder=init_encoder_stack(ks[3]),
        cls_w_pad=cls_w_pad.astype(jnp.bfloat16),
        cls_b_pad=jnp.zeros((1, CLS_PAD), jnp.float32),
        pos_table=0.02 * jax.random.normal(ks[5], (GRID_SHAPE[0], GRID_SHAPE[1], PROJ_DIM),
                                           jnp.float32),
    )


# ------------------------------------------ main -----------------------------------------
if __name__ == "__main__":
    root = jax.random.PRNGKey(0)
    k_bag, k_px, k_py, k_par = jax.random.split(root, 4)

    bag = jax.random.normal(k_bag, (BATCH, BAG_DIM, IMG, IMG), jnp.float32)
    pos = jnp.stack(
        [jax.random.randint(k_px, (BAG_DIM,), 0, GRID_SHAPE[0]),
         jax.random.randint(k_py, (BAG_DIM,), 0, GRID_SHAPE[1])], axis=1).astype(jnp.int32)
    params = init_params(k_par)

    forward = jax.jit(trusformer_forward)
    y = jax.block_until_ready(forward(bag, pos, params))
    assert y.shape == (BATCH, 2) and y.dtype == jnp.float32
    print("KERNEL_OK")
</pallas_src>

<mosaic_0001>
module attributes {stable_mosaic.version = 11 : i64} {
  func.func @_fused_add_act_kernel(%arg0: memref<8x2048xf32, #tpu.memory_space<vmem>>, %arg1: memref<1x2048xf32, #tpu.memory_space<vmem>>, %arg2: memref<8x2048xf32, #tpu.memory_space<vmem>>) attributes {dimension_semantics = [], scalar_prefetch = 0 : i64, scratch_operands = 0 : i64, tpu.core_type = #tpu.core_type<tc>} {
    %c0 = arith.constant 0 : index
    %c0_0 = arith.constant 0 : index
    %0 = vector.load %arg0[%c0, %c0_0] : memref<8x2048xf32, #tpu.memory_space<vmem>>, vector<8x2048xf32>
    %c0_1 = arith.constant 0 : index
    %c0_2 = arith.constant 0 : index
    %1 = vector.load %arg1[%c0_1, %c0_2] : memref<1x2048xf32, #tpu.memory_space<vmem>>, vector<1x2048xf32>
    %2 = vector.broadcast %1 : vector<1x2048xf32> to vector<8x2048xf32>
    %3 = arith.addf %0, %2 : vector<8x2048xf32>
    %cst = arith.constant 0.000000e+00 : f32
    %4 = vector.broadcast %cst : f32 to vector<8x2048xf32>
    %5 = arith.maximumf %3, %4 : vector<8x2048xf32>
    %c0_3 = arith.constant 0 : index
    %c0_4 = arith.constant 0 : index
    %6 = vector.load %arg2[%c0_3, %c0_4] : memref<8x2048xf32, #tpu.memory_space<vmem>>, vector<8x2048xf32>
    tpu.vector_store %arg2[%c0_3, %c0_4], %5 {strides = array<i32>} : memref<8x2048xf32, #tpu.memory_space<vmem>>, vector<8x2048xf32>,
    return
  }
}

module attributes {stable_mosaic.version = 11 : i64} {
  func.func @_fused_add_act_kernel(%arg0: memref<8x512xf32, #tpu.memory_space<vmem>>, %arg1: memref<1x512xf32, #tpu.memory_space<vmem>>, %arg2: memref<8x512xf32, #tpu.memory_space<vmem>>) attributes {dimension_semantics = [], scalar_prefetch = 0 : i64, scratch_operands = 0 : i64, tpu.core_type = #tpu.core_type<tc>} {
    %c0 = arith.constant 0 : index
    %c0_0 = arith.constant 0 : index
    %0 = vector.load %arg0[%c0, %c0_0] : memref<8x512xf32, #tpu.memory_space<vmem>>, vector<8x512xf32>
    %c0_1 = arith.constant 0 : index
    %c0_2 = arith.constant 0 : index
    %1 = vector.load %arg1[%c0_1, %c0_2] : memref<1x512xf32, #tpu.memory_space<vmem>>, vector<1x512xf32>
    %2 = vector.broadcast %1 : vector<1x512xf32> to vector<8x512xf32>
    %3 = arith.addf %0, %2 : vector<8x512xf32>
    %cst = arith.constant 0.000000e+00 : f32
    %4 = vector.broadcast %cst : f32 to vector<8x512xf32>
    %5 = arith.maximumf %3, %4 : vector<8x512xf32>
    %c0_3 = arith.constant 0 : index
    %c0_4 = arith.constant 0 : index
    %6 = vector.load %arg2[%c0_3, %c0_4] : memref<8x512xf32, #tpu.memory_space<vmem>>, vector<8x512xf32>
    tpu.vector_store %arg2[%c0_3, %c0_4], %5 {strides = array<i32>} : memref<8x512xf32, #tpu.memory_space<vmem>>, vector<8x512xf32>,
    return
  }
}

module attributes {stable_mosaic.version = 11 : i64} {
  func.func @_fused_add_act_kernel(%arg0: memref<8x512xf32, #tpu.memory_space<vmem>>, %arg1: memref<1x512xf32, #tpu.memory_space<vmem>>, %arg2: memref<8x512xf32, #tpu.memory_space<vmem>>, %arg3: memref<8x512xf32, #tpu.memory_space<vmem>>) attributes {dimension_semantics = [], scalar_prefetch = 0 : i64, scratch_operands = 0 : i64, tpu.core_type = #tpu.core_type<tc>} {
    %c0 = arith.constant 0 : index
    %c0_0 = arith.constant 0 : index
    %0 = vector.load %arg0[%c0, %c0_0] : memref<8x512xf32, #tpu.memory_space<vmem>>, vector<8x512xf32>
    %c0_1 = arith.constant 0 : index
    %c0_2 = arith.constant 0 : index
    %1 = vector.load %arg1[%c0_1, %c0_2] : memref<1x512xf32, #tpu.memory_space<vmem>>, vector<1x512xf32>
    %2 = vector.broadcast %1 : vector<1x512xf32> to vector<8x512xf32>
    %3 = arith.addf %0, %2 : vector<8x512xf32>
    %c0_3 = arith.constant 0 : index
    %c0_4 = arith.constant 0 : index
    %4 = vector.load %arg2[%c0_3, %c0_4] : memref<8x512xf32, #tpu.memory_space<vmem>>, vector<8x512xf32>
    %5 = arith.addf %3, %4 : vector<8x512xf32>
    %cst = arith.constant 0.000000e+00 : f32
    %6 = vector.broadcast %cst : f32 to vector<8x512xf32>
    %7 = arith.maximumf %5, %6 : vector<8x512xf32>
    %c0_5 = arith.constant 0 : index
    %c0_6 = arith.constant 0 : index
    %8 = vector.load %arg3[%c0_5, %c0_6] : memref<8x512xf32, #tpu.memory_space<vmem>>, vector<8x512xf32>
    tpu.vector_store %arg3[%c0_5, %c0_6], %7 {strides = array<i32>} : memref<8x512xf32, #tpu.memory_space<vmem>>, vector<8x512xf32>,
    return
  }
}

module attributes {stable_mosaic.version = 11 : i64} {
  func.func @_fused_add_act_kernel(%arg0: memref<8x256xf32, #tpu.memory_space<vmem>>, %arg1: memref<1x256xf32, #tpu.memory_space<vmem>>, %arg2: memref<8x256xf32, #tpu.memory_space<vmem>>) attributes {dimension_semantics = [], scalar_prefetch = 0 : i64, scratch_operands = 0 : i64, tpu.core_type = #tpu.core_type<tc>} {
    %c0 = arith.constant 0 : index
    %c0_0 = arith.constant 0 : index
    %0 = vector.load %arg0[%c0, %c0_0] : memref<8x256xf32, #tpu.memory_space<vmem>>, vector<8x256xf32>
    %c0_1 = arith.constant 0 : index
    %c0_2 = arith.constant 0 : index
    %1 = vector.load %arg1[%c0_1, %c0_2] : memref<1x256xf32, #tpu.memory_space<vmem>>, vector<1x256xf32>
    %2 = vector.broadcast %1 : vector<1x256xf32> to vector<8x256xf32>
    %3 = arith.addf %0, %2 : vector<8x256xf32>
    %cst = arith.constant 0.000000e+00 : f32
    %4 = vector.broadcast %cst : f32 to vector<8x256xf32>
    %5 = arith.maximumf %3, %4 : vector<8x256xf32>
    %c0_3 = arith.constant 0 : index
    %c0_4 = arith.constant 0 : index
    %6 = vector.load %arg2[%c0_3, %c0_4] : memref<8x256xf32, #tpu.memory_space<vmem>>, vector<8x256xf32>
    tpu.vector_store %arg2[%c0_3, %c0_4], %5 {strides = array<i32>} : memref<8x256xf32, #tpu.memory_space<vmem>>, vector<8x256xf32>,
    return
  }
}

module attributes {stable_mosaic.version = 11 : i64} {
  func.func @_fused_add_act_kernel(%arg0: memref<8x256xf32, #tpu.memory_space<vmem>>, %arg1: memref<1x256xf32, #tpu.memory_space<vmem>>, %arg2: memref<8x256xf32, #tpu.memory_space<vmem>>, %arg3: memref<1x256xf32, #tpu.memory_space<vmem>>, %arg4: memref<8x256xf32, #tpu.memory_space<vmem>>) attributes {dimension_semantics = [], scalar_prefetch = 0 : i64, scratch_operands = 0 : i64, tpu.core_type = #tpu.core_type<tc>} {
    %c0 = arith.constant 0 : index
    %c0_0 = arith.constant 0 : index
    %0 = vector.load %arg0[%c0, %c0_0] : memref<8x256xf32, #tpu.memory_space<vmem>>, vector<8x256xf32>
    %c0_1 = arith.constant 0 : index
    %c0_2 = arith.constant 0 : index
    %1 = vector.load %arg1[%c0_1, %c0_2] : memref<1x256xf32, #tpu.memory_space<vmem>>, vector<1x256xf32>
    %2 = vector.broadcast %1 : vector<1x256xf32> to vector<8x256xf32>
    %3 = arith.addf %0, %2 : vector<8x256xf32>
    %c0_3 = arith.constant 0 : index
    %c0_4 = arith.constant 0 : index
    %4 = vector.load %arg2[%c0_3, %c0_4] : memref<8x256xf32, #tpu.memory_space<vmem>>, vector<8x256xf32>
    %5 = arith.addf %3, %4 : vector<8x256xf32>
    %c0_5 = arith.constant 0 : index
    %c0_6 = arith.constant 0 : index
    %6 = vector.load %arg3[%c0_5, %c0_6] : memref<1x256xf32, #tpu.memory_space<vmem>>, vector<1x256xf32>
    %7 = vector.broadcast %6 : vector<1x256xf32> to vector<8x256xf32>
    %8 = arith.addf %5, %7 : vector<8x256xf32>
    %cst = arith.constant 0.000000e+00 : f32
    %9 = vector.broadcast %cst : f32 to vector<8x256xf32>
    %10 = arith.maximumf %8, %9 : vector<8x256xf32>
    %c0_7 = arith.constant 0 : index
    %c0_8 = arith.constant 0 : index
    %11 = vector.load %arg4[%c0_7, %c0_8] : memref<8x256xf32, #tpu.memory_space<vmem>>, vector<8x256xf32>
    tpu.vector_store %arg4[%c0_7, %c0_8], %10 {strides = array<i32>} : memref<8x256xf32, #tpu.memory_space<vmem>>, vector<8x256xf32>,
    return
  }
}

module attributes {stable_mosaic.version = 11 : i64} {
  func.func @_fused_add_act_kernel(%arg0: memref<8x128xf32, #tpu.memory_space<vmem>>, %arg1: memref<1x128xf32, #tpu.memory_space<vmem>>, %arg2: memref<8x128xf32, #tpu.memory_space<vmem>>) attributes {dimension_semantics = [], scalar_prefetch = 0 : i64, scratch_operands = 0 : i64, tpu.core_type = #tpu.core_type<tc>} {
    %c0 = arith.constant 0 : index
    %c0_0 = arith.constant 0 : index
    %0 = vector.load %arg0[%c0, %c0_0] : memref<8x128xf32, #tpu.memory_space<vmem>>, vector<8x128xf32>
    %c0_1 = arith.constant 0 : index
    %c0_2 = arith.constant 0 : index
    %1 = vector.load %arg1[%c0_1, %c0_2] : memref<1x128xf32, #tpu.memory_space<vmem>>, vector<1x128xf32>
    %2 = vector.broadcast %1 : vector<1x128xf32> to vector<8x128xf32>
    %3 = arith.addf %0, %2 : vector<8x128xf32>
    %cst = arith.constant 0.000000e+00 : f32
    %4 = vector.broadcast %cst : f32 to vector<8x128xf32>
    %5 = arith.maximumf %3, %4 : vector<8x128xf32>
    %c0_3 = arith.constant 0 : index
    %c0_4 = arith.constant 0 : index
    %6 = vector.load %arg2[%c0_3, %c0_4] : memref<8x128xf32, #tpu.memory_space<vmem>>, vector<8x128xf32>
    tpu.vector_store %arg2[%c0_3, %c0_4], %5 {strides = array<i32>} : memref<8x128xf32, #tpu.memory_space<vmem>>, vector<8x128xf32>,
    return
  }
}

module attributes {stable_mosaic.version = 11 : i64} {
  func.func @_fused_add_act_kernel(%arg0: memref<8x128xf32, #tpu.memory_space<vmem>>, %arg1: memref<1x128xf32, #tpu.memory_space<vmem>>, %arg2: memref<8x128xf32, #tpu.memory_space<vmem>>, %arg3: memref<1x128xf32, #tpu.memory_space<vmem>>, %arg4: memref<8x128xf32, #tpu.memory_space<vmem>>) attributes {dimension_semantics = [], scalar_prefetch = 0 : i64, scratch_operands = 0 : i64, tpu.core_type = #tpu.core_type<tc>} {
    %c0 = arith.constant 0 : index
    %c0_0 = arith.constant 0 : index
    %0 = vector.load %arg0[%c0, %c0_0] : memref<8x128xf32, #tpu.memory_space<vmem>>, vector<8x128xf32>
    %c0_1 = arith.constant 0 : index
    %c0_2 = arith.constant 0 : index
    %1 = vector.load %arg1[%c0_1, %c0_2] : memref<1x128xf32, #tpu.memory_space<vmem>>, vector<1x128xf32>
    %2 = vector.broadcast %1 : vector<1x128xf32> to vector<8x128xf32>
    %3 = arith.addf %0, %2 : vector<8x128xf32>
    %c0_3 = arith.constant 0 : index
    %c0_4 = arith.constant 0 : index
    %4 = vector.load %arg2[%c0_3, %c0_4] : memref<8x128xf32, #tpu.memory_space<vmem>>, vector<8x128xf32>
    %5 = arith.addf %3, %4 : vector<8x128xf32>
    %c0_5 = arith.constant 0 : index
    %c0_6 = arith.constant 0 : index
    %6 = vector.load %arg3[%c0_5, %c0_6] : memref<1x128xf32, #tpu.memory_space<vmem>>, vector<1x128xf32>
    %7 = vector.broadcast %6 : vector<1x128xf32> to vector<8x128xf32>
    %8 = arith.addf %5, %7 : vector<8x128xf32>
    %cst = arith.constant 0.000000e+00 : f32
    %9 = vector.broadcast %cst : f32 to vector<8x128xf32>
    %10 = arith.maximumf %8, %9 : vector<8x128xf32>
    %c0_7 = arith.constant 0 : index
    %c0_8 = arith.constant 0 : index
    %11 = vector.load %arg4[%c0_7, %c0_8] : memref<8x128xf32, #tpu.memory_space<vmem>>, vector<8x128xf32>
    tpu.vector_store %arg4[%c0_7, %c0_8], %10 {strides = array<i32>} : memref<8x128xf32, #tpu.memory_space<vmem>>, vector<8x128xf32>,
    return
  }
}

module attributes {stable_mosaic.version = 11 : i64} {
  func.func @_fused_add_act_kernel(%arg0: memref<8x64xf32, #tpu.memory_space<vmem>>, %arg1: memref<1x64xf32, #tpu.memory_space<vmem>>, %arg2: memref<8x64xf32, #tpu.memory_space<vmem>>) attributes {dimension_semantics = [], scalar_prefetch = 0 : i64, scratch_operands = 0 : i64, tpu.core_type = #tpu.core_type<tc>} {
    %c0 = arith.constant 0 : index
    %c0_0 = arith.constant 0 : index
    %0 = vector.load %arg0[%c0, %c0_0] : memref<8x64xf32, #tpu.memory_space<vmem>>, vector<8x64xf32>
    %c0_1 = arith.constant 0 : index
    %c0_2 = arith.constant 0 : index
    %1 = vector.load %arg1[%c0_1, %c0_2] : memref<1x64xf32, #tpu.memory_space<vmem>>, vector<1x64xf32>
    %2 = vector.broadcast %1 : vector<1x64xf32> to vector<8x64xf32>
    %3 = arith.addf %0, %2 : vector<8x64xf32>
    %cst = arith.constant 0.000000e+00 : f32
    %4 = vector.broadcast %cst : f32 to vector<8x64xf32>
    %5 = arith.maximumf %3, %4 : vector<8x64xf32>
    %c0_3 = arith.constant 0 : index
    %c0_4 = arith.constant 0 : index
    %6 = vector.load %arg2[%c0_3, %c0_4] : memref<8x64xf32, #tpu.memory_space<vmem>>, vector<8x64xf32>
    tpu.vector_store %arg2[%c0_3, %c0_4], %5 {strides = array<i32>} : memref<8x64xf32, #tpu.memory_space<vmem>>, vector<8x64xf32>,
    return
  }
}

module attributes {stable_mosaic.version = 11 : i64} {
  func.func @_fused_add_act_kernel(%arg0: memref<8x64xf32, #tpu.memory_space<vmem>>, %arg1: memref<1x64xf32, #tpu.memory_space<vmem>>, %arg2: memref<8x64xf32, #tpu.memory_space<vmem>>, %arg3: memref<1x64xf32, #tpu.memory_space<vmem>>, %arg4: memref<8x64xf32, #tpu.memory_space<vmem>>) attributes {dimension_semantics = [], scalar_prefetch = 0 : i64, scratch_operands = 0 : i64, tpu.core_type = #tpu.core_type<tc>} {
    %c0 = arith.constant 0 : index
    %c0_0 = arith.constant 0 : index
    %0 = vector.load %arg0[%c0, %c0_0] : memref<8x64xf32, #tpu.memory_space<vmem>>, vector<8x64xf32>
    %c0_1 = arith.constant 0 : index
    %c0_2 = arith.constant 0 : index
    %1 = vector.load %arg1[%c0_1, %c0_2] : memref<1x64xf32, #tpu.memory_space<vmem>>, vector<1x64xf32>
    %2 = vector.broadcast %1 : vector<1x64xf32> to vector<8x64xf32>
    %3 = arith.addf %0, %2 : vector<8x64xf32>
    %c0_3 = arith.constant 0 : index
    %c0_4 = arith.constant 0 : index
    %4 = vector.load %arg2[%c0_3, %c0_4] : memref<8x64xf32, #tpu.memory_space<vmem>>, vector<8x64xf32>
    %5 = arith.addf %3, %4 : vector<8x64xf32>
    %c0_5 = arith.constant 0 : index
    %c0_6 = arith.constant 0 : index
    %6 = vector.load %arg3[%c0_5, %c0_6] : memref<1x64xf32, #tpu.memory_space<vmem>>, vector<1x64xf32>
    %7 = vector.broadcast %6 : vector<1x64xf32> to vector<8x64xf32>
    %8 = arith.addf %5, %7 : vector<8x64xf32>
    %cst = arith.constant 0.000000e+00 : f32
    %9 = vector.broadcast %cst : f32 to vector<8x64xf32>
    %10 = arith.maximumf %8, %9 : vector<8x64xf32>
    %c0_7 = arith.constant 0 : index
    %c0_8 = arith.constant 0 : index
    %11 = vector.load %arg4[%c0_7, %c0_8] : memref<8x64xf32, #tpu.memory_space<vmem>>, vector<8x64xf32>
    tpu.vector_store %arg4[%c0_7, %c0_8], %10 {strides = array<i32>} : memref<8x64xf32, #tpu.memory_space<vmem>>, vector<8x64xf32>,
    return
  }
}

module attributes {stable_mosaic.version = 11 : i64} {
  func.func @_encoder_kernel(%arg0: i32, %arg1: i32, %arg2: memref<1x4x64xbf16, #tpu.memory_space<vmem>>, %arg3: memref<64x64xbf16, #tpu.memory_space<vmem>>, %arg4: memref<1x64xf32, #tpu.memory_space<vmem>>, %arg5: memref<1x4x64xf32, #tpu.memory_space<vmem>>, %arg6: memref<1x64x192xbf16, #tpu.memory_space<vmem>>, %arg7: memref<1x1x192xf32, #tpu.memory_space<vmem>>, %arg8: memref<1x64x64xbf16, #tpu.memory_space<vmem>>, %arg9: memref<1x1x64xf32, #tpu.memory_space<vmem>>, %arg10: memref<1x1x64xf32, #tpu.memory_space<vmem>>, %arg11: memref<1x1x64xf32, #tpu.memory_space<vmem>>, %arg12: memref<1x64x64xbf16, #tpu.memory_space<vmem>>, %arg13: memref<1x1x64xf32, #tpu.memory_space<vmem>>, %arg14: memref<1x64x64xbf16, #tpu.memory_space<vmem>>, %arg15: memref<1x1x64xf32, #tpu.memory_space<vmem>>, %arg16: memref<1x1x64xf32, #tpu.memory_space<vmem>>, %arg17: memref<1x1x64xf32, #tpu.memory_space<vmem>>, %arg18: memref<64x128xbf16, #tpu.memory_space<vmem>>, %arg19: memref<1x128xf32, #tpu.memory_space<vmem>>, %arg20: memref<1x1x128xf32, #tpu.memory_space<vmem>>, %arg21: memref<4x64xf32, #tpu.memory_space<vmem>>) attributes {dimension_semantics = [#tpu.dimension_semantics<parallel>, #tpu.dimension_semantics<arbitrary>], iteration_bounds = array<i64: 2, 12>, scalar_prefetch = 0 : i64, scratch_operands = 1 : i64, tpu.core_type = #tpu.core_type<tc>, window_params = [{transform_indices = @transform_0, window_bounds = array<i64: 1, 4, 64>}, {pipeline_mode = #tpu.pipeline_mode<synchronous>, transform_indices = @transform_1, window_bounds = array<i64: 64, 64>}, {pipeline_mode = #tpu.pipeline_mode<synchronous>, transform_indices = @transform_2, window_bounds = array<i64: 1, 64>}, {transform_indices = @transform_3, window_bounds = array<i64: 1, 4, 64>}, {transform_indices = @transform_4, window_bounds = array<i64: 1, 64, 192>}, {transform_indices = @transform_5, window_bounds = array<i64: 1, 1, 192>}, {transform_indices = @transform_6, window_bounds = array<i64: 1, 64, 64>}, {transform_indices = @transform_7, window_bounds = array<i64: 1, 1, 64>}, {transform_indices = @transform_8, window_bounds = array<i64: 1, 1, 64>}, {transform_indices = @transform_9, window_bounds = array<i64: 1, 1, 64>}, {transform_indices = @transform_10, window_bounds = array<i64: 1, 64, 64>}, {transform_indices = @transform_11, window_bounds = array<i64: 1, 1, 64>}, {transform_indices = @transform_12, window_bounds = array<i64: 1, 64, 64>}, {transform_indices = @transform_13, window_bounds = array<i64: 1, 1, 64>}, {transform_indices = @transform_14, window_bounds = array<i64: 1, 1, 64>}, {transform_indices = @transform_15, window_bounds = array<i64: 1, 1, 64>}, {pipeline_mode = #tpu.pipeline_mode<synchronous>, transform_indices = @transform_16, window_bounds = array<i64: 64, 128>}, {pipeline_mode = #tpu.pipeline_mode<synchronous>, transform_indices = @transform_17, window_bounds = array<i64: 1, 128>}, {transform_indices = @transform_18, window_bounds = array<i64: 1, 1, 128>}]} {
    %c0_i32 = arith.constant 0 : i32
    %0 = arith.cmpi eq, %arg1, %c0_i32 : i32
    %1 = arith.extui %0 : i1 to i32
    %c0_i32_0 = arith.constant 0 : i32
    %2 = arith.cmpi ne, %1, %c0_i32_0 : i32
    scf.if %2 {
      %c0_106 = arith.constant 0 : index
      %c0_107 = arith.constant 0 : index
      %c0_108 = arith.constant 0 : index
      %302 = vector.load %arg2[%c0_106, %c0_107, %c0_108] : memref<1x4x64xbf16, #tpu.memory_space<vmem>>, vector<1x4x64xbf16>
      %303 = vector.shape_cast %302 : vector<1x4x64xbf16> to vector<4x64xbf16>
      %c0_109 = arith.constant 0 : index
      %c0_110 = arith.constant 0 : index
      %304 = vector.load %arg3[%c0_109, %c0_110] : memref<64x64xbf16, #tpu.memory_space<vmem>>, vector<64x64xbf16>
      %cst_111 = arith.constant dense<0.000000e+00> : vector<4x64xf32>
      %305 = tpu.matmul %303, %304, %cst_111 {dimension_numbers = #tpu.dot_dimension_numbers<[1], [0], [0], [1], [0, 0, 1, 1], [], []>} : vector<4x64xbf16>, vector<64x64xbf16>, vector<4x64xf32> -> vector<4x64xf32>
      %c0_112 = arith.constant 0 : index
      %c0_113 = arith.constant 0 : index
      %306 = vector.load %arg4[%c0_112, %c0_113] : memref<1x64xf32, #tpu.memory_space<vmem>>, vector<1x64xf32>
      %307 = vector.broadcast %306 : vector<1x64xf32> to vector<4x64xf32>
      %308 = arith.addf %305, %307 : vector<4x64xf32>
      %c0_114 = arith.constant 0 : index
      %c0_115 = arith.constant 0 : index
      %c0_116 = arith.constant 0 : index
      %309 = vector.load %arg5[%c0_114, %c0_115, %c0_116] : memref<1x4x64xf32, #tpu.memory_space<vmem>>, vector<1x4x64xf32>
      %310 = vector.shape_cast %309 : vector<1x4x64xf32> to vector<4x64xf32>
      %311 = arith.addf %308, %310 : vector<4x64xf32>
      %c0_117 = arith.constant 0 : index
      %c0_118 = arith.constant 0 : index
      %312 = vector.load %arg21[%c0_117, %c0_118] : memref<4x64xf32, #tpu.memory_space<vmem>>, vector<4x64xf32>
      tpu.vector_store %arg21[%c0_117, %c0_118], %311 {strides = array<i32>} : memref<4x64xf32, #tpu.memory_space<vmem>>, vector<4x64xf32>,
      %cst_119 = arith.constant 0.000000e+00 : f32
      %313 = vector.broadcast %cst_119 : f32 to vector<1x1x128xf32>
      %c0_120 = arith.constant 0 : index
      %c0_121 = arith.constant 0 : index
      %c0_122 = arith.constant 0 : index
      %314 = vector.load %arg20[%c0_120, %c0_121, %c0_122] : memref<1x1x128xf32, #tpu.memory_space<vmem>>, vector<1x1x128xf32>
      tpu.vector_store %arg20[%c0_120, %c0_121, %c0_122], %313 {strides = array<i32>} : memref<1x1x128xf32, #tpu.memory_space<vmem>>, vector<1x1x128xf32>,
    } else {
    }
    %c0 = arith.constant 0 : index
    %c0_1 = arith.constant 0 : index
    %3 = vector.load %arg21[%c0, %c0_1] : memref<4x64xf32, #tpu.memory_space<vmem>>, vector<4x64xf32>
    %4 = arith.truncf %3 : vector<4x64xf32> to vector<4x64xbf16>
    %c0_2 = arith.constant 0 : index
    %c0_3 = arith.constant 0 : index
    %c0_4 = arith.constant 0 : index
    %5 = vector.load %arg8[%c0_2, %c0_3, %c0_4] : memref<1x64x64xbf16, #tpu.memory_space<vmem>>, vector<1x64x64xbf16>
    %6 = vector.shape_cast %5 : vector<1x64x64xbf16> to vector<64x64xbf16>
    %c0_5 = arith.constant 0 : index
    %c0_6 = arith.constant 0 : index
    %c0_7 = arith.constant 0 : index
    %7 = vector.load %arg6[%c0_5, %c0_6, %c0_7] : memref<1x64x192xbf16, #tpu.memory_space<vmem>>, vector<1x64x192xbf16>
    %8 = vector.shape_cast %7 : vector<1x64x192xbf16> to vector<64x192xbf16>
    %cst = arith.constant dense<0.000000e+00> : vector<4x192xf32>
    %9 = tpu.matmul %4, %8, %cst {dimension_numbers = #tpu.dot_dimension_numbers<[1], [0], [0], [1], [0, 0, 1, 1], [], []>} : vector<4x64xbf16>, vector<64x192xbf16>, vector<4x192xf32> -> vector<4x192xf32>
    %c0_8 = arith.constant 0 : index
    %c0_9 = arith.constant 0 : index
    %c0_10 = arith.constant 0 : index
    %10 = vector.load %arg7[%c0_8, %c0_9, %c0_10] : memref<1x1x192xf32, #tpu.memory_space<vmem>>, vector<1x1x192xf32>
    %11 = vector.shape_cast %10 : vector<1x1x192xf32> to vector<1x192xf32>
    %12 = vector.broadcast %11 : vector<1x192xf32> to vector<4x192xf32>
    %13 = arith.addf %9, %12 : vector<4x192xf32>
    %cst_11 = arith.constant 0.000000e+00 : f32
    %14 = vector.broadcast %cst_11 : f32 to vector<4x64xf32>
    %15 = vector.extract_strided_slice %13 {offsets = [0, 0], sizes = [4, 8], strides = [1, 1]} : vector<4x192xf32> to vector<4x8xf32>
    %16 = arith.truncf %15 : vector<4x8xf32> to vector<4x8xbf16>
    %17 = vector.extract_strided_slice %13 {offsets = [0, 64], sizes = [4, 8], strides = [1, 1]} : vector<4x192xf32> to vector<4x8xf32>
    %18 = arith.truncf %17 : vector<4x8xf32> to vector<4x8xbf16>
    %19 = vector.extract_strided_slice %13 {offsets = [0, 128], sizes = [4, 8], strides = [1, 1]} : vector<4x192xf32> to vector<4x8xf32>
    %20 = arith.truncf %19 : vector<4x8xf32> to vector<4x8xbf16>
    %cst_12 = arith.constant dense<0.000000e+00> : vector<4x4xf32>
    %21 = tpu.matmul %16, %18, %cst_12 {dimension_numbers = #tpu.dot_dimension_numbers<[1], [1], [0], [0], [0, 0, 1, 0], [], []>} : vector<4x8xbf16>, vector<4x8xbf16>, vector<4x4xf32> -> vector<4x4xf32>
    %cst_13 = arith.constant 0.353553385 : f32
    %22 = vector.broadcast %cst_13 : f32 to vector<4x4xf32>
    %23 = arith.mulf %21, %22 : vector<4x4xf32>
    %cst_14 = arith.constant dense<0xFF800000> : vector<4xf32>
    %24 = vector.multi_reduction <maximumf>, %23, %cst_14 [1] : vector<4x4xf32> to vector<4xf32>
    %25 = vector.shape_cast %24 : vector<4xf32> to vector<4x1xf32>
    %26 = vector.broadcast %25 : vector<4x1xf32> to vector<4x4xf32>
    %27 = arith.subf %23, %26 : vector<4x4xf32>
    %28 = math.exp %27 : vector<4x4xf32>
    %cst_15 = arith.constant dense<0.000000e+00> : vector<4xf32>
    %29 = vector.multi_reduction <add>, %28, %cst_15 [1] : vector<4x4xf32> to vector<4xf32>
    %30 = vector.shape_cast %29 : vector<4xf32> to vector<4x1xf32>
    %31 = tpu.reciprocal %30 {approx = true} : vector<4x1xf32> -> vector<4x1xf32>
    %32 = vector.broadcast %31 : vector<4x1xf32> to vector<4x4xf32>
    %33 = arith.mulf %28, %32 : vector<4x4xf32>
    %34 = arith.truncf %33 : vector<4x4xf32> to vector<4x4xbf16>
    %cst_16 = arith.constant dense<0.000000e+00> : vector<4x8xf32>
    %35 = tpu.matmul %34, %20, %cst_16 {dimension_numbers = #tpu.dot_dimension_numbers<[1], [0], [0], [1], [0, 0, 1, 1], [], []>} : vector<4x4xbf16>, vector<4x8xbf16>, vector<4x8xf32> -> vector<4x8xf32>
    %36 = arith.truncf %35 : vector<4x8xf32> to vector<4x8xbf16>
    %37 = vector.extract_strided_slice %6 {offsets = [0, 0], sizes = [8, 64], strides = [1, 1]} : vector<64x64xbf16> to vector<8x64xbf16>
    %cst_17 = arith.constant dense<0.000000e+00> : vector<4x64xf32>
    %38 = tpu.matmul %36, %37, %cst_17 {dimension_numbers = #tpu.dot_dimension_numbers<[1], [0], [0], [1], [0, 0, 1, 1], [], []>} : vector<4x8xbf16>, vector<8x64xbf16>, vector<4x64xf32> -> vector<4x64xf32>
    %39 = arith.addf %14, %38 : vector<4x64xf32>
    %40 = vector.extract_strided_slice %13 {offsets = [0, 8], sizes = [4, 8], strides = [1, 1]} : vector<4x192xf32> to vector<4x8xf32>
    %41 = arith.truncf %40 : vector<4x8xf32> to vector<4x8xbf16>
    %42 = vector.extract_strided_slice %13 {offsets = [0, 72], sizes = [4, 8], strides = [1, 1]} : vector<4x192xf32> to vector<4x8xf32>
    %43 = arith.truncf %42 : vector<4x8xf32> to vector<4x8xbf16>
    %44 = vector.extract_strided_slice %13 {offsets = [0, 136], sizes = [4, 8], strides = [1, 1]} : vector<4x192xf32> to vector<4x8xf32>
    %45 = arith.truncf %44 : vector<4x8xf32> to vector<4x8xbf16>
    %cst_18 = arith.constant dense<0.000000e+00> : vector<4x4xf32>
    %46 = tpu.matmul %41, %43, %cst_18 {dimension_numbers = #tpu.dot_dimension_numbers<[1], [1], [0], [0], [0, 0, 1, 0], [], []>} : vector<4x8xbf16>, vector<4x8xbf16>, vector<4x4xf32> -> vector<4x4xf32>
    %cst_19 = arith.constant 0.353553385 : f32
    %47 = vector.broadcast %cst_19 : f32 to vector<4x4xf32>
    %48 = arith.mulf %46, %47 : vector<4x4xf32>
    %cst_20 = arith.constant dense<0xFF800000> : vector<4xf32>
    %49 = vector.multi_reduction <maximumf>, %48, %cst_20 [1] : vector<4x4xf32> to vector<4xf32>
    %50 = vector.shape_cast %49 : vector<4xf32> to vector<4x1xf32>
    %51 = vector.broadcast %50 : vector<4x1xf32> to vector<4x4xf32>
    %52 = arith.subf %48, %51 : vector<4x4xf32>
    %53 = math.exp %52 : vector<4x4xf32>
    %cst_21 = arith.constant dense<0.000000e+00> : vector<4xf32>
    %54 = vector.multi_reduction <add>, %53, %cst_21 [1] : vector<4x4xf32> to vector<4xf32>
    %55 = vector.shape_cast %54 : vector<4xf32> to vector<4x1xf32>
    %56 = tpu.reciprocal %55 {approx = true} : vector<4x1xf32> -> vector<4x1xf32>
    %57 = vector.broadcast %56 : vector<4x1xf32> to vector<4x4xf32>
    %58 = arith.mulf %53, %57 : vector<4x4xf32>
    %59 = arith.truncf %58 : vector<4x4xf32> to vector<4x4xbf16>
    %cst_22 = arith.constant dense<0.000000e+00> : vector<4x8xf32>
    %60 = tpu.matmul %59, %45, %cst_22 {dimension_numbers = #tpu.dot_dimension_numbers<[1], [0], [0], [1], [0, 0, 1, 1], [], []>} : vector<4x4xbf16>, vector<4x8xbf16>, vector<4x8xf32> -> vector<4x8xf32>
    %61 = arith.truncf %60 : vector<4x8xf32> to vector<4x8xbf16>
    %62 = vector.extract_strided_slice %6 {offsets = [8, 0], sizes = [8, 64], strides = [1, 1]} : vector<64x64xbf16> to vector<8x64xbf16>
    %cst_23 = arith.constant dense<0.000000e+00> : vector<4x64xf32>
    %63 = tpu.matmul %61, %62, %cst_23 {dimension_numbers = #tpu.dot_dimension_numbers<[1], [0], [0], [1], [0, 0, 1, 1], [], []>} : vector<4x8xbf16>, vector<8x64xbf16>, vector<4x64xf32> -> vector<4x64xf32>
    %64 = arith.addf %39, %63 : vector<4x64xf32>
    %65 = vector.extract_strided_slice %13 {offsets = [0, 16], sizes = [4, 8], strides = [1, 1]} : vector<4x192xf32> to vector<4x8xf32>
    %66 = arith.truncf %65 : vector<4x8xf32> to vector<4x8xbf16>
    %67 = vector.extract_strided_slice %13 {offsets = [0, 80], sizes = [4, 8], strides = [1, 1]} : vector<4x192xf32> to vector<4x8xf32>
    %68 = arith.truncf %67 : vector<4x8xf32> to vector<4x8xbf16>
    %69 = vector.extract_strided_slice %13 {offsets = [0, 144], sizes = [4, 8], strides = [1, 1]} : vector<4x192xf32> to vector<4x8xf32>
    %70 = arith.truncf %69 : vector<4x8xf32> to vector<4x8xbf16>
    %cst_24 = arith.constant dense<0.000000e+00> : vector<4x4xf32>
    %71 = tpu.matmul %66, %68, %cst_24 {dimension_numbers = #tpu.dot_dimension_numbers<[1], [1], [0], [0], [0, 0, 1, 0], [], []>} : vector<4x8xbf16>, vector<4x8xbf16>, vector<4x4xf32> -> vector<4x4xf32>
    %cst_25 = arith.constant 0.353553385 : f32
    %72 = vector.broadcast %cst_25 : f32 to vector<4x4xf32>
    %73 = arith.mulf %71, %72 : vector<4x4xf32>
    %cst_26 = arith.constant dense<0xFF800000> : vector<4xf32>
    %74 = vector.multi_reduction <maximumf>, %73, %cst_26 [1] : vector<4x4xf32> to vector<4xf32>
    %75 = vector.shape_cast %74 : vector<4xf32> to vector<4x1xf32>
    %76 = vector.broadcast %75 : vector<4x1xf32> to vector<4x4xf32>
    %77 = arith.subf %73, %76 : vector<4x4xf32>
    %78 = math.exp %77 : vector<4x4xf32>
    %cst_27 = arith.constant dense<0.000000e+00> : vector<4xf32>
    %79 = vector.multi_reduction <add>, %78, %cst_27 [1] : vector<4x4xf32> to vector<4xf32>
    %80 = vector.shape_cast %79 : vector<4xf32> to vector<4x1xf32>
    %81 = tpu.reciprocal %80 {approx = true} : vector<4x1xf32> -> vector<4x1xf32>
    %82 = vector.broadcast %81 : vector<4x1xf32> to vector<4x4xf32>
    %83 = arith.mulf %78, %82 : vector<4x4xf32>
    %84 = arith.truncf %83 : vector<4x4xf32> to vector<4x4xbf16>
    %cst_28 = arith.constant dense<0.000000e+00> : vector<4x8xf32>
    %85 = tpu.matmul %84, %70, %cst_28 {dimension_numbers = #tpu.dot_dimension_numbers<[1], [0], [0], [1], [0, 0, 1, 1], [], []>} : vector<4x4xbf16>, vector<4x8xbf16>, vector<4x8xf32> -> vector<4x8xf32>
    %86 = arith.truncf %85 : vector<4x8xf32> to vector<4x8xbf16>
    %87 = vector.extract_strided_slice %6 {offsets = [16, 0], sizes = [8, 64], strides = [1, 1]} : vector<64x64xbf16> to vector<8x64xbf16>
    %cst_29 = arith.constant dense<0.000000e+00> : vector<4x64xf32>
    %88 = tpu.matmul %86, %87, %cst_29 {dimension_numbers = #tpu.dot_dimension_numbers<[1], [0], [0], [1], [0, 0, 1, 1], [], []>} : vector<4x8xbf16>, vector<8x64xbf16>, vector<4x64xf32> -> vector<4x64xf32>
    %89 = arith.addf %64, %88 : vector<4x64xf32>
    %90 = vector.extract_strided_slice %13 {offsets = [0, 24], sizes = [4, 8], strides = [1, 1]} : vector<4x192xf32> to vector<4x8xf32>
    %91 = arith.truncf %90 : vector<4x8xf32> to vector<4x8xbf16>
    %92 = vector.extract_strided_slice %13 {offsets = [0, 88], sizes = [4, 8], strides = [1, 1]} : vector<4x192xf32> to vector<4x8xf32>
    %93 = arith.truncf %92 : vector<4x8xf32> to vector<4x8xbf16>
    %94 = vector.extract_strided_slice %13 {offsets = [0, 152], sizes = [4, 8], strides = [1, 1]} : vector<4x192xf32> to vector<4x8xf32>
    %95 = arith.truncf %94 : vector<4x8xf32> to vector<4x8xbf16>
    %cst_30 = arith.constant dense<0.000000e+00> : vector<4x4xf32>
    %96 = tpu.matmul %91, %93, %cst_30 {dimension_numbers = #tpu.dot_dimension_numbers<[1], [1], [0], [0], [0, 0, 1, 0], [], []>} : vector<4x8xbf16>, vector<4x8xbf16>, vector<4x4xf32> -> vector<4x4xf32>
    %cst_31 = arith.constant 0.353553385 : f32
    %97 = vector.broadcast %cst_31 : f32 to vector<4x4xf32>
    %98 = arith.mulf %96, %97 : vector<4x4xf32>
    %cst_32 = arith.constant dense<0xFF800000> : vector<4xf32>
    %99 = vector.multi_reduction <maximumf>, %98, %cst_32 [1] : vector<4x4xf32> to vector<4xf32>
    %100 = vector.shape_cast %99 : vector<4xf32> to vector<4x1xf32>
    %101 = vector.broadcast %100 : vector<4x1xf32> to vector<4x4xf32>
    %102 = arith.subf %98, %101 : vector<4x4xf32>
    %103 = math.exp %102 : vector<4x4xf32>
    %cst_33 = arith.constant dense<0.000000e+00> : vector<4xf32>
    %104 = vector.multi_reduction <add>, %103, %cst_33 [1] : vector<4x4xf32> to vector<4xf32>
    %105 = vector.shape_cast %104 : vector<4xf32> to vector<4x1xf32>
    %106 = tpu.reciprocal %105 {approx = true} : vector<4x1xf32> -> vector<4x1xf32>
    %107 = vector.broadcast %106 : vector<4x1xf32> to vector<4x4xf32>
    %108 = arith.mulf %103, %107 : vector<4x4xf32>
    %109 = arith.truncf %108 : vector<4x4xf32> to vector<4x4xbf16>
    %cst_34 = arith.constant dense<0.000000e+00> : vector<4x8xf32>
    %110 = tpu.matmul %109, %95, %cst_34 {dimension_numbers = #tpu.dot_dimension_numbers<[1], [0], [0], [1], [0, 0, 1, 1], [], []>} : vector<4x4xbf16>, vector<4x8xbf16>, vector<4x8xf32> -> vector<4x8xf32>
    %111 = arith.truncf %110 : vector<4x8xf32> to vector<4x8xbf16>
    %112 = vector.extract_strided_slice %6 {offsets = [24, 0], sizes = [8, 64], strides = [1, 1]} : vector<64x64xbf16> to vector<8x64xbf16>
    %cst_35 = arith.constant dense<0.000000e+00> : vector<4x64xf32>
    %113 = tpu.matmul %111, %112, %cst_35 {dimension_numbers = #tpu.dot_dimension_numbers<[1], [0], [0], [1], [0, 0, 1, 1], [], []>} : vector<4x8xbf16>, vector<8x64xbf16>, vector<4x64xf32> -> vector<4x64xf32>
    %114 = arith.addf %89, %113 : vector<4x64xf32>
    %115 = vector.extract_strided_slice %13 {offsets = [0, 32], sizes = [4, 8], strides = [1, 1]} : vector<4x192xf32> to vector<4x8xf32>
    %116 = arith.truncf %115 : vector<4x8xf32> to vector<4x8xbf16>
    %117 = vector.extract_strided_slice %13 {offsets = [0, 96], sizes = [4, 8], strides = [1, 1]} : vector<4x192xf32> to vector<4x8xf32>
    %118 = arith.truncf %117 : vector<4x8xf32> to vector<4x8xbf16>
    %119 = vector.extract_strided_slice %13 {offsets = [0, 160], sizes = [4, 8], strides = [1, 1]} : vector<4x192xf32> to vector<4x8xf32>
    %120 = arith.truncf %119 : vector<4x8xf32> to vector<4x8xbf16>
    %cst_36 = arith.constant dense<0.000000e+00> : vector<4x4xf32>
    %121 = tpu.matmul %116, %118, %cst_36 {dimension_numbers = #tpu.dot_dimension_numbers<[1], [1], [0], [0], [0, 0, 1, 0], [], []>} : vector<4x8xbf16>, vector<4x8xbf16>, vector<4x4xf32> -> vector<4x4xf32>
    %cst_37 = arith.constant 0.353553385 : f32
    %122 = vector.broadcast %cst_37 : f32 to vector<4x4xf32>
    %123 = arith.mulf %121, %122 : vector<4x4xf32>
    %cst_38 = arith.constant dense<0xFF800000> : vector<4xf32>
    %124 = vector.multi_reduction <maximumf>, %123, %cst_38 [1] : vector<4x4xf32> to vector<4xf32>
    %125 = vector.shape_cast %124 : vector<4xf32> to vector<4x1xf32>
    %126 = vector.broadcast %125 : vector<4x1xf32> to vector<4x4xf32>
    %127 = arith.subf %123, %126 : vector<4x4xf32>
    %128 = math.exp %127 : vector<4x4xf32>
    %cst_39 = arith.constant dense<0.000000e+00> : vector<4xf32>
    %129 = vector.multi_reduction <add>, %128, %cst_39 [1] : vector<4x4xf32> to vector<4xf32>
    %130 = vector.shape_cast %129 : vector<4xf32> to vector<4x1xf32>
    %131 = tpu.reciprocal %130 {approx = true} : vector<4x1xf32> -> vector<4x1xf32>
    %132 = vector.broadcast %131 : vector<4x1xf32> to vector<4x4xf32>
    %133 = arith.mulf %128, %132 : vector<4x4xf32>
    %134 = arith.truncf %133 : vector<4x4xf32> to vector<4x4xbf16>
    %cst_40 = arith.constant dense<0.000000e+00> : vector<4x8xf32>
    %135 = tpu.matmul %134, %120, %cst_40 {dimension_numbers = #tpu.dot_dimension_numbers<[1], [0], [0], [1], [0, 0, 1, 1], [], []>} : vector<4x4xbf16>, vector<4x8xbf16>, vector<4x8xf32> -> vector<4x8xf32>
    %136 = arith.truncf %135 : vector<4x8xf32> to vector<4x8xbf16>
    %137 = vector.extract_strided_slice %6 {offsets = [32, 0], sizes = [8, 64], strides = [1, 1]} : vector<64x64xbf16> to vector<8x64xbf16>
    %cst_41 = arith.constant dense<0.000000e+00> : vector<4x64xf32>
    %138 = tpu.matmul %136, %137, %cst_41 {dimension_numbers = #tpu.dot_dimension_numbers<[1], [0], [0], [1], [0, 0, 1, 1], [], []>} : vector<4x8xbf16>, vector<8x64xbf16>, vector<4x64xf32> -> vector<4x64xf32>
    %139 = arith.addf %114, %138 : vector<4x64xf32>
    %140 = vector.extract_strided_slice %13 {offsets = [0, 40], sizes = [4, 8], strides = [1, 1]} : vector<4x192xf32> to vector<4x8xf32>
    %141 = arith.truncf %140 : vector<4x8xf32> to vector<4x8xbf16>
    %142 = vector.extract_strided_slice %13 {offsets = [0, 104], sizes = [4, 8], strides = [1, 1]} : vector<4x192xf32> to vector<4x8xf32>
    %143 = arith.truncf %142 : vector<4x8xf32> to vector<4x8xbf16>
    %144 = vector.extract_strided_slice %13 {offsets = [0, 168], sizes = [4, 8], strides = [1, 1]} : vector<4x192xf32> to vector<4x8xf32>
    %145 = arith.truncf %144 : vector<4x8xf32> to vector<4x8xbf16>
    %cst_42 = arith.constant dense<0.000000e+00> : vector<4x4xf32>
    %146 = tpu.matmul %141, %143, %cst_42 {dimension_numbers = #tpu.dot_dimension_numbers<[1], [1], [0], [0], [0, 0, 1, 0], [], []>} : vector<4x8xbf16>, vector<4x8xbf16>, vector<4x4xf32> -> vector<4x4xf32>
    %cst_43 = arith.constant 0.353553385 : f32
    %147 = vector.broadcast %cst_43 : f32 to vector<4x4xf32>
    %148 = arith.mulf %146, %147 : vector<4x4xf32>
    %cst_44 = arith.constant dense<0xFF800000> : vector<4xf32>
    %149 = vector.multi_reduction <maximumf>, %148, %cst_44 [1] : vector<4x4xf32> to vector<4xf32>
    %150 = vector.shape_cast %149 : vector<4xf32> to vector<4x1xf32>
    %151 = vector.broadcast %150 : vector<4x1xf32> to vector<4x4xf32>
    %152 = arith.subf %148, %151 : vector<4x4xf32>
    %153 = math.exp %152 : vector<4x4xf32>
    %cst_45 = arith.constant dense<0.000000e+00> : vector<4xf32>
    %154 = vector.multi_reduction <add>, %153, %cst_45 [1] : vector<4x4xf32> to vector<4xf32>
    %155 = vector.shape_cast %154 : vector<4xf32> to vector<4x1xf32>
    %156 = tpu.reciprocal %155 {approx = true} : vector<4x1xf32> -> vector<4x1xf32>
    %157 = vector.broadcast %156 : vector<4x1xf32> to vector<4x4xf32>
    %158 = arith.mulf %153, %157 : vector<4x4xf32>
    %159 = arith.truncf %158 : vector<4x4xf32> to vector<4x4xbf16>
    %cst_46 = arith.constant dense<0.000000e+00> : vector<4x8xf32>
    %160 = tpu.matmul %159, %145, %cst_46 {dimension_numbers = #tpu.dot_dimension_numbers<[1], [0], [0], [1], [0, 0, 1, 1], [], []>} : vector<4x4xbf16>, vector<4x8xbf16>, vector<4x8xf32> -> vector<4x8xf32>
    %161 = arith.truncf %160 : vector<4x8xf32> to vector<4x8xbf16>
    %162 = vector.extract_strided_slice %6 {offsets = [40, 0], sizes = [8, 64], strides = [1, 1]} : vector<64x64xbf16> to vector<8x64xbf16>
    %cst_47 = arith.constant dense<0.000000e+00> : vector<4x64xf32>
    %163 = tpu.matmul %161, %162, %cst_47 {dimension_numbers = #tpu.dot_dimension_numbers<[1], [0], [0], [1], [0, 0, 1, 1], [], []>} : vector<4x8xbf16>, vector<8x64xbf16>, vector<4x64xf32> -> vector<4x64xf32>
    %164 = arith.addf %139, %163 : vector<4x64xf32>
    %165 = vector.extract_strided_slice %13 {offsets = [0, 48], sizes = [4, 8], strides = [1, 1]} : vector<4x192xf32> to vector<4x8xf32>
    %166 = arith.truncf %165 : vector<4x8xf32> to vector<4x8xbf16>
    %167 = vector.extract_strided_slice %13 {offsets = [0, 112], sizes = [4, 8], strides = [1, 1]} : vector<4x192xf32> to vector<4x8xf32>
    %168 = arith.truncf %167 : vector<4x8xf32> to vector<4x8xbf16>
    %169 = vector.extract_strided_slice %13 {offsets = [0, 176], sizes = [4, 8], strides = [1, 1]} : vector<4x192xf32> to vector<4x8xf32>
    %170 = arith.truncf %169 : vector<4x8xf32> to vector<4x8xbf16>
    %cst_48 = arith.constant dense<0.000000e+00> : vector<4x4xf32>
    %171 = tpu.matmul %166, %168, %cst_48 {dimension_numbers = #tpu.dot_dimension_numbers<[1], [1], [0], [0], [0, 0, 1, 0], [], []>} : vector<4x8xbf16>, vector<4x8xbf16>, vector<4x4xf32> -> vector<4x4xf32>
    %cst_49 = arith.constant 0.353553385 : f32
    %172 = vector.broadcast %cst_49 : f32 to vector<4x4xf32>
    %173 = arith.mulf %171, %172 : vector<4x4xf32>
    %cst_50 = arith.constant dense<0xFF800000> : vector<4xf32>
    %174 = vector.multi_reduction <maximumf>, %173, %cst_50 [1] : vector<4x4xf32> to vector<4xf32>
    %175 = vector.shape_cast %174 : vector<4xf32> to vector<4x1xf32>
    %176 = vector.broadcast %175 : vector<4x1xf32> to vector<4x4xf32>
    %177 = arith.subf %173, %176 : vector<4x4xf32>
    %178 = math.exp %177 : vector<4x4xf32>
    %cst_51 = arith.constant dense<0.000000e+00> : vector<4xf32>
    %179 = vector.multi_reduction <add>, %178, %cst_51 [1] : vector<4x4xf32> to vector<4xf32>
    %180 = vector.shape_cast %179 : vector<4xf32> to vector<4x1xf32>
    %181 = tpu.reciprocal %180 {approx = true} : vector<4x1xf32> -> vector<4x1xf32>
    %182 = vector.broadcast %181 : vector<4x1xf32> to vector<4x4xf32>
    %183 = arith.mulf %178, %182 : vector<4x4xf32>
    %184 = arith.truncf %183 : vector<4x4xf32> to vector<4x4xbf16>
    %cst_52 = arith.constant dense<0.000000e+00> : vector<4x8xf32>
    %185 = tpu.matmul %184, %170, %cst_52 {dimension_numbers = #tpu.dot_dimension_numbers<[1], [0], [0], [1], [0, 0, 1, 1], [], []>} : vector<4x4xbf16>, vector<4x8xbf16>, vector<4x8xf32> -> vector<4x8xf32>
    %186 = arith.truncf %185 : vector<4x8xf32> to vector<4x8xbf16>
    %187 = vector.extract_strided_slice %6 {offsets = [48, 0], sizes = [8, 64], strides = [1, 1]} : vector<64x64xbf16> to vector<8x64xbf16>
    %cst_53 = arith.constant dense<0.000000e+00> : vector<4x64xf32>
    %188 = tpu.matmul %186, %187, %cst_53 {dimension_numbers = #tpu.dot_dimension_numbers<[1], [0], [0], [1], [0, 0, 1, 1], [], []>} : vector<4x8xbf16>, vector<8x64xbf16>, vector<4x64xf32> -> vector<4x64xf32>
    %189 = arith.addf %164, %188 : vector<4x64xf32>
    %190 = vector.extract_strided_slice %13 {offsets = [0, 56], sizes = [4, 8], strides = [1, 1]} : vector<4x192xf32> to vector<4x8xf32>
    %191 = arith.truncf %190 : vector<4x8xf32> to vector<4x8xbf16>
    %192 = vector.extract_strided_slice %13 {offsets = [0, 120], sizes = [4, 8], strides = [1, 1]} : vector<4x192xf32> to vector<4x8xf32>
    %193 = arith.truncf %192 : vector<4x8xf32> to vector<4x8xbf16>
    %194 = vector.extract_strided_slice %13 {offsets = [0, 184], sizes = [4, 8], strides = [1, 1]} : vector<4x192xf32> to vector<4x8xf32>
    %195 = arith.truncf %194 : vector<4x8xf32> to vector<4x8xbf16>
    %cst_54 = arith.constant dense<0.000000e+00> : vector<4x4xf32>
    %196 = tpu.matmul %191, %193, %cst_54 {dimension_numbers = #tpu.dot_dimension_numbers<[1], [1], [0], [0], [0, 0, 1, 0], [], []>} : vector<4x8xbf16>, vector<4x8xbf16>, vector<4x4xf32> -> vector<4x4xf32>
    %cst_55 = arith.constant 0.353553385 : f32
    %197 = vector.broadcast %cst_55 : f32 to vector<4x4xf32>
    %198 = arith.mulf %196, %197 : vector<4x4xf32>
    %cst_56 = arith.constant dense<0xFF800000> : vector<4xf32>
    %199 = vector.multi_reduction <maximumf>, %198, %cst_56 [1] : vector<4x4xf32> to vector<4xf32>
    %200 = vector.shape_cast %199 : vector<4xf32> to vector<4x1xf32>
    %201 = vector.broadcast %200 : vector<4x1xf32> to vector<4x4xf32>
    %202 = arith.subf %198, %201 : vector<4x4xf32>
    %203 = math.exp %202 : vector<4x4xf32>
    %cst_57 = arith.constant dense<0.000000e+00> : vector<4xf32>
    %204 = vector.multi_reduction <add>, %203, %cst_57 [1] : vector<4x4xf32> to vector<4xf32>
    %205 = vector.shape_cast %204 : vector<4xf32> to vector<4x1xf32>
    %206 = tpu.reciprocal %205 {approx = true} : vector<4x1xf32> -> vector<4x1xf32>
    %207 = vector.broadcast %206 : vector<4x1xf32> to vector<4x4xf32>
    %208 = arith.mulf %203, %207 : vector<4x4xf32>
    %209 = arith.truncf %208 : vector<4x4xf32> to vector<4x4xbf16>
    %cst_58 = arith.constant dense<0.000000e+00> : vector<4x8xf32>
    %210 = tpu.matmul %209, %195, %cst_58 {dimension_numbers = #tpu.dot_dimension_numbers<[1], [0], [0], [1], [0, 0, 1, 1], [], []>} : vector<4x4xbf16>, vector<4x8xbf16>, vector<4x8xf32> -> vector<4x8xf32>
    %211 = arith.truncf %210 : vector<4x8xf32> to vector<4x8xbf16>
    %212 = vector.extract_strided_slice %6 {offsets = [56, 0], sizes = [8, 64], strides = [1, 1]} : vector<64x64xbf16> to vector<8x64xbf16>
    %cst_59 = arith.constant dense<0.000000e+00> : vector<4x64xf32>
    %213 = tpu.matmul %211, %212, %cst_59 {dimension_numbers = #tpu.dot_dimension_numbers<[1], [0], [0], [1], [0, 0, 1, 1], [], []>} : vector<4x8xbf16>, vector<8x64xbf16>, vector<4x64xf32> -> vector<4x64xf32>
    %214 = arith.addf %189, %213 : vector<4x64xf32>
    %c0_60 = arith.constant 0 : index
    %c0_61 = arith.constant 0 : index
    %c0_62 = arith.constant 0 : index
    %215 = vector.load %arg9[%c0_60, %c0_61, %c0_62] : memref<1x1x64xf32, #tpu.memory_space<vmem>>, vector<1x1x64xf32>
    %216 = vector.shape_cast %215 : vector<1x1x64xf32> to vector<1x64xf32>
    %217 = vector.broadcast %216 : vector<1x64xf32> to vector<4x64xf32>
    %218 = arith.addf %214, %217 : vector<4x64xf32>
    %219 = arith.addf %3, %218 : vector<4x64xf32>
    %c0_63 = arith.constant 0 : index
    %c0_64 = arith.constant 0 : index
    %c0_65 = arith.constant 0 : index
    %220 = vector.load %arg10[%c0_63, %c0_64, %c0_65] : memref<1x1x64xf32, #tpu.memory_space<vmem>>, vector<1x1x64xf32>
    %221 = vector.shape_cast %220 : vector<1x1x64xf32> to vector<1x64xf32>
    %c0_66 = arith.constant 0 : index
    %c0_67 = arith.constant 0 : index
    %c0_68 = arith.constant 0 : index
    %222 = vector.load %arg11[%c0_66, %c0_67, %c0_68] : memref<1x1x64xf32, #tpu.memory_space<vmem>>, vector<1x1x64xf32>
    %223 = vector.shape_cast %222 : vector<1x1x64xf32> to vector<1x64xf32>
    %cst_69 = arith.constant dense<0.000000e+00> : vector<4xf32>
    %224 = vector.multi_reduction <add>, %219, %cst_69 [1] : vector<4x64xf32> to vector<4xf32>
    %225 = vector.shape_cast %224 : vector<4xf32> to vector<4x1xf32>
    %cst_70 = arith.constant 6.400000e+01 : f32
    %226 = vector.broadcast %cst_70 : f32 to vector<4x1xf32>
    %227 = arith.divf %225, %226 : vector<4x1xf32>
    %228 = vector.broadcast %227 : vector<4x1xf32> to vector<4x64xf32>
    %229 = arith.subf %219, %228 : vector<4x64xf32>
    %230 = arith.mulf %229, %229 : vector<4x64xf32>
    %cst_71 = arith.constant dense<0.000000e+00> : vector<4xf32>
    %231 = vector.multi_reduction <add>, %230, %cst_71 [1] : vector<4x64xf32> to vector<4xf32>
    %232 = vector.shape_cast %231 : vector<4xf32> to vector<4x1xf32>
    %cst_72 = arith.constant 6.400000e+01 : f32
    %233 = vector.broadcast %cst_72 : f32 to vector<4x1xf32>
    %234 = arith.divf %232, %233 : vector<4x1xf32>
    %cst_73 = arith.constant 9.99999996E-13 : f32
    %235 = vector.broadcast %cst_73 : f32 to vector<4x1xf32>
    %236 = arith.addf %234, %235 : vector<4x1xf32>
    %237 = math.rsqrt %236 : vector<4x1xf32>
    %238 = vector.broadcast %237 : vector<4x1xf32> to vector<4x64xf32>
    %239 = arith.mulf %229, %238 : vector<4x64xf32>
    %240 = vector.broadcast %221 : vector<1x64xf32> to vector<4x64xf32>
    %241 = arith.mulf %239, %240 : vector<4x64xf32>
    %242 = vector.broadcast %223 : vector<1x64xf32> to vector<4x64xf32>
    %243 = arith.addf %241, %242 : vector<4x64xf32>
    %244 = arith.truncf %243 : vector<4x64xf32> to vector<4x64xbf16>
    %c0_74 = arith.constant 0 : index
    %c0_75 = arith.constant 0 : index
    %c0_76 = arith.constant 0 : index
    %245 = vector.load %arg12[%c0_74, %c0_75, %c0_76] : memref<1x64x64xbf16, #tpu.memory_space<vmem>>, vector<1x64x64xbf16>
    %246 = vector.shape_cast %245 : vector<1x64x64xbf16> to vector<64x64xbf16>
    %cst_77 = arith.constant dense<0.000000e+00> : vector<4x64xf32>
    %247 = tpu.matmul %244, %246, %cst_77 {dimension_numbers = #tpu.dot_dimension_numbers<[1], [0], [0], [1], [0, 0, 1, 1], [], []>} : vector<4x64xbf16>, vector<64x64xbf16>, vector<4x64xf32> -> vector<4x64xf32>
    %c0_78 = arith.constant 0 : index
    %c0_79 = arith.constant 0 : index
    %c0_80 = arith.constant 0 : index
    %248 = vector.load %arg13[%c0_78, %c0_79, %c0_80] : memref<1x1x64xf32, #tpu.memory_space<vmem>>, vector<1x1x64xf32>
    %249 = vector.shape_cast %248 : vector<1x1x64xf32> to vector<1x64xf32>
    %250 = vector.broadcast %249 : vector<1x64xf32> to vector<4x64xf32>
    %251 = arith.addf %247, %250 : vector<4x64xf32>
    %252 = arith.mulf %251, %251 : vector<4x64xf32>
    %253 = arith.mulf %251, %252 : vector<4x64xf32>
    %cst_81 = arith.constant 4.471500e-02 : f32
    %254 = vector.broadcast %cst_81 : f32 to vector<4x64xf32>
    %255 = arith.mulf %254, %253 : vector<4x64xf32>
    %256 = arith.addf %251, %255 : vector<4x64xf32>
    %cst_82 = arith.constant 0.797884583 : f32
    %257 = vector.broadcast %cst_82 : f32 to vector<4x64xf32>
    %258 = arith.mulf %257, %256 : vector<4x64xf32>
    %259 = math.tanh %258 : vector<4x64xf32>
    %cst_83 = arith.constant 1.000000e+00 : f32
    %260 = vector.broadcast %cst_83 : f32 to vector<4x64xf32>
    %261 = arith.addf %260, %259 : vector<4x64xf32>
    %cst_84 = arith.constant 5.000000e-01 : f32
    %262 = vector.broadcast %cst_84 : f32 to vector<4x64xf32>
    %263 = arith.mulf %262, %261 : vector<4x64xf32>
    %264 = arith.mulf %251, %263 : vector<4x64xf32>
    %265 = arith.truncf %264 : vector<4x64xf32> to vector<4x64xbf16>
    %c0_85 = arith.constant 0 : index
    %c0_86 = arith.constant 0 : index
    %c0_87 = arith.constant 0 : index
    %266 = vector.load %arg14[%c0_85, %c0_86, %c0_87] : memref<1x64x64xbf16, #tpu.memory_space<vmem>>, vector<1x64x64xbf16>
    %267 = vector.shape_cast %266 : vector<1x64x64xbf16> to vector<64x64xbf16>
    %cst_88 = arith.constant dense<0.000000e+00> : vector<4x64xf32>
    %268 = tpu.matmul %265, %267, %cst_88 {dimension_numbers = #tpu.dot_dimension_numbers<[1], [0], [0], [1], [0, 0, 1, 1], [], []>} : vector<4x64xbf16>, vector<64x64xbf16>, vector<4x64xf32> -> vector<4x64xf32>
    %c0_89 = arith.constant 0 : index
    %c0_90 = arith.constant 0 : index
    %c0_91 = arith.constant 0 : index
    %269 = vector.load %arg15[%c0_89, %c0_90, %c0_91] : memref<1x1x64xf32, #tpu.memory_space<vmem>>, vector<1x1x64xf32>
    %270 = vector.shape_cast %269 : vector<1x1x64xf32> to vector<1x64xf32>
    %271 = vector.broadcast %270 : vector<1x64xf32> to vector<4x64xf32>
    %272 = arith.addf %268, %271 : vector<4x64xf32>
    %273 = arith.addf %243, %272 : vector<4x64xf32>
    %c0_92 = arith.constant 0 : index
    %c0_93 = arith.constant 0 : index
    %c0_94 = arith.constant 0 : index
    %274 = vector.load %arg16[%c0_92, %c0_93, %c0_94] : memref<1x1x64xf32, #tpu.memory_space<vmem>>, vector<1x1x64xf32>
    %275 = vector.shape_cast %274 : vector<1x1x64xf32> to vector<1x64xf32>
    %c0_95 = arith.constant 0 : index
    %c0_96 = arith.constant 0 : index
    %c0_97 = arith.constant 0 : index
    %276 = vector.load %arg17[%c0_95, %c0_96, %c0_97] : memref<1x1x64xf32, #tpu.memory_space<vmem>>, vector<1x1x64xf32>
    %277 = vector.shape_cast %276 : vector<1x1x64xf32> to vector<1x64xf32>
    %cst_98 = arith.constant dense<0.000000e+00> : vector<4xf32>
    %278 = vector.multi_reduction <add>, %273, %cst_98 [1] : vector<4x64xf32> to vector<4xf32>
    %279 = vector.shape_cast %278 : vector<4xf32> to vector<4x1xf32>
    %cst_99 = arith.constant 6.400000e+01 : f32
    %280 = vector.broadcast %cst_99 : f32 to vector<4x1xf32>
    %281 = arith.divf %279, %280 : vector<4x1xf32>
    %282 = vector.broadcast %281 : vector<4x1xf32> to vector<4x64xf32>
    %283 = arith.subf %273, %282 : vector<4x64xf32>
    %284 = arith.mulf %283, %283 : vector<4x64xf32>
    %cst_100 = arith.constant dense<0.000000e+00> : vector<4xf32>
    %285 = vector.multi_reduction <add>, %284, %cst_100 [1] : vector<4x64xf32> to vector<4xf32>
    %286 = vector.shape_cast %285 : vector<4xf32> to vector<4x1xf32>
    %cst_101 = arith.constant 6.400000e+01 : f32
    %287 = vector.broadcast %cst_101 : f32 to vector<4x1xf32>
    %288 = arith.divf %286, %287 : vector<4x1xf32>
    %cst_102 = arith.constant 9.99999996E-13 : f32
    %289 = vector.broadcast %cst_102 : f32 to vector<4x1xf32>
    %290 = arith.addf %288, %289 : vector<4x1xf32>
    %291 = math.rsqrt %290 : vector<4x1xf32>
    %292 = vector.broadcast %291 : vector<4x1xf32> to vector<4x64xf32>
    %293 = arith.mulf %283, %292 : vector<4x64xf32>
    %294 = vector.broadcast %275 : vector<1x64xf32> to vector<4x64xf32>
    %295 = arith.mulf %293, %294 : vector<4x64xf32>
    %296 = vector.broadcast %277 : vector<1x64xf32> to vector<4x64xf32>
    %297 = arith.addf %295, %296 : vector<4x64xf32>
    %c0_103 = arith.constant 0 : index
    %c0_104 = arith.constant 0 : index
    %298 = vector.load %arg21[%c0_103, %c0_104] : memref<4x64xf32, #tpu.memory_space<vmem>>, vector<4x64xf32>
    tpu.vector_store %arg21[%c0_103, %c0_104], %297 {strides = array<i32>} : memref<4x64xf32, #tpu.memory_space<vmem>>, vector<4x64xf32>,
    %c11_i32 = arith.constant 11 : i32
    %299 = arith.cmpi eq, %arg1, %c11_i32 : i32
    %300 = arith.extui %299 : i1 to i32
    %c0_i32_105 = arith.constant 0 : i32
    %301 = arith.cmpi ne, %300, %c0_i32_105 : i32
    scf.if %301 {
      %cst_106 = arith.constant dense<0.000000e+00> : vector<64xf32>
      %302 = vector.multi_reduction <add>, %297, %cst_106 [0] : vector<4x64xf32> to vector<64xf32>
      %303 = vector.shape_cast %302 : vector<64xf32> to vector<1x64xf32>
      %cst_107 = arith.constant 4.000000e+00 : f32
      %304 = vector.broadcast %cst_107 : f32 to vector<1x64xf32>
      %305 = arith.divf %303, %304 : vector<1x64xf32>
      %306 = arith.truncf %305 : vector<1x64xf32> to vector<1x64xbf16>
      %c0_108 = arith.constant 0 : index
      %c0_109 = arith.constant 0 : index
      %307 = vector.load %arg18[%c0_108, %c0_109] : memref<64x128xbf16, #tpu.memory_space<vmem>>, vector<64x128xbf16>
      %cst_110 = arith.constant dense<0.000000e+00> : vector<1x128xf32>
      %308 = tpu.matmul %306, %307, %cst_110 {dimension_numbers = #tpu.dot_dimension_numbers<[1], [0], [0], [1], [0, 0, 1, 1], [], []>} : vector<1x64xbf16>, vector<64x128xbf16>, vector<1x128xf32> -> vector<1x128xf32>
      %c0_111 = arith.constant 0 : index
      %c0_112 = arith.constant 0 : index
      %309 = vector.load %arg19[%c0_111, %c0_112] : memref<1x128xf32, #tpu.memory_space<vmem>>, vector<1x128xf32>
      %310 = arith.addf %308, %309 : vector<1x128xf32>
      %c0_113 = arith.constant 0 : index
      %c0_114 = arith.constant 0 : index
      %c0_115 = arith.constant 0 : index
      %311 = vector.load %arg20[%c0_113, %c0_114, %c0_115] : memref<1x1x128xf32, #tpu.memory_space<vmem>>, vector<1x1x128xf32>
      %312 = vector.shape_cast %311 : vector<1x1x128xf32> to vector<1x128xf32>
      %313 = vector.shape_cast %310 : vector<1x128xf32> to vector<1x1x128xf32>
      tpu.vector_store %arg20[%c0_113, %c0_114, %c0_115], %313 {strides = array<i32>} : memref<1x1x128xf32, #tpu.memory_space<vmem>>, vector<1x1x128xf32>,
    } else {
    }
    return
  }
  func.func @transform_0(%arg0: i32, %arg1: i32) -> (i32, i32, i32) {
    %c0_i32 = arith.constant 0 : i32
    %c0_i32_0 = arith.constant 0 : i32
    %c0_i32_1 = arith.constant 0 : i32
    return %arg0, %c0_i32, %c0_i32_0 : i32, i32, i32
  }
  func.func @transform_1(%arg0: i32, %arg1: i32) -> (i32, i32) {
    %c0_i32 = arith.constant 0 : i32
    %c0_i32_0 = arith.constant 0 : i32
    %c0_i32_1 = arith.constant 0 : i32
    return %c0_i32, %c0_i32_0 : i32, i32
  }
  func.func @transform_2(%arg0: i32, %arg1: i32) -> (i32, i32) {
    %c0_i32 = arith.constant 0 : i32
    %c0_i32_0 = arith.constant 0 : i32
    %c0_i32_1 = arith.constant 0 : i32
    return %c0_i32, %c0_i32_0 : i32, i32
  }
  func.func @transform_3(%arg0: i32, %arg1: i32) -> (i32, i32, i32) {
    %c0_i32 = arith.constant 0 : i32
    %c0_i32_0 = arith.constant 0 : i32
    %c0_i32_1 = arith.constant 0 : i32
    return %arg0, %c0_i32, %c0_i32_0 : i32, i32, i32
  }
  func.func @transform_4(%arg0: i32, %arg1: i32) -> (i32, i32, i32) {
    %c0_i32 = arith.constant 0 : i32
    %c0_i32_0 = arith.constant 0 : i32
    %c0_i32_1 = arith.constant 0 : i32
    return %arg1, %c0_i32, %c0_i32_0 : i32, i32, i32
  }
  func.func @transform_5(%arg0: i32, %arg1: i32) -> (i32, i32, i32) {
    %c0_i32 = arith.constant 0 : i32
    %c0_i32_0 = arith.constant 0 : i32
    %c0_i32_1 = arith.constant 0 : i32
    return %arg1, %c0_i32, %c0_i32_0 : i32, i32, i32
  }
  func.func @transform_6(%arg0: i32, %arg1: i32) -> (i32, i32, i32) {
    %c0_i32 = arith.constant 0 : i32
    %c0_i32_0 = arith.constant 0 : i32
    %c0_i32_1 = arith.constant 0 : i32
    return %arg1, %c0_i32, %c0_i32_0 : i32, i32, i32
  }
  func.func @transform_7(%arg0: i32, %arg1: i32) -> (i32, i32, i32) {
    %c0_i32 = arith.constant 0 : i32
    %c0_i32_0 = arith.constant 0 : i32
    %c0_i32_1 = arith.constant 0 : i32
    return %arg1, %c0_i32, %c0_i32_0 : i32, i32, i32
  }
  func.func @transform_8(%arg0: i32, %arg1: i32) -> (i32, i32, i32) {
    %c0_i32 = arith.constant 0 : i32
    %c0_i32_0 = arith.constant 0 : i32
    %c0_i32_1 = arith.constant 0 : i32
    return %arg1, %c0_i32, %c0_i32_0 : i32, i32, i32
  }
  func.func @transform_9(%arg0: i32, %arg1: i32) -> (i32, i32, i32) {
    %c0_i32 = arith.constant 0 : i32
    %c0_i32_0 = arith.constant 0 : i32
    %c0_i32_1 = arith.constant 0 : i32
    return %arg1, %c0_i32, %c0_i32_0 : i32, i32, i32
  }
  func.func @transform_10(%arg0: i32, %arg1: i32) -> (i32, i32, i32) {
    %c0_i32 = arith.constant 0 : i32
    %c0_i32_0 = arith.constant 0 : i32
    %c0_i32_1 = arith.constant 0 : i32
    return %arg1, %c0_i32, %c0_i32_0 : i32, i32, i32
  }
  func.func @transform_11(%arg0: i32, %arg1: i32) -> (i32, i32, i32) {
    %c0_i32 = arith.constant 0 : i32
    %c0_i32_0 = arith.constant 0 : i32
    %c0_i32_1 = arith.constant 0 : i32
    return %arg1, %c0_i32, %c0_i32_0 : i32, i32, i32
  }
  func.func @transform_12(%arg0: i32, %arg1: i32) -> (i32, i32, i32) {
    %c0_i32 = arith.constant 0 : i32
    %c0_i32_0 = arith.constant 0 : i32
    %c0_i32_1 = arith.constant 0 : i32
    return %arg1, %c0_i32, %c0_i32_0 : i32, i32, i32
  }
  func.func @transform_13(%arg0: i32, %arg1: i32) -> (i32, i32, i32) {
    %c0_i32 = arith.constant 0 : i32
    %c0_i32_0 = arith.constant 0 : i32
    %c0_i32_1 = arith.constant 0 : i32
    return %arg1, %c0_i32, %c0_i32_0 : i32, i32, i32
  }
  func.func @transform_14(%arg0: i32, %arg1: i32) -> (i32, i32, i32) {
    %c0_i32 = arith.constant 0 : i32
    %c0_i32_0 = arith.constant 0 : i32
    %c0_i32_1 = arith.constant 0 : i32
    return %arg1, %c0_i32, %c0_i32_0 : i32, i32, i32
  }
  func.func @transform_15(%arg0: i32, %arg1: i32) -> (i32, i32, i32) {
    %c0_i32 = arith.constant 0 : i32
    %c0_i32_0 = arith.constant 0 : i32
    %c0_i32_1 = arith.constant 0 : i32
    return %arg1, %c0_i32, %c0_i32_0 : i32, i32, i32
  }
  func.func @transform_16(%arg0: i32, %arg1: i32) -> (i32, i32) {
    %c0_i32 = arith.constant 0 : i32
    %c0_i32_0 = arith.constant 0 : i32
    %c0_i32_1 = arith.constant 0 : i32
    return %c0_i32, %c0_i32_0 : i32, i32
  }
  func.func @transform_17(%arg0: i32, %arg1: i32) -> (i32, i32) {
    %c0_i32 = arith.constant 0 : i32
    %c0_i32_0 = arith.constant 0 : i32
    %c0_i32_1 = arith.constant 0 : i32
    return %c0_i32, %c0_i32_0 : i32, i32
  }
  func.func @transform_18(%arg0: i32, %arg1: i32) -> (i32, i32, i32) {
    %c0_i32 = arith.constant 0 : i32
    %c0_i32_0 = arith.constant 0 : i32
    %c0_i32_1 = arith.constant 0 : i32
    return %arg0, %c0_i32, %c0_i32_0 : i32, i32, i32
  }
}

</mosaic_0001>

<llo_original>
// kernel: tile.51
$region0: #{tile.51}
  #allocation0 [shape = 's32[1]{0}', space=sflag, size = 0x4, scoped, tag = 'scoped memory for tile.51']
  %s0 = inlined_call_operand.vmem [shape: f32[8], index: 0, kind: input, shape index: {}]
  %s1 = inlined_call_operand.vmem [shape: f32[256,8], index: 1, kind: output, shape index: {}]
  // Predicated region
  $region2: #{tile.51} parent=0 // pred_check
    _
  $region3: #{tile.51} parent=0 // pred_check_branch
    %3 = sbr.rel (0) target = $region5
  $region4: #{tile.51} parent=0 // pred_region
    _
  $region5: #{tile.51} parent=0 // pred_fallthru
    _
  %v4 = vld [vmem:[%s0] ss:$0 sm:$0xff]
  %5 = vst [vmem:[%s1] sm:$0xff] %v4
  %s6 = scalar_lea.vmem %s1, 8
  %7 = vst [vmem:[%s6] sm:$0xff] %v4
  %s8 = scalar_lea.vmem %s1, 16
  %9 = vst [vmem:[%s8] sm:$0xff] %v4
  %s10 = scalar_lea.vmem %s1, 24
  %11 = vst [vmem:[%s10] sm:$0xff] %v4
  %s12 = scalar_lea.vmem %s1, 32
  %13 = vst [vmem:[%s12] sm:$0xff] %v4
  %s14 = scalar_lea.vmem %s1, 40
  %15 = vst [vmem:[%s14] sm:$0xff] %v4
  %s16 = scalar_lea.vmem %s1, 48
  %17 = vst [vmem:[%s16] sm:$0xff] %v4
  %s18 = scalar_lea.vmem %s1, 56
  %19 = vst [vmem:[%s18] sm:$0xff] %v4
  %s20 = scalar_lea.vmem %s1, 64
  %21 = vst [vmem:[%s20] sm:$0xff] %v4
  %s22 = scalar_lea.vmem %s1, 72
  %23 = vst [vmem:[%s22] sm:$0xff] %v4
  %s24 = scalar_lea.vmem %s1, 80
  %25 = vst [vmem:[%s24] sm:$0xff] %v4
  %s26 = scalar_lea.vmem %s1, 88
  %27 = vst [vmem:[%s26] sm:$0xff] %v4
  %s28 = scalar_lea.vmem %s1, 96
  %29 = vst [vmem:[%s28] sm:$0xff] %v4
  %s30 = scalar_lea.vmem %s1, 104
  %31 = vst [vmem:[%s30] sm:$0xff] %v4
  %s32 = scalar_lea.vmem %s1, 112
  %33 = vst [vmem:[%s32] sm:$0xff] %v4
  %s34 = scalar_lea.vmem %s1, 120
  %35 = vst [vmem:[%s34] sm:$0xff] %v4
  %s36 = scalar_lea.vmem %s1, 128
  %37 = vst [vmem:[%s36] sm:$0xff] %v4
  %s38 = scalar_lea.vmem %s1, 136
  %39 = vst [vmem:[%s38] sm:$0xff] %v4
  %s40 = scalar_lea.vmem %s1, 144
  %41 = vst [vmem:[%s40] sm:$0xff] %v4
  %s42 = scalar_lea.vmem %s1, 152
  %43 = vst [vmem:[%s42] sm:$0xff] %v4
  %s44 = scalar_lea.vmem %s1, 160
  %45 = vst [vmem:[%s44] sm:$0xff] %v4
  %s46 = scalar_lea.vmem %s1, 168
  %47 = vst [vmem:[%s46] sm:$0xff] %v4
  %s48 = scalar_lea.vmem %s1, 176
  %49 = vst [vmem:[%s48] sm:$0xff] %v4
  %s50 = scalar_lea.vmem %s1, 184
  %51 = vst [vmem:[%s50] sm:$0xff] %v4
  %s52 = scalar_lea.vmem %s1, 192
  %53 = vst [vmem:[%s52] sm:$0xff] %v4
  %s54 = scalar_lea.vmem %s1, 200
  %55 = vst [vmem:[%s54] sm:$0xff] %v4
  %s56 = scalar_lea.vmem %s1, 208
  %57 = vst [vmem:[%s56] sm:$0xff] %v4
  %s58 = scalar_lea.vmem %s1, 216
  %59 = vst [vmem:[%s58] sm:$0xff] %v4
  %s60 = scalar_lea.vmem %s1, 224
  %61 = vst [vmem:[%s60] sm:$0xff] %v4
  %s62 = scalar_lea.vmem %s1, 232
  %63 = vst [vmem:[%s62] sm:$0xff] %v4
  %s64 = scalar_lea.vmem %s1, 240
  %65 = vst [vmem:[%s64] sm:$0xff] %v4
  %s66 = scalar_lea.vmem %s1, 248
  %67 = vst [vmem:[%s66] sm:$0xff] %v4

// kernel: tile.52
$region0: #{tile.52}
  %s0 = inlined_call_operand.vmem [shape: f32[256,8], index: 0, kind: input, shape index: {}]
  %s1 = inlined_call_operand.vmem [shape: f32[1,2048], index: 1, kind: output, shape index: {}]
  $region1: #{tile.52} parent=0
    #allocation0 [shape = 'u8[65536]{0}', space=vmem, size = 0x10000, scoped, tag = 'scoped mem for output reshape']
    %s2 = smov 3
    %v3 = vld [vmem:[%s0] ss:$16 sm:%s2]
    %s4 = smov 12
    %v5 = vld [vmem:[%s0] ss:$16 sm:%s4]
    %vm6 = vcmask 1043458
    %v7 = vsel %vm6, %v5, %v3
    %s8 = smov 48
    %v9 = vld [vmem:[%s0] ss:$16 sm:%s8]
    %vm10 = vcmask 1045508
    %v11 = vsel %vm10, %v9, %v7
    %s12 = smov 192
    %v13 = vld [vmem:[%s0] ss:$16 sm:%s12]
    %vm14 = vcmask 1047558
    %v15 = vsel %vm14, %v13, %v11
    %vm16 = vcmask 64512
    %17 = vst.msk [vmem:[#allocation0] ss:$8 sm:$0xf] %vm16, %v15
    %18 = vst.msk [vmem:[#allocation0] ss:$8 sm:$0xf0] %vm16, %v15
    %s19 = scalar_lea.vmem %s0, 128
    %s20 = smov 3
    %v21 = vld [vmem:[%s19] ss:$16 sm:%s20]
    %s22 = scalar_lea.vmem %s0, 128
    %s23 = smov 12
    %v24 = vld [vmem:[%s22] ss:$16 sm:%s23]
    %vm25 = vcmask 1043458
    %v26 = vsel %vm25, %v24, %v21
    %s27 = scalar_lea.vmem %s0, 128
    %s28 = smov 48
    %v29 = vld [vmem:[%s27] ss:$16 sm:%s28]
    %vm30 = vcmask 1045508
    %v31 = vsel %vm30, %v29, %v26
    %s32 = scalar_lea.vmem %s0, 128
    %s33 = smov 192
    %v34 = vld [vmem:[%s32] ss:$16 sm:%s33]
    %vm35 = vcmask 1047558
    %v36 = vsel %vm35, %v34, %v31
    %vm37 = vcmask 64512
    %s38 = scalar_lea.vmem [#allocation0], 64
    %39 = vst.msk [vmem:[%s38] ss:$8 sm:$0xf] %vm37, %v36
    %s40 = scalar_lea.vmem [#allocation0], 64
    %41 = vst.msk [vmem:[%s40] ss:$8 sm:$0xf0] %vm37, %v36
    %s42 = scalar_lea.vmem %s0, 15
    %s43 = smov 3
    %v44 = vld [vmem:[%s42] ss:$16 sm:%s43]
    %s45 = scalar_lea.vmem %s0, 15
    %s46 = smov 12
    %v47 = vld [vmem:[%s45] ss:$16 sm:%s46]
    %vm48 = vcmask 1043458
    %v49 = vsel %vm48, %v47, %v44
    %s50 = scalar_lea.vmem %s0, 15
    %s51 = smov 48
    %v52 = vld [vmem:[%s50] ss:$16 sm:%s51]
    %vm53 = vcmask 1045508
    %v54 = vsel %vm53, %v52, %v49
    %s55 = scalar_lea.vmem %s0, 15
    %s56 = smov 192
    %v57 = vld [vmem:[%s55] ss:$16 sm:%s56]
    %vm58 = vcmask 1047558
    %v59 = vsel %vm58, %v57, %v54
    %60 = vrot.lane.b32.xlu0 %v59, 120
    %v61 = vpop.permute.xlu0 %60
    %vm62 = vcmask 1048512
    %63 = vst.msk [vmem:[#allocation0] ss:$8 sm:$0xf] %vm62, %v61
    %64 = vst.msk [vmem:[#allocation0] ss:$8 sm:$0xf0] %vm62, %v61
    %s65 = scalar_lea.vmem %s0, 143
    %s66 = smov 3
    %v67 = vld [vmem:[%s65] ss:$16 sm:%s66]
    %s68 = scalar_lea.vmem %s0, 143
    %s69 = smov 12
    %v70 = vld [vmem:[%s68] ss:$16 sm:%s69]
    %vm71 = vcmask 1043458
    %v72 = vsel %vm71, %v70, %v67
    %s73 = scalar_lea.vmem %s0, 143
    %s74 = smov 48
    %v75 = vld [vmem:[%s73] ss:$16 sm:%s74]
    %vm76 = vcmask 1045508
    %v77 = vsel %vm76, %v75, %v72
    %s78 = scalar_lea.vmem %s0, 143
    %s79 = smov 192
    %v80 = vld [vmem:[%s78] ss:$16 sm:%s79]
    %vm81 = vcmask 1047558
    %v82 = vsel %vm81, %v80, %v77
    %83 = vrot.lane.b32.xlu0 %v82, 120
    %v84 = vpop.permute.xlu0 %83
    %vm85 = vcmask 1048512
    %s86 = scalar_lea.vmem [#allocation0], 64
    %87 = vst.msk [vmem:[%s86] ss:$8 sm:$0xf] %vm85, %v84
    %s88 = scalar_lea.vmem [#allocation0], 64
    %89 = vst.msk [vmem:[%s88] ss:$8 sm:$0xf0] %vm85, %v84
    %s90 = scalar_lea.vmem %s0, 14
    %s91 = smov 3
    %v92 = vld [vmem:[%s90] ss:$16 sm:%s91]
    %s93 = scalar_lea.vmem %s0, 14
    %s94 = smov 12
    %v95 = vld [vmem:[%s93] ss:$16 sm:%s94]
    %vm96 = vcmask 1043458
    %v97 = vsel %vm96, %v95, %v92
    %s98 = scalar_lea.vmem %s0, 14
    %s99 = smov 48
    %v100 = vld [vmem:[%s98] ss:$16 sm:%s99]
    %vm101 = vcmask 1045508
    %v102 = vsel %vm101, %v100, %v97
    %s103 = scalar_lea.vmem %s0, 14
    %s104 = smov 192
    %v105 = vld [vmem:[%s103] ss:$16 sm:%s104]
    %vm106 = vcmask 1047558
    %v107 = vsel %vm106, %v105, %v102
    %108 = vrot.lane.b32.xlu0 %v107, 112
    %v109 = vpop.permute.xlu0 %108
    %vm110 = vcmask 982912
    %111 = vst.msk [vmem:[#allocation0] ss:$8 sm:$0xf] %vm110, %v109
    %112 = vst.msk [vmem:[#allocation0] ss:$8 sm:$0xf0] %vm110, %v109
    %s113 = scalar_lea.vmem %s0, 142
    %s114 = smov 3
    %v115 = vld [vmem:[%s113] ss:$16 sm:%s114]
    %s116 = scalar_lea.vmem %s0, 142
    %s117 = smov 12
    %v118 = vld [vmem:[%s116] ss:$16 sm:%s117]
    %vm119 = vcmask 1043458
    %v120 = vsel %vm119, %v118, %v115
    %s121 = scalar_lea.vmem %s0, 142
    %s122 = smov 48
    %v123 = vld [vmem:[%s121] ss:$16 sm:%s122]
    %vm124 = vcmask 1045508
    %v125 = vsel %vm124, %v123, %v120
    %s126 = scalar_lea.vmem %s0, 142
    %s127 = smov 192
    %v128 = vld [vmem:[%s126] ss:$16 sm:%s127]
    %vm129 = vcmask 1047558
    %v130 = vsel %vm129, %v128, %v125
    %131 = vrot.lane.b32.xlu0 %v130, 112
    %v132 = vpop.permute.xlu0 %131
    %vm133 = vcmask 982912
    %s134 = scalar_lea.vmem [#allocation0], 64
    %135 = vst.msk [vmem:[%s134] ss:$8 sm:$0xf] %vm133, %v132
    %s136 = scalar_lea.vmem [#allocation0], 64
    %137 = vst.msk [vmem:[%s136] ss:$8 sm:$0xf0] %vm133, %v132
    %s138 = scalar_lea.vmem %s0, 13
    %s139 = smov 3
    %v140 = vld [vmem:[%s138] ss:$16 sm:%s139]
    %s141 = scalar_lea.vmem %s0, 13
    %s142 = smov 12
    %v143 = vld [vmem:[%s141] ss:$16 sm:%s142]
    %vm144 = vcmask 1043458
    %v145 = vsel %vm144, %v143, %v140
    %s146 = scalar_lea.vmem %s0, 13
    %s147 = smov 48
    %v148 = vld [vmem:[%s146] ss:$16 sm:%s147]
    %vm149 = vcmask 1045508
    %v150 = vsel %vm149, %v148, %v145
    %s151 = scalar_lea.vmem %s0, 13
    %s152 = smov 192
    %v153 = vld [vmem:[%s151] ss:$16 sm:%s152]
    %vm154 = vcmask 1047558
    %v155 = vsel %vm154, %v153, %v150
    %156 = vrot.lane.b32.xlu0 %v155, 104
    %v157 = vpop.permute.xlu0 %156
    %vm158 = vcmask 917312
    %159 = vst.msk [vmem:[#allocation0] ss:$8 sm:$0xf] %vm158, %v157
    %160 = vst.msk [vmem:[#allocation0] ss:$8 sm:$0xf0] %vm158, %v157
    %s161 = scalar_lea.vmem %s0, 141
    %s162 = smov 3
    %v163 = vld [vmem:[%s161] ss:$16 sm:%s162]
    %s164 = scalar_lea.vmem %s0, 141
    %s165 = smov 12
    %v166 = vld [vmem:[%s164] ss:$16 sm:%s165]
    %vm167 = vcmask 1043458
    %v168 = vsel %vm167, %v166, %v163
    %s169 = scalar_lea.vmem %s0, 141
    %s170 = smov 48
    %v171 = vld [vmem:[%s169] ss:$16 sm:%s170]
    %vm172 = vcmask 1045508
    %v173 = vsel %vm172, %v171, %v168
    %s174 = scalar_lea.vmem %s0, 141
    %s175 = smov 192
    %v176 = vld [vmem:[%s174] ss:$16 sm:%s175]
    %vm177 = vcmask 1047558
    %v178 = vsel %vm177, %v176, %v173
    %179 = vrot.lane.b32.xlu0 %v178, 104
    %v180 = vpop.permute.xlu0 %179
    %vm181 = vcmask 917312
    %s182 = scalar_lea.vmem [#allocation0], 64
    %183 = vst.msk [vmem:[%s182] ss:$8 sm:$0xf] %vm181, %v180
    %s184 = scalar_lea.vmem [#allocation0], 64
    %185 = vst.msk [vmem:[%s184] ss:$8 sm:$0xf0] %vm181, %v180
    %s186 = scalar_lea.vmem %s0, 12
    %s187 = smov 3
    %v188 = vld [vmem:[%s186] ss:$16 sm:%s187]
    %s189 = scalar_lea.vmem %s0, 12
    %s190 = smov 12
    %v191 = vld [vmem:[%s189] ss:$16 sm:%s190]
    %vm192 = vcmask 1043458
    %v193 = vsel %vm192, %v191, %v188
    %s194 = scalar_lea.vmem %s0, 12
    %s195 = smov 48
    %v196 = vld [vmem:[%s194] ss:$16 sm:%s195]
    %vm197 = vcmask 1045508
    %v198 = vsel %vm197, %v196, %v193
    %s199 = scalar_lea.vmem %s0, 12
    %s200 = smov 192
    %v201 = vld [vmem:[%s199] ss:$16 sm:%s200]
    %vm202 = vcmask 1047558
    %v203 = vsel %vm202, %v201, %v198
    %204 = vrot.lane.b32.xlu0 %v203, 96
    %v205 = vpop.permute.xlu0 %204
    %vm206 = vcmask 851712
    %207 = vst.msk [vmem:[#allocation0] ss:$8 sm:$0xf] %vm206, %v205
    %208 = vst.msk [vmem:[#allocation0] ss:$8 sm:$0xf0] %vm206, %v205
    %s209 = scalar_lea.vmem %s0, 140
    %s210 = smov 3
    %v211 = vld [vmem:[%s209] ss:$16 sm:%s210]
    %s212 = scalar_lea.vmem %s0, 140
    %s213 = smov 12
    %v214 = vld [vmem:[%s212] ss:$16 sm:%s213]
    %vm215 = vcmask 1043458
    %v216 = vsel %vm215, %v214, %v211
    %s217 = scalar_lea.vmem %s0, 140
    %s218 = smov 48
    %v219 = vld [vmem:[%s217] ss:$16 sm:%s218]
    %vm220 = vcmask 1045508
    %v221 = vsel %vm220, %v219, %v216
    %s222 = scalar_lea.vmem %s0, 140
    %s223 = smov 192
    %v224 = vld [vmem:[%s222] ss:$16 sm:%s223]
    %vm225 = vcmask 1047558
    %v226 = vsel %vm225, %v224, %v221
    %227 = vrot.lane.b32.xlu0 %v226, 96
    %v228 = vpop.permute.xlu0 %227
    %vm229 = vcmask 851712
    %s230 = scalar_lea.vmem [#allocation0], 64
    %231 = vst.msk [vmem:[%s230] ss:$8 sm:$0xf] %vm229, %v228
    %s232 = scalar_lea.vmem [#allocation0], 64
    %233 = vst.msk [vmem:[%s232] ss:$8 sm:$0xf0] %vm229, %v228
    %s234 = scalar_lea.vmem %s0, 11
    %s235 = smov 3
    %v236 = vld [vmem:[%s234] ss:$16 sm:%s235]
    %s237 = scalar_lea.vmem %s0, 11
    %s238 = smov 12
    %v239 = vld [vmem:[%s237] ss:$16 sm:%s238]
    %vm240 = vcmask 1043458
    %v241 = vsel %vm240, %v239, %v236
    %s242 = scalar_lea.vmem %s0, 11
    %s243 = smov 48
    %v244 = vld [vmem:[%s242] ss:$16 sm:%s243]
    %vm245 = vcmask 1045508
    %v246 = vsel %vm245, %v244, %v241
    %s247 = scalar_lea.vmem %s0, 11
    %s248 = smov 192
    %v249 = vld [vmem:[%s247] ss:$16 sm:%s248]
    %vm250 = vcmask 1047558
    %v251 = vsel %vm250, %v249, %v246
    %252 = vrot.lane.b32.xlu0 %v251, 88
    %v253 = vpop.permute.xlu0 %252
    %vm254 = vcmask 786112
    %255 = vst.msk [vmem:[#allocation0] ss:$8 sm:$0xf] %vm254, %v253
    %256 = vst.msk [vmem:[#allocation0] ss:$8 sm:$0xf0] %vm254, %v253
    %s257 = scalar_lea.vmem %s0, 139
    %s258 = smov 3
    %v259 = vld [vmem:[%s257] ss:$16 sm:%s258]
    %s260 = scalar_lea.vmem %s0, 139
    %s261 = smov 12
    %v262 = vld [vmem:[%s260] ss:$16 sm:%s261]
    %vm263 = vcmask 1043458
    %v264 = vsel %vm263, %v262, %v259
    %s265 = scalar_lea.vmem %s0, 139
    %s266 = smov 48
    %v267 = vld [vmem:[%s265] ss:$16 sm:%s266]
    %vm268 = vcmask 1045508
    %v269 = vsel %vm268, %v267, %v264
    %s270 = scalar_lea.vmem %s0, 139
    %s271 = smov 192
    %v272 = vld [vmem:[%s270] ss:$16 sm:%s271]
    %vm273 = vcmask 1047558
    %v274 = vsel %vm273, %v272, %v269
    %275 = vrot.lane.b32.xlu0 %v274, 88
    %v276 = vpop.permute.xlu0 %275
    %vm277 = vcmask 786112
    %s278 = scalar_lea.vmem [#allocation0], 64
    %279 = vst.msk [vmem:[%s278] ss:$8 sm:$0xf] %vm277, %v276
    %s280 = scalar_lea.vmem [#allocation0], 64
    %281 = vst.msk [vmem:[%s280] ss:$8 sm:$0xf0] %vm277, %v276
    %s282 = scalar_lea.vmem %s0, 10
    %s283 = smov 3
    %v284 = vld [vmem:[%s282] ss:$16 sm:%s283]
    %s285 = scalar_lea.vmem %s0, 10
    %s286 = smov 12
    %v287 = vld [vmem:[%s285] ss:$16 sm:%s286]
    %vm288 = vcmask 1043458
    %v289 = vsel %vm288, %v287, %v284
    %s290 = scalar_lea.vmem %s0, 10
    %s291 = smov 48
    %v292 = vld [vmem:[%s290] ss:$16 sm:%s291]
    %vm293 = vcmask 1045508
    %v294 = vsel %vm293, %v292, %v289
    %s295 = scalar_lea.vmem %s0, 10
    %s296 = smov 192
    %v297 = vld [vmem:[%s295] ss:$16 sm:%s296]
    %vm298 = vcmask 1047558
    %v299 = vsel %vm298, %v297, %v294
    %300 = vrot.lane.b32.xlu0 %v299, 80
    %v301 = vpop.permute.xlu0 %300
    %vm302 = vcmask 720512
    %303 = vst.msk [vmem:[#allocation0] ss:$8 sm:$0xf] %vm302, %v301
    %304 = vst.msk [vmem:[#allocation0] ss:$8 sm:$0xf0] %vm302, %v301
    %s305 = scalar_lea.vmem %s0, 138
    %s306 = smov 3
    %v307 = vld [vmem:[%s305] ss:$16 sm:%s306]
    %s308 = scalar_lea.vmem %s0, 138
    %s309 = smov 12
    %v310 = vld [vmem:[%s308] ss:$16 sm:%s309]
    %vm311 = vcmask 1043458
    %v312 = vsel %vm311, %v310, %v307
    %s313 = scalar_lea.vmem %s0, 138
    %s314 = smov 48
    %v315 = vld [vmem:[%s313] ss:$16 sm:%s314]
    %vm316 = vcmask 1045508
    %v317 = vsel %vm316, %v315, %v312
    %s318 = scalar_lea.vmem %s0, 138
    %s319 = smov 192
    %v320 = vld [vmem:[%s318] ss:$16 sm:%s319]
    %vm321 = vcmask 1047558
    %v322 = vsel %vm321, %v320, %v317
    %323 = vrot.lane.b32.xlu0 %v322, 80
    %v324 = vpop.permute.xlu0 %323
    %vm325 = vcmask 720512
    %s326 = scalar_lea.vmem [#allocation0], 64
    %327 = vst.msk [vmem:[%s326] ss:$8 sm:$0xf] %vm325, %v324
    %s328 = scalar_lea.vmem [#allocation0], 64
    %329 = vst.msk [vmem:[%s328] ss:$8 sm:$0xf0] %vm325, %v324
    %s330 = scalar_lea.vmem %s0, 9
    %s331 = smov 3
    %v332 = vld [vmem:[%s330] ss:$16 sm:%s331]
    %s333 = scalar_lea.vmem %s0, 9
    %s334 = smov 12
    %v335 = vld [vmem:[%s333] ss:$16 sm:%s334]
    %vm336 = vcmask 1043458
    %v337 = vsel %vm336, %v335, %v332
    %s338 = scalar_lea.vmem %s0, 9
    %s339 = smov 48
    %v340 = vld [vmem:[%s338] ss:$16 sm:%s339]
    %vm341 = vcmask 1045508
    %v342 = vsel %vm341, %v340, %v337
    %s343 = scalar_lea.vmem %s0, 9
    %s344 = smov 192
    %v345 = vld [vmem:[%s343] ss:$16 sm:%s344]
    %vm346 = vcmask 1047558
    %v347 = vsel %vm346, %v345, %v342
    %348 = vrot.lane.b32.xlu0 %v347, 72
    %v349 = vpop.permute.xlu0 %348
    %vm350 = vcmask 654912
    %351 = vst.msk [vmem:[#allocation0] ss:$8 sm:$0xf] %vm350, %v349
    %352 = vst.msk [vmem:[#allocation0] ss:$8 sm:$0xf0] %vm350, %v349
    %s353 = scalar_lea.vmem %s0, 137
    %s354 = smov 3
    %v355 = vld [vmem:[%s353] ss:$16 sm:%s354]
    %s356 = scalar_lea.vmem %s0, 137
    %s357 = smov 12
    %v358 = vld [vmem:[%s356] ss:$16 sm:%s357]
    %vm359 = vcmask 1043458
    %v360 = vsel %vm359, %v358, %v355
    %s361 = scalar_lea.vmem %s0, 137
    %s362 = smov 48
    %v363 = vld [vmem:[%s361] ss:$16 sm:%s362]
    %vm364 = vcmask 1045508
    %v365 = vsel %vm364, %v363, %v360
    %s366 = scalar_lea.vmem %s0, 137
    %s367 = smov 192
    %v368 = vld [vmem:[%s366] ss:$16 sm:%s367]
    %vm369 = vcmask 1047558
    %v370 = vsel %vm369, %v368, %v365
    %371 = vrot.lane.b32.xlu0 %v370, 72
    %v372 = vpop.permute.xlu0 %371
    %vm373 = vcmask 654912
    %s374 = scalar_lea.vmem [#allocation0], 64
    %375 = vst.msk [vmem:[%s374] ss:$8 sm:$0xf] %vm373, %v372
    %s376 = scalar_lea.vmem [#allocation0], 64
    %377 = vst.msk [vmem:[%s376] ss:$8 sm:$0xf0] %vm373, %v372
    %s378 = scalar_lea.vmem %s0, 8
    %s379 = smov 3
    %v380 = vld [vmem:[%s378] ss:$16 sm:%s379]
    %s381 = scalar_lea.vmem %s0, 8
    %s382 = smov 12
    %v383 = vld [vmem:[%s381] ss:$16 sm:%s382]
    %vm384 = vcmask 1043458
    %v385 = vsel %vm384, %v383, %v380
    %s386 = scalar_lea.vmem %s0, 8
    %s387 = smov 48
    %v388 = vld [vmem:[%s386] ss:$16 sm:%s387]
    %vm389 = vcmask 1045508
    %v390 = vsel %vm389, %v388, %v385
    %s391 = scalar_lea.vmem %s0, 8
    %s392 = smov 192
    %v393 = vld [vmem:[%s391] ss:$16 sm:%s392]
    %vm394 = vcmask 1047558
    %v395 = vsel %vm394, %v393, %v390
    %396 = vrot.lane.b32.xlu0 %v395, 64
    %v397 = vpop.permute.xlu0 %396
    %vm398 = vcmask 589312
    %399 = vst.msk [vmem:[#allocation0] ss:$8 sm:$0xf] %vm398, %v397
    %400 = vst.msk [vmem:[#allocation0] ss:$8 sm:$0xf0] %vm398, %v397
    %s401 = scalar_lea.vmem %s0, 136
    %s402 = smov 3
    %v403 = vld [vmem:[%s401] ss:$16 sm:%s402]
    %s404 = scalar_lea.vmem %s0, 136
    %s405 = smov 12
    %v406 = vld [vmem:[%s404] ss:$16 sm:%s405]
    %vm407 = vcmask 1043458
    %v408 = vsel %vm407, %v406, %v403
    %s409 = scalar_lea.vmem %s0, 136
    %s410 = smov 48
    %v411 = vld [vmem:[%s409] ss:$16 sm:%s410]
    %vm412 = vcmask 1045508
    %v413 = vsel %vm412, %v411, %v408
    %s414 = scalar_lea.vmem %s0, 136
    %s415 = smov 192
    %v416 = vld [vmem:[%s414] ss:$16 sm:%s415]
    %vm417 = vcmask 1047558
    %v418 = vsel %vm417, %v416, %v413
    %419 = vrot.lane.b32.xlu0 %v418, 64
    %v420 = vpop.permute.xlu0 %419
    %vm421 = vcmask 589312
    %s422 = scalar_lea.vmem [#allocation0], 64
    %423 = vst.msk [vmem:[%s422] ss:$8 sm:$0xf] %vm421, %v420
    %s424 = scalar_lea.vmem [#allocation0], 64
    %425 = vst.msk [vmem:[%s424] ss:$8 sm:$0xf0] %vm421, %v420
    %s426 = scalar_lea.vmem %s0, 7
    %s427 = smov 3
    %v428 = vld [vmem:[%s426] ss:$16 sm:%s427]
    %s429 = scalar_lea.vmem %s0, 7
    %s430 = smov 12
    %v431 = vld [vmem:[%s429] ss:$16 sm:%s430]
    %vm432 = vcmask 1043458
    %v433 = vsel %vm432, %v431, %v428
    %s434 = scalar_lea.vmem %s0, 7
    %s435 = smov 48
    %v436 = vld [vmem:[%s434] ss:$16 sm:%s435]
    %vm437 = vcmask 1045508
    %v438 = vsel %vm437, %v436, %v433
    %s439 = scalar_lea.vmem %s0, 7
    %s440 = smov 192
    %v441 = vld [vmem:[%s439] ss:$16 sm:%s440]
    %vm442 = vcmask 1047558
    %v443 = vsel %vm442, %v441, %v438
    %444 = vrot.lane.b32.xlu0 %v443, 56
    %v445 = vpop.permute.xlu0 %444
    %vm446 = vcmask 523712
    %447 = vst.msk [vmem:[#allocation0] ss:$8 sm:$0xf] %vm446, %v445
    %448 = vst.msk [vmem:[#allocation0] ss:$8 sm:$0xf0] %vm446, %v445
    %s449 = scalar_lea.vmem %s0, 135
    %s450 = smov 3
    %v451 = vld [vmem:[%s449] ss:$16 sm:%s450]
    %s452 = scalar_lea.vmem %s0, 135
    %s453 = smov 12
    %v454 = vld [vmem:[%s452] ss:$16 sm:%s453]
    %vm455 = vcmask 1043458
    %v456 = vsel %vm455, %v454, %v451
    %s457 = scalar_lea.vmem %s0, 135
    %s458 = smov 48
    %v459 = vld [vmem:[%s457] ss:$16 sm:%s458]
    %vm460 = vcmask 1045508
    %v461 = vsel %vm460, %v459, %v456
    %s462 = scalar_lea.vmem %s0, 135
    %s463 = smov 192
    %v464 = vld [vmem:[%s462] ss:$16 sm:%s463]
    %vm465 = vcmask 1047558
    %v466 = vsel %vm465, %v464, %v461
    %467 = vrot.lane.b32.xlu0 %v466, 56
    %v468 = vpop.permute.xlu0 %467
    %vm469 = vcmask 523712
    %s470 = scalar_lea.vmem [#allocation0], 64
    %471 = vst.msk [vmem:[%s470] ss:$8 sm:$0xf] %vm469, %v468
    %s472 = scalar_lea.vmem [#allocation0], 64
    %473 = vst.msk [vmem:[%s472] ss:$8 sm:$0xf0] %vm469, %v468
    %s474 = scalar_lea.vmem %s0, 6
    %s475 = smov 3
    %v476 = vld [vmem:[%s474] ss:$16 sm:%s475]
    %s477 = scalar_lea.vmem %s0, 6
    %s478 = smov 12
    %v479 = vld [vmem:[%s477] ss:$16 sm:%s478]
    %vm480 = vcmask 1043458
    %v481 = vsel %vm480, %v479, %v476
    %s482 = scalar_lea.vmem %s0, 6
    %s483 = smov 48
    %v484 = vld [vmem:[%s482] ss:$16 sm:%s483]
    %vm485 = vcmask 1045508
    %v486 = vsel %vm485, %v484, %v481
    %s487 = scalar_lea.vmem %s0, 6
    %s488 = smov 192
    %v489 = vld [vmem:[%s487] ss:$16 sm:%s488]
    %vm490 = vcmask 1047558
    %v491 = vsel %vm490, %v489, %v486
    %492 = vrot.lane.b32.xlu0 %v491, 48
    %v493 = vpop.permute.xlu0 %492
    %vm494 = vcmask 458112
    %495 = vst.msk [vmem:[#allocation0] ss:$8 sm:$0xf] %vm494, %v493
    %496 = vst.msk [vmem:[#allocation0] ss:$8 sm:$0xf0] %vm494, %v493
    %s497 = scalar_lea.vmem %s0, 134
    %s498 = smov 3
    %v499 = vld [vmem:[%s497] ss:$16 sm:%s498]
    %s500 = scalar_lea.vmem %s0, 134
    %s501 = smov 12
    %v502 = vld [vmem:[%s500] ss:$16 sm:%s501]
    %vm503 = vcmask 1043458
    %v504 = vsel %vm503, %v502, %v499
    %s505 = scalar_lea.vmem %s0, 134
    %s506 = smov 48
    %v507 = vld [vmem:[%s505] ss:$16 sm:%s506]
    %vm508 = vcmask 1045508
    %v509 = vsel %vm508, %v507, %v504
    %s510 = scalar_lea.vmem %s0, 134
    %s511 = smov 192
    %v512 = vld [vmem:[%s510] ss:$16 sm:%s511]
    %vm513 = vcmask 1047558
    %v514 = vsel %vm513, %v512, %v509
    %515 = vrot.lane.b32.xlu0 %v514, 48
    %v516 = vpop.permute.xlu0 %515
    %vm517 = vcmask 458112
    %s518 = scalar_lea.vmem [#allocation0], 64
    %519 = vst.msk [vmem:[%s518] ss:$8 sm:$0xf] %vm517, %v516
    %s520 = scalar_lea.vmem [#allocation0], 64
    %521 = vst.msk [vmem:[%s520] ss:$8 sm:$0xf0] %vm517, %v516
    %s522 = scalar_lea.vmem %s0, 5
    %s523 = smov 3
    %v524 = vld [vmem:[%s522] ss:$16 sm:%s523]
    %s525 = scalar_lea.vmem %s0, 5
    %s526 = smov 12
    %v527 = vld [vmem:[%s525] ss:$16 sm:%s526]
    %vm528 = vcmask 1043458
    %v529 = vsel %vm528, %v527, %v524
    %s530 = scalar_lea.vmem %s0, 5
    %s531 = smov 48
    %v532 = vld [vmem:[%s530] ss:$16 sm:%s531]
    %vm533 = vcmask 1045508
    %v534 = vsel %vm533, %v532, %v529
    %s535 = scalar_lea.vmem %s0, 5
    %s536 = smov 192
    %v537 = vld [vmem:[%s535] ss:$16 sm:%s536]
    %vm538 = vcmask 1047558
    %v539 = vsel %vm538, %v537, %v534
    %540 = vrot.lane.b32.xlu0 %v539, 40
    %v541 = vpop.permute.xlu0 %540
    %vm542 = vcmask 392512
    %543 = vst.msk [vmem:[#allocation0] ss:$8 sm:$0xf] %vm542, %v541
    %544 = vst.msk [vmem:[#allocation0] ss:$8 sm:$0xf0] %vm542, %v541
    %s545 = scalar_lea.vmem %s0, 133
    %s546 = smov 3
    %v547 = vld [vmem:[%s545] ss:$16 sm:%s546]
    %s548 = scalar_lea.vmem %s0, 133
    %s549 = smov 12
    %v550 = vld [vmem:[%s548] ss:$16 sm:%s549]
    %vm551 = vcmask 1043458
    %v552 = vsel %vm551, %v550, %v547
    %s553 = scalar_lea.vmem %s0, 133
    %s554 = smov 48
    %v555 = vld [vmem:[%s553] ss:$16 sm:%s554]
    %vm556 = vcmask 1045508
    %v557 = vsel %vm556, %v555, %v552
    %s558 = scalar_lea.vmem %s0, 133
    %s559 = smov 192
    %v560 = vld [vmem:[%s558] ss:$16 sm:%s559]
    %vm561 = vcmask 1047558
    %v562 = vsel %vm561, %v560, %v557
    %563 = vrot.lane.b32.xlu0 %v562, 40
    %v564 = vpop.permute.xlu0 %563
    %vm565 = vcmask 392512
    %s566 = scalar_lea.vmem [#allocation0], 64
    %567 = vst.msk [vmem:[%s566] ss:$8 sm:$0xf] %vm565, %v564
    %s568 = scalar_lea.vmem [#allocation0], 64
    %569 = vst.msk [vmem:[%s568] ss:$8 sm:$0xf0] %vm565, %v564
    %s570 = scalar_lea.vmem %s0, 4
    %s571 = smov 3
    %v572 = vld [vmem:[%s570] ss:$16 sm:%s571]
    %s573 = scalar_lea.vmem %s0, 4
    %s574 = smov 12
    %v575 = vld [vmem:[%s573] ss:$16 sm:%s574]
    %vm576 = vcmask 1043458
    %v577 = vsel %vm576, %v575, %v572
    %s578 = scalar_lea.vmem %s0, 4
    %s579 = smov 48
    %v580 = vld [vmem:[%s578] ss:$16 sm:%s579]
    %vm581 = vcmask 1045508
    %v582 = vsel %vm581, %v580, %v577
    %s583 = scalar_lea.vmem %s0, 4
    %s584 = smov 192
    %v585 = vld [vmem:[%s583] ss:$16 sm:%s584]
    %vm586 = vcmask 1047558
    %v587 = vsel %vm586, %v585, %v582
    %588 = vrot.lane.b32.xlu0 %v587, 32
    %v589 = vpop.permute.xlu0 %588
    %vm590 = vcmask 326912
    %591 = vst.msk [vmem:[#allocation0] ss:$8 sm:$0xf] %vm590, %v589
    %592 = vst.msk [vmem:[#allocation0] ss:$8 sm:$0xf0] %vm590, %v589
    %s593 = scalar_lea.vmem %s0, 132
    %s594 = smov 3
    %v595 = vld [vmem:[%s593] ss:$16 sm:%s594]
    %s596 = scalar_lea.vmem %s0, 132
    %s597 = smov 12
    %v598 = vld [vmem:[%s596] ss:$16 sm:%s597]
    %vm599 = vcmask 1043458
    %v600 = vsel %vm599, %v598, %v595
    %s601 = scalar_lea.vmem %s0, 132
    %s602 = smov 48
    %v603 = vld [vmem:[%s601] ss:$16 sm:%s602]
    %vm604 = vcmask 1045508
    %v605 = vsel %vm604, %v603, %v600
    %s606 = scalar_lea.vmem %s0, 132
    %s607 = smov 192
    %v608 = vld [vmem:[%s606] ss:$16 sm:%s607]
    %vm609 = vcmask 1047558
    %v610 = vsel %vm609, %v608, %v605
    %611 = vrot.lane.b32.xlu0 %v610, 32
    %v612 = vpop.permute.xlu0 %611
    %vm613 = vcmask 326912
    %s614 = scalar_lea.vmem [#allocation0], 64
    %615 = vst.msk [vmem:[%s614] ss:$8 sm:$0xf] %vm613, %v612
    %s616 = scalar_lea.vmem [#allocation0], 64
    %617 = vst.msk [vmem:[%s616] ss:$8 sm:$0xf0] %vm613, %v612
    %s618 = scalar_lea.vmem %s0, 3
    %s619 = smov 3
    %v620 = vld [vmem:[%s618] ss:$16 sm:%s619]
    %s621 = scalar_lea.vmem %s0, 3
    %s622 = smov 12
    %v623 = vld [vmem:[%s621] ss:$16 sm:%s622]
    %vm624 = vcmask 1043458
    %v625 = vsel %vm624, %v623, %v620
    %s626 = scalar_lea.vmem %s0, 3
    %s627 = smov 48
    %v628 = vld [vmem:[%s626] ss:$16 sm:%s627]
    %vm629 = vcmask 1045508
    %v630 = vsel %vm629, %v628, %v625
    %s631 = scalar_lea.vmem %s0, 3
    %s632 = smov 192
    %v633 = vld [vmem:[%s631] ss:$16 sm:%s632]
    %vm634 = vcmask 1047558
    %v635 = vsel %vm634, %v633, %v630
    %636 = vrot.lane.b32.xlu0 %v635, 24
    %v637 = vpop.permute.xlu0 %636
    %vm638 = vcmask 261312
    %639 = vst.msk [vmem:[#allocation0] ss:$8 sm:$0xf] %vm638, %v637
    %640 = vst.msk [vmem:[#allocation0] ss:$8 sm:$0xf0] %vm638, %v637
    %s641 = scalar_lea.vmem %s0, 131
    %s642 = smov 3
    %v643 = vld [vmem:[%s641] ss:$16 sm:%s642]
    %s644 = scalar_lea.vmem %s0, 131
    %s645 = smov 12
    %v646 = vld [vmem:[%s644] ss:$16 sm:%s645]
    %vm647 = vcmask 1043458
    %v648 = vsel %vm647, %v646, %v643
    %s649 = scalar_lea.vmem %s0, 131
    %s650 = smov 48
    %v651 = vld [vmem:[%s649] ss:$16 sm:%s650]
    %vm652 = vcmask 1045508
    %v653 = vsel %vm652, %v651, %v648
    %s654 = scalar_lea.vmem %s0, 131
    %s655 = smov 192
    %v656 = vld [vmem:[%s654] ss:$16 sm:%s655]
    %vm657 = vcmask 1047558
    %v658 = vsel %vm657, %v656, %v653
    %659 = vrot.lane.b32.xlu0 %v658, 24
    %v660 = vpop.permute.xlu0 %659
    %vm661 = vcmask 261312
    %s662 = scalar_lea.vmem [#allocation0], 64
    %663 = vst.msk [vmem:[%s662] ss:$8 sm:$0xf] %vm661, %v660
    %s664 = scalar_lea.vmem [#allocation0], 64
    %665 = vst.msk [vmem:[%s664] ss:$8 sm:$0xf0] %vm661, %v660
    %s666 = scalar_lea.vmem %s0, 2
    %s667 = smov 3
    %v668 = vld [vmem:[%s666] ss:$16 sm:%s667]
    %s669 = scalar_lea.vmem %s0, 2
    %s670 = smov 12
    %v671 = vld [vmem:[%s669] ss:$16 sm:%s670]
    %vm672 = vcmask 1043458
    %v673 = vsel %vm672, %v671, %v668
    %s674 = scalar_lea.vmem %s0, 2
    %s675 = smov 48
    %v676 = vld [vmem:[%s674] ss:$16 sm:%s675]
    %vm677 = vcmask 1045508
    %v678 = vsel %vm677, %v676, %v673
    %s679 = scalar_lea.vmem %s0, 2
    %s680 = smov 192
    %v681 = vld [vmem:[%s679] ss:$16 sm:%s680]
    %vm682 = vcmask 1047558
    %v683 = vsel %vm682, %v681, %v678
    %684 = vrot.lane.b32.xlu0 %v683, 16
    %v685 = vpop.permute.xlu0 %684
    %vm686 = vcmask 195712
    %687 = vst.msk [vmem:[#allocation0] ss:$8 sm:$0xf] %vm686, %v685
    %688 = vst.msk [vmem:[#allocation0] ss:$8 sm:$0xf0] %vm686, %v685
    %s689 = scalar_lea.vmem %s0, 130
    %s690 = smov 3
    %v691 = vld [vmem:[%s689] ss:$16 sm:%s690]
    %s692 = scalar_lea.vmem %s0, 130
    %s693 = smov 12
    %v694 = vld [vmem:[%s692] ss:$16 sm:%s693]
    %vm695 = vcmask 1043458
    %v696 = vsel %vm695, %v694, %v691
    %s697 = scalar_lea.vmem %s0, 130
    %s698 = smov 48
    %v699 = vld [vmem:[%s697] ss:$16 sm:%s698]
    %vm700 = vcmask 1045508
    %v701 = vsel %vm700, %v699, %v696
    %s702 = scalar_lea.vmem %s0, 130
    %s703 = smov 192
    %v704 = vld [vmem:[%s702] ss:$16 sm:%s703]
    %vm705 = vcmask 1047558
    %v706 = vsel %vm705, %v704, %v701
    %707 = vrot.lane.b32.xlu0 %v706, 16
    %v708 = vpop.permute.xlu0 %707
    %vm709 = vcmask 195712
    %s710 = scalar_lea.vmem [#allocation0], 64
    %711 = vst.msk [vmem:[%s710] ss:$8 sm:$0xf] %vm709, %v708
    %s712 = scalar_lea.vmem [#allocation0], 64
    %713 = vst.msk [vmem:[%s712] ss:$8 sm:$0xf0] %vm709, %v708
    %s714 = scalar_lea.vmem %s0, 1
    %s715 = smov 3
    %v716 = vld [vmem:[%s714] ss:$16 sm:%s715]
    %s717 = scalar_lea.vmem %s0, 1
    %s718 = smov 12
    %v719 = vld [vmem:[%s717] ss:$16 sm:%s718]
    %vm720 = vcmask 1043458
    %v721 = vsel %vm720, %v719, %v716
    %s722 = scalar_lea.vmem %s0, 1
    %s723 = smov 48
    %v724 = vld [vmem:[%s722] ss:$16 sm:%s723]
    %vm725 = vcmask 1045508
    %v726 = vsel %vm725, %v724, %v721
    %s727 = scalar_lea.vmem %s0, 1
    %s728 = smov 192
    %v729 = vld [vmem:[%s727] ss:$16 sm:%s728]
    %vm730 = vcmask 1047558
    %v731 = vsel %vm730, %v729, %v726
    %732 = vrot.lane.b32.xlu0 %v731, 8
    %v733 = vpop.permute.xlu0 %732
    %vm734 = vcmask 130112
    %735 = vst.msk [vmem:[#allocation0] ss:$8 sm:$0xf] %vm734, %v733
    %736 = vst.msk [vmem:[#allocation0] ss:$8 sm:$0xf0] %vm734, %v733
    %s737 = scalar_lea.vmem %s0, 129
    %s738 = smov 3
    %v739 = vld [vmem:[%s737] ss:$16 sm:%s738]
    %s740 = scalar_lea.vmem %s0, 129
    %s741 = smov 12
    %v742 = vld [vmem:[%s740] ss:$16 sm:%s741]
    %vm743 = vcmask 1043458
    %v744 = vsel %vm743, %v742, %v739
    %s745 = scalar_lea.vmem %s0, 129
    %s746 = smov 48
    %v747 = vld [vmem:[%s745] ss:$16 sm:%s746]
    %vm748 = vcmask 1045508
    %v749 = vsel %vm748, %v747, %v744
    %s750 = scalar_lea.vmem %s0, 129
    %s751 = smov 192
    %v752 = vld [vmem:[%s750] ss:$16 sm:%s751]
    %vm753 = vcmask 1047558
    %v754 = vsel %vm753, %v752, %v749
    %755 = vrot.lane.b32.xlu0 %v754, 8
    %v756 = vpop.permute.xlu0 %755
    %vm757 = vcmask 130112
    %s758 = scalar_lea.vmem [#allocation0], 64
    %759 = vst.msk [vmem:[%s758] ss:$8 sm:$0xf] %vm757, %v756
    %s760 = scalar_lea.vmem [#allocation0], 64
    %761 = vst.msk [vmem:[%s760] ss:$8 sm:$0xf0] %vm757, %v756
    %s763 = sshllo.u32 0, 1
    %v765 = vld [vmem:[#allocation0] sm:%s763]
    %s766 = sshllo.u32 0, 1
    %767 = vst [vmem:[%s1] sm:%s766] %v765
    %s768 = scalar_lea.vmem [#allocation0], 8
    %v769 = vld [vmem:[%s768] sm:%s763]
    %s770 = sshllo.u32 0, 1
    %s771 = scalar_lea.vmem %s1, 1
    %772 = vst [vmem:[%s771] sm:%s770] %v769
    %s773 = scalar_lea.vmem [#allocation0], 16
    %v774 = vld [vmem:[%s773] sm:%s763]
    %s775 = sshllo.u32 0, 1
    %s776 = smul.addr 1, 2
    %s777 = scalar_lea.vmem %s1, %s776
    %778 = vst [vmem:[%s777] sm:%s775] %v774
    %s779 = scalar_lea.vmem [#allocation0], 24
    %v780 = vld [vmem:[%s779] sm:%s763]
    %s781 = sshllo.u32 0, 1
    %s782 = smul.addr 1, 3
    %s783 = scalar_lea.vmem %s1, %s782
    %784 = vst [vmem:[%s783] sm:%s781] %v780
    %s785 = scalar_lea.vmem [#allocation0], 32
    %v786 = vld [vmem:[%s785] sm:%s763]
    %s787 = sshllo.u32 0, 1
    %s788 = smul.addr 1, 4
    %s789 = scalar_lea.vmem %s1, %s788
    %790 = vst [vmem:[%s789] sm:%s787] %v786
    %s791 = scalar_lea.vmem [#allocation0], 40
    %v792 = vld [vmem:[%s791] sm:%s763]
    %s793 = sshllo.u32 0, 1
    %s794 = smul.addr 1, 5
    %s795 = scalar_lea.vmem %s1, %s794
    %796 = vst [vmem:[%s795] sm:%s793] %v792
    %s797 = scalar_lea.vmem [#allocation0], 48
    %v798 = vld [vmem:[%s797] sm:%s763]
    %s799 = sshllo.u32 0, 1
    %s800 = smul.addr 1, 6
    %s801 = scalar_lea.vmem %s1, %s800
    %802 = vst [vmem:[%s801] sm:%s799] %v798
    %s803 = scalar_lea.vmem [#allocation0], 56
    %v804 = vld [vmem:[%s803] sm:%s763]
    %s805 = sshllo.u32 0, 1
    %s806 = smul.addr 1, 7
    %s807 = scalar_lea.vmem %s1, %s806
    %808 = vst [vmem:[%s807] sm:%s805] %v804
    %s809 = scalar_lea.vmem [#allocation0], 64
    %v810 = vld [vmem:[%s809] sm:%s763]
    %s811 = sshllo.u32 0, 1
    %s812 = smul.addr 1, 8
    %s813 = scalar_lea.vmem %s1, %s812
    %814 = vst [vmem:[%s813] sm:%s811] %v810
    %s815 = scalar_lea.vmem [#allocation0], 72
    %v816 = vld [vmem:[%s815] sm:%s763]
    %s817 = sshllo.u32 0, 1
    %s818 = smul.addr 1, 9
    %s819 = scalar_lea.vmem %s1, %s818
    %820 = vst [vmem:[%s819] sm:%s817] %v816
    %s821 = scalar_lea.vmem [#allocation0], 80
    %v822 = vld [vmem:[%s821] sm:%s763]
    %s823 = sshllo.u32 0, 1
    %s824 = smul.addr 1, 10
    %s825 = scalar_lea.vmem %s1, %s824
    %826 = vst [vmem:[%s825] sm:%s823] %v822
    %s827 = scalar_lea.vmem [#allocation0], 88
    %v828 = vld [vmem:[%s827] sm:%s763]
    %s829 = sshllo.u32 0, 1
    %s830 = smul.addr 1, 11
    %s831 = scalar_lea.vmem %s1, %s830
    %832 = vst [vmem:[%s831] sm:%s829] %v828
    %s833 = scalar_lea.vmem [#allocation0], 96
    %v834 = vld [vmem:[%s833] sm:%s763]
    %s835 = sshllo.u32 0, 1
    %s836 = smul.addr 1, 12
    %s837 = scalar_lea.vmem %s1, %s836
    %838 = vst [vmem:[%s837] sm:%s835] %v834
    %s839 = scalar_lea.vmem [#allocation0], 104
    %v840 = vld [vmem:[%s839] sm:%s763]
    %s841 = sshllo.u32 0, 1
    %s842 = smul.addr 1, 13
    %s843 = scalar_lea.vmem %s1, %s842
    %844 = vst [vmem:[%s843] sm:%s841] %v840
    %s845 = scalar_lea.vmem [#allocation0], 112
    %v846 = vld [vmem:[%s845] sm:%s763]
    %s847 = sshllo.u32 0, 1
    %s848 = smul.addr 1, 14
    %s849 = scalar_lea.vmem %s1, %s848
    %850 = vst [vmem:[%s849] sm:%s847] %v846
    %s851 = scalar_lea.vmem [#allocation0], 120
    %v852 = vld [vmem:[%s851] sm:%s763]
    %s853 = sshllo.u32 0, 1
    %s854 = smul.addr 1, 15
    %s855 = scalar_lea.vmem %s1, %s854
    %856 = vst [vmem:[%s855] sm:%s853] %v852

// kernel: trusformer_forward.10
$region0: #{trusformer_forward.10}
  #allocation0 [shape = 'u32[]', space=smem, size = 0x4, offset = 0x4, fixed_abs, tag = 'smem constant byte address 0x4 - core index']
  #allocation1 [shape = 'u32[144,128]{1,0:T(1,128)}', space=vmem, size = 0x12000, scoped, tag = 'internal scratch']
  %s0 = inlined_call_operand.vmem [shape: f32[8,2048], index: 0, kind: input, shape index: {}]
  %s1 = inlined_call_operand.vmem [shape: f32[1,2048], index: 1, kind: input, shape index: {}]
  %s2 = inlined_call_operand.vmem [shape: f32[8,2048], index: 2, kind: output, shape index: {}]
  %s3 = sld [smem:[#allocation0]]
  $region18: #{trusformer_forward.10} parent=0
    _
  %s5 = ssub.s32 1, %s3
  %s6 = scalar_select 0, %s5, %s3
  // Predicated region
  $region2: #{trusformer_forward.10} parent=0 // pred_check
    _
  $region3: #{trusformer_forward.10} parent=0 // pred_check_branch
    %8 = sbr.rel (0) target = $region5
  $region4: #{trusformer_forward.10} parent=0 // pred_region
    _
  $region5: #{trusformer_forward.10} parent=0 // pred_fallthru
    _
  // Predicated region
  $region6: #{trusformer_forward.10} parent=0 // pred_check
    _
  $region7: #{trusformer_forward.10} parent=0 // pred_check_branch
    %10 = sbr.rel (0) target = $region9
  $region8: #{trusformer_forward.10} parent=0 // pred_region
    _
  $region9: #{trusformer_forward.10} parent=0 // pred_fallthru
    _
  %v11 = vld [vmem:[%s0] sm:$0xff]
  %v12 = vld [vmem:[%s0 + $0x8] sm:$0xff]
  %v13 = vld [vmem:[%s0 + $0x10] sm:$0xff]
  %v14 = vld [vmem:[%s0 + $0x18] sm:$0xff]
  %v15 = vld [vmem:[%s0 + $0x20] sm:$0xff]
  %v16 = vld [vmem:[%s0 + $0x28] sm:$0xff]
  %v17 = vld [vmem:[%s0 + $0x30] sm:$0xff]
  %v18 = vld [vmem:[%s0 + $0x38] sm:$0xff]
  %v19 = vld [vmem:[%s0 + $0x40] sm:$0xff]
  %v20 = vld [vmem:[%s0 + $0x48] sm:$0xff]
  %v21 = vld [vmem:[%s0 + $0x50] sm:$0xff]
  %v22 = vld [vmem:[%s0 + $0x58] sm:$0xff]
  %v23 = vld [vmem:[%s0 + $0x60] sm:$0xff]
  %v24 = vld [vmem:[%s0 + $0x68] sm:$0xff]
  %v25 = vld [vmem:[%s0 + $0x70] sm:$0xff]
  %v26 = vld [vmem:[%s0 + $0x78] sm:$0xff]
  %v27 = vld [vmem:[%s1] sm:$0xff]
  %v28 = vld [vmem:[%s1 + $0x8] sm:$0xff]
  %v31 = vlaneseq
  %v32 = vshrl.u32 %v31, 7
  %v33 = vsub.s32 0, %v32
  %v34 = vrot.slane %v27, %v33
  %v35 = vlaneseq
  %v36 = vshrl.u32 %v35, 7
  %v37 = vsub.s32 1, %v36
  %v38 = vrot.slane %v27, %v37
  %v39 = vlaneseq
  %v40 = vshrl.u32 %v39, 7
  %v41 = vsub.s32 2, %v40
  %v42 = vrot.slane %v27, %v41
  %v43 = vlaneseq
  %v44 = vshrl.u32 %v43, 7
  %v45 = vsub.s32 3, %v44
  %v46 = vrot.slane %v27, %v45
  %v47 = vlaneseq
  %v48 = vshrl.u32 %v47, 7
  %v49 = vsub.s32 4, %v48
  %v50 = vrot.slane %v27, %v49
  %v51 = vlaneseq
  %v52 = vshrl.u32 %v51, 7
  %v53 = vsub.s32 5, %v52
  %v54 = vrot.slane %v27, %v53
  %v55 = vlaneseq
  %v56 = vshrl.u32 %v55, 7
  %v57 = vsub.s32 6, %v56
  %v58 = vrot.slane %v27, %v57
  %v59 = vlaneseq
  %v60 = vshrl.u32 %v59, 7
  %v61 = vsub.s32 7, %v60
  %v62 = vrot.slane %v27, %v61
  %v63 = vlaneseq
  %v64 = vshrl.u32 %v63, 7
  %v65 = vsub.s32 0, %v64
  %v66 = vrot.slane %v28, %v65
  %v67 = vlaneseq
  %v68 = vshrl.u32 %v67, 7
  %v69 = vsub.s32 1, %v68
  %v70 = vrot.slane %v28, %v69
  %v71 = vlaneseq
  %v72 = vshrl.u32 %v71, 7
  %v73 = vsub.s32 2, %v72
  %v74 = vrot.slane %v28, %v73
  %v75 = vlaneseq
  %v76 = vshrl.u32 %v75, 7
  %v77 = vsub.s32 3, %v76
  %v78 = vrot.slane %v28, %v77
  %v79 = vlaneseq
  %v80 = vshrl.u32 %v79, 7
  %v81 = vsub.s32 4, %v80
  %v82 = vrot.slane %v28, %v81
  %v83 = vlaneseq
  %v84 = vshrl.u32 %v83, 7
  %v85 = vsub.s32 5, %v84
  %v86 = vrot.slane %v28, %v85
  %v87 = vlaneseq
  %v88 = vshrl.u32 %v87, 7
  %v89 = vsub.s32 6, %v88
  %v90 = vrot.slane %v28, %v89
  %v91 = vlaneseq
  %v92 = vshrl.u32 %v91, 7
  %v93 = vsub.s32 7, %v92
  %v94 = vrot.slane %v28, %v93
  %v111 = vadd.f32 %v11, %v34
  %v112 = vadd.f32 %v12, %v38
  %v113 = vadd.f32 %v13, %v42
  %v114 = vadd.f32 %v14, %v46
  %v115 = vadd.f32 %v15, %v50
  %v116 = vadd.f32 %v16, %v54
  %v117 = vadd.f32 %v17, %v58
  %v118 = vadd.f32 %v18, %v62
  %v119 = vadd.f32 %v19, %v66
  %v120 = vadd.f32 %v20, %v70
  %v121 = vadd.f32 %v21, %v74
  %v122 = vadd.f32 %v22, %v78
  %v123 = vadd.f32 %v23, %v82
  %v124 = vadd.f32 %v24, %v86
  %v125 = vadd.f32 %v25, %v90
  %v126 = vadd.f32 %v26, %v94
  %v127 = vmax.f32 %v111, 0.0
  %v128 = vmax.f32 %v112, 0.0
  %v129 = vmax.f32 %v113, 0.0
  %v130 = vmax.f32 %v114, 0.0
  %v131 = vmax.f32 %v115, 0.0
  %v132 = vmax.f32 %v116, 0.0
  %v133 = vmax.f32 %v117, 0.0
  %v134 = vmax.f32 %v118, 0.0
  %v135 = vmax.f32 %v119, 0.0
  %v136 = vmax.f32 %v120, 0.0
  %v137 = vmax.f32 %v121, 0.0
  %v138 = vmax.f32 %v122, 0.0
  %v139 = vmax.f32 %v123, 0.0
  %v140 = vmax.f32 %v124, 0.0
  %v141 = vmax.f32 %v125, 0.0
  %v142 = vmax.f32 %v126, 0.0
  %143 = vst [vmem:[%s2] sm:$0xff] %v127
  %144 = vst [vmem:[%s2 + $0x8] sm:$0xff] %v128
  %145 = vst [vmem:[%s2 + $0x10] sm:$0xff] %v129
  %146 = vst [vmem:[%s2 + $0x18] sm:$0xff] %v130
  %147 = vst [vmem:[%s2 + $0x20] sm:$0xff] %v131
  %148 = vst [vmem:[%s2 + $0x28] sm:$0xff] %v132
  %149 = vst [vmem:[%s2 + $0x30] sm:$0xff] %v133
  %150 = vst [vmem:[%s2 + $0x38] sm:$0xff] %v134
  %151 = vst [vmem:[%s2 + $0x40] sm:$0xff] %v135
  %152 = vst [vmem:[%s2 + $0x48] sm:$0xff] %v136
  %153 = vst [vmem:[%s2 + $0x50] sm:$0xff] %v137
  %154 = vst [vmem:[%s2 + $0x58] sm:$0xff] %v138
  %155 = vst [vmem:[%s2 + $0x60] sm:$0xff] %v139
  %156 = vst [vmem:[%s2 + $0x68] sm:$0xff] %v140
  %157 = vst [vmem:[%s2 + $0x70] sm:$0xff] %v141
  %158 = vst [vmem:[%s2 + $0x78] sm:$0xff] %v142
  // Predicated region
  $region10: #{trusformer_forward.10} parent=0 // pred_check
    _
  $region11: #{trusformer_forward.10} parent=0 // pred_check_branch
    %160 = sbr.rel (0) target = $region13
  $region12: #{trusformer_forward.10} parent=0 // pred_region
    _
  $region13: #{trusformer_forward.10} parent=0 // pred_fallthru
    _
  // Predicated region
  $region14: #{trusformer_forward.10} parent=0 // pred_check
    _
  $region15: #{trusformer_forward.10} parent=0 // pred_check_branch
    %162 = sbr.rel (0) target = $region17
  $region16: #{trusformer_forward.10} parent=0 // pred_region
    _
  $region17: #{trusformer_forward.10} parent=0 // pred_fallthru
    _

// kernel: tile.56
$region0: #{tile.56}
  #allocation0 [shape = 's32[1]{0}', space=sflag, size = 0x4, scoped, tag = 'scoped memory for tile.56']
  %s0 = inlined_call_operand.vmem [shape: f32[8], index: 0, kind: input, shape index: {}]
  %s1 = inlined_call_operand.vmem [shape: f32[64,8], index: 1, kind: output, shape index: {}]
  // Predicated region
  $region2: #{tile.56} parent=0 // pred_check
    _
  $region3: #{tile.56} parent=0 // pred_check_branch
    %3 = sbr.rel (0) target = $region5
  $region4: #{tile.56} parent=0 // pred_region
    _
  $region5: #{tile.56} parent=0 // pred_fallthru
    _
  %v4 = vld [vmem:[%s0] ss:$0 sm:$0xff]
  %5 = vst [vmem:[%s1] sm:$0xff] %v4
  %s6 = scalar_lea.vmem %s1, 8
  %7 = vst [vmem:[%s6] sm:$0xff] %v4
  %s8 = scalar_lea.vmem %s1, 16
  %9 = vst [vmem:[%s8] sm:$0xff] %v4
  %s10 = scalar_lea.vmem %s1, 24
  %11 = vst [vmem:[%s10] sm:$0xff] %v4
  %s12 = scalar_lea.vmem %s1, 32
  %13 = vst [vmem:[%s12] sm:$0xff] %v4
  %s14 = scalar_lea.vmem %s1, 40
  %15 = vst [vmem:[%s14] sm:$0xff] %v4
  %s16 = scalar_lea.vmem %s1, 48
  %17 = vst [vmem:[%s16] sm:$0xff] %v4
  %s18 = scalar_lea.vmem %s1, 56
  %19 = vst [vmem:[%s18] sm:$0xff] %v4

// kernel: tile.57
$region0: #{tile.57}
  %s0 = inlined_call_operand.vmem [shape: f32[64,8], index: 0, kind: input, shape index: {}]
  %s1 = inlined_call_operand.vmem [shape: f32[1,512], index: 1, kind: output, shape index: {}]
  $region1: #{tile.57} parent=0
    #allocation0 [shape = 'u8[16384]{0}', space=vmem, size = 0x4000, scoped, tag = 'scoped mem for output reshape']
    %s2 = smov 3
    %v3 = vld [vmem:[%s0] ss:$16 sm:%s2]
    %s4 = smov 12
    %v5 = vld [vmem:[%s0] ss:$16 sm:%s4]
    %vm6 = vcmask 1043458
    %v7 = vsel %vm6, %v5, %v3
    %vm8 = vcmask 64512
    %9 = vst.msk [vmem:[#allocation0] ss:$8 sm:$0xf] %vm8, %v7
    %s10 = scalar_lea.vmem %s0, 15
    %s11 = smov 3
    %v12 = vld [vmem:[%s10] ss:$16 sm:%s11]
    %s13 = scalar_lea.vmem %s0, 15
    %s14 = smov 12
    %v15 = vld [vmem:[%s13] ss:$16 sm:%s14]
    %vm16 = vcmask 1043458
    %v17 = vsel %vm16, %v15, %v12
    %18 = vrot.lane.b32.xlu0 %v17, 120
    %v19 = vpop.permute.xlu0 %18
    %vm20 = vcmask 1048512
    %21 = vst.msk [vmem:[#allocation0] ss:$8 sm:$0xf] %vm20, %v19
    %s22 = scalar_lea.vmem %s0, 14
    %s23 = smov 3
    %v24 = vld [vmem:[%s22] ss:$16 sm:%s23]
    %s25 = scalar_lea.vmem %s0, 14
    %s26 = smov 12
    %v27 = vld [vmem:[%s25] ss:$16 sm:%s26]
    %vm28 = vcmask 1043458
    %v29 = vsel %vm28, %v27, %v24
    %30 = vrot.lane.b32.xlu0 %v29, 112
    %v31 = vpop.permute.xlu0 %30
    %vm32 = vcmask 982912
    %33 = vst.msk [vmem:[#allocation0] ss:$8 sm:$0xf] %vm32, %v31
    %s34 = scalar_lea.vmem %s0, 13
    %s35 = smov 3
    %v36 = vld [vmem:[%s34] ss:$16 sm:%s35]
    %s37 = scalar_lea.vmem %s0, 13
    %s38 = smov 12
    %v39 = vld [vmem:[%s37] ss:$16 sm:%s38]
    %vm40 = vcmask 1043458
    %v41 = vsel %vm40, %v39, %v36
    %42 = vrot.lane.b32.xlu0 %v41, 104
    %v43 = vpop.permute.xlu0 %42
    %vm44 = vcmask 917312
    %45 = vst.msk [vmem:[#allocation0] ss:$8 sm:$0xf] %vm44, %v43
    %s46 = scalar_lea.vmem %s0, 12
    %s47 = smov 3
    %v48 = vld [vmem:[%s46] ss:$16 sm:%s47]
    %s49 = scalar_lea.vmem %s0, 12
    %s50 = smov 12
    %v51 = vld [vmem:[%s49] ss:$16 sm:%s50]
    %vm52 = vcmask 1043458
    %v53 = vsel %vm52, %v51, %v48
    %54 = vrot.lane.b32.xlu0 %v53, 96
    %v55 = vpop.permute.xlu0 %54
    %vm56 = vcmask 851712
    %57 = vst.msk [vmem:[#allocation0] ss:$8 sm:$0xf] %vm56, %v55
    %s58 = scalar_lea.vmem %s0, 11
    %s59 = smov 3
    %v60 = vld [vmem:[%s58] ss:$16 sm:%s59]
    %s61 = scalar_lea.vmem %s0, 11
    %s62 = smov 12
    %v63 = vld [vmem:[%s61] ss:$16 sm:%s62]
    %vm64 = vcmask 1043458
    %v65 = vsel %vm64, %v63, %v60
    %66 = vrot.lane.b32.xlu0 %v65, 88
    %v67 = vpop.permute.xlu0 %66
    %vm68 = vcmask 786112
    %69 = vst.msk [vmem:[#allocation0] ss:$8 sm:$0xf] %vm68, %v67
    %s70 = scalar_lea.vmem %s0, 10
    %s71 = smov 3
    %v72 = vld [vmem:[%s70] ss:$16 sm:%s71]
    %s73 = scalar_lea.vmem %s0, 10
    %s74 = smov 12
    %v75 = vld [vmem:[%s73] ss:$16 sm:%s74]
    %vm76 = vcmask 1043458
    %v77 = vsel %vm76, %v75, %v72
    %78 = vrot.lane.b32.xlu0 %v77, 80
    %v79 = vpop.permute.xlu0 %78
    %vm80 = vcmask 720512
    %81 = vst.msk [vmem:[#allocation0] ss:$8 sm:$0xf] %vm80, %v79
    %s82 = scalar_lea.vmem %s0, 9
    %s83 = smov 3
    %v84 = vld [vmem:[%s82] ss:$16 sm:%s83]
    %s85 = scalar_lea.vmem %s0, 9
    %s86 = smov 12
    %v87 = vld [vmem:[%s85] ss:$16 sm:%s86]
    %vm88 = vcmask 1043458
    %v89 = vsel %vm88, %v87, %v84
    %90 = vrot.lane.b32.xlu0 %v89, 72
    %v91 = vpop.permute.xlu0 %90
    %vm92 = vcmask 654912
    %93 = vst.msk [vmem:[#allocation0] ss:$8 sm:$0xf] %vm92, %v91
    %s94 = scalar_lea.vmem %s0, 8
    %s95 = smov 3
    %v96 = vld [vmem:[%s94] ss:$16 sm:%s95]
    %s97 = scalar_lea.vmem %s0, 8
    %s98 = smov 12
    %v99 = vld [vmem:[%s97] ss:$16 sm:%s98]
    %vm100 = vcmask 1043458
    %v101 = vsel %vm100, %v99, %v96
    %102 = vrot.lane.b32.xlu0 %v101, 64
    %v103 = vpop.permute.xlu0 %102
    %vm104 = vcmask 589312
    %105 = vst.msk [vmem:[#allocation0] ss:$8 sm:$0xf] %vm104, %v103
    %s106 = scalar_lea.vmem %s0, 7
    %s107 = smov 3
    %v108 = vld [vmem:[%s106] ss:$16 sm:%s107]
    %s109 = scalar_lea.vmem %s0, 7
    %s110 = smov 12
    %v111 = vld [vmem:[%s109] ss:$16 sm:%s110]
    %vm112 = vcmask 1043458
    %v113 = vsel %vm112, %v111, %v108
    %114 = vrot.lane.b32.xlu0 %v113, 56
    %v115 = vpop.permute.xlu0 %114
    %vm116 = vcmask 523712
    %117 = vst.msk [vmem:[#allocation0] ss:$8 sm:$0xf] %vm116, %v115
    %s118 = scalar_lea.vmem %s0, 6
    %s119 = smov 3
    %v120 = vld [vmem:[%s118] ss:$16 sm:%s119]
    %s121 = scalar_lea.vmem %s0, 6
    %s122 = smov 12
    %v123 = vld [vmem:[%s121] ss:$16 sm:%s122]
    %vm124 = vcmask 1043458
    %v125 = vsel %vm124, %v123, %v120
    %126 = vrot.lane.b32.xlu0 %v125, 48
    %v127 = vpop.permute.xlu0 %126
    %vm128 = vcmask 458112
    %129 = vst.msk [vmem:[#allocation0] ss:$8 sm:$0xf] %vm128, %v127
    %s130 = scalar_lea.vmem %s0, 5
    %s131 = smov 3
    %v132 = vld [vmem:[%s130] ss:$16 sm:%s131]
    %s133 = scalar_lea.vmem %s0, 5
    %s134 = smov 12
    %v135 = vld [vmem:[%s133] ss:$16 sm:%s134]
    %vm136 = vcmask 1043458
    %v137 = vsel %vm136, %v135, %v132
    %138 = vrot.lane.b32.xlu0 %v137, 40
    %v139 = vpop.permute.xlu0 %138
    %vm140 = vcmask 392512
    %141 = vst.msk [vmem:[#allocation0] ss:$8 sm:$0xf] %vm140, %v139
    %s142 = scalar_lea.vmem %s0, 4
    %s143 = smov 3
    %v144 = vld [vmem:[%s142] ss:$16 sm:%s143]
    %s145 = scalar_lea.vmem %s0, 4
    %s146 = smov 12
    %v147 = vld [vmem:[%s145] ss:$16 sm:%s146]
    %vm148 = vcmask 1043458
    %v149 = vsel %vm148, %v147, %v144
    %150 = vrot.lane.b32.xlu0 %v149, 32
    %v151 = vpop.permute.xlu0 %150
    %vm152 = vcmask 326912
    %153 = vst.msk [vmem:[#allocation0] ss:$8 sm:$0xf] %vm152, %v151
    %s154 = scalar_lea.vmem %s0, 3
    %s155 = smov 3
    %v156 = vld [vmem:[%s154] ss:$16 sm:%s155]
    %s157 = scalar_lea.vmem %s0, 3
    %s158 = smov 12
    %v159 = vld [vmem:[%s157] ss:$16 sm:%s158]
    %vm160 = vcmask 1043458
    %v161 = vsel %vm160, %v159, %v156
    %162 = vrot.lane.b32.xlu0 %v161, 24
    %v163 = vpop.permute.xlu0 %162
    %vm164 = vcmask 261312
    %165 = vst.msk [vmem:[#allocation0] ss:$8 sm:$0xf] %vm164, %v163
    %s166 = scalar_lea.vmem %s0, 2
    %s167 = smov 3
    %v168 = vld [vmem:[%s166] ss:$16 sm:%s167]
    %s169 = scalar_lea.vmem %s0, 2
    %s170 = smov 12
    %v171 = vld [vmem:[%s169] ss:$16 sm:%s170]
    %vm172 = vcmask 1043458
    %v173 = vsel %vm172, %v171, %v168
    %174 = vrot.lane.b32.xlu0 %v173, 16
    %v175 = vpop.permute.xlu0 %174
    %vm176 = vcmask 195712
    %177 = vst.msk [vmem:[#allocation0] ss:$8 sm:$0xf] %vm176, %v175
    %s178 = scalar_lea.vmem %s0, 1
    %s179 = smov 3
    %v180 = vld [vmem:[%s178] ss:$16 sm:%s179]
    %s181 = scalar_lea.vmem %s0, 1
    %s182 = smov 12
    %v183 = vld [vmem:[%s181] ss:$16 sm:%s182]
    %vm184 = vcmask 1043458
    %v185 = vsel %vm184, %v183, %v180
    %186 = vrot.lane.b32.xlu0 %v185, 8
    %v187 = vpop.permute.xlu0 %186
    %vm188 = vcmask 130112
    %189 = vst.msk [vmem:[#allocation0] ss:$8 sm:$0xf] %vm188, %v187
    %s191 = sshllo.u32 0, 1
    %v193 = vld [vmem:[#allocation0] sm:%s191]
    %s194 = sshllo.u32 0, 1
    %195 = vst [vmem:[%s1] sm:%s194] %v193
    %s196 = scalar_lea.vmem [#allocation0], 8
    %v197 = vld [vmem:[%s196] sm:%s191]
    %s198 = sshllo.u32 0, 1
    %s199 = scalar_lea.vmem %s1, 1
    %200 = vst [vmem:[%s199] sm:%s198] %v197
    %s201 = scalar_lea.vmem [#allocation0], 16
    %v202 = vld [vmem:[%s201] sm:%s191]
    %s203 = sshllo.u32 0, 1
    %s204 = smul.addr 1, 2
    %s205 = scalar_lea.vmem %s1, %s204
    %206 = vst [vmem:[%s205] sm:%s203] %v202
    %s207 = scalar_lea.vmem [#allocation0], 24
    %v208 = vld [vmem:[%s207] sm:%s191]
    %s209 = sshllo.u32 0, 1
    %s210 = smul.addr 1, 3
    %s211 = scalar_lea.vmem %s1, %s210
    %212 = vst [vmem:[%s211] sm:%s209] %v208

// kernel: trusformer_forward.11
$region0: #{trusformer_forward.11}
  #allocation0 [shape = 'u32[]', space=smem, size = 0x4, offset = 0x4, fixed_abs, tag = 'smem constant byte address 0x4 - core index']
  #allocation1 [shape = 'u32[144,128]{1,0:T(1,128)}', space=vmem, size = 0x12000, scoped, tag = 'internal scratch']
  %s0 = inlined_call_operand.vmem [shape: f32[8,512], index: 0, kind: input, shape index: {}]
  %s1 = inlined_call_operand.vmem [shape: f32[1,512], index: 1, kind: input, shape index: {}]
  %s2 = inlined_call_operand.vmem [shape: f32[8,512], index: 2, kind: output, shape index: {}]
  %s3 = sld [smem:[#allocation0]]
  $region18: #{trusformer_forward.11} parent=0
    _
  %s5 = ssub.s32 1, %s3
  %s6 = scalar_select 0, %s5, %s3
  // Predicated region
  $region2: #{trusformer_forward.11} parent=0 // pred_check
    _
  $region3: #{trusformer_forward.11} parent=0 // pred_check_branch
    %8 = sbr.rel (0) target = $region5
  $region4: #{trusformer_forward.11} parent=0 // pred_region
    _
  $region5: #{trusformer_forward.11} parent=0 // pred_fallthru
    _
  // Predicated region
  $region6: #{trusformer_forward.11} parent=0 // pred_check
    _
  $region7: #{trusformer_forward.11} parent=0 // pred_check_branch
    %10 = sbr.rel (0) target = $region9
  $region8: #{trusformer_forward.11} parent=0 // pred_region
    _
  $region9: #{trusformer_forward.11} parent=0 // pred_fallthru
    _
  %v11 = vld [vmem:[%s0] sm:$0xff]
  %v12 = vld [vmem:[%s0 + $0x8] sm:$0xff]
  %v13 = vld [vmem:[%s0 + $0x10] sm:$0xff]
  %v14 = vld [vmem:[%s0 + $0x18] sm:$0xff]
  %v15 = vld [vmem:[%s1] sm:$0xf]
  %v17 = vlaneseq
  %v18 = vshrl.u32 %v17, 7
  %v19 = vsub.s32 0, %v18
  %v20 = vrot.slane %v15, %v19
  %v21 = vlaneseq
  %v22 = vshrl.u32 %v21, 7
  %v23 = vsub.s32 1, %v22
  %v24 = vrot.slane %v15, %v23
  %v25 = vlaneseq
  %v26 = vshrl.u32 %v25, 7
  %v27 = vsub.s32 2, %v26
  %v28 = vrot.slane %v15, %v27
  %v29 = vlaneseq
  %v30 = vshrl.u32 %v29, 7
  %v31 = vsub.s32 3, %v30
  %v32 = vrot.slane %v15, %v31
  %v37 = vadd.f32 %v11, %v20
  %v38 = vadd.f32 %v12, %v24
  %v39 = vadd.f32 %v13, %v28
  %v40 = vadd.f32 %v14, %v32
  %v41 = vmax.f32 %v37, 0.0
  %v42 = vmax.f32 %v38, 0.0
  %v43 = vmax.f32 %v39, 0.0
  %v44 = vmax.f32 %v40, 0.0
  %45 = vst [vmem:[%s2] sm:$0xff] %v41
  %46 = vst [vmem:[%s2 + $0x8] sm:$0xff] %v42
  %47 = vst [vmem:[%s2 + $0x10] sm:$0xff] %v43
  %48 = vst [vmem:[%s2 + $0x18] sm:$0xff] %v44
  // Predicated region
  $region10: #{trusformer_forward.11} parent=0 // pred_check
    _
  $region11: #{trusformer_forward.11} parent=0 // pred_check_branch
    %50 = sbr.rel (0) target = $region13
  $region12: #{trusformer_forward.11} parent=0 // pred_region
    _
  $region13: #{trusformer_forward.11} parent=0 // pred_fallthru
    _
  // Predicated region
  $region14: #{trusformer_forward.11} parent=0 // pred_check
    _
  $region15: #{trusformer_forward.11} parent=0 // pred_check_branch
    %52 = sbr.rel (0) target = $region17
  $region16: #{trusformer_forward.11} parent=0 // pred_region
    _
  $region17: #{trusformer_forward.11} parent=0 // pred_fallthru
    _

// kernel: trusformer_forward.12
$region0: #{trusformer_forward.12}
  #allocation0 [shape = 'u32[]', space=smem, size = 0x4, offset = 0x4, fixed_abs, tag = 'smem constant byte address 0x4 - core index']
  #allocation1 [shape = 'u32[144,128]{1,0:T(1,128)}', space=vmem, size = 0x12000, scoped, tag = 'internal scratch']
  %s0 = inlined_call_operand.vmem [shape: f32[8,512], index: 0, kind: input, shape index: {}]
  %s1 = inlined_call_operand.vmem [shape: f32[1,512], index: 1, kind: input, shape index: {}]
  %s2 = inlined_call_operand.vmem [shape: f32[8,512], index: 2, kind: input, shape index: {}]
  %s3 = inlined_call_operand.vmem [shape: f32[8,512], index: 3, kind: output, shape index: {}]
  %s4 = sld [smem:[#allocation0]]
  $region22: #{trusformer_forward.12} parent=0
    _
  %s6 = ssub.s32 1, %s4
  %s7 = scalar_select 0, %s6, %s4
  // Predicated region
  $region2: #{trusformer_forward.12} parent=0 // pred_check
    _
  $region3: #{trusformer_forward.12} parent=0 // pred_check_branch
    %9 = sbr.rel (0) target = $region5
  $region4: #{trusformer_forward.12} parent=0 // pred_region
    _
  $region5: #{trusformer_forward.12} parent=0 // pred_fallthru
    _
  // Predicated region
  $region6: #{trusformer_forward.12} parent=0 // pred_check
    _
  $region7: #{trusformer_forward.12} parent=0 // pred_check_branch
    %11 = sbr.rel (0) target = $region9
  $region8: #{trusformer_forward.12} parent=0 // pred_region
    _
  $region9: #{trusformer_forward.12} parent=0 // pred_fallthru
    _
  // Predicated region
  $region10: #{trusformer_forward.12} parent=0 // pred_check
    _
  $region11: #{trusformer_forward.12} parent=0 // pred_check_branch
    %13 = sbr.rel (0) target = $region13
  $region12: #{trusformer_forward.12} parent=0 // pred_region
    _
  $region13: #{trusformer_forward.12} parent=0 // pred_fallthru
    _
  %v14 = vld [vmem:[%s0] sm:$0xff]
  %v15 = vld [vmem:[%s0 + $0x8] sm:$0xff]
  %v16 = vld [vmem:[%s0 + $0x10] sm:$0xff]
  %v17 = vld [vmem:[%s0 + $0x18] sm:$0xff]
  %v18 = vld [vmem:[%s1] sm:$0xf]
  %v20 = vlaneseq
  %v21 = vshrl.u32 %v20, 7
  %v22 = vsub.s32 0, %v21
  %v23 = vrot.slane %v18, %v22
  %v24 = vlaneseq
  %v25 = vshrl.u32 %v24, 7
  %v26 = vsub.s32 1, %v25
  %v27 = vrot.slane %v18, %v26
  %v28 = vlaneseq
  %v29 = vshrl.u32 %v28, 7
  %v30 = vsub.s32 2, %v29
  %v31 = vrot.slane %v18, %v30
  %v32 = vlaneseq
  %v33 = vshrl.u32 %v32, 7
  %v34 = vsub.s32 3, %v33
  %v35 = vrot.slane %v18, %v34
  %v40 = vadd.f32 %v14, %v23
  %v41 = vadd.f32 %v15, %v27
  %v42 = vadd.f32 %v16, %v31
  %v43 = vadd.f32 %v17, %v35
  %v44 = vld [vmem:[%s2] sm:$0xff]
  %v45 = vld [vmem:[%s2 + $0x8] sm:$0xff]
  %v46 = vld [vmem:[%s2 + $0x10] sm:$0xff]
  %v47 = vld [vmem:[%s2 + $0x18] sm:$0xff]
  %v48 = vadd.f32 %v40, %v44
  %v49 = vadd.f32 %v41, %v45
  %v50 = vadd.f32 %v42, %v46
  %v51 = vadd.f32 %v43, %v47
  %v52 = vmax.f32 %v48, 0.0
  %v53 = vmax.f32 %v49, 0.0
  %v54 = vmax.f32 %v50, 0.0
  %v55 = vmax.f32 %v51, 0.0
  %56 = vst [vmem:[%s3] sm:$0xff] %v52
  %57 = vst [vmem:[%s3 + $0x8] sm:$0xff] %v53
  %58 = vst [vmem:[%s3 + $0x10] sm:$0xff] %v54
  %59 = vst [vmem:[%s3 + $0x18] sm:$0xff] %v55
  // Predicated region
  $region14: #{trusformer_forward.12} parent=0 // pred_check
    _
  $region15: #{trusformer_forward.12} parent=0 // pred_check_branch
    %61 = sbr.rel (0) target = $region17
  $region16: #{trusformer_forward.12} parent=0 // pred_region
    _
  $region17: #{trusformer_forward.12} parent=0 // pred_fallthru
    _
  // Predicated region
  $region18: #{trusformer_forward.12} parent=0 // pred_check
    _
  $region19: #{trusformer_forward.12} parent=0 // pred_check_branch
    %63 = sbr.rel (0) target = $region21
  $region20: #{trusformer_forward.12} parent=0 // pred_region
    _
  $region21: #{trusformer_forward.12} parent=0 // pred_fallthru
    _

// kernel: tile.66
$region0: #{tile.66}
  #allocation0 [shape = 's32[1]{0}', space=sflag, size = 0x4, scoped, tag = 'scoped memory for tile.66']
  %s0 = inlined_call_operand.vmem [shape: f32[16], index: 0, kind: input, shape index: {}]
  %s1 = inlined_call_operand.vmem [shape: f32[16,16], index: 1, kind: output, shape index: {}]
  // Predicated region
  $region2: #{tile.66} parent=0 // pred_check
    _
  $region3: #{tile.66} parent=0 // pred_check_branch
    %3 = sbr.rel (0) target = $region5
  $region4: #{tile.66} parent=0 // pred_region
    _
  $region5: #{tile.66} parent=0 // pred_fallthru
    _
  %v4 = vld [vmem:[%s0] ss:$0 sm:$0xff]
  %5 = vst [vmem:[%s1] sm:$0xff] %v4
  %s6 = scalar_lea.vmem %s1, 8
  %7 = vst [vmem:[%s6] sm:$0xff] %v4

// kernel: tile.67
$region0: #{tile.67}
  %s0 = inlined_call_operand.vmem [shape: f32[16,16], index: 0, kind: input, shape index: {}]
  %s1 = inlined_call_operand.vmem [shape: f32[1,256], index: 1, kind: output, shape index: {}]
  $region1: #{tile.67} parent=0
    #allocation0 [shape = 'u8[8192]{0}', space=vmem, size = 0x2000, scoped, tag = 'scoped mem for output reshape']
    %s2 = smov 3
    %v3 = vld [vmem:[%s0] ss:$8 sm:%s2]
    %vm4 = vcmask 130048
    %5 = vst.msk [vmem:[#allocation0] ss:$8 sm:$0x3] %vm4, %v3
    %s6 = scalar_lea.vmem %s0, 7
    %s7 = smov 3
    %v8 = vld [vmem:[%s6] ss:$8 sm:%s7]
    %9 = vrot.lane.b32.xlu0 %v8, 112
    %v10 = vpop.permute.xlu0 %9
    %vm11 = vcmask 1048448
    %12 = vst.msk [vmem:[#allocation0] ss:$8 sm:$0x3] %vm11, %v10
    %s13 = scalar_lea.vmem %s0, 6
    %s14 = smov 3
    %v15 = vld [vmem:[%s13] ss:$8 sm:%s14]
    %16 = vrot.lane.b32.xlu0 %v15, 96
    %v17 = vpop.permute.xlu0 %16
    %vm18 = vcmask 917248
    %19 = vst.msk [vmem:[#allocation0] ss:$8 sm:$0x3] %vm18, %v17
    %s20 = scalar_lea.vmem %s0, 5
    %s21 = smov 3
    %v22 = vld [vmem:[%s20] ss:$8 sm:%s21]
    %23 = vrot.lane.b32.xlu0 %v22, 80
    %v24 = vpop.permute.xlu0 %23
    %vm25 = vcmask 786048
    %26 = vst.msk [vmem:[#allocation0] ss:$8 sm:$0x3] %vm25, %v24
    %s27 = scalar_lea.vmem %s0, 4
    %s28 = smov 3
    %v29 = vld [vmem:[%s27] ss:$8 sm:%s28]
    %30 = vrot.lane.b32.xlu0 %v29, 64
    %v31 = vpop.permute.xlu0 %30
    %vm32 = vcmask 654848
    %33 = vst.msk [vmem:[#allocation0] ss:$8 sm:$0x3] %vm32, %v31
    %s34 = scalar_lea.vmem %s0, 3
    %s35 = smov 3
    %v36 = vld [vmem:[%s34] ss:$8 sm:%s35]
    %37 = vrot.lane.b32.xlu0 %v36, 48
    %v38 = vpop.permute.xlu0 %37
    %vm39 = vcmask 523648
    %40 = vst.msk [vmem:[#allocation0] ss:$8 sm:$0x3] %vm39, %v38
    %s41 = scalar_lea.vmem %s0, 2
    %s42 = smov 3
    %v43 = vld [vmem:[%s41] ss:$8 sm:%s42]
    %44 = vrot.lane.b32.xlu0 %v43, 32
    %v45 = vpop.permute.xlu0 %44
    %vm46 = vcmask 392448
    %47 = vst.msk [vmem:[#allocation0] ss:$8 sm:$0x3] %vm46, %v45
    %s48 = scalar_lea.vmem %s0, 1
    %s49 = smov 3
    %v50 = vld [vmem:[%s48] ss:$8 sm:%s49]
    %51 = vrot.lane.b32.xlu0 %v50, 16
    %v52 = vpop.permute.xlu0 %51
    %vm53 = vcmask 261248
    %54 = vst.msk [vmem:[#allocation0] ss:$8 sm:$0x3] %vm53, %v52
    %s56 = sshllo.u32 0, 1
    %v58 = vld [vmem:[#allocation0] sm:%s56]
    %s59 = sshllo.u32 0, 1
    %60 = vst [vmem:[%s1] sm:%s59] %v58
    %s61 = scalar_lea.vmem [#allocation0], 8
    %v62 = vld [vmem:[%s61] sm:%s56]
    %s63 = sshllo.u32 0, 1
    %s64 = scalar_lea.vmem %s1, 1
    %65 = vst [vmem:[%s64] sm:%s63] %v62

// kernel: trusformer_forward.13
$region0: #{trusformer_forward.13}
  #allocation0 [shape = 'u32[]', space=smem, size = 0x4, offset = 0x4, fixed_abs, tag = 'smem constant byte address 0x4 - core index']
  #allocation1 [shape = 'u32[144,128]{1,0:T(1,128)}', space=vmem, size = 0x12000, scoped, tag = 'internal scratch']
  %s0 = inlined_call_operand.vmem [shape: f32[8,256], index: 0, kind: input, shape index: {}]
  %s1 = inlined_call_operand.vmem [shape: f32[1,256], index: 1, kind: input, shape index: {}]
  %s2 = inlined_call_operand.vmem [shape: f32[8,256], index: 2, kind: output, shape index: {}]
  %s3 = sld [smem:[#allocation0]]
  $region18: #{trusformer_forward.13} parent=0
    _
  %s5 = ssub.s32 1, %s3
  %s6 = scalar_select 0, %s5, %s3
  // Predicated region
  $region2: #{trusformer_forward.13} parent=0 // pred_check
    _
  $region3: #{trusformer_forward.13} parent=0 // pred_check_branch
    %8 = sbr.rel (0) target = $region5
  $region4: #{trusformer_forward.13} parent=0 // pred_region
    _
  $region5: #{trusformer_forward.13} parent=0 // pred_fallthru
    _
  // Predicated region
  $region6: #{trusformer_forward.13} parent=0 // pred_check
    _
  $region7: #{trusformer_forward.13} parent=0 // pred_check_branch
    %10 = sbr.rel (0) target = $region9
  $region8: #{trusformer_forward.13} parent=0 // pred_region
    _
  $region9: #{trusformer_forward.13} parent=0 // pred_fallthru
    _
  %v11 = vld [vmem:[%s0] sm:$0xff]
  %v12 = vld [vmem:[%s0 + $0x8] sm:$0xff]
  %v13 = vld [vmem:[%s1] sm:$0x3]
  %v15 = vlaneseq
  %v16 = vshrl.u32 %v15, 7
  %v17 = vsub.s32 0, %v16
  %v18 = vrot.slane %v13, %v17
  %v19 = vlaneseq
  %v20 = vshrl.u32 %v19, 7
  %v21 = vsub.s32 1, %v20
  %v22 = vrot.slane %v13, %v21
  %v25 = vadd.f32 %v11, %v18
  %v26 = vadd.f32 %v12, %v22
  %v27 = vmax.f32 %v25, 0.0
  %v28 = vmax.f32 %v26, 0.0
  %29 = vst [vmem:[%s2] sm:$0xff] %v27
  %30 = vst [vmem:[%s2 + $0x8] sm:$0xff] %v28
  // Predicated region
  $region10: #{trusformer_forward.13} parent=0 // pred_check
    _
  $region11: #{trusformer_forward.13} parent=0 // pred_check_branch
    %32 = sbr.rel (0) target = $region13
  $region12: #{trusformer_forward.13} parent=0 // pred_region
    _
  $region13: #{trusformer_forward.13} parent=0 // pred_fallthru
    _
  // Predicated region
  $region14: #{trusformer_forward.13} parent=0 // pred_check
    _
  $region15: #{trusformer_forward.13} parent=0 // pred_check_branch
    %34 = sbr.rel (0) target = $region17
  $region16: #{trusformer_forward.13} parent=0 // pred_region
    _
  $region17: #{trusformer_forward.13} parent=0 // pred_fallthru
    _

// kernel: tile.81
$region0: #{tile.81}
  #allocation0 [shape = 's32[1]{0}', space=sflag, size = 0x4, scoped, tag = 'scoped memory for tile.81']
  %s0 = inlined_call_operand.vmem [shape: f32[32], index: 0, kind: input, shape index: {}]
  %s1 = inlined_call_operand.vmem [shape: f32[4,32], index: 1, kind: output, shape index: {}]
  // Predicated region
  $region2: #{tile.81} parent=0 // pred_check
    _
  $region3: #{tile.81} parent=0 // pred_check_branch
    %3 = sbr.rel (0) target = $region5
  $region4: #{tile.81} parent=0 // pred_region
    _
  $region5: #{tile.81} parent=0 // pred_fallthru
    _
  %v4 = vld [vmem:[%s0] ss:$0 sm:$0xff]
  %5 = vst [vmem:[%s1] sm:$0xf] %v4

// kernel: trusformer_forward.14
$region0: #{trusformer_forward.14}
  #allocation0 [shape = 'u32[]', space=smem, size = 0x4, offset = 0x4, fixed_abs, tag = 'smem constant byte address 0x4 - core index']
  #allocation1 [shape = 'u32[144,128]{1,0:T(1,128)}', space=vmem, size = 0x12000, scoped, tag = 'internal scratch']
  %s0 = inlined_call_operand.vmem [shape: f32[8,256], index: 0, kind: input, shape index: {}]
  %s1 = inlined_call_operand.vmem [shape: f32[1,256], index: 1, kind: input, shape index: {}]
  %s2 = inlined_call_operand.vmem [shape: f32[8,256], index: 2, kind: input, shape index: {}]
  %s3 = inlined_call_operand.vmem [shape: f32[1,256], index: 3, kind: input, shape index: {}]
  %s4 = inlined_call_operand.vmem [shape: f32[8,256], index: 4, kind: output, shape index: {}]
  %s5 = sld [smem:[#allocation0]]
  $region26: #{trusformer_forward.14} parent=0
    _
  %s7 = ssub.s32 1, %s5
  %s8 = scalar_select 0, %s7, %s5
  // Predicated region
  $region2: #{trusformer_forward.14} parent=0 // pred_check
    _
  $region3: #{trusformer_forward.14} parent=0 // pred_check_branch
    %10 = sbr.rel (0) target = $region5
  $region4: #{trusformer_forward.14} parent=0 // pred_region
    _
  $region5: #{trusformer_forward.14} parent=0 // pred_fallthru
    _
  // Predicated region
  $region6: #{trusformer_forward.14} parent=0 // pred_check
    _
  $region7: #{trusformer_forward.14} parent=0 // pred_check_branch
    %12 = sbr.rel (0) target = $region9
  $region8: #{trusformer_forward.14} parent=0 // pred_region
    _
  $region9: #{trusformer_forward.14} parent=0 // pred_fallthru
    _
  // Predicated region
  $region10: #{trusformer_forward.14} parent=0 // pred_check
    _
  $region11: #{trusformer_forward.14} parent=0 // pred_check_branch
    %14 = sbr.rel (0) target = $region13
  $region12: #{trusformer_forward.14} parent=0 // pred_region
    _
  $region13: #{trusformer_forward.14} parent=0 // pred_fallthru
    _
  // Predicated region
  $region14: #{trusformer_forward.14} parent=0 // pred_check
    _
  $region15: #{trusformer_forward.14} parent=0 // pred_check_branch
    %16 = sbr.rel (0) target = $region17
  $region16: #{trusformer_forward.14} parent=0 // pred_region
    _
  $region17: #{trusformer_forward.14} parent=0 // pred_fallthru
    _
  %v17 = vld [vmem:[%s0] sm:$0xff]
  %v18 = vld [vmem:[%s0 + $0x8] sm:$0xff]
  %v19 = vld [vmem:[%s1] sm:$0x3]
  %v21 = vlaneseq
  %v22 = vshrl.u32 %v21, 7
  %v23 = vsub.s32 0, %v22
  %v24 = vrot.slane %v19, %v23
  %v25 = vlaneseq
  %v26 = vshrl.u32 %v25, 7
  %v27 = vsub.s32 1, %v26
  %v28 = vrot.slane %v19, %v27
  %v31 = vadd.f32 %v17, %v24
  %v32 = vadd.f32 %v18, %v28
  %v33 = vld [vmem:[%s2] sm:$0xff]
  %v34 = vld [vmem:[%s2 + $0x8] sm:$0xff]
  %v35 = vadd.f32 %v31, %v33
  %v36 = vadd.f32 %v32, %v34
  %v37 = vld [vmem:[%s3] sm:$0x3]
  %v39 = vlaneseq
  %v40 = vshrl.u32 %v39, 7
  %v41 = vsub.s32 0, %v40
  %v42 = vrot.slane %v37, %v41
  %v43 = vlaneseq
  %v44 = vshrl.u32 %v43, 7
  %v45 = vsub.s32 1, %v44
  %v46 = vrot.slane %v37, %v45
  %v49 = vadd.f32 %v35, %v42
  %v50 = vadd.f32 %v36, %v46
  %v51 = vmax.f32 %v49, 0.0
  %v52 = vmax.f32 %v50, 0.0
  %53 = vst [vmem:[%s4] sm:$0xff] %v51
  %54 = vst [vmem:[%s4 + $0x8] sm:$0xff] %v52
  // Predicated region
  $region18: #{trusformer_forward.14} parent=0 // pred_check
    _
  $region19: #{trusformer_forward.14} parent=0 // pred_check_branch
    %56 = sbr.rel (0) target = $region21
  $region20: #{trusformer_forward.14} parent=0 // pred_region
    _
  $region21: #{trusformer_forward.14} parent=0 // pred_fallthru
    _
  // Predicated region
  $region22: #{trusformer_forward.14} parent=0 // pred_check
    _
  $region23: #{trusformer_forward.14} parent=0 // pred_check_branch
    %58 = sbr.rel (0) target = $region25
  $region24: #{trusformer_forward.14} parent=0 // pred_region
    _
  $region25: #{trusformer_forward.14} parent=0 // pred_fallthru
    _

// kernel: tile.82
$region0: #{tile.82}
  %s0 = inlined_call_operand.vmem [shape: f32[4,32], index: 0, kind: input, shape index: {}]
  %s1 = inlined_call_operand.vmem [shape: f32[1,128], index: 1, kind: output, shape index: {}]
  $region1: #{tile.82} parent=0
    #allocation0 [shape = 'u8[4096]{0}', space=vmem, size = 0x1000, scoped, tag = 'scoped mem for output reshape']
    #allocation1 [shape = 'u8[4096]{0}', space=vmem, size = 0x1000, scoped, tag = 'scoped mem for input reshape']
    %s3 = sshllo.u32 0, 4
    %v4 = vld [vmem:[%s0] sm:%s3]
    %5 = vst [vmem:[#allocation1] sm:%s3] %v4
    %v6 = vld [vmem:[#allocation1] sm:$0x1]
    %vm7 = vcmask 261120
    %8 = vst.msk [vmem:[#allocation0] sm:$0x1] %vm7, %v6
    %s9 = scalar_lea.vmem [#allocation1], 3
    %v10 = vld [vmem:[%s9] sm:$0x1]
    %11 = vrot.lane.b32.xlu0 %v10, 96
    %v12 = vpop.permute.xlu0 %11
    %vm13 = vcmask 1048320
    %14 = vst.msk [vmem:[#allocation0] sm:$0x1] %vm13, %v12
    %s15 = scalar_lea.vmem [#allocation1], 2
    %v16 = vld [vmem:[%s15] sm:$0x1]
    %17 = vrot.lane.b32.xlu0 %v16, 64
    %v18 = vpop.permute.xlu0 %17
    %vm19 = vcmask 785920
    %20 = vst.msk [vmem:[#allocation0] sm:$0x1] %vm19, %v18
    %s21 = scalar_lea.vmem [#allocation1], 1
    %v22 = vld [vmem:[%s21] sm:$0x1]
    %23 = vrot.lane.b32.xlu0 %v22, 32
    %v24 = vpop.permute.xlu0 %23
    %vm25 = vcmask 523520
    %26 = vst.msk [vmem:[#allocation0] sm:$0x1] %vm25, %v24
    %s28 = sshllo.u32 0, 1
    %v30 = vld [vmem:[#allocation0] sm:%s28]
    %s31 = sshllo.u32 0, 1
    %32 = vst [vmem:[%s1] sm:%s31] %v30

// kernel: reverse
$region0: #{reverse}
  #allocation0 [shape = 's32[1]{0}', space=sflag, size = 0x4, scoped, tag = 'scoped memory for reverse']
  %s0 = inlined_call_operand.vmem [shape: bf16[3,3,32,32], index: 0, kind: input, shape index: {}]
  %s1 = inlined_call_operand.vmem [shape: bf16[3,3,32,32], index: 1, kind: output, shape index: {}]
  %s2 = scalar_lea.vmem %s0, 128
  %v3 = vld [vmem:[%s2] sm:$0xf]
  %v4 = vunpack.c.l.bf16 %v3
  %v5 = vunpack.c.h.bf16 %v3
  %v6 = vpack.c.bf16 0.0, %v4
  %7 = vst [vmem:[%s1] sm:$0xf] %v6
  %s8 = scalar_lea.vmem %s0, 80
  %v9 = vld [vmem:[%s8] sm:$0xf]
  %v10 = vunpack.c.l.bf16 %v9
  %v11 = vunpack.c.h.bf16 %v9
  %s12 = scalar_lea.vmem %s1, 48
  %v13 = vpack.c.bf16 0.0, %v10
  %14 = vst [vmem:[%s12] sm:$0xf] %v13
  %s15 = scalar_lea.vmem %s0, 32
  %v16 = vld [vmem:[%s15] sm:$0xf]
  %v17 = vunpack.c.l.bf16 %v16
  %v18 = vunpack.c.h.bf16 %v16
  %s19 = scalar_lea.vmem %s1, 96
  %v20 = vpack.c.bf16 0.0, %v17
  %21 = vst [vmem:[%s19] sm:$0xf] %v20
  %s22 = scalar_lea.vmem %s0, 112
  %v23 = vld [vmem:[%s22] sm:$0xf]
  %v24 = vunpack.c.l.bf16 %v23
  %v25 = vunpack.c.h.bf16 %v23
  %s26 = scalar_lea.vmem %s1, 16
  %v27 = vpack.c.bf16 0.0, %v24
  %28 = vst [vmem:[%s26] sm:$0xf] %v27
  %s29 = scalar_lea.vmem %s0, 64
  %v30 = vld [vmem:[%s29] sm:$0xf]
  %v31 = vunpack.c.l.bf16 %v30
  %v32 = vunpack.c.h.bf16 %v30
  %s33 = scalar_lea.vmem %s1, 64
  %v34 = vpack.c.bf16 0.0, %v31
  %35 = vst [vmem:[%s33] sm:$0xf] %v34
  %s36 = scalar_lea.vmem %s0, 16
  %v37 = vld [vmem:[%s36] sm:$0xf]
  %v38 = vunpack.c.l.bf16 %v37
  %v39 = vunpack.c.h.bf16 %v37
  %s40 = scalar_lea.vmem %s1, 112
  %v41 = vpack.c.bf16 0.0, %v38
  %42 = vst [vmem:[%s40] sm:$0xf] %v41
  %s43 = scalar_lea.vmem %s0, 96
  %v44 = vld [vmem:[%s43] sm:$0xf]
  %v45 = vunpack.c.l.bf16 %v44
  %v46 = vunpack.c.h.bf16 %v44
  %s47 = scalar_lea.vmem %s1, 32
  %v48 = vpack.c.bf16 0.0, %v45
  %49 = vst [vmem:[%s47] sm:$0xf] %v48
  %s50 = scalar_lea.vmem %s0, 48
  %v51 = vld [vmem:[%s50] sm:$0xf]
  %v52 = vunpack.c.l.bf16 %v51
  %v53 = vunpack.c.h.bf16 %v51
  %s54 = scalar_lea.vmem %s1, 80
  %v55 = vpack.c.bf16 0.0, %v52
  %56 = vst [vmem:[%s54] sm:$0xf] %v55
  %v57 = vld [vmem:[%s0] sm:$0xf]
  %v58 = vunpack.c.l.bf16 %v57
  %v59 = vunpack.c.h.bf16 %v57
  %s60 = scalar_lea.vmem %s1, 128
  %v61 = vpack.c.bf16 0.0, %v58
  %62 = vst [vmem:[%s60] sm:$0xf] %v61
  %s63 = scalar_lea.vmem %s0, 132
  %v64 = vld [vmem:[%s63] sm:$0xf]
  %v65 = vunpack.c.l.bf16 %v64
  %v66 = vunpack.c.h.bf16 %v64
  %s67 = scalar_lea.vmem %s1, 4
  %v68 = vpack.c.bf16 0.0, %v65
  %69 = vst [vmem:[%s67] sm:$0xf] %v68
  %s70 = scalar_lea.vmem %s0, 84
  %v71 = vld [vmem:[%s70] sm:$0xf]
  %v72 = vunpack.c.l.bf16 %v71
  %v73 = vunpack.c.h.bf16 %v71
  %s74 = scalar_lea.vmem %s1, 52
  %v75 = vpack.c.bf16 0.0, %v72
  %76 = vst [vmem:[%s74] sm:$0xf] %v75
  %s77 = scalar_lea.vmem %s0, 36
  %v78 = vld [vmem:[%s77] sm:$0xf]
  %v79 = vunpack.c.l.bf16 %v78
  %v80 = vunpack.c.h.bf16 %v78
  %s81 = scalar_lea.vmem %s1, 100
  %v82 = vpack.c.bf16 0.0, %v79
  %83 = vst [vmem:[%s81] sm:$0xf] %v82
  %s84 = scalar_lea.vmem %s0, 116
  %v85 = vld [vmem:[%s84] sm:$0xf]
  %v86 = vunpack.c.l.bf16 %v85
  %v87 = vunpack.c.h.bf16 %v85
  %s88 = scalar_lea.vmem %s1, 20
  %v89 = vpack.c.bf16 0.0, %v86
  %90 = vst [vmem:[%s88] sm:$0xf] %v89
  %s91 = scalar_lea.vmem %s0, 68
  %v92 = vld [vmem:[%s91] sm:$0xf]
  %v93 = vunpack.c.l.bf16 %v92
  %v94 = vunpack.c.h.bf16 %v92
  %s95 = scalar_lea.vmem %s1, 68
  %v96 = vpack.c.bf16 0.0, %v93
  %97 = vst [vmem:[%s95] sm:$0xf] %v96
  %s98 = scalar_lea.vmem %s0, 20
  %v99 = vld [vmem:[%s98] sm:$0xf]
  %v100 = vunpack.c.l.bf16 %v99
  %v101 = vunpack.c.h.bf16 %v99
  %s102 = scalar_lea.vmem %s1, 116
  %v103 = vpack.c.bf16 0.0, %v100
  %104 = vst [vmem:[%s102] sm:$0xf] %v103
  %s105 = scalar_lea.vmem %s0, 100
  %v106 = vld [vmem:[%s105] sm:$0xf]
  %v107 = vunpack.c.l.bf16 %v106
  %v108 = vunpack.c.h.bf16 %v106
  %s109 = scalar_lea.vmem %s1, 36
  %v110 = vpack.c.bf16 0.0, %v107
  %111 = vst [vmem:[%s109] sm:$0xf] %v110
  %s112 = scalar_lea.vmem %s0, 52
  %v113 = vld [vmem:[%s112] sm:$0xf]
  %v114 = vunpack.c.l.bf16 %v113
  %v115 = vunpack.c.h.bf16 %v113
  %s116 = scalar_lea.vmem %s1, 84
  %v117 = vpack.c.bf16 0.0, %v114
  %118 = vst [vmem:[%s116] sm:$0xf] %v117
  %s119 = scalar_lea.vmem %s0, 4
  %v120 = vld [vmem:[%s119] sm:$0xf]
  %v121 = vunpack.c.l.bf16 %v120
  %v122 = vunpack.c.h.bf16 %v120
  %s123 = scalar_lea.vmem %s1, 132
  %v124 = vpack.c.bf16 0.0, %v121
  %125 = vst [vmem:[%s123] sm:$0xf] %v124
  %s126 = scalar_lea.vmem %s0, 136
  %v127 = vld [vmem:[%s126] sm:$0xf]
  %v128 = vunpack.c.l.bf16 %v127
  %v129 = vunpack.c.h.bf16 %v127
  %s130 = scalar_lea.vmem %s1, 8
  %v131 = vpack.c.bf16 0.0, %v128
  %132 = vst [vmem:[%s130] sm:$0xf] %v131
  %s133 = scalar_lea.vmem %s0, 88
  %v134 = vld [vmem:[%s133] sm:$0xf]
  %v135 = vunpack.c.l.bf16 %v134
  %v136 = vunpack.c.h.bf16 %v134
  %s137 = scalar_lea.vmem %s1, 56
  %v138 = vpack.c.bf16 0.0, %v135
  %139 = vst [vmem:[%s137] sm:$0xf] %v138
  %s140 = scalar_lea.vmem %s0, 40
  %v141 = vld [vmem:[%s140] sm:$0xf]
  %v142 = vunpack.c.l.bf16 %v141
  %v143 = vunpack.c.h.bf16 %v141
  %s144 = scalar_lea.vmem %s1, 104
  %v145 = vpack.c.bf16 0.0, %v142
  %146 = vst [vmem:[%s144] sm:$0xf] %v145
  %s147 = scalar_lea.vmem %s0, 120
  %v148 = vld [vmem:[%s147] sm:$0xf]
  %v149 = vunpack.c.l.bf16 %v148
  %v150 = vunpack.c.h.bf16 %v148
  %s151 = scalar_lea.vmem %s1, 24
  %v152 = vpack.c.bf16 0.0, %v149
  %153 = vst [vmem:[%s151] sm:$0xf] %v152
  %s154 = scalar_lea.vmem %s0, 72
  %v155 = vld [vmem:[%s154] sm:$0xf]
  %v156 = vunpack.c.l.bf16 %v155
  %v157 = vunpack.c.h.bf16 %v155
  %s158 = scalar_lea.vmem %s1, 72
  %v159 = vpack.c.bf16 0.0, %v156
  %160 = vst [vmem:[%s158] sm:$0xf] %v159
  %s161 = scalar_lea.vmem %s0, 24
  %v162 = vld [vmem:[%s161] sm:$0xf]
  %v163 = vunpack.c.l.bf16 %v162
  %v164 = vunpack.c.h.bf16 %v162
  %s165 = scalar_lea.vmem %s1, 120
  %v166 = vpack.c.bf16 0.0, %v163
  %167 = vst [vmem:[%s165] sm:$0xf] %v166
  %s168 = scalar_lea.vmem %s0, 104
  %v169 = vld [vmem:[%s168] sm:$0xf]
  %v170 = vunpack.c.l.bf16 %v169
  %v171 = vunpack.c.h.bf16 %v169
  %s172 = scalar_lea.vmem %s1, 40
  %v173 = vpack.c.bf16 0.0, %v170
  %174 = vst [vmem:[%s172] sm:$0xf] %v173
  %s175 = scalar_lea.vmem %s0, 56
  %v176 = vld [vmem:[%s175] sm:$0xf]
  %v177 = vunpack.c.l.bf16 %v176
  %v178 = vunpack.c.h.bf16 %v176
  %s179 = scalar_lea.vmem %s1, 88
  %v180 = vpack.c.bf16 0.0, %v177
  %181 = vst [vmem:[%s179] sm:$0xf] %v180
  %s182 = scalar_lea.vmem %s0, 8
  %v183 = vld [vmem:[%s182] sm:$0xf]
  %v184 = vunpack.c.l.bf16 %v183
  %v185 = vunpack.c.h.bf16 %v183
  %s186 = scalar_lea.vmem %s1, 136
  %v187 = vpack.c.bf16 0.0, %v184
  %188 = vst [vmem:[%s186] sm:$0xf] %v187
  %s189 = scalar_lea.vmem %s0, 140
  %v190 = vld [vmem:[%s189] sm:$0xf]
  %v191 = vunpack.c.l.bf16 %v190
  %v192 = vunpack.c.h.bf16 %v190
  %s193 = scalar_lea.vmem %s1, 12
  %v194 = vpack.c.bf16 0.0, %v191
  %195 = vst [vmem:[%s193] sm:$0xf] %v194
  %s196 = scalar_lea.vmem %s0, 92
  %v197 = vld [vmem:[%s196] sm:$0xf]
  %v198 = vunpack.c.l.bf16 %v197
  %v199 = vunpack.c.h.bf16 %v197
  %s200 = scalar_lea.vmem %s1, 60
  %v201 = vpack.c.bf16 0.0, %v198
  %202 = vst [vmem:[%s200] sm:$0xf] %v201
  %s203 = scalar_lea.vmem %s0, 44
  %v204 = vld [vmem:[%s203] sm:$0xf]
  %v205 = vunpack.c.l.bf16 %v204
  %v206 = vunpack.c.h.bf16 %v204
  %s207 = scalar_lea.vmem %s1, 108
  %v208 = vpack.c.bf16 0.0, %v205
  %209 = vst [vmem:[%s207] sm:$0xf] %v208
  %s210 = scalar_lea.vmem %s0, 124
  %v211 = vld [vmem:[%s210] sm:$0xf]
  %v212 = vunpack.c.l.bf16 %v211
  %v213 = vunpack.c.h.bf16 %v211
  %s214 = scalar_lea.vmem %s1, 28
  %v215 = vpack.c.bf16 0.0, %v212
  %216 = vst [vmem:[%s214] sm:$0xf] %v215
  %s217 = scalar_lea.vmem %s0, 76
  %v218 = vld [vmem:[%s217] sm:$0xf]
  %v219 = vunpack.c.l.bf16 %v218
  %v220 = vunpack.c.h.bf16 %v218
  %s221 = scalar_lea.vmem %s1, 76
  %v222 = vpack.c.bf16 0.0, %v219
  %223 = vst [vmem:[%s221] sm:$0xf] %v222
  %s224 = scalar_lea.vmem %s0, 28
  %v225 = vld [vmem:[%s224] sm:$0xf]
  %v226 = vunpack.c.l.bf16 %v225
  %v227 = vunpack.c.h.bf16 %v225
  %s228 = scalar_lea.vmem %s1, 124
  %v229 = vpack.c.bf16 0.0, %v226
  %230 = vst [vmem:[%s228] sm:$0xf] %v229
  %s231 = scalar_lea.vmem %s0, 108
  %v232 = vld [vmem:[%s231] sm:$0xf]
  %v233 = vunpack.c.l.bf16 %v232
  %v234 = vunpack.c.h.bf16 %v232
  %s235 = scalar_lea.vmem %s1, 44
  %v236 = vpack.c.bf16 0.0, %v233
  %237 = vst [vmem:[%s235] sm:$0xf] %v236
  %s238 = scalar_lea.vmem %s0, 60
  %v239 = vld [vmem:[%s238] sm:$0xf]
  %v240 = vunpack.c.l.bf16 %v239
  %v241 = vunpack.c.h.bf16 %v239
  %s242 = scalar_lea.vmem %s1, 92
  %v243 = vpack.c.bf16 0.0, %v240
  %244 = vst [vmem:[%s242] sm:$0xf] %v243
  %s245 = scalar_lea.vmem %s0, 12
  %v246 = vld [vmem:[%s245] sm:$0xf]
  %v247 = vunpack.c.l.bf16 %v246
  %v248 = vunpack.c.h.bf16 %v246
  %s249 = scalar_lea.vmem %s1, 140
  %v250 = vpack.c.bf16 0.0, %v247
  %251 = vst [vmem:[%s249] sm:$0xf] %v250

// kernel: trusformer_forward.15
$region0: #{trusformer_forward.15}
  #allocation0 [shape = 'u32[]', space=smem, size = 0x4, offset = 0x4, fixed_abs, tag = 'smem constant byte address 0x4 - core index']
  #allocation1 [shape = 'u32[144,128]{1,0:T(1,128)}', space=vmem, size = 0x12000, scoped, tag = 'internal scratch']
  %s0 = inlined_call_operand.vmem [shape: f32[8,128], index: 0, kind: input, shape index: {}]
  %s1 = inlined_call_operand.vmem [shape: f32[1,128], index: 1, kind: input, shape index: {}]
  %s2 = inlined_call_operand.vmem [shape: f32[8,128], index: 2, kind: output, shape index: {}]
  %s3 = sld [smem:[#allocation0]]
  $region18: #{trusformer_forward.15} parent=0
    _
  %s5 = ssub.s32 1, %s3
  %s6 = scalar_select 0, %s5, %s3
  // Predicated region
  $region2: #{trusformer_forward.15} parent=0 // pred_check
    _
  $region3: #{trusformer_forward.15} parent=0 // pred_check_branch
    %8 = sbr.rel (0) target = $region5
  $region4: #{trusformer_forward.15} parent=0 // pred_region
    _
  $region5: #{trusformer_forward.15} parent=0 // pred_fallthru
    _
  // Predicated region
  $region6: #{trusformer_forward.15} parent=0 // pred_check
    _
  $region7: #{trusformer_forward.15} parent=0 // pred_check_branch
    %10 = sbr.rel (0) target = $region9
  $region8: #{trusformer_forward.15} parent=0 // pred_region
    _
  $region9: #{trusformer_forward.15} parent=0 // pred_fallthru
    _
  %v11 = vld [vmem:[%s0] sm:$0xff]
  %v12 = vld [vmem:[%s1] sm:$0x1]
  %v14 = vlaneseq
  %v15 = vshrl.u32 %v14, 7
  %v16 = vsub.s32 0, %v15
  %v17 = vrot.slane %v12, %v16
  %v19 = vadd.f32 %v11, %v17
  %v20 = vmax.f32 %v19, 0.0
  %21 = vst [vmem:[%s2] sm:$0xff] %v20
  // Predicated region
  $region10: #{trusformer_forward.15} parent=0 // pred_check
    _
  $region11: #{trusformer_forward.15} parent=0 // pred_check_branch
    %23 = sbr.rel (0) target = $region13
  $region12: #{trusformer_forward.15} parent=0 // pred_region
    _
  $region13: #{trusformer_forward.15} parent=0 // pred_fallthru
    _
  // Predicated region
  $region14: #{trusformer_forward.15} parent=0 // pred_check
    _
  $region15: #{trusformer_forward.15} parent=0 // pred_check_branch
    %25 = sbr.rel (0) target = $region17
  $region16: #{trusformer_forward.15} parent=0 // pred_region
    _
  $region17: #{trusformer_forward.15} parent=0 // pred_fallthru
    _

// kernel: reverse.1
$region0: #{reverse.1}
  #allocation0 [shape = 's32[1]{0}', space=sflag, size = 0x4, scoped, tag = 'scoped memory for reverse.1']
  %s0 = inlined_call_operand.vmem [shape: bf16[3,3,32,64], index: 0, kind: input, shape index: {}]
  %s1 = inlined_call_operand.vmem [shape: bf16[3,3,32,64], index: 1, kind: output, shape index: {}]
  %s2 = scalar_lea.vmem %s0, 128
  %v3 = vld [vmem:[%s2] sm:$0xf]
  %v4 = vunpack.c.l.bf16 %v3
  %v5 = vunpack.c.h.bf16 %v3
  %v6 = vpack.c.bf16 0.0, %v4
  %7 = vst [vmem:[%s1] sm:$0xf] %v6
  %s8 = scalar_lea.vmem %s0, 80
  %v9 = vld [vmem:[%s8] sm:$0xf]
  %v10 = vunpack.c.l.bf16 %v9
  %v11 = vunpack.c.h.bf16 %v9
  %s12 = scalar_lea.vmem %s1, 48
  %v13 = vpack.c.bf16 0.0, %v10
  %14 = vst [vmem:[%s12] sm:$0xf] %v13
  %s15 = scalar_lea.vmem %s0, 32
  %v16 = vld [vmem:[%s15] sm:$0xf]
  %v17 = vunpack.c.l.bf16 %v16
  %v18 = vunpack.c.h.bf16 %v16
  %s19 = scalar_lea.vmem %s1, 96
  %v20 = vpack.c.bf16 0.0, %v17
  %21 = vst [vmem:[%s19] sm:$0xf] %v20
  %s22 = scalar_lea.vmem %s0, 112
  %v23 = vld [vmem:[%s22] sm:$0xf]
  %v24 = vunpack.c.l.bf16 %v23
  %v25 = vunpack.c.h.bf16 %v23
  %s26 = scalar_lea.vmem %s1, 16
  %v27 = vpack.c.bf16 0.0, %v24
  %28 = vst [vmem:[%s26] sm:$0xf] %v27
  %s29 = scalar_lea.vmem %s0, 64
  %v30 = vld [vmem:[%s29] sm:$0xf]
  %v31 = vunpack.c.l.bf16 %v30
  %v32 = vunpack.c.h.bf16 %v30
  %s33 = scalar_lea.vmem %s1, 64
  %v34 = vpack.c.bf16 0.0, %v31
  %35 = vst [vmem:[%s33] sm:$0xf] %v34
  %s36 = scalar_lea.vmem %s0, 16
  %v37 = vld [vmem:[%s36] sm:$0xf]
  %v38 = vunpack.c.l.bf16 %v37
  %v39 = vunpack.c.h.bf16 %v37
  %s40 = scalar_lea.vmem %s1, 112
  %v41 = vpack.c.bf16 0.0, %v38
  %42 = vst [vmem:[%s40] sm:$0xf] %v41
  %s43 = scalar_lea.vmem %s0, 96
  %v44 = vld [vmem:[%s43] sm:$0xf]
  %v45 = vunpack.c.l.bf16 %v44
  %v46 = vunpack.c.h.bf16 %v44
  %s47 = scalar_lea.vmem %s1, 32
  %v48 = vpack.c.bf16 0.0, %v45
  %49 = vst [vmem:[%s47] sm:$0xf] %v48
  %s50 = scalar_lea.vmem %s0, 48
  %v51 = vld [vmem:[%s50] sm:$0xf]
  %v52 = vunpack.c.l.bf16 %v51
  %v53 = vunpack.c.h.bf16 %v51
  %s54 = scalar_lea.vmem %s1, 80
  %v55 = vpack.c.bf16 0.0, %v52
  %56 = vst [vmem:[%s54] sm:$0xf] %v55
  %v57 = vld [vmem:[%s0] sm:$0xf]
  %v58 = vunpack.c.l.bf16 %v57
  %v59 = vunpack.c.h.bf16 %v57
  %s60 = scalar_lea.vmem %s1, 128
  %v61 = vpack.c.bf16 0.0, %v58
  %62 = vst [vmem:[%s60] sm:$0xf] %v61
  %s63 = scalar_lea.vmem %s0, 132
  %v64 = vld [vmem:[%s63] sm:$0xf]
  %v65 = vunpack.c.l.bf16 %v64
  %v66 = vunpack.c.h.bf16 %v64
  %s67 = scalar_lea.vmem %s1, 4
  %v68 = vpack.c.bf16 0.0, %v65
  %69 = vst [vmem:[%s67] sm:$0xf] %v68
  %s70 = scalar_lea.vmem %s0, 84
  %v71 = vld [vmem:[%s70] sm:$0xf]
  %v72 = vunpack.c.l.bf16 %v71
  %v73 = vunpack.c.h.bf16 %v71
  %s74 = scalar_lea.vmem %s1, 52
  %v75 = vpack.c.bf16 0.0, %v72
  %76 = vst [vmem:[%s74] sm:$0xf] %v75
  %s77 = scalar_lea.vmem %s0, 36
  %v78 = vld [vmem:[%s77] sm:$0xf]
  %v79 = vunpack.c.l.bf16 %v78
  %v80 = vunpack.c.h.bf16 %v78
  %s81 = scalar_lea.vmem %s1, 100
  %v82 = vpack.c.bf16 0.0, %v79
  %83 = vst [vmem:[%s81] sm:$0xf] %v82
  %s84 = scalar_lea.vmem %s0, 116
  %v85 = vld [vmem:[%s84] sm:$0xf]
  %v86 = vunpack.c.l.bf16 %v85
  %v87 = vunpack.c.h.bf16 %v85
  %s88 = scalar_lea.vmem %s1, 20
  %v89 = vpack.c.bf16 0.0, %v86
  %90 = vst [vmem:[%s88] sm:$0xf] %v89
  %s91 = scalar_lea.vmem %s0, 68
  %v92 = vld [vmem:[%s91] sm:$0xf]
  %v93 = vunpack.c.l.bf16 %v92
  %v94 = vunpack.c.h.bf16 %v92
  %s95 = scalar_lea.vmem %s1, 68
  %v96 = vpack.c.bf16 0.0, %v93
  %97 = vst [vmem:[%s95] sm:$0xf] %v96
  %s98 = scalar_lea.vmem %s0, 20
  %v99 = vld [vmem:[%s98] sm:$0xf]
  %v100 = vunpack.c.l.bf16 %v99
  %v101 = vunpack.c.h.bf16 %v99
  %s102 = scalar_lea.vmem %s1, 116
  %v103 = vpack.c.bf16 0.0, %v100
  %104 = vst [vmem:[%s102] sm:$0xf] %v103
  %s105 = scalar_lea.vmem %s0, 100
  %v106 = vld [vmem:[%s105] sm:$0xf]
  %v107 = vunpack.c.l.bf16 %v106
  %v108 = vunpack.c.h.bf16 %v106
  %s109 = scalar_lea.vmem %s1, 36
  %v110 = vpack.c.bf16 0.0, %v107
  %111 = vst [vmem:[%s109] sm:$0xf] %v110
  %s112 = scalar_lea.vmem %s0, 52
  %v113 = vld [vmem:[%s112] sm:$0xf]
  %v114 = vunpack.c.l.bf16 %v113
  %v115 = vunpack.c.h.bf16 %v113
  %s116 = scalar_lea.vmem %s1, 84
  %v117 = vpack.c.bf16 0.0, %v114
  %118 = vst [vmem:[%s116] sm:$0xf] %v117
  %s119 = scalar_lea.vmem %s0, 4
  %v120 = vld [vmem:[%s119] sm:$0xf]
  %v121 = vunpack.c.l.bf16 %v120
  %v122 = vunpack.c.h.bf16 %v120
  %s123 = scalar_lea.vmem %s1, 132
  %v124 = vpack.c.bf16 0.0, %v121
  %125 = vst [vmem:[%s123] sm:$0xf] %v124
  %s126 = scalar_lea.vmem %s0, 136
  %v127 = vld [vmem:[%s126] sm:$0xf]
  %v128 = vunpack.c.l.bf16 %v127
  %v129 = vunpack.c.h.bf16 %v127
  %s130 = scalar_lea.vmem %s1, 8
  %v131 = vpack.c.bf16 0.0, %v128
  %132 = vst [vmem:[%s130] sm:$0xf] %v131
  %s133 = scalar_lea.vmem %s0, 88
  %v134 = vld [vmem:[%s133] sm:$0xf]
  %v135 = vunpack.c.l.bf16 %v134
  %v136 = vunpack.c.h.bf16 %v134
  %s137 = scalar_lea.vmem %s1, 56
  %v138 = vpack.c.bf16 0.0, %v135
  %139 = vst [vmem:[%s137] sm:$0xf] %v138
  %s140 = scalar_lea.vmem %s0, 40
  %v141 = vld [vmem:[%s140] sm:$0xf]
  %v142 = vunpack.c.l.bf16 %v141
  %v143 = vunpack.c.h.bf16 %v141
  %s144 = scalar_lea.vmem %s1, 104
  %v145 = vpack.c.bf16 0.0, %v142
  %146 = vst [vmem:[%s144] sm:$0xf] %v145
  %s147 = scalar_lea.vmem %s0, 120
  %v148 = vld [vmem:[%s147] sm:$0xf]
  %v149 = vunpack.c.l.bf16 %v148
  %v150 = vunpack.c.h.bf16 %v148
  %s151 = scalar_lea.vmem %s1, 24
  %v152 = vpack.c.bf16 0.0, %v149
  %153 = vst [vmem:[%s151] sm:$0xf] %v152
  %s154 = scalar_lea.vmem %s0, 72
  %v155 = vld [vmem:[%s154] sm:$0xf]
  %v156 = vunpack.c.l.bf16 %v155
  %v157 = vunpack.c.h.bf16 %v155
  %s158 = scalar_lea.vmem %s1, 72
  %v159 = vpack.c.bf16 0.0, %v156
  %160 = vst [vmem:[%s158] sm:$0xf] %v159
  %s161 = scalar_lea.vmem %s0, 24
  %v162 = vld [vmem:[%s161] sm:$0xf]
  %v163 = vunpack.c.l.bf16 %v162
  %v164 = vunpack.c.h.bf16 %v162
  %s165 = scalar_lea.vmem %s1, 120
  %v166 = vpack.c.bf16 0.0, %v163
  %167 = vst [vmem:[%s165] sm:$0xf] %v166
  %s168 = scalar_lea.vmem %s0, 104
  %v169 = vld [vmem:[%s168] sm:$0xf]
  %v170 = vunpack.c.l.bf16 %v169
  %v171 = vunpack.c.h.bf16 %v169
  %s172 = scalar_lea.vmem %s1, 40
  %v173 = vpack.c.bf16 0.0, %v170
  %174 = vst [vmem:[%s172] sm:$0xf] %v173
  %s175 = scalar_lea.vmem %s0, 56
  %v176 = vld [vmem:[%s175] sm:$0xf]
  %v177 = vunpack.c.l.bf16 %v176
  %v178 = vunpack.c.h.bf16 %v176
  %s179 = scalar_lea.vmem %s1, 88
  %v180 = vpack.c.bf16 0.0, %v177
  %181 = vst [vmem:[%s179] sm:$0xf] %v180
  %s182 = scalar_lea.vmem %s0, 8
  %v183 = vld [vmem:[%s182] sm:$0xf]
  %v184 = vunpack.c.l.bf16 %v183
  %v185 = vunpack.c.h.bf16 %v183
  %s186 = scalar_lea.vmem %s1, 136
  %v187 = vpack.c.bf16 0.0, %v184
  %188 = vst [vmem:[%s186] sm:$0xf] %v187
  %s189 = scalar_lea.vmem %s0, 140
  %v190 = vld [vmem:[%s189] sm:$0xf]
  %v191 = vunpack.c.l.bf16 %v190
  %v192 = vunpack.c.h.bf16 %v190
  %s193 = scalar_lea.vmem %s1, 12
  %v194 = vpack.c.bf16 0.0, %v191
  %195 = vst [vmem:[%s193] sm:$0xf] %v194
  %s196 = scalar_lea.vmem %s0, 92
  %v197 = vld [vmem:[%s196] sm:$0xf]
  %v198 = vunpack.c.l.bf16 %v197
  %v199 = vunpack.c.h.bf16 %v197
  %s200 = scalar_lea.vmem %s1, 60
  %v201 = vpack.c.bf16 0.0, %v198
  %202 = vst [vmem:[%s200] sm:$0xf] %v201
  %s203 = scalar_lea.vmem %s0, 44
  %v204 = vld [vmem:[%s203] sm:$0xf]
  %v205 = vunpack.c.l.bf16 %v204
  %v206 = vunpack.c.h.bf16 %v204
  %s207 = scalar_lea.vmem %s1, 108
  %v208 = vpack.c.bf16 0.0, %v205
  %209 = vst [vmem:[%s207] sm:$0xf] %v208
  %s210 = scalar_lea.vmem %s0, 124
  %v211 = vld [vmem:[%s210] sm:$0xf]
  %v212 = vunpack.c.l.bf16 %v211
  %v213 = vunpack.c.h.bf16 %v211
  %s214 = scalar_lea.vmem %s1, 28
  %v215 = vpack.c.bf16 0.0, %v212
  %216 = vst [vmem:[%s214] sm:$0xf] %v215
  %s217 = scalar_lea.vmem %s0, 76
  %v218 = vld [vmem:[%s217] sm:$0xf]
  %v219 = vunpack.c.l.bf16 %v218
  %v220 = vunpack.c.h.bf16 %v218
  %s221 = scalar_lea.vmem %s1, 76
  %v222 = vpack.c.bf16 0.0, %v219
  %223 = vst [vmem:[%s221] sm:$0xf] %v222
  %s224 = scalar_lea.vmem %s0, 28
  %v225 = vld [vmem:[%s224] sm:$0xf]
  %v226 = vunpack.c.l.bf16 %v225
  %v227 = vunpack.c.h.bf16 %v225
  %s228 = scalar_lea.vmem %s1, 124
  %v229 = vpack.c.bf16 0.0, %v226
  %230 = vst [vmem:[%s228] sm:$0xf] %v229
  %s231 = scalar_lea.vmem %s0, 108
  %v232 = vld [vmem:[%s231] sm:$0xf]
  %v233 = vunpack.c.l.bf16 %v232
  %v234 = vunpack.c.h.bf16 %v232
  %s235 = scalar_lea.vmem %s1, 44
  %v236 = vpack.c.bf16 0.0, %v233
  %237 = vst [vmem:[%s235] sm:$0xf] %v236
  %s238 = scalar_lea.vmem %s0, 60
  %v239 = vld [vmem:[%s238] sm:$0xf]
  %v240 = vunpack.c.l.bf16 %v239
  %v241 = vunpack.c.h.bf16 %v239
  %s242 = scalar_lea.vmem %s1, 92
  %v243 = vpack.c.bf16 0.0, %v240
  %244 = vst [vmem:[%s242] sm:$0xf] %v243
  %s245 = scalar_lea.vmem %s0, 12
  %v246 = vld [vmem:[%s245] sm:$0xf]
  %v247 = vunpack.c.l.bf16 %v246
  %v248 = vunpack.c.h.bf16 %v246
  %s249 = scalar_lea.vmem %s1, 140
  %v250 = vpack.c.bf16 0.0, %v247
  %251 = vst [vmem:[%s249] sm:$0xf] %v250

// kernel: trusformer_forward.16
$region0: #{trusformer_forward.16}
  #allocation0 [shape = 'u32[]', space=smem, size = 0x4, offset = 0x4, fixed_abs, tag = 'smem constant byte address 0x4 - core index']
  #allocation1 [shape = 'u32[144,128]{1,0:T(1,128)}', space=vmem, size = 0x12000, scoped, tag = 'internal scratch']
  %s0 = inlined_call_operand.vmem [shape: f32[8,128], index: 0, kind: input, shape index: {}]
  %s1 = inlined_call_operand.vmem [shape: f32[1,128], index: 1, kind: input, shape index: {}]
  %s2 = inlined_call_operand.vmem [shape: f32[8,128], index: 2, kind: input, shape index: {}]
  %s3 = inlined_call_operand.vmem [shape: f32[1,128], index: 3, kind: input, shape index: {}]
  %s4 = inlined_call_operand.vmem [shape: f32[8,128], index: 4, kind: output, shape index: {}]
  %s5 = sld [smem:[#allocation0]]
  $region26: #{trusformer_forward.16} parent=0
    _
  %s7 = ssub.s32 1, %s5
  %s8 = scalar_select 0, %s7, %s5
  // Predicated region
  $region2: #{trusformer_forward.16} parent=0 // pred_check
    _
  $region3: #{trusformer_forward.16} parent=0 // pred_check_branch
    %10 = sbr.rel (0) target = $region5
  $region4: #{trusformer_forward.16} parent=0 // pred_region
    _
  $region5: #{trusformer_forward.16} parent=0 // pred_fallthru
    _
  // Predicated region
  $region6: #{trusformer_forward.16} parent=0 // pred_check
    _
  $region7: #{trusformer_forward.16} parent=0 // pred_check_branch
    %12 = sbr.rel (0) target = $region9
  $region8: #{trusformer_forward.16} parent=0 // pred_region
    _
  $region9: #{trusformer_forward.16} parent=0 // pred_fallthru
    _
  // Predicated region
  $region10: #{trusformer_forward.16} parent=0 // pred_check
    _
  $region11: #{trusformer_forward.16} parent=0 // pred_check_branch
    %14 = sbr.rel (0) target = $region13
  $region12: #{trusformer_forward.16} parent=0 // pred_region
    _
  $region13: #{trusformer_forward.16} parent=0 // pred_fallthru
    _
  // Predicated region
  $region14: #{trusformer_forward.16} parent=0 // pred_check
    _
  $region15: #{trusformer_forward.16} parent=0 // pred_check_branch
    %16 = sbr.rel (0) target = $region17
  $region16: #{trusformer_forward.16} parent=0 // pred_region
    _
  $region17: #{trusformer_forward.16} parent=0 // pred_fallthru
    _
  %v17 = vld [vmem:[%s0] sm:$0xff]
  %v18 = vld [vmem:[%s1] sm:$0x1]
  %v20 = vlaneseq
  %v21 = vshrl.u32 %v20, 7
  %v22 = vsub.s32 0, %v21
  %v23 = vrot.slane %v18, %v22
  %v25 = vadd.f32 %v17, %v23
  %v26 = vld [vmem:[%s2] sm:$0xff]
  %v27 = vadd.f32 %v25, %v26
  %v28 = vld [vmem:[%s3] sm:$0x1]
  %v30 = vlaneseq
  %v31 = vshrl.u32 %v30, 7
  %v32 = vsub.s32 0, %v31
  %v33 = vrot.slane %v28, %v32
  %v35 = vadd.f32 %v27, %v33
  %v36 = vmax.f32 %v35, 0.0
  %37 = vst [vmem:[%s4] sm:$0xff] %v36
  // Predicated region
  $region18: #{trusformer_forward.16} parent=0 // pred_check
    _
  $region19: #{trusformer_forward.16} parent=0 // pred_check_branch
    %39 = sbr.rel (0) target = $region21
  $region20: #{trusformer_forward.16} parent=0 // pred_region
    _
  $region21: #{trusformer_forward.16} parent=0 // pred_fallthru
    _
  // Predicated region
  $region22: #{trusformer_forward.16} parent=0 // pred_check
    _
  $region23: #{trusformer_forward.16} parent=0 // pred_check_branch
    %41 = sbr.rel (0) target = $region25
  $region24: #{trusformer_forward.16} parent=0 // pred_region
    _
  $region25: #{trusformer_forward.16} parent=0 // pred_fallthru
    _

// kernel: reverse.2
$region0: #{reverse.2}
  #allocation0 [shape = 's32[1]{0}', space=sflag, size = 0x4, scoped, tag = 'scoped memory for reverse.2']
  %s0 = inlined_call_operand.vmem [shape: bf16[3,3,64,64], index: 0, kind: input, shape index: {}]
  %s1 = inlined_call_operand.vmem [shape: bf16[3,3,64,64], index: 1, kind: output, shape index: {}]
  %s2 = scalar_lea.vmem %s0, 256
  %v3 = vld [vmem:[%s2] sm:$0xf]
  %v4 = vunpack.c.l.bf16 %v3
  %v5 = vunpack.c.h.bf16 %v3
  %v6 = vpack.c.bf16 0.0, %v4
  %7 = vst [vmem:[%s1] sm:$0xf] %v6
  %s8 = scalar_lea.vmem %s0, 160
  %v9 = vld [vmem:[%s8] sm:$0xf]
  %v10 = vunpack.c.l.bf16 %v9
  %v11 = vunpack.c.h.bf16 %v9
  %s12 = scalar_lea.vmem %s1, 96
  %v13 = vpack.c.bf16 0.0, %v10
  %14 = vst [vmem:[%s12] sm:$0xf] %v13
  %s15 = scalar_lea.vmem %s0, 64
  %v16 = vld [vmem:[%s15] sm:$0xf]
  %v17 = vunpack.c.l.bf16 %v16
  %v18 = vunpack.c.h.bf16 %v16
  %s19 = scalar_lea.vmem %s1, 192
  %v20 = vpack.c.bf16 0.0, %v17
  %21 = vst [vmem:[%s19] sm:$0xf] %v20
  %s22 = scalar_lea.vmem %s0, 224
  %v23 = vld [vmem:[%s22] sm:$0xf]
  %v24 = vunpack.c.l.bf16 %v23
  %v25 = vunpack.c.h.bf16 %v23
  %s26 = scalar_lea.vmem %s1, 32
  %v27 = vpack.c.bf16 0.0, %v24
  %28 = vst [vmem:[%s26] sm:$0xf] %v27
  %s29 = scalar_lea.vmem %s0, 128
  %v30 = vld [vmem:[%s29] sm:$0xf]
  %v31 = vunpack.c.l.bf16 %v30
  %v32 = vunpack.c.h.bf16 %v30
  %s33 = scalar_lea.vmem %s1, 128
  %v34 = vpack.c.bf16 0.0, %v31
  %35 = vst [vmem:[%s33] sm:$0xf] %v34
  %s36 = scalar_lea.vmem %s0, 32
  %v37 = vld [vmem:[%s36] sm:$0xf]
  %v38 = vunpack.c.l.bf16 %v37
  %v39 = vunpack.c.h.bf16 %v37
  %s40 = scalar_lea.vmem %s1, 224
  %v41 = vpack.c.bf16 0.0, %v38
  %42 = vst [vmem:[%s40] sm:$0xf] %v41
  %s43 = scalar_lea.vmem %s0, 192
  %v44 = vld [vmem:[%s43] sm:$0xf]
  %v45 = vunpack.c.l.bf16 %v44
  %v46 = vunpack.c.h.bf16 %v44
  %s47 = scalar_lea.vmem %s1, 64
  %v48 = vpack.c.bf16 0.0, %v45
  %49 = vst [vmem:[%s47] sm:$0xf] %v48
  %s50 = scalar_lea.vmem %s0, 96
  %v51 = vld [vmem:[%s50] sm:$0xf]
  %v52 = vunpack.c.l.bf16 %v51
  %v53 = vunpack.c.h.bf16 %v51
  %s54 = scalar_lea.vmem %s1, 160
  %v55 = vpack.c.bf16 0.0, %v52
  %56 = vst [vmem:[%s54] sm:$0xf] %v55
  %v57 = vld [vmem:[%s0] sm:$0xf]
  %v58 = vunpack.c.l.bf16 %v57
  %v59 = vunpack.c.h.bf16 %v57
  %s60 = scalar_lea.vmem %s1, 256
  %v61 = vpack.c.bf16 0.0, %v58
  %62 = vst [vmem:[%s60] sm:$0xf] %v61
  %s63 = scalar_lea.vmem %s0, 260
  %v64 = vld [vmem:[%s63] sm:$0xf]
  %v65 = vunpack.c.l.bf16 %v64
  %v66 = vunpack.c.h.bf16 %v64
  %s67 = scalar_lea.vmem %s1, 4
  %v68 = vpack.c.bf16 0.0, %v65
  %69 = vst [vmem:[%s67] sm:$0xf] %v68
  %s70 = scalar_lea.vmem %s0, 164
  %v71 = vld [vmem:[%s70] sm:$0xf]
  %v72 = vunpack.c.l.bf16 %v71
  %v73 = vunpack.c.h.bf16 %v71
  %s74 = scalar_lea.vmem %s1, 100
  %v75 = vpack.c.bf16 0.0, %v72
  %76 = vst [vmem:[%s74] sm:$0xf] %v75
  %s77 = scalar_lea.vmem %s0, 68
  %v78 = vld [vmem:[%s77] sm:$0xf]
  %v79 = vunpack.c.l.bf16 %v78
  %v80 = vunpack.c.h.bf16 %v78
  %s81 = scalar_lea.vmem %s1, 196
  %v82 = vpack.c.bf16 0.0, %v79
  %83 = vst [vmem:[%s81] sm:$0xf] %v82
  %s84 = scalar_lea.vmem %s0, 228
  %v85 = vld [vmem:[%s84] sm:$0xf]
  %v86 = vunpack.c.l.bf16 %v85
  %v87 = vunpack.c.h.bf16 %v85
  %s88 = scalar_lea.vmem %s1, 36
  %v89 = vpack.c.bf16 0.0, %v86
  %90 = vst [vmem:[%s88] sm:$0xf] %v89
  %s91 = scalar_lea.vmem %s0, 132
  %v92 = vld [vmem:[%s91] sm:$0xf]
  %v93 = vunpack.c.l.bf16 %v92
  %v94 = vunpack.c.h.bf16 %v92
  %s95 = scalar_lea.vmem %s1, 132
  %v96 = vpack.c.bf16 0.0, %v93
  %97 = vst [vmem:[%s95] sm:$0xf] %v96
  %s98 = scalar_lea.vmem %s0, 36
  %v99 = vld [vmem:[%s98] sm:$0xf]
  %v100 = vunpack.c.l.bf16 %v99
  %v101 = vunpack.c.h.bf16 %v99
  %s102 = scalar_lea.vmem %s1, 228
  %v103 = vpack.c.bf16 0.0, %v100
  %104 = vst [vmem:[%s102] sm:$0xf] %v103
  %s105 = scalar_lea.vmem %s0, 196
  %v106 = vld [vmem:[%s105] sm:$0xf]
  %v107 = vunpack.c.l.bf16 %v106
  %v108 = vunpack.c.h.bf16 %v106
  %s109 = scalar_lea.vmem %s1, 68
  %v110 = vpack.c.bf16 0.0, %v107
  %111 = vst [vmem:[%s109] sm:$0xf] %v110
  %s112 = scalar_lea.vmem %s0, 100
  %v113 = vld [vmem:[%s112] sm:$0xf]
  %v114 = vunpack.c.l.bf16 %v113
  %v115 = vunpack.c.h.bf16 %v113
  %s116 = scalar_lea.vmem %s1, 164
  %v117 = vpack.c.bf16 0.0, %v114
  %118 = vst [vmem:[%s116] sm:$0xf] %v117
  %s119 = scalar_lea.vmem %s0, 4
  %v120 = vld [vmem:[%s119] sm:$0xf]
  %v121 = vunpack.c.l.bf16 %v120
  %v122 = vunpack.c.h.bf16 %v120
  %s123 = scalar_lea.vmem %s1, 260
  %v124 = vpack.c.bf16 0.0, %v121
  %125 = vst [vmem:[%s123] sm:$0xf] %v124
  %s126 = scalar_lea.vmem %s0, 264
  %v127 = vld [vmem:[%s126] sm:$0xf]
  %v128 = vunpack.c.l.bf16 %v127
  %v129 = vunpack.c.h.bf16 %v127
  %s130 = scalar_lea.vmem %s1, 8
  %v131 = vpack.c.bf16 0.0, %v128
  %132 = vst [vmem:[%s130] sm:$0xf] %v131
  %s133 = scalar_lea.vmem %s0, 168
  %v134 = vld [vmem:[%s133] sm:$0xf]
  %v135 = vunpack.c.l.bf16 %v134
  %v136 = vunpack.c.h.bf16 %v134
  %s137 = scalar_lea.vmem %s1, 104
  %v138 = vpack.c.bf16 0.0, %v135
  %139 = vst [vmem:[%s137] sm:$0xf] %v138
  %s140 = scalar_lea.vmem %s0, 72
  %v141 = vld [vmem:[%s140] sm:$0xf]
  %v142 = vunpack.c.l.bf16 %v141
  %v143 = vunpack.c.h.bf16 %v141
  %s144 = scalar_lea.vmem %s1, 200
  %v145 = vpack.c.bf16 0.0, %v142
  %146 = vst [vmem:[%s144] sm:$0xf] %v145
  %s147 = scalar_lea.vmem %s0, 232
  %v148 = vld [vmem:[%s147] sm:$0xf]
  %v149 = vunpack.c.l.bf16 %v148
  %v150 = vunpack.c.h.bf16 %v148
  %s151 = scalar_lea.vmem %s1, 40
  %v152 = vpack.c.bf16 0.0, %v149
  %153 = vst [vmem:[%s151] sm:$0xf] %v152
  %s154 = scalar_lea.vmem %s0, 136
  %v155 = vld [vmem:[%s154] sm:$0xf]
  %v156 = vunpack.c.l.bf16 %v155
  %v157 = vunpack.c.h.bf16 %v155
  %s158 = scalar_lea.vmem %s1, 136
  %v159 = vpack.c.bf16 0.0, %v156
  %160 = vst [vmem:[%s158] sm:$0xf] %v159
  %s161 = scalar_lea.vmem %s0, 40
  %v162 = vld [vmem:[%s161] sm:$0xf]
  %v163 = vunpack.c.l.bf16 %v162
  %v164 = vunpack.c.h.bf16 %v162
  %s165 = scalar_lea.vmem %s1, 232
  %v166 = vpack.c.bf16 0.0, %v163
  %167 = vst [vmem:[%s165] sm:$0xf] %v166
  %s168 = scalar_lea.vmem %s0, 200
  %v169 = vld [vmem:[%s168] sm:$0xf]
  %v170 = vunpack.c.l.bf16 %v169
  %v171 = vunpack.c.h.bf16 %v169
  %s172 = scalar_lea.vmem %s1, 72
  %v173 = vpack.c.bf16 0.0, %v170
  %174 = vst [vmem:[%s172] sm:$0xf] %v173
  %s175 = scalar_lea.vmem %s0, 104
  %v176 = vld [vmem:[%s175] sm:$0xf]
  %v177 = vunpack.c.l.bf16 %v176
  %v178 = vunpack.c.h.bf16 %v176
  %s179 = scalar_lea.vmem %s1, 168
  %v180 = vpack.c.bf16 0.0, %v177
  %181 = vst [vmem:[%s179] sm:$0xf] %v180
  %s182 = scalar_lea.vmem %s0, 8
  %v183 = vld [vmem:[%s182] sm:$0xf]
  %v184 = vunpack.c.l.bf16 %v183
  %v185 = vunpack.c.h.bf16 %v183
  %s186 = scalar_lea.vmem %s1, 264
  %v187 = vpack.c.bf16 0.0, %v184
  %188 = vst [vmem:[%s186] sm:$0xf] %v187
  %s189 = scalar_lea.vmem %s0, 268
  %v190 = vld [vmem:[%s189] sm:$0xf]
  %v191 = vunpack.c.l.bf16 %v190
  %v192 = vunpack.c.h.bf16 %v190
  %s193 = scalar_lea.vmem %s1, 12
  %v194 = vpack.c.bf16 0.0, %v191
  %195 = vst [vmem:[%s193] sm:$0xf] %v194
  %s196 = scalar_lea.vmem %s0, 172
  %v197 = vld [vmem:[%s196] sm:$0xf]
  %v198 = vunpack.c.l.bf16 %v197
  %v199 = vunpack.c.h.bf16 %v197
  %s200 = scalar_lea.vmem %s1, 108
  %v201 = vpack.c.bf16 0.0, %v198
  %202 = vst [vmem:[%s200] sm:$0xf] %v201
  %s203 = scalar_lea.vmem %s0, 76
  %v204 = vld [vmem:[%s203] sm:$0xf]
  %v205 = vunpack.c.l.bf16 %v204
  %v206 = vunpack.c.h.bf16 %v204
  %s207 = scalar_lea.vmem %s1, 204
  %v208 = vpack.c.bf16 0.0, %v205
  %209 = vst [vmem:[%s207] sm:$0xf] %v208
  %s210 = scalar_lea.vmem %s0, 236
  %v211 = vld [vmem:[%s210] sm:$0xf]
  %v212 = vunpack.c.l.bf16 %v211
  %v213 = vunpack.c.h.bf16 %v211
  %s214 = scalar_lea.vmem %s1, 44
  %v215 = vpack.c.bf16 0.0, %v212
  %216 = vst [vmem:[%s214] sm:$0xf] %v215
  %s217 = scalar_lea.vmem %s0, 140
  %v218 = vld [vmem:[%s217] sm:$0xf]
  %v219 = vunpack.c.l.bf16 %v218
  %v220 = vunpack.c.h.bf16 %v218
  %s221 = scalar_lea.vmem %s1, 140
  %v222 = vpack.c.bf16 0.0, %v219
  %223 = vst [vmem:[%s221] sm:$0xf] %v222
  %s224 = scalar_lea.vmem %s0, 44
  %v225 = vld [vmem:[%s224] sm:$0xf]
  %v226 = vunpack.c.l.bf16 %v225
  %v227 = vunpack.c.h.bf16 %v225
  %s228 = scalar_lea.vmem %s1, 236
  %v229 = vpack.c.bf16 0.0, %v226
  %230 = vst [vmem:[%s228] sm:$0xf] %v229
  %s231 = scalar_lea.vmem %s0, 204
  %v232 = vld [vmem:[%s231] sm:$0xf]
  %v233 = vunpack.c.l.bf16 %v232
  %v234 = vunpack.c.h.bf16 %v232
  %s235 = scalar_lea.vmem %s1, 76
  %v236 = vpack.c.bf16 0.0, %v233
  %237 = vst [vmem:[%s235] sm:$0xf] %v236
  %s238 = scalar_lea.vmem %s0, 108
  %v239 = vld [vmem:[%s238] sm:$0xf]
  %v240 = vunpack.c.l.bf16 %v239
  %v241 = vunpack.c.h.bf16 %v239
  %s242 = scalar_lea.vmem %s1, 172
  %v243 = vpack.c.bf16 0.0, %v240
  %244 = vst [vmem:[%s242] sm:$0xf] %v243
  %s245 = scalar_lea.vmem %s0, 12
  %v246 = vld [vmem:[%s245] sm:$0xf]
  %v247 = vunpack.c.l.bf16 %v246
  %v248 = vunpack.c.h.bf16 %v246
  %s249 = scalar_lea.vmem %s1, 268
  %v250 = vpack.c.bf16 0.0, %v247
  %251 = vst [vmem:[%s249] sm:$0xf] %v250
  %s252 = scalar_lea.vmem %s0, 272
  %v253 = vld [vmem:[%s252] sm:$0xf]
  %v254 = vunpack.c.l.bf16 %v253
  %v255 = vunpack.c.h.bf16 %v253
  %s256 = scalar_lea.vmem %s1, 16
  %v257 = vpack.c.bf16 0.0, %v254
  %258 = vst [vmem:[%s256] sm:$0xf] %v257
  %s259 = scalar_lea.vmem %s0, 176
  %v260 = vld [vmem:[%s259] sm:$0xf]
  %v261 = vunpack.c.l.bf16 %v260
  %v262 = vunpack.c.h.bf16 %v260
  %s263 = scalar_lea.vmem %s1, 112
  %v264 = vpack.c.bf16 0.0, %v261
  %265 = vst [vmem:[%s263] sm:$0xf] %v264
  %s266 = scalar_lea.vmem %s0, 80
  %v267 = vld [vmem:[%s266] sm:$0xf]
  %v268 = vunpack.c.l.bf16 %v267
  %v269 = vunpack.c.h.bf16 %v267
  %s270 = scalar_lea.vmem %s1, 208
  %v271 = vpack.c.bf16 0.0, %v268
  %272 = vst [vmem:[%s270] sm:$0xf] %v271
  %s273 = scalar_lea.vmem %s0, 240
  %v274 = vld [vmem:[%s273] sm:$0xf]
  %v275 = vunpack.c.l.bf16 %v274
  %v276 = vunpack.c.h.bf16 %v274
  %s277 = scalar_lea.vmem %s1, 48
  %v278 = vpack.c.bf16 0.0, %v275
  %279 = vst [vmem:[%s277] sm:$0xf] %v278
  %s280 = scalar_lea.vmem %s0, 144
  %v281 = vld [vmem:[%s280] sm:$0xf]
  %v282 = vunpack.c.l.bf16 %v281
  %v283 = vunpack.c.h.bf16 %v281
  %s284 = scalar_lea.vmem %s1, 144
  %v285 = vpack.c.bf16 0.0, %v282
  %286 = vst [vmem:[%s284] sm:$0xf] %v285
  %s287 = scalar_lea.vmem %s0, 48
  %v288 = vld [vmem:[%s287] sm:$0xf]
  %v289 = vunpack.c.l.bf16 %v288
  %v290 = vunpack.c.h.bf16 %v288
  %s291 = scalar_lea.vmem %s1, 240
  %v292 = vpack.c.bf16 0.0, %v289
  %293 = vst [vmem:[%s291] sm:$0xf] %v292
  %s294 = scalar_lea.vmem %s0, 208
  %v295 = vld [vmem:[%s294] sm:$0xf]
  %v296 = vunpack.c.l.bf16 %v295
  %v297 = vunpack.c.h.bf16 %v295
  %s298 = scalar_lea.vmem %s1, 80
  %v299 = vpack.c.bf16 0.0, %v296
  %300 = vst [vmem:[%s298] sm:$0xf] %v299
  %s301 = scalar_lea.vmem %s0, 112
  %v302 = vld [vmem:[%s301] sm:$0xf]
  %v303 = vunpack.c.l.bf16 %v302
  %v304 = vunpack.c.h.bf16 %v302
  %s305 = scalar_lea.vmem %s1, 176
  %v306 = vpack.c.bf16 0.0, %v303
  %307 = vst [vmem:[%s305] sm:$0xf] %v306
  %s308 = scalar_lea.vmem %s0, 16
  %v309 = vld [vmem:[%s308] sm:$0xf]
  %v310 = vunpack.c.l.bf16 %v309
  %v311 = vunpack.c.h.bf16 %v309
  %s312 = scalar_lea.vmem %s1, 272
  %v313 = vpack.c.bf16 0.0, %v310
  %314 = vst [vmem:[%s312] sm:$0xf] %v313
  %s315 = scalar_lea.vmem %s0, 276
  %v316 = vld [vmem:[%s315] sm:$0xf]
  %v317 = vunpack.c.l.bf16 %v316
  %v318 = vunpack.c.h.bf16 %v316
  %s319 = scalar_lea.vmem %s1, 20
  %v320 = vpack.c.bf16 0.0, %v317
  %321 = vst [vmem:[%s319] sm:$0xf] %v320
  %s322 = scalar_lea.vmem %s0, 180
  %v323 = vld [vmem:[%s322] sm:$0xf]
  %v324 = vunpack.c.l.bf16 %v323
  %v325 = vunpack.c.h.bf16 %v323
  %s326 = scalar_lea.vmem %s1, 116
  %v327 = vpack.c.bf16 0.0, %v324
  %328 = vst [vmem:[%s326] sm:$0xf] %v327
  %s329 = scalar_lea.vmem %s0, 84
  %v330 = vld [vmem:[%s329] sm:$0xf]
  %v331 = vunpack.c.l.bf16 %v330
  %v332 = vunpack.c.h.bf16 %v330
  %s333 = scalar_lea.vmem %s1, 212
  %v334 = vpack.c.bf16 0.0, %v331
  %335 = vst [vmem:[%s333] sm:$0xf] %v334
  %s336 = scalar_lea.vmem %s0, 244
  %v337 = vld [vmem:[%s336] sm:$0xf]
  %v338 = vunpack.c.l.bf16 %v337
  %v339 = vunpack.c.h.bf16 %v337
  %s340 = scalar_lea.vmem %s1, 52
  %v341 = vpack.c.bf16 0.0, %v338
  %342 = vst [vmem:[%s340] sm:$0xf] %v341
  %s343 = scalar_lea.vmem %s0, 148
  %v344 = vld [vmem:[%s343] sm:$0xf]
  %v345 = vunpack.c.l.bf16 %v344
  %v346 = vunpack.c.h.bf16 %v344
  %s347 = scalar_lea.vmem %s1, 148
  %v348 = vpack.c.bf16 0.0, %v345
  %349 = vst [vmem:[%s347] sm:$0xf] %v348
  %s350 = scalar_lea.vmem %s0, 52
  %v351 = vld [vmem:[%s350] sm:$0xf]
  %v352 = vunpack.c.l.bf16 %v351
  %v353 = vunpack.c.h.bf16 %v351
  %s354 = scalar_lea.vmem %s1, 244
  %v355 = vpack.c.bf16 0.0, %v352
  %356 = vst [vmem:[%s354] sm:$0xf] %v355
  %s357 = scalar_lea.vmem %s0, 212
  %v358 = vld [vmem:[%s357] sm:$0xf]
  %v359 = vunpack.c.l.bf16 %v358
  %v360 = vunpack.c.h.bf16 %v358
  %s361 = scalar_lea.vmem %s1, 84
  %v362 = vpack.c.bf16 0.0, %v359
  %363 = vst [vmem:[%s361] sm:$0xf] %v362
  %s364 = scalar_lea.vmem %s0, 116
  %v365 = vld [vmem:[%s364] sm:$0xf]
  %v366 = vunpack.c.l.bf16 %v365
  %v367 = vunpack.c.h.bf16 %v365
  %s368 = scalar_lea.vmem %s1, 180
  %v369 = vpack.c.bf16 0.0, %v366
  %370 = vst [vmem:[%s368] sm:$0xf] %v369
  %s371 = scalar_lea.vmem %s0, 20
  %v372 = vld [vmem:[%s371] sm:$0xf]
  %v373 = vunpack.c.l.bf16 %v372
  %v374 = vunpack.c.h.bf16 %v372
  %s375 = scalar_lea.vmem %s1, 276
  %v376 = vpack.c.bf16 0.0, %v373
  %377 = vst [vmem:[%s375] sm:$0xf] %v376
  %s378 = scalar_lea.vmem %s0, 280
  %v379 = vld [vmem:[%s378] sm:$0xf]
  %v380 = vunpack.c.l.bf16 %v379
  %v381 = vunpack.c.h.bf16 %v379
  %s382 = scalar_lea.vmem %s1, 24
  %v383 = vpack.c.bf16 0.0, %v380
  %384 = vst [vmem:[%s382] sm:$0xf] %v383
  %s385 = scalar_lea.vmem %s0, 184
  %v386 = vld [vmem:[%s385] sm:$0xf]
  %v387 = vunpack.c.l.bf16 %v386
  %v388 = vunpack.c.h.bf16 %v386
  %s389 = scalar_lea.vmem %s1, 120
  %v390 = vpack.c.bf16 0.0, %v387
  %391 = vst [vmem:[%s389] sm:$0xf] %v390
  %s392 = scalar_lea.vmem %s0, 88
  %v393 = vld [vmem:[%s392] sm:$0xf]
  %v394 = vunpack.c.l.bf16 %v393
  %v395 = vunpack.c.h.bf16 %v393
  %s396 = scalar_lea.vmem %s1, 216
  %v397 = vpack.c.bf16 0.0, %v394
  %398 = vst [vmem:[%s396] sm:$0xf] %v397
  %s399 = scalar_lea.vmem %s0, 248
  %v400 = vld [vmem:[%s399] sm:$0xf]
  %v401 = vunpack.c.l.bf16 %v400
  %v402 = vunpack.c.h.bf16 %v400
  %s403 = scalar_lea.vmem %s1, 56
  %v404 = vpack.c.bf16 0.0, %v401
  %405 = vst [vmem:[%s403] sm:$0xf] %v404
  %s406 = scalar_lea.vmem %s0, 152
  %v407 = vld [vmem:[%s406] sm:$0xf]
  %v408 = vunpack.c.l.bf16 %v407
  %v409 = vunpack.c.h.bf16 %v407
  %s410 = scalar_lea.vmem %s1, 152
  %v411 = vpack.c.bf16 0.0, %v408
  %412 = vst [vmem:[%s410] sm:$0xf] %v411
  %s413 = scalar_lea.vmem %s0, 56
  %v414 = vld [vmem:[%s413] sm:$0xf]
  %v415 = vunpack.c.l.bf16 %v414
  %v416 = vunpack.c.h.bf16 %v414
  %s417 = scalar_lea.vmem %s1, 248
  %v418 = vpack.c.bf16 0.0, %v415
  %419 = vst [vmem:[%s417] sm:$0xf] %v418
  %s420 = scalar_lea.vmem %s0, 216
  %v421 = vld [vmem:[%s420] sm:$0xf]
  %v422 = vunpack.c.l.bf16 %v421
  %v423 = vunpack.c.h.bf16 %v421
  %s424 = scalar_lea.vmem %s1, 88
  %v425 = vpack.c.bf16 0.0, %v422
  %426 = vst [vmem:[%s424] sm:$0xf] %v425
  %s427 = scalar_lea.vmem %s0, 120
  %v428 = vld [vmem:[%s427] sm:$0xf]
  %v429 = vunpack.c.l.bf16 %v428
  %v430 = vunpack.c.h.bf16 %v428
  %s431 = scalar_lea.vmem %s1, 184
  %v432 = vpack.c.bf16 0.0, %v429
  %433 = vst [vmem:[%s431] sm:$0xf] %v432
  %s434 = scalar_lea.vmem %s0, 24
  %v435 = vld [vmem:[%s434] sm:$0xf]
  %v436 = vunpack.c.l.bf16 %v435
  %v437 = vunpack.c.h.bf16 %v435
  %s438 = scalar_lea.vmem %s1, 280
  %v439 = vpack.c.bf16 0.0, %v436
  %440 = vst [vmem:[%s438] sm:$0xf] %v439
  %s441 = scalar_lea.vmem %s0, 284
  %v442 = vld [vmem:[%s441] sm:$0xf]
  %v443 = vunpack.c.l.bf16 %v442
  %v444 = vunpack.c.h.bf16 %v442
  %s445 = scalar_lea.vmem %s1, 28
  %v446 = vpack.c.bf16 0.0, %v443
  %447 = vst [vmem:[%s445] sm:$0xf] %v446
  %s448 = scalar_lea.vmem %s0, 188
  %v449 = vld [vmem:[%s448] sm:$0xf]
  %v450 = vunpack.c.l.bf16 %v449
  %v451 = vunpack.c.h.bf16 %v449
  %s452 = scalar_lea.vmem %s1, 124
  %v453 = vpack.c.bf16 0.0, %v450
  %454 = vst [vmem:[%s452] sm:$0xf] %v453
  %s455 = scalar_lea.vmem %s0, 92
  %v456 = vld [vmem:[%s455] sm:$0xf]
  %v457 = vunpack.c.l.bf16 %v456
  %v458 = vunpack.c.h.bf16 %v456
  %s459 = scalar_lea.vmem %s1, 220
  %v460 = vpack.c.bf16 0.0, %v457
  %461 = vst [vmem:[%s459] sm:$0xf] %v460
  %s462 = scalar_lea.vmem %s0, 252
  %v463 = vld [vmem:[%s462] sm:$0xf]
  %v464 = vunpack.c.l.bf16 %v463
  %v465 = vunpack.c.h.bf16 %v463
  %s466 = scalar_lea.vmem %s1, 60
  %v467 = vpack.c.bf16 0.0, %v464
  %468 = vst [vmem:[%s466] sm:$0xf] %v467
  %s469 = scalar_lea.vmem %s0, 156
  %v470 = vld [vmem:[%s469] sm:$0xf]
  %v471 = vunpack.c.l.bf16 %v470
  %v472 = vunpack.c.h.bf16 %v470
  %s473 = scalar_lea.vmem %s1, 156
  %v474 = vpack.c.bf16 0.0, %v471
  %475 = vst [vmem:[%s473] sm:$0xf] %v474
  %s476 = scalar_lea.vmem %s0, 60
  %v477 = vld [vmem:[%s476] sm:$0xf]
  %v478 = vunpack.c.l.bf16 %v477
  %v479 = vunpack.c.h.bf16 %v477
  %s480 = scalar_lea.vmem %s1, 252
  %v481 = vpack.c.bf16 0.0, %v478
  %482 = vst [vmem:[%s480] sm:$0xf] %v481
  %s483 = scalar_lea.vmem %s0, 220
  %v484 = vld [vmem:[%s483] sm:$0xf]
  %v485 = vunpack.c.l.bf16 %v484
  %v486 = vunpack.c.h.bf16 %v484
  %s487 = scalar_lea.vmem %s1, 92
  %v488 = vpack.c.bf16 0.0, %v485
  %489 = vst [vmem:[%s487] sm:$0xf] %v488
  %s490 = scalar_lea.vmem %s0, 124
  %v491 = vld [vmem:[%s490] sm:$0xf]
  %v492 = vunpack.c.l.bf16 %v491
  %v493 = vunpack.c.h.bf16 %v491
  %s494 = scalar_lea.vmem %s1, 188
  %v495 = vpack.c.bf16 0.0, %v492
  %496 = vst [vmem:[%s494] sm:$0xf] %v495
  %s497 = scalar_lea.vmem %s0, 28
  %v498 = vld [vmem:[%s497] sm:$0xf]
  %v499 = vunpack.c.l.bf16 %v498
  %v500 = vunpack.c.h.bf16 %v498
  %s501 = scalar_lea.vmem %s1, 284
  %v502 = vpack.c.bf16 0.0, %v499
  %503 = vst [vmem:[%s501] sm:$0xf] %v502

// kernel: trusformer_forward.17
$region0: #{trusformer_forward.17}
  #allocation0 [shape = 'u32[]', space=smem, size = 0x4, offset = 0x4, fixed_abs, tag = 'smem constant byte address 0x4 - core index']
  #allocation1 [shape = 'u32[144,128]{1,0:T(1,128)}', space=vmem, size = 0x12000, scoped, tag = 'internal scratch']
  %s0 = inlined_call_operand.vmem [shape: f32[8,64], index: 0, kind: input, shape index: {}]
  %s1 = inlined_call_operand.vmem [shape: f32[1,64], index: 1, kind: input, shape index: {}]
  %s2 = inlined_call_operand.vmem [shape: f32[8,64], index: 2, kind: output, shape index: {}]
  %s3 = sld [smem:[#allocation0]]
  $region18: #{trusformer_forward.17} parent=0
    _
  %s5 = ssub.s32 1, %s3
  %s6 = scalar_select 0, %s5, %s3
  // Predicated region
  $region2: #{trusformer_forward.17} parent=0 // pred_check
    _
  $region3: #{trusformer_forward.17} parent=0 // pred_check_branch
    %8 = sbr.rel (0) target = $region5
  $region4: #{trusformer_forward.17} parent=0 // pred_region
    _
  $region5: #{trusformer_forward.17} parent=0 // pred_fallthru
    _
  // Predicated region
  $region6: #{trusformer_forward.17} parent=0 // pred_check
    _
  $region7: #{trusformer_forward.17} parent=0 // pred_check_branch
    %10 = sbr.rel (0) target = $region9
  $region8: #{trusformer_forward.17} parent=0 // pred_region
    _
  $region9: #{trusformer_forward.17} parent=0 // pred_fallthru
    _
  %v11 = vld [vmem:[%s0] sm:$0xff]
  %v12 = vld [vmem:[%s1] sm:$0x1]
  %v14 = vlaneseq
  %v15 = vshrl.u32 %v14, 7
  %v16 = vsub.s32 0, %v15
  %v17 = vrot.slane %v12, %v16
  %v19 = vadd.f32 %v11, %v17
  %v20 = vmax.f32 %v19, 0.0
  %vm21 = vcmask 523264
  %22 = vst.msk [vmem:[%s2] sm:$0xff] %vm21, %v20
  // Predicated region
  $region10: #{trusformer_forward.17} parent=0 // pred_check
    _
  $region11: #{trusformer_forward.17} parent=0 // pred_check_branch
    %24 = sbr.rel (0) target = $region13
  $region12: #{trusformer_forward.17} parent=0 // pred_region
    _
  $region13: #{trusformer_forward.17} parent=0 // pred_fallthru
    _
  // Predicated region
  $region14: #{trusformer_forward.17} parent=0 // pred_check
    _
  $region15: #{trusformer_forward.17} parent=0 // pred_check_branch
    %26 = sbr.rel (0) target = $region17
  $region16: #{trusformer_forward.17} parent=0 // pred_region
    _
  $region17: #{trusformer_forward.17} parent=0 // pred_fallthru
    _

// kernel: trusformer_forward.18
$region0: #{trusformer_forward.18}
  #allocation0 [shape = 'u32[]', space=smem, size = 0x4, offset = 0x4, fixed_abs, tag = 'smem constant byte address 0x4 - core index']
  #allocation1 [shape = 'u32[144,128]{1,0:T(1,128)}', space=vmem, size = 0x12000, scoped, tag = 'internal scratch']
  %s0 = inlined_call_operand.vmem [shape: f32[8,64], index: 0, kind: input, shape index: {}]
  %s1 = inlined_call_operand.vmem [shape: f32[1,64], index: 1, kind: input, shape index: {}]
  %s2 = inlined_call_operand.vmem [shape: f32[8,64], index: 2, kind: input, shape index: {}]
  %s3 = inlined_call_operand.vmem [shape: f32[1,64], index: 3, kind: input, shape index: {}]
  %s4 = inlined_call_operand.vmem [shape: f32[8,64], index: 4, kind: output, shape index: {}]
  %s5 = sld [smem:[#allocation0]]
  $region26: #{trusformer_forward.18} parent=0
    _
  %s7 = ssub.s32 1, %s5
  %s8 = scalar_select 0, %s7, %s5
  // Predicated region
  $region2: #{trusformer_forward.18} parent=0 // pred_check
    _
  $region3: #{trusformer_forward.18} parent=0 // pred_check_branch
    %10 = sbr.rel (0) target = $region5
  $region4: #{trusformer_forward.18} parent=0 // pred_region
    _
  $region5: #{trusformer_forward.18} parent=0 // pred_fallthru
    _
  // Predicated region
  $region6: #{trusformer_forward.18} parent=0 // pred_check
    _
  $region7: #{trusformer_forward.18} parent=0 // pred_check_branch
    %12 = sbr.rel (0) target = $region9
  $region8: #{trusformer_forward.18} parent=0 // pred_region
    _
  $region9: #{trusformer_forward.18} parent=0 // pred_fallthru
    _
  // Predicated region
  $region10: #{trusformer_forward.18} parent=0 // pred_check
    _
  $region11: #{trusformer_forward.18} parent=0 // pred_check_branch
    %14 = sbr.rel (0) target = $region13
  $region12: #{trusformer_forward.18} parent=0 // pred_region
    _
  $region13: #{trusformer_forward.18} parent=0 // pred_fallthru
    _
  // Predicated region
  $region14: #{trusformer_forward.18} parent=0 // pred_check
    _
  $region15: #{trusformer_forward.18} parent=0 // pred_check_branch
    %16 = sbr.rel (0) target = $region17
  $region16: #{trusformer_forward.18} parent=0 // pred_region
    _
  $region17: #{trusformer_forward.18} parent=0 // pred_fallthru
    _
  %v17 = vld [vmem:[%s0] sm:$0xff]
  %v18 = vld [vmem:[%s1] sm:$0x1]
  %v20 = vlaneseq
  %v21 = vshrl.u32 %v20, 7
  %v22 = vsub.s32 0, %v21
  %v23 = vrot.slane %v18, %v22
  %v25 = vadd.f32 %v17, %v23
  %v26 = vld [vmem:[%s2] sm:$0xff]
  %v27 = vadd.f32 %v25, %v26
  %v28 = vld [vmem:[%s3] sm:$0x1]
  %v30 = vlaneseq
  %v31 = vshrl.u32 %v30, 7
  %v32 = vsub.s32 0, %v31
  %v33 = vrot.slane %v28, %v32
  %v35 = vadd.f32 %v27, %v33
  %v36 = vmax.f32 %v35, 0.0
  %vm37 = vcmask 523264
  %38 = vst.msk [vmem:[%s4] sm:$0xff] %vm37, %v36
  // Predicated region
  $region18: #{trusformer_forward.18} parent=0 // pred_check
    _
  $region19: #{trusformer_forward.18} parent=0 // pred_check_branch
    %40 = sbr.rel (0) target = $region21
  $region20: #{trusformer_forward.18} parent=0 // pred_region
    _
  $region21: #{trusformer_forward.18} parent=0 // pred_fallthru
    _
  // Predicated region
  $region22: #{trusformer_forward.18} parent=0 // pred_check
    _
  $region23: #{trusformer_forward.18} parent=0 // pred_check_branch
    %42 = sbr.rel (0) target = $region25
  $region24: #{trusformer_forward.18} parent=0 // pred_region
    _
  $region25: #{trusformer_forward.18} parent=0 // pred_fallthru
    _

// kernel: trusformer_forward.19
$region0: #{trusformer_forward.19}
  #allocation0 [shape = 'u32[]', space=smem, size = 0x4, offset = 0x4, fixed_abs, tag = 'smem constant byte address 0x4 - core index']
  #allocation1 [shape = 'u32[144,128]{1,0:T(1,128)}', space=vmem, size = 0x12000, scoped, tag = 'internal scratch']
  #allocation2 [shape = 'f32[4,64]{1,0:T(4,128)}', space=vmem, size = 0x800, scoped, tag = 'scratch operand']
  %s0 = inlined_call_operand.vmem [shape: bf16[2,4,64], index: 0, kind: input, shape index: {}]
  %s1 = inlined_call_operand.vmem [shape: bf16[64,64], index: 1, kind: input, shape index: {}]
  %s2 = inlined_call_operand.vmem [shape: f32[1,64], index: 2, kind: input, shape index: {}]
  %s3 = inlined_call_operand.vmem [shape: f32[2,4,64], index: 3, kind: input, shape index: {}]
  %s4 = inlined_call_operand.vmem [shape: bf16[12,64,192], index: 4, kind: input, shape index: {}]
  %s5 = inlined_call_operand.vmem [shape: f32[12,1,192], index: 5, kind: input, shape index: {}]
  %s6 = inlined_call_operand.vmem [shape: bf16[12,64,64], index: 6, kind: input, shape index: {}]
  %s7 = inlined_call_operand.vmem [shape: f32[12,1,64], index: 7, kind: input, shape index: {}]
  %s8 = inlined_call_operand.vmem [shape: f32[12,1,64], index: 8, kind: input, shape index: {}]
  %s9 = inlined_call_operand.vmem [shape: f32[12,1,64], index: 9, kind: input, shape index: {}]
  %s10 = inlined_call_operand.vmem [shape: bf16[12,64,64], index: 10, kind: input, shape index: {}]
  %s11 = inlined_call_operand.vmem [shape: f32[12,1,64], index: 11, kind: input, shape index: {}]
  %s12 = inlined_call_operand.vmem [shape: bf16[12,64,64], index: 12, kind: input, shape index: {}]
  %s13 = inlined_call_operand.vmem [shape: f32[12,1,64], index: 13, kind: input, shape index: {}]
  %s14 = inlined_call_operand.vmem [shape: f32[12,1,64], index: 14, kind: input, shape index: {}]
  %s15 = inlined_call_operand.vmem [shape: f32[12,1,64], index: 15, kind: input, shape index: {}]
  %s16 = inlined_call_operand.vmem [shape: bf16[64,128], index: 16, kind: input, shape index: {}]
  %s17 = inlined_call_operand.vmem [shape: f32[1,128], index: 17, kind: input, shape index: {}]
  %s18 = inlined_call_operand.hbm [shape: f32[2,1,128], index: 18, kind: output, shape index: {}]
  %s19 = sld [smem:[#allocation0]]
  $region113: #{trusformer_forward.19} parent=0
    _
  %s21 = ssub.s32 1, %s19
  %s22 = scalar_select 0, %s21, %s19
  $region1: #{trusformer_forward.19} parent=0
    #allocation3 [shape = 'u8[1024]{0}', space=vmem, size = 0x400, scoped, tag = 'output window, operand 0']
    #allocation4 [shape = 's32[2]{0}', space=sflag, size = 0x8, scoped, tag = 'scoped memory for trusformer_forward.19']
    %23 = vsyncpa [#allocation4], 0
    %s24 = scalar_lea.sflag [#allocation4], 1
    %25 = vsyncpa %s24, 0
    loop: start=0, step=1, limit=26
    $region2: #{trusformer_forward.19} parent=1 // loop_pre_header
      _
    $region3: #{trusformer_forward.19} parent=1 // loop_header
      %s27 = sphi 0, %s31
      %p28 = scmp.ge.s32.totalorder %s27, 26
      %s34 = sphi 0, %s46
      %s35 = sphi 0, %s42
      %s36 = sphi 0, %s34
      %s37 = sphi 0, %s35
      %s38 = sphi 0, %s36
      %s39 = sphi 0, %s37
      %s49 = sphi 0, %s51
      %s52 = sphi 0, %s49
      %s53 = sphi 0, %s52
      %s69 = sphi 0, %s53
      %s73 = sphi 0, %s73
      %s75 = sphi 0, %s73
      %s76 = sphi 0, %s75
      %s90 = sphi 0, %s76
      %s94 = sphi 0, %s94
      %s96 = sphi 0, %s94
      %s97 = sphi 0, %s96
      %s111 = sphi 0, %s97
      %s117 = sphi 0, %s119
      %s120 = sphi 0, %s117
      %s121 = sphi 0, %s120
      %s137 = sphi 0, %s121
      %s143 = sphi 0, %s145
      %s146 = sphi 0, %s143
      %s147 = sphi 0, %s146
      %s163 = sphi 0, %s147
      %s169 = sphi 0, %s171
      %s172 = sphi 0, %s169
      %s173 = sphi 0, %s172
      %s189 = sphi 0, %s173
      %s195 = sphi 0, %s197
      %s198 = sphi 0, %s195
      %s199 = sphi 0, %s198
      %s215 = sphi 0, %s199
      %s221 = sphi 0, %s223
      %s224 = sphi 0, %s221
      %s225 = sphi 0, %s224
      %s241 = sphi 0, %s225
      %s247 = sphi 0, %s249
      %s250 = sphi 0, %s247
      %s251 = sphi 0, %s250
      %s267 = sphi 0, %s251
      %s273 = sphi 0, %s275
      %s276 = sphi 0, %s273
      %s277 = sphi 0, %s276
      %s293 = sphi 0, %s277
      %s299 = sphi 0, %s301
      %s302 = sphi 0, %s299
      %s303 = sphi 0, %s302
      %s319 = sphi 0, %s303
      %s325 = sphi 0, %s327
      %s328 = sphi 0, %s325
      %s329 = sphi 0, %s328
      %s345 = sphi 0, %s329
      %s351 = sphi 0, %s353
      %s354 = sphi 0, %s351
      %s355 = sphi 0, %s354
      %s371 = sphi 0, %s355
      %s377 = sphi 0, %s379
      %s380 = sphi 0, %s377
      %s381 = sphi 0, %s380
      %s397 = sphi 0, %s381
      %s403 = sphi 0, %s405
      %s406 = sphi 0, %s403
      %s407 = sphi 0, %s406
      %s423 = sphi 0, %s407
      %s429 = sphi 0, %s431
      %s432 = sphi 0, %s429
      %s433 = sphi 0, %s432
      %s449 = sphi 0, %s433
      %s453 = sphi 0, %s453
      %s455 = sphi 0, %s453
      %s456 = sphi 0, %s455
      %s470 = sphi 0, %s456
      %s474 = sphi 0, %s474
      %s476 = sphi 0, %s474
      %s477 = sphi 0, %s476
      %s491 = sphi 0, %s477
      %s497 = sphi 0, %s499
      %s500 = sphi 0, %s497
      %s501 = sphi 0, %s500
      %s517 = sphi 0, %s501
    $region4: #{trusformer_forward.19} parent=1 // loop_header_branch
      %30 = sbr.rel (%p28) target = $region8
    $region5: #{trusformer_forward.19} parent=1 // loop_body
      %s32 = ssub.s32 %s27, 1
      %s33 = ssub.s32 %s27, 2
      %s40 = sadd.s32 1, %s35
      %p41 = scmp.ge.s32.totalorder %s40, 12
      %s42 = scalar_select %p41, 0, %s40
      %s43 = sadd.s32 1, %s34
      %s44 = scalar_select %p41, %s43, %s34
      %p45 = scmp.ge.s32.totalorder %s44, 2
      %s46 = scalar_select %p45, 0, %s44
      %s47 = ssub.s32 %s34, %s46
      %p48 = scmp.eq.s32.totalorder %s47, 0
      %s50 = sadd.s32 %s49, 1
      %s51 = scalar_select %p48, %s49, %s50
      %p54 = pneg %p48
      %p55 = scmp.eq.s32.totalorder %s27, 23
      %p56 = por %p54, %p55
      %p57 = scmp.ne.s32.totalorder %s49, %s52
      %p58 = scmp.eq.s32.totalorder %s27, 0
      %p59 = por %p57, %p58
      %p60 = scmp.ne.s32.totalorder %s49, %s52
      %p61 = scmp.eq.s32.totalorder %s32, 23
      %p62 = por %p60, %p61
      %p63 = scmp.ne.s32.totalorder %s52, %s53
      %p64 = scmp.eq.s32.totalorder %s32, 0
      %p65 = por %p63, %p64
      %p66 = scmp.ne.s32.totalorder %s52, %s53
      %p67 = scmp.eq.s32.totalorder %s33, 23
      %p68 = por %p66, %p67
      %p70 = scmp.ne.s32.totalorder %s53, %s69
      %p71 = scmp.eq.s32.totalorder %s33, 0
      %p72 = por %p70, %p71
      %s74 = sadd.s32 %s73, 1
      %p77 = scmp.eq.s32.totalorder %s27, 23
      %p78 = scmp.ne.s32.totalorder %s73, %s75
      %p79 = scmp.eq.s32.totalorder %s27, 0
      %p80 = por %p78, %p79
      %p81 = scmp.ne.s32.totalorder %s73, %s75
      %p82 = scmp.eq.s32.totalorder %s32, 23
      %p83 = por %p81, %p82
      %p84 = scmp.ne.s32.totalorder %s75, %s76
      %p85 = scmp.eq.s32.totalorder %s32, 0
      %p86 = por %p84, %p85
      %p87 = scmp.ne.s32.totalorder %s75, %s76
      %p88 = scmp.eq.s32.totalorder %s33, 23
      %p89 = por %p87, %p88
      %p91 = scmp.ne.s32.totalorder %s76, %s90
      %p92 = scmp.eq.s32.totalorder %s33, 0
      %p93 = por %p91, %p92
      %s95 = sadd.s32 %s94, 1
      %p98 = scmp.eq.s32.totalorder %s27, 23
      %p99 = scmp.ne.s32.totalorder %s94, %s96
      %p100 = scmp.eq.s32.totalorder %s27, 0
      %p101 = por %p99, %p100
      %p102 = scmp.ne.s32.totalorder %s94, %s96
      %p103 = scmp.eq.s32.totalorder %s32, 23
      %p104 = por %p102, %p103
      %p105 = scmp.ne.s32.totalorder %s96, %s97
      %p106 = scmp.eq.s32.totalorder %s32, 0
      %p107 = por %p105, %p106
      %p108 = scmp.ne.s32.totalorder %s96, %s97
      %p109 = scmp.eq.s32.totalorder %s33, 23
      %p110 = por %p108, %p109
      %p112 = scmp.ne.s32.totalorder %s97, %s111
      %p113 = scmp.eq.s32.totalorder %s33, 0
      %p114 = por %p112, %p113
      %s115 = ssub.s32 %s34, %s46
      %p116 = scmp.eq.s32.totalorder %s115, 0
      %s118 = sadd.s32 %s117, 1
      %s119 = scalar_select %p116, %s117, %s118
      %p122 = pneg %p116
      %p123 = scmp.eq.s32.totalorder %s27, 23
      %p124 = por %p122, %p123
      %p125 = scmp.ne.s32.totalorder %s117, %s120
      %p126 = scmp.eq.s32.totalorder %s27, 0
      %p127 = por %p125, %p126
      %p128 = scmp.ne.s32.totalorder %s117, %s120
      %p129 = scmp.eq.s32.totalorder %s32, 23
      %p130 = por %p128, %p129
      %p131 = scmp.ne.s32.totalorder %s120, %s121
      %p132 = scmp.eq.s32.totalorder %s32, 0
      %p133 = por %p131, %p132
      %p134 = scmp.ne.s32.totalorder %s120, %s121
      %p135 = scmp.eq.s32.totalorder %s33, 23
      %p136 = por %p134, %p135
      %p138 = scmp.ne.s32.totalorder %s121, %s137
      %p139 = scmp.eq.s32.totalorder %s33, 0
      %p140 = por %p138, %p139
      %s141 = ssub.s32 %s35, %s42
      %p142 = scmp.eq.s32.totalorder %s141, 0
      %s144 = sadd.s32 %s143, 1
      %s145 = scalar_select %p142, %s143, %s144
      %p148 = pneg %p142
      %p149 = scmp.eq.s32.totalorder %s27, 23
      %p150 = por %p148, %p149
      %p151 = scmp.ne.s32.totalorder %s143, %s146
      %p152 = scmp.eq.s32.totalorder %s27, 0
      %p153 = por %p151, %p152
      %p154 = scmp.ne.s32.totalorder %s143, %s146
      %p155 = scmp.eq.s32.totalorder %s32, 23
      %p156 = por %p154, %p155
      %p157 = scmp.ne.s32.totalorder %s146, %s147
      %p158 = scmp.eq.s32.totalorder %s32, 0
      %p159 = por %p157, %p158
      %p160 = scmp.ne.s32.totalorder %s146, %s147
      %p161 = scmp.eq.s32.totalorder %s33, 23
      %p162 = por %p160, %p161
      %p164 = scmp.ne.s32.totalorder %s147, %s163
      %p165 = scmp.eq.s32.totalorder %s33, 0
      %p166 = por %p164, %p165
      %s167 = ssub.s32 %s35, %s42
      %p168 = scmp.eq.s32.totalorder %s167, 0
      %s170 = sadd.s32 %s169, 1
      %s171 = scalar_select %p168, %s169, %s170
      %p174 = pneg %p168
      %p175 = scmp.eq.s32.totalorder %s27, 23
      %p176 = por %p174, %p175
      %p177 = scmp.ne.s32.totalorder %s169, %s172
      %p178 = scmp.eq.s32.totalorder %s27, 0
      %p179 = por %p177, %p178
      %p180 = scmp.ne.s32.totalorder %s169, %s172
      %p181 = scmp.eq.s32.totalorder %s32, 23
      %p182 = por %p180, %p181
      %p183 = scmp.ne.s32.totalorder %s172, %s173
      %p184 = scmp.eq.s32.totalorder %s32, 0
      %p185 = por %p183, %p184
      %p186 = scmp.ne.s32.totalorder %s172, %s173
      %p187 = scmp.eq.s32.totalorder %s33, 23
      %p188 = por %p186, %p187
      %p190 = scmp.ne.s32.totalorder %s173, %s189
      %p191 = scmp.eq.s32.totalorder %s33, 0
      %p192 = por %p190, %p191
      %s193 = ssub.s32 %s35, %s42
      %p194 = scmp.eq.s32.totalorder %s193, 0
      %s196 = sadd.s32 %s195, 1
      %s197 = scalar_select %p194, %s195, %s196
      %p200 = pneg %p194
      %p201 = scmp.eq.s32.totalorder %s27, 23
      %p202 = por %p200, %p201
      %p203 = scmp.ne.s32.totalorder %s195, %s198
      %p204 = scmp.eq.s32.totalorder %s27, 0
      %p205 = por %p203, %p204
      %p206 = scmp.ne.s32.totalorder %s195, %s198
      %p207 = scmp.eq.s32.totalorder %s32, 23
      %p208 = por %p206, %p207
      %p209 = scmp.ne.s32.totalorder %s198, %s199
      %p210 = scmp.eq.s32.totalorder %s32, 0
      %p211 = por %p209, %p210
      %p212 = scmp.ne.s32.totalorder %s198, %s199
      %p213 = scmp.eq.s32.totalorder %s33, 23
      %p214 = por %p212, %p213
      %p216 = scmp.ne.s32.totalorder %s199, %s215
      %p217 = scmp.eq.s32.totalorder %s33, 0
      %p218 = por %p216, %p217
      %s219 = ssub.s32 %s35, %s42
      %p220 = scmp.eq.s32.totalorder %s219, 0
      %s222 = sadd.s32 %s221, 1
      %s223 = scalar_select %p220, %s221, %s222
      %p226 = pneg %p220
      %p227 = scmp.eq.s32.totalorder %s27, 23
      %p228 = por %p226, %p227
      %p229 = scmp.ne.s32.totalorder %s221, %s224
      %p230 = scmp.eq.s32.totalorder %s27, 0
      %p231 = por %p229, %p230
      %p232 = scmp.ne.s32.totalorder %s221, %s224
      %p233 = scmp.eq.s32.totalorder %s32, 23
      %p234 = por %p232, %p233
      %p235 = scmp.ne.s32.totalorder %s224, %s225
      %p236 = scmp.eq.s32.totalorder %s32, 0
      %p237 = por %p235, %p236
      %p238 = scmp.ne.s32.totalorder %s224, %s225
      %p239 = scmp.eq.s32.totalorder %s33, 23
      %p240 = por %p238, %p239
      %p242 = scmp.ne.s32.totalorder %s225, %s241
      %p243 = scmp.eq.s32.totalorder %s33, 0
      %p244 = por %p242, %p243
      %s245 = ssub.s32 %s35, %s42
      %p246 = scmp.eq.s32.totalorder %s245, 0
      %s248 = sadd.s32 %s247, 1
      %s249 = scalar_select %p246, %s247, %s248
      %p252 = pneg %p246
      %p253 = scmp.eq.s32.totalorder %s27, 23
      %p254 = por %p252, %p253
      %p255 = scmp.ne.s32.totalorder %s247, %s250
      %p256 = scmp.eq.s32.totalorder %s27, 0
      %p257 = por %p255, %p256
      %p258 = scmp.ne.s32.totalorder %s247, %s250
      %p259 = scmp.eq.s32.totalorder %s32, 23
      %p260 = por %p258, %p259
      %p261 = scmp.ne.s32.totalorder %s250, %s251
      %p262 = scmp.eq.s32.totalorder %s32, 0
      %p263 = por %p261, %p262
      %p264 = scmp.ne.s32.totalorder %s250, %s251
      %p265 = scmp.eq.s32.totalorder %s33, 23
      %p266 = por %p264, %p265
      %p268 = scmp.ne.s32.totalorder %s251, %s267
      %p269 = scmp.eq.s32.totalorder %s33, 0
      %p270 = por %p268, %p269
      %s271 = ssub.s32 %s35, %s42
      %p272 = scmp.eq.s32.totalorder %s271, 0
      %s274 = sadd.s32 %s273, 1
      %s275 = scalar_select %p272, %s273, %s274
      %p278 = pneg %p272
      %p279 = scmp.eq.s32.totalorder %s27, 23
      %p280 = por %p278, %p279
      %p281 = scmp.ne.s32.totalorder %s273, %s276
      %p282 = scmp.eq.s32.totalorder %s27, 0
      %p283 = por %p281, %p282
      %p284 = scmp.ne.s32.totalorder %s273, %s276
      %p285 = scmp.eq.s32.totalorder %s32, 23
      %p286 = por %p284, %p285
      %p287 = scmp.ne.s32.totalorder %s276, %s277
      %p288 = scmp.eq.s32.totalorder %s32, 0
      %p289 = por %p287, %p288
      %p290 = scmp.ne.s32.totalorder %s276, %s277
      %p291 = scmp.eq.s32.totalorder %s33, 23
      %p292 = por %p290, %p291
      %p294 = scmp.ne.s32.totalorder %s277, %s293
      %p295 = scmp.eq.s32.totalorder %s33, 0
      %p296 = por %p294, %p295
      %s297 = ssub.s32 %s35, %s42
      %p298 = scmp.eq.s32.totalorder %s297, 0
      %s300 = sadd.s32 %s299, 1
      %s301 = scalar_select %p298, %s299, %s300
      %p304 = pneg %p298
      %p305 = scmp.eq.s32.totalorder %s27, 23
      %p306 = por %p304, %p305
      %p307 = scmp.ne.s32.totalorder %s299, %s302
      %p308 = scmp.eq.s32.totalorder %s27, 0
      %p309 = por %p307, %p308
      %p310 = scmp.ne.s32.totalorder %s299, %s302
      %p311 = scmp.eq.s32.totalorder %s32, 23
      %p312 = por %p310, %p311
      %p313 = scmp.ne.s32.totalorder %s302, %s303
      %p314 = scmp.eq.s32.totalorder %s32, 0
      %p315 = por %p313, %p314
      %p316 = scmp.ne.s32.totalorder %s302, %s303
      %p317 = scmp.eq.s32.totalorder %s33, 23
      %p318 = por %p316, %p317
      %p320 = scmp.ne.s32.totalorder %s303, %s319
      %p321 = scmp.eq.s32.totalorder %s33, 0
      %p322 = por %p320, %p321
      %s323 = ssub.s32 %s35, %s42
      %p324 = scmp.eq.s32.totalorder %s323, 0
      %s326 = sadd.s32 %s325, 1
      %s327 = scalar_select %p324, %s325, %s326
      %p330 = pneg %p324
      %p331 = scmp.eq.s32.totalorder %s27, 23
      %p332 = por %p330, %p331
      %p333 = scmp.ne.s32.totalorder %s325, %s328
      %p334 = scmp.eq.s32.totalorder %s27, 0
      %p335 = por %p333, %p334
      %p336 = scmp.ne.s32.totalorder %s325, %s328
      %p337 = scmp.eq.s32.totalorder %s32, 23
      %p338 = por %p336, %p337
      %p339 = scmp.ne.s32.totalorder %s328, %s329
      %p340 = scmp.eq.s32.totalorder %s32, 0
      %p341 = por %p339, %p340
      %p342 = scmp.ne.s32.totalorder %s328, %s329
      %p343 = scmp.eq.s32.totalorder %s33, 23
      %p344 = por %p342, %p343
      %p346 = scmp.ne.s32.totalorder %s329, %s345
      %p347 = scmp.eq.s32.totalorder %s33, 0
      %p348 = por %p346, %p347
      %s349 = ssub.s32 %s35, %s42
      %p350 = scmp.eq.s32.totalorder %s349, 0
      %s352 = sadd.s32 %s351, 1
      %s353 = scalar_select %p350, %s351, %s352
      %p356 = pneg %p350
      %p357 = scmp.eq.s32.totalorder %s27, 23
      %p358 = por %p356, %p357
      %p359 = scmp.ne.s32.totalorder %s351, %s354
      %p360 = scmp.eq.s32.totalorder %s27, 0
      %p361 = por %p359, %p360
      %p362 = scmp.ne.s32.totalorder %s351, %s354
      %p363 = scmp.eq.s32.totalorder %s32, 23
      %p364 = por %p362, %p363
      %p365 = scmp.ne.s32.totalorder %s354, %s355
      %p366 = scmp.eq.s32.totalorder %s32, 0
      %p367 = por %p365, %p366
      %p368 = scmp.ne.s32.totalorder %s354, %s355
      %p369 = scmp.eq.s32.totalorder %s33, 23
      %p370 = por %p368, %p369
      %p372 = scmp.ne.s32.totalorder %s355, %s371
      %p373 = scmp.eq.s32.totalorder %s33, 0
      %p374 = por %p372, %p373
      %s375 = ssub.s32 %s35, %s42
      %p376 = scmp.eq.s32.totalorder %s375, 0
      %s378 = sadd.s32 %s377, 1
      %s379 = scalar_select %p376, %s377, %s378
      %p382 = pneg %p376
      %p383 = scmp.eq.s32.totalorder %s27, 23
      %p384 = por %p382, %p383
      %p385 = scmp.ne.s32.totalorder %s377, %s380
      %p386 = scmp.eq.s32.totalorder %s27, 0
      %p387 = por %p385, %p386
      %p388 = scmp.ne.s32.totalorder %s377, %s380
      %p389 = scmp.eq.s32.totalorder %s32, 23
      %p390 = por %p388, %p389
      %p391 = scmp.ne.s32.totalorder %s380, %s381
      %p392 = scmp.eq.s32.totalorder %s32, 0
      %p393 = por %p391, %p392
      %p394 = scmp.ne.s32.totalorder %s380, %s381
      %p395 = scmp.eq.s32.totalorder %s33, 23
      %p396 = por %p394, %p395
      %p398 = scmp.ne.s32.totalorder %s381, %s397
      %p399 = scmp.eq.s32.totalorder %s33, 0
      %p400 = por %p398, %p399
      %s401 = ssub.s32 %s35, %s42
      %p402 = scmp.eq.s32.totalorder %s401, 0
      %s404 = sadd.s32 %s403, 1
      %s405 = scalar_select %p402, %s403, %s404
      %p408 = pneg %p402
      %p409 = scmp.eq.s32.totalorder %s27, 23
      %p410 = por %p408, %p409
      %p411 = scmp.ne.s32.totalorder %s403, %s406
      %p412 = scmp.eq.s32.totalorder %s27, 0
      %p413 = por %p411, %p412
      %p414 = scmp.ne.s32.totalorder %s403, %s406
      %p415 = scmp.eq.s32.totalorder %s32, 23
      %p416 = por %p414, %p415
      %p417 = scmp.ne.s32.totalorder %s406, %s407
      %p418 = scmp.eq.s32.totalorder %s32, 0
      %p419 = por %p417, %p418
      %p420 = scmp.ne.s32.totalorder %s406, %s407
      %p421 = scmp.eq.s32.totalorder %s33, 23
      %p422 = por %p420, %p421
      %p424 = scmp.ne.s32.totalorder %s407, %s423
      %p425 = scmp.eq.s32.totalorder %s33, 0
      %p426 = por %p424, %p425
      %s427 = ssub.s32 %s35, %s42
      %p428 = scmp.eq.s32.totalorder %s427, 0
      %s430 = sadd.s32 %s429, 1
      %s431 = scalar_select %p428, %s429, %s430
      %p434 = pneg %p428
      %p435 = scmp.eq.s32.totalorder %s27, 23
      %p436 = por %p434, %p435
      %p437 = scmp.ne.s32.totalorder %s429, %s432
      %p438 = scmp.eq.s32.totalorder %s27, 0
      %p439 = por %p437, %p438
      %p440 = scmp.ne.s32.totalorder %s429, %s432
      %p441 = scmp.eq.s32.totalorder %s32, 23
      %p442 = por %p440, %p441
      %p443 = scmp.ne.s32.totalorder %s432, %s433
      %p444 = scmp.eq.s32.totalorder %s32, 0
      %p445 = por %p443, %p444
      %p446 = scmp.ne.s32.totalorder %s432, %s433
      %p447 = scmp.eq.s32.totalorder %s33, 23
      %p448 = por %p446, %p447
      %p450 = scmp.ne.s32.totalorder %s433, %s449
      %p451 = scmp.eq.s32.totalorder %s33, 0
      %p452 = por %p450, %p451
      %s454 = sadd.s32 %s453, 1
      %p457 = scmp.eq.s32.totalorder %s27, 23
      %p458 = scmp.ne.s32.totalorder %s453, %s455
      %p459 = scmp.eq.s32.totalorder %s27, 0
      %p460 = por %p458, %p459
      %p461 = scmp.ne.s32.totalorder %s453, %s455
      %p462 = scmp.eq.s32.totalorder %s32, 23
      %p463 = por %p461, %p462
      %p464 = scmp.ne.s32.totalorder %s455, %s456
      %p465 = scmp.eq.s32.totalorder %s32, 0
      %p466 = por %p464, %p465
      %p467 = scmp.ne.s32.totalorder %s455, %s456
      %p468 = scmp.eq.s32.totalorder %s33, 23
      %p469 = por %p467, %p468
      %p471 = scmp.ne.s32.totalorder %s456, %s470
      %p472 = scmp.eq.s32.totalorder %s33, 0
      %p473 = por %p471, %p472
      %s475 = sadd.s32 %s474, 1
      %p478 = scmp.eq.s32.totalorder %s27, 23
      %p479 = scmp.ne.s32.totalorder %s474, %s476
      %p480 = scmp.eq.s32.totalorder %s27, 0
      %p481 = por %p479, %p480
      %p482 = scmp.ne.s32.totalorder %s474, %s476
      %p483 = scmp.eq.s32.totalorder %s32, 23
      %p484 = por %p482, %p483
      %p485 = scmp.ne.s32.totalorder %s476, %s477
      %p486 = scmp.eq.s32.totalorder %s32, 0
      %p487 = por %p485, %p486
      %p488 = scmp.ne.s32.totalorder %s476, %s477
      %p489 = scmp.eq.s32.totalorder %s33, 23
      %p490 = por %p488, %p489
      %p492 = scmp.ne.s32.totalorder %s477, %s491
      %p493 = scmp.eq.s32.totalorder %s33, 0
      %p494 = por %p492, %p493
      %s495 = ssub.s32 %s34, %s46
      %p496 = scmp.eq.s32.totalorder %s495, 0
      %s498 = sadd.s32 %s497, 1
      %s499 = scalar_select %p496, %s497, %s498
      %p502 = pneg %p496
      %p503 = scmp.eq.s32.totalorder %s27, 23
      %p504 = por %p502, %p503
      %p505 = scmp.ne.s32.totalorder %s497, %s500
      %p506 = scmp.eq.s32.totalorder %s27, 0
      %p507 = por %p505, %p506
      %p508 = scmp.ne.s32.totalorder %s497, %s500
      %p509 = scmp.eq.s32.totalorder %s32, 23
      %p510 = por %p508, %p509
      %p511 = scmp.ne.s32.totalorder %s500, %s501
      %p512 = scmp.eq.s32.totalorder %s32, 0
      %p513 = por %p511, %p512
      %p514 = scmp.ne.s32.totalorder %s500, %s501
      %p515 = scmp.eq.s32.totalorder %s33, 23
      %p516 = por %p514, %p515
      %p518 = scmp.ne.s32.totalorder %s501, %s517
      %p519 = scmp.eq.s32.totalorder %s33, 0
      %p520 = por %p518, %p519
      %p521 = scmp.le.s32.totalorder 1, %s27
      %p522 = scmp.lt.s32.totalorder %s27, 25
      %p523 = pnand %p521, %p522
      %p524 = pneg %p523
      // Predicated region
      $region9: #{trusformer_forward.19} parent=5 // pred_check
        _
      $region10: #{trusformer_forward.19} parent=5 // pred_check_branch
        %526 = sbr.rel (%p523) target = $region12
      $region11: #{trusformer_forward.19} parent=5 // pred_region
        %s527 = ssub.s32 %s27, 1
        // Predicated region
        $region13: #{trusformer_forward.19} parent=11 // pred_check
          %p528 = pneg %p86
        $region14: #{trusformer_forward.19} parent=11 // pred_check_branch
          %530 = sbr.rel (%p528) target = $region16
        $region15: #{trusformer_forward.19} parent=11 // pred_region
          _
        $region16: #{trusformer_forward.19} parent=11 // pred_fallthru
          _
        // Predicated region
        $region17: #{trusformer_forward.19} parent=11 // pred_check
          %p531 = pneg %p107
        $region18: #{trusformer_forward.19} parent=11 // pred_check_branch
          %533 = sbr.rel (%p531) target = $region20
        $region19: #{trusformer_forward.19} parent=11 // pred_region
          _
        $region20: #{trusformer_forward.19} parent=11 // pred_fallthru
          _
        // Predicated region
        $region21: #{trusformer_forward.19} parent=11 // pred_check
          %p534 = pneg %p466
        $region22: #{trusformer_forward.19} parent=11 // pred_check_branch
          %536 = sbr.rel (%p534) target = $region24
        $region23: #{trusformer_forward.19} parent=11 // pred_region
          _
        $region24: #{trusformer_forward.19} parent=11 // pred_fallthru
          _
        // Predicated region
        $region25: #{trusformer_forward.19} parent=11 // pred_check
          %p537 = pneg %p487
        $region26: #{trusformer_forward.19} parent=11 // pred_check_branch
          %539 = sbr.rel (%p537) target = $region28
        $region27: #{trusformer_forward.19} parent=11 // pred_region
          _
        $region28: #{trusformer_forward.19} parent=11 // pred_fallthru
          _
      $region12: #{trusformer_forward.19} parent=5 // pred_fallthru
        _
      %p540 = scmp.lt.s32.totalorder %s27, 24
      // Predicated region
      $region29: #{trusformer_forward.19} parent=5 // pred_check
        %p541 = pneg %p540
      $region30: #{trusformer_forward.19} parent=5 // pred_check_branch
        %543 = sbr.rel (%p541) target = $region32
      $region31: #{trusformer_forward.19} parent=5 // pred_region
        // Predicated region
        $region33: #{trusformer_forward.19} parent=31 // pred_check
          %p544 = pneg %p59
        $region34: #{trusformer_forward.19} parent=31 // pred_check_branch
          %546 = sbr.rel (%p544) target = $region36
        $region35: #{trusformer_forward.19} parent=31 // pred_region
          %p547 = scmp.lt.s32.totalorder %s34, 1
          %s548 = scalar_select %p547, %s34, 1
          %s549 = smul.addr %s548, 2
          %s550 = scalar_lea.vmem %s0, %s549
        $region36: #{trusformer_forward.19} parent=31 // pred_fallthru
          _
        // Predicated region
        $region37: #{trusformer_forward.19} parent=31 // pred_check
          %p551 = pneg %p127
        $region38: #{trusformer_forward.19} parent=31 // pred_check_branch
          %553 = sbr.rel (%p551) target = $region40
        $region39: #{trusformer_forward.19} parent=31 // pred_region
          %p554 = scmp.lt.s32.totalorder %s34, 1
          %s555 = scalar_select %p554, %s34, 1
          %s556 = smul.addr %s555, 4
          %s557 = scalar_lea.vmem %s3, %s556
        $region40: #{trusformer_forward.19} parent=31 // pred_fallthru
          _
        // Predicated region
        $region41: #{trusformer_forward.19} parent=31 // pred_check
          %p558 = pneg %p153
        $region42: #{trusformer_forward.19} parent=31 // pred_check_branch
          %560 = sbr.rel (%p558) target = $region44
        $region43: #{trusformer_forward.19} parent=31 // pred_region
          %p561 = scmp.lt.s32.totalorder %s35, 11
          %s562 = scalar_select %p561, %s35, 11
          %s563 = smul.addr %s562, 16
          %s564 = smul.addr %s563, 4
          %s565 = scalar_lea.vmem %s4, %s564
        $region44: #{trusformer_forward.19} parent=31 // pred_fallthru
          _
        // Predicated region
        $region45: #{trusformer_forward.19} parent=31 // pred_check
          %p566 = pneg %p179
        $region46: #{trusformer_forward.19} parent=31 // pred_check_branch
          %568 = sbr.rel (%p566) target = $region48
        $region47: #{trusformer_forward.19} parent=31 // pred_region
          %p569 = scmp.lt.s32.totalorder %s35, 11
          %s570 = scalar_select %p569, %s35, 11
          %s571 = smul.addr %s570, 2
          %s572 = scalar_lea.vmem %s5, %s571
        $region48: #{trusformer_forward.19} parent=31 // pred_fallthru
          _
        // Predicated region
        $region49: #{trusformer_forward.19} parent=31 // pred_check
          %p573 = pneg %p205
        $region50: #{trusformer_forward.19} parent=31 // pred_check_branch
          %575 = sbr.rel (%p573) target = $region52
        $region51: #{trusformer_forward.19} parent=31 // pred_region
          %p576 = scmp.lt.s32.totalorder %s35, 11
          %s577 = scalar_select %p576, %s35, 11
          %s578 = smul.addr %s577, 8
          %s579 = smul.addr %s578, 4
          %s580 = scalar_lea.vmem %s6, %s579
        $region52: #{trusformer_forward.19} parent=31 // pred_fallthru
          _
        // Predicated region
        $region53: #{trusformer_forward.19} parent=31 // pred_check
          %p581 = pneg %p231
        $region54: #{trusformer_forward.19} parent=31 // pred_check_branch
          %583 = sbr.rel (%p581) target = $region56
        $region55: #{trusformer_forward.19} parent=31 // pred_region
          %p584 = scmp.lt.s32.totalorder %s35, 11
          %s585 = scalar_select %p584, %s35, 11
          %s586 = scalar_lea.vmem %s7, %s585
        $region56: #{trusformer_forward.19} parent=31 // pred_fallthru
          _
        // Predicated region
        $region57: #{trusformer_forward.19} parent=31 // pred_check
          %p587 = pneg %p257
        $region58: #{trusformer_forward.19} parent=31 // pred_check_branch
          %589 = sbr.rel (%p587) target = $region60
        $region59: #{trusformer_forward.19} parent=31 // pred_region
          %p590 = scmp.lt.s32.totalorder %s35, 11
          %s591 = scalar_select %p590, %s35, 11
          %s592 = scalar_lea.vmem %s8, %s591
        $region60: #{trusformer_forward.19} parent=31 // pred_fallthru
          _
        // Predicated region
        $region61: #{trusformer_forward.19} parent=31 // pred_check
          %p593 = pneg %p283
        $region62: #{trusformer_forward.19} parent=31 // pred_check_branch
          %595 = sbr.rel (%p593) target = $region64
        $region63: #{trusformer_forward.19} parent=31 // pred_region
          %p596 = scmp.lt.s32.totalorder %s35, 11
          %s597 = scalar_select %p596, %s35, 11
          %s598 = scalar_lea.vmem %s9, %s597
        $region64: #{trusformer_forward.19} parent=31 // pred_fallthru
          _
        // Predicated region
        $region65: #{trusformer_forward.19} parent=31 // pred_check
          %p599 = pneg %p309
        $region66: #{trusformer_forward.19} parent=31 // pred_check_branch
          %601 = sbr.rel (%p599) target = $region68
        $region67: #{trusformer_forward.19} parent=31 // pred_region
          %p602 = scmp.lt.s32.totalorder %s35, 11
          %s603 = scalar_select %p602, %s35, 11
          %s604 = smul.addr %s603, 8
          %s605 = smul.addr %s604, 4
          %s606 = scalar_lea.vmem %s10, %s605
        $region68: #{trusformer_forward.19} parent=31 // pred_fallthru
          _
        // Predicated region
        $region69: #{trusformer_forward.19} parent=31 // pred_check
          %p607 = pneg %p335
        $region70: #{trusformer_forward.19} parent=31 // pred_check_branch
          %609 = sbr.rel (%p607) target = $region72
        $region71: #{trusformer_forward.19} parent=31 // pred_region
          %p610 = scmp.lt.s32.totalorder %s35, 11
          %s611 = scalar_select %p610, %s35, 11
          %s612 = scalar_lea.vmem %s11, %s611
        $region72: #{trusformer_forward.19} parent=31 // pred_fallthru
          _
        // Predicated region
        $region73: #{trusformer_forward.19} parent=31 // pred_check
          %p613 = pneg %p361
        $region74: #{trusformer_forward.19} parent=31 // pred_check_branch
          %615 = sbr.rel (%p613) target = $region76
        $region75: #{trusformer_forward.19} parent=31 // pred_region
          %p616 = scmp.lt.s32.totalorder %s35, 11
          %s617 = scalar_select %p616, %s35, 11
          %s618 = smul.addr %s617, 8
          %s619 = smul.addr %s618, 4
          %s620 = scalar_lea.vmem %s12, %s619
        $region76: #{trusformer_forward.19} parent=31 // pred_fallthru
          _
        // Predicated region
        $region77: #{trusformer_forward.19} parent=31 // pred_check
          %p621 = pneg %p387
        $region78: #{trusformer_forward.19} parent=31 // pred_check_branch
          %623 = sbr.rel (%p621) target = $region80
        $region79: #{trusformer_forward.19} parent=31 // pred_region
          %p624 = scmp.lt.s32.totalorder %s35, 11
          %s625 = scalar_select %p624, %s35, 11
          %s626 = scalar_lea.vmem %s13, %s625
        $region80: #{trusformer_forward.19} parent=31 // pred_fallthru
          _
        // Predicated region
        $region81: #{trusformer_forward.19} parent=31 // pred_check
          %p627 = pneg %p413
        $region82: #{trusformer_forward.19} parent=31 // pred_check_branch
          %629 = sbr.rel (%p627) target = $region84
        $region83: #{trusformer_forward.19} parent=31 // pred_region
          %p630 = scmp.lt.s32.totalorder %s35, 11
          %s631 = scalar_select %p630, %s35, 11
          %s632 = scalar_lea.vmem %s14, %s631
        $region84: #{trusformer_forward.19} parent=31 // pred_fallthru
          _
        // Predicated region
        $region85: #{trusformer_forward.19} parent=31 // pred_check
          %p633 = pneg %p439
        $region86: #{trusformer_forward.19} parent=31 // pred_check_branch
          %635 = sbr.rel (%p633) target = $region88
        $region87: #{trusformer_forward.19} parent=31 // pred_region
          %p636 = scmp.lt.s32.totalorder %s35, 11
          %s637 = scalar_select %p636, %s35, 11
          %s638 = scalar_lea.vmem %s15, %s637
        $region88: #{trusformer_forward.19} parent=31 // pred_fallthru
          _
      $region32: #{trusformer_forward.19} parent=5 // pred_fallthru
        _
      %p639 = scmp.le.s32.totalorder 1, %s27
      %p640 = scmp.lt.s32.totalorder %s27, 25
      %p641 = pnand %p639, %p640
      %p642 = pneg %p641
      // Predicated region
      $region89: #{trusformer_forward.19} parent=5 // pred_check
        _
      $region90: #{trusformer_forward.19} parent=5 // pred_check_branch
        %644 = sbr.rel (%p641) target = $region92
      $region91: #{trusformer_forward.19} parent=5 // pred_region
        %s645 = ssub.s32 %s27, 1
        %p646 = scmp.lt.s32.totalorder %s36, 1
        %s647 = scalar_select %p646, %s36, 1
        %s648 = smul.addr %s647, 2
        %s649 = scalar_lea.vmem %s0, %s648
        %p650 = pneg %p65
        %p651 = pneg %p62
        %p652 = pneg %p86
        %p653 = pneg %p83
        %p654 = pneg %p107
        %p655 = pneg %p104
        %p656 = scmp.lt.s32.totalorder %s36, 1
        %s657 = scalar_select %p656, %s36, 1
        %s658 = smul.addr %s657, 4
        %s659 = scalar_lea.vmem %s3, %s658
        %p660 = pneg %p133
        %p661 = pneg %p130
        %p662 = scmp.lt.s32.totalorder %s37, 11
        %s663 = scalar_select %p662, %s37, 11
        %s664 = smul.addr %s663, 16
        %s665 = smul.addr %s664, 4
        %s666 = scalar_lea.vmem %s4, %s665
        %p667 = pneg %p159
        %p668 = pneg %p156
        %p669 = scmp.lt.s32.totalorder %s37, 11
        %s670 = scalar_select %p669, %s37, 11
        %s671 = smul.addr %s670, 2
        %s672 = scalar_lea.vmem %s5, %s671
        %p673 = pneg %p185
        %p674 = pneg %p182
        %p675 = scmp.lt.s32.totalorder %s37, 11
        %s676 = scalar_select %p675, %s37, 11
        %s677 = smul.addr %s676, 8
        %s678 = smul.addr %s677, 4
        %s679 = scalar_lea.vmem %s6, %s678
        %p680 = pneg %p211
        %p681 = pneg %p208
        %p682 = scmp.lt.s32.totalorder %s37, 11
        %s683 = scalar_select %p682, %s37, 11
        %s684 = scalar_lea.vmem %s7, %s683
        %p685 = pneg %p237
        %p686 = pneg %p234
        %p687 = scmp.lt.s32.totalorder %s37, 11
        %s688 = scalar_select %p687, %s37, 11
        %s689 = scalar_lea.vmem %s8, %s688
        %p690 = pneg %p263
        %p691 = pneg %p260
        %p692 = scmp.lt.s32.totalorder %s37, 11
        %s693 = scalar_select %p692, %s37, 11
        %s694 = scalar_lea.vmem %s9, %s693
        %p695 = pneg %p289
        %p696 = pneg %p286
        %p697 = scmp.lt.s32.totalorder %s37, 11
        %s698 = scalar_select %p697, %s37, 11
        %s699 = smul.addr %s698, 8
        %s700 = smul.addr %s699, 4
        %s701 = scalar_lea.vmem %s10, %s700
        %p702 = pneg %p315
        %p703 = pneg %p312
        %p704 = scmp.lt.s32.totalorder %s37, 11
        %s705 = scalar_select %p704, %s37, 11
        %s706 = scalar_lea.vmem %s11, %s705
        %p707 = pneg %p341
        %p708 = pneg %p338
        %p709 = scmp.lt.s32.totalorder %s37, 11
        %s710 = scalar_select %p709, %s37, 11
        %s711 = smul.addr %s710, 8
        %s712 = smul.addr %s711, 4
        %s713 = scalar_lea.vmem %s12, %s712
        %p714 = pneg %p367
        %p715 = pneg %p364
        %p716 = scmp.lt.s32.totalorder %s37, 11
        %s717 = scalar_select %p716, %s37, 11
        %s718 = scalar_lea.vmem %s13, %s717
        %p719 = pneg %p393
        %p720 = pneg %p390
        %p721 = scmp.lt.s32.totalorder %s37, 11
        %s722 = scalar_select %p721, %s37, 11
        %s723 = scalar_lea.vmem %s14, %s722
        %p724 = pneg %p419
        %p725 = pneg %p416
        %p726 = scmp.lt.s32.totalorder %s37, 11
        %s727 = scalar_select %p726, %s37, 11
        %s728 = scalar_lea.vmem %s15, %s727
        %p729 = pneg %p445
        %p730 = pneg %p442
        %p731 = pneg %p466
        %p732 = pneg %p463
        %p733 = pneg %p487
        %p734 = pneg %p484
        %p735 = pneg %p513
        %p736 = pneg %p510
        %s737 = sand.u32 %s500, 1
        %s738 = scalar_lea.sflag [#allocation4], %s737
        %s739 = sand.u32 %s500, 1
        %s740 = scalar_lea.vmem [#allocation3], %s739
        %p741 = scmp.lt.s32.totalorder %s36, 1
        %s742 = scalar_select %p741, %s36, 1
        %s743 = smul.addr %s742, 2
        %s744 = scalar_lea.vmem %s0, %s743
        %p745 = scmp.lt.s32.totalorder %s36, 1
        %s746 = scalar_select %p745, %s36, 1
        %s747 = smul.addr %s746, 4
        %s748 = scalar_lea.vmem %s3, %s747
        %p749 = scmp.lt.s32.totalorder %s37, 11
        %s750 = scalar_select %p749, %s37, 11
        %s751 = smul.addr %s750, 16
        %s752 = smul.addr %s751, 4
        %s753 = scalar_lea.vmem %s4, %s752
        %p754 = scmp.lt.s32.totalorder %s37, 11
        %s755 = scalar_select %p754, %s37, 11
        %s756 = smul.addr %s755, 2
        %s757 = scalar_lea.vmem %s5, %s756
        %p758 = scmp.lt.s32.totalorder %s37, 11
        %s759 = scalar_select %p758, %s37, 11
        %s760 = smul.addr %s759, 8
        %s761 = smul.addr %s760, 4
        %s762 = scalar_lea.vmem %s6, %s761
        %p763 = scmp.lt.s32.totalorder %s37, 11
        %s764 = scalar_select %p763, %s37, 11
        %s765 = scalar_lea.vmem %s7, %s764
        %p766 = scmp.lt.s32.totalorder %s37, 11
        %s767 = scalar_select %p766, %s37, 11
        %s768 = scalar_lea.vmem %s8, %s767
        %p769 = scmp.lt.s32.totalorder %s37, 11
        %s770 = scalar_select %p769, %s37, 11
        %s771 = scalar_lea.vmem %s9, %s770
        %p772 = scmp.lt.s32.totalorder %s37, 11
        %s773 = scalar_select %p772, %s37, 11
        %s774 = smul.addr %s773, 8
        %s775 = smul.addr %s774, 4
        %s776 = scalar_lea.vmem %s10, %s775
        %p777 = scmp.lt.s32.totalorder %s37, 11
        %s778 = scalar_select %p777, %s37, 11
        %s779 = scalar_lea.vmem %s11, %s778
        %p780 = scmp.lt.s32.totalorder %s37, 11
        %s781 = scalar_select %p780, %s37, 11
        %s782 = smul.addr %s781, 8
        %s783 = smul.addr %s782, 4
        %s784 = scalar_lea.vmem %s12, %s783
        %p785 = scmp.lt.s32.totalorder %s37, 11
        %s786 = scalar_select %p785, %s37, 11
        %s787 = scalar_lea.vmem %s13, %s786
        %p788 = scmp.lt.s32.totalorder %s37, 11
        %s789 = scalar_select %p788, %s37, 11
        %s790 = scalar_lea.vmem %s14, %s789
        %p791 = scmp.lt.s32.totalorder %s37, 11
        %s792 = scalar_select %p791, %s37, 11
        %s793 = scalar_lea.vmem %s15, %s792
        %p795 = scmp.eq.s32.totalorder %s37, 0
        // Predicated region
        $region93: #{trusformer_forward.19} parent=91 // pred_check
          %p796 = pneg %p795
        $region94: #{trusformer_forward.19} parent=91 // pred_check_branch
          %798 = sbr.rel (%p796) target = $region96
        $region95: #{trusformer_forward.19} parent=91 // pred_region
          %v799 = vld [vmem:[%s744] sm:$0x3]
          %v800 = vld [vmem:[%s1] sm:$0xf]
          %v801 = vld [vmem:[%s1 + $0x4] sm:$0xf]
          %v802 = vld [vmem:[%s1 + $0x8] sm:$0xf]
          %v803 = vld [vmem:[%s1 + $0xc] sm:$0xf]
          %v804 = vld [vmem:[%s1 + $0x10] sm:$0xf]
          %v805 = vld [vmem:[%s1 + $0x14] sm:$0xf]
          %v806 = vld [vmem:[%s1 + $0x18] sm:$0xf]
          %v807 = vld [vmem:[%s1 + $0x1c] sm:$0xf]
          %v808 = vld [vmem:[%s2] sm:$0x1]
          %v810 = vlaneseq
          %v811 = vshrl.u32 %v810, 7
          %v812 = vsub.s32 0, %v811
          %v813 = vrot.slane %v808, %v812
          %v823 = vunpack.c.l.b16 %v800
          %v824 = vunpack.c.l.b16 %v801
          %v825 = vunpack.c.l.b16 %v802
          %v826 = vunpack.c.l.b16 %v803
          %v827 = vunpack.c.l.b16 %v804
          %v828 = vunpack.c.l.b16 %v805
          %v829 = vunpack.c.l.b16 %v806
          %v830 = vunpack.c.l.b16 %v807
          %v831 = vpack.c.b16 %v824, %v823
          %v832 = vpack.c.b16 %v826, %v825
          %v833 = vpack.c.b16 %v828, %v827
          %v834 = vpack.c.b16 %v830, %v829
          %vm839 = vcmask 523264
          %v841 = vsel %vm839, %v799, 0
          %843 = vmatprep.subr.bf16.mxu0 0
          %844 = vmatpush1.bf16.msra.mxu0 %v831
          %845 = vmatprep.subr.bf16.mxu0 0
          %846 = vmatpush1.bf16.msra.mxu0 %v832
          %847 = vmatprep.subr.bf16.mxu0 0
          %848 = vmatpush1.bf16.msra.mxu0 %v833
          %849 = vmatprep.subr.bf16.mxu0 0
          %850 = vmatpush1.bf16.msra.mxu0 %v834
          %851 = vmatprep.subr.bf16.mxu0 0
          %852 = vmatpush1.bf16.msra.mxu0 0
          %853 = vmatprep.subr.bf16.mxu0 0
          %854 = vmatpush1.bf16.msra.mxu0 0
          %855 = vmatprep.subr.bf16.mxu0 0
          %856 = vmatpush1.bf16.msra.mxu0 0
          %857 = vmatprep.subr.bf16.mxu0 0
          %858 = vmatpush1.bf16.msra.mxu0 0
          %859 = vmatprep.subr.bf16.mxu0 0
          %860 = vmatpush1.bf16.msra.mxu0 0
          %861 = vmatprep.subr.bf16.mxu0 0
          %862 = vmatpush1.bf16.msra.mxu0 0
          %863 = vmatprep.subr.bf16.mxu0 0
          %864 = vmatpush1.bf16.msra.mxu0 0
          %865 = vmatprep.subr.bf16.mxu0 0
          %866 = vmatpush1.bf16.msra.mxu0 0
          %867 = vmatprep.subr.bf16.mxu0 0
          %868 = vmatpush1.bf16.msra.mxu0 0
          %869 = vmatprep.subr.bf16.mxu0 0
          %870 = vmatpush1.bf16.msra.mxu0 0
          %871 = vmatprep.subr.bf16.mxu0 0
          %872 = vmatpush1.bf16.msra.mxu0 0
          %873 = vmatprep.subr.bf16.mxu0 0
          %874 = vmatpush1.bf16.msra.mxu0 0
          %875 = vmatprep.mubr.bf16.mxu0 0
          %876 = vmatmul.mubr.bf16.gmra.mrb[0].mxu0 %v841
          %v877 = vpop.f32.mrb[0].mxu0
          %v878 = vadd.f32 %v813, %v877
          %v879 = vpop.f32.mrb[0].mxu0
          %v880 = vpop.f32.mrb[0].mxu0
          %v881 = vpop.f32.mrb[0].mxu0
          %882 = vdwg.mxu0
          %v883 = vld [vmem:[%s748] sm:$0xf]
          %v884 = vadd.f32 %v878, %v883
          %vm885 = vcmask 519168
          %886 = vst.msk [vmem:[#allocation2] sm:$0xf] %vm885, %v884
          %887 = vst [vmem:[%s740] sm:$0x1] 0.0
        $region96: #{trusformer_forward.19} parent=91 // pred_fallthru
          _
        %v888 = vld [vmem:[#allocation2] sm:$0xf]
        %v889 = vpack.c.bf16 %v888, %v888
        %v890 = vld [vmem:[%s762] sm:$0xf]
        %v891 = vld [vmem:[%s762 + $0x4] sm:$0xf]
        %v892 = vld [vmem:[%s762 + $0x8] sm:$0xf]
        %v893 = vld [vmem:[%s762 + $0xc] sm:$0xf]
        %v894 = vld [vmem:[%s762 + $0x10] sm:$0xf]
        %v895 = vld [vmem:[%s762 + $0x14] sm:$0xf]
        %v896 = vld [vmem:[%s762 + $0x18] sm:$0xf]
        %v897 = vld [vmem:[%s762 + $0x1c] sm:$0xf]
        %v898 = vld [vmem:[%s753] sm:$0xff]
        %v899 = vld [vmem:[%s753 + $0x8] sm:$0xff]
        %v900 = vld [vmem:[%s753 + $0x10] sm:$0xff]
        %v901 = vld [vmem:[%s753 + $0x18] sm:$0xff]
        %v902 = vld [vmem:[%s753 + $0x20] sm:$0xff]
        %v903 = vld [vmem:[%s753 + $0x28] sm:$0xff]
        %v904 = vld [vmem:[%s753 + $0x30] sm:$0xff]
        %v905 = vld [vmem:[%s753 + $0x38] sm:$0xff]
        %v906 = vld [vmem:[%s757] sm:$0x3]
        %v908 = vlaneseq
        %v909 = vshrl.u32 %v908, 7
        %v910 = vsub.s32 0, %v909
        %v911 = vrot.slane %v906, %v910
        %v912 = vlaneseq
        %v913 = vshrl.u32 %v912, 7
        %v914 = vsub.s32 1, %v913
        %v915 = vrot.slane %v906, %v914
        %v926 = vunpack.c.l.b16 %v898
        %v927 = vunpack.c.h.b16 %v898
        %v928 = vunpack.c.l.b16 %v899
        %v929 = vunpack.c.h.b16 %v899
        %v930 = vunpack.c.l.b16 %v900
        %v931 = vunpack.c.h.b16 %v900
        %v932 = vunpack.c.l.b16 %v901
        %v933 = vunpack.c.h.b16 %v901
        %v934 = vunpack.c.l.b16 %v902
        %v935 = vunpack.c.h.b16 %v902
        %v936 = vunpack.c.l.b16 %v903
        %v937 = vunpack.c.h.b16 %v903
        %v938 = vunpack.c.l.b16 %v904
        %v939 = vunpack.c.h.b16 %v904
        %v940 = vunpack.c.l.b16 %v905
        %v941 = vunpack.c.h.b16 %v905
        %v942 = vpack.c.b16 %v928, %v926
        %v943 = vpack.c.b16 %v929, %v927
        %v944 = vpack.c.b16 %v932, %v930
        %v945 = vpack.c.b16 %v933, %v931
        %v946 = vpack.c.b16 %v936, %v934
        %v947 = vpack.c.b16 %v937, %v935
        %v948 = vpack.c.b16 %v940, %v938
        %v949 = vpack.c.b16 %v941, %v939
        %vm958 = vcmask 523264
        %v960 = vsel %vm958, %v889, 0
        %962 = vmatprep.subr.bf16.mxu0 %v943
        %963 = vmatpush1.bf16.msra.mxu0 %v942
        %964 = vmatprep.subr.bf16.mxu0 %v945
        %965 = vmatpush1.bf16.msra.mxu0 %v944
        %966 = vmatprep.subr.bf16.mxu0 %v947
        %967 = vmatpush1.bf16.msra.mxu0 %v946
        %968 = vmatprep.subr.bf16.mxu0 %v949
        %969 = vmatpush1.bf16.msra.mxu0 %v948
        %970 = vmatprep.subr.bf16.mxu0 0
        %971 = vmatpush1.bf16.msra.mxu0 0
        %972 = vmatprep.subr.bf16.mxu0 0
        %973 = vmatpush1.bf16.msra.mxu0 0
        %974 = vmatprep.subr.bf16.mxu0 0
        %975 = vmatpush1.bf16.msra.mxu0 0
        %976 = vmatprep.subr.bf16.mxu0 0
        %977 = vmatpush1.bf16.msra.mxu0 0
        %978 = vmatprep.subr.bf16.mxu0 0
        %979 = vmatpush1.bf16.msra.mxu0 0
        %980 = vmatprep.subr.bf16.mxu0 0
        %981 = vmatpush1.bf16.msra.mxu0 0
        %982 = vmatprep.subr.bf16.mxu0 0
        %983 = vmatpush1.bf16.msra.mxu0 0
        %984 = vmatprep.subr.bf16.mxu0 0
        %985 = vmatpush1.bf16.msra.mxu0 0
        %986 = vmatprep.subr.bf16.mxu0 0
        %987 = vmatpush1.bf16.msra.mxu0 0
        %988 = vmatprep.subr.bf16.mxu0 0
        %989 = vmatpush1.bf16.msra.mxu0 0
        %990 = vmatprep.subr.bf16.mxu0 0
        %991 = vmatpush1.bf16.msra.mxu0 0
        %992 = vmatprep.subr.bf16.mxu0 0
        %993 = vmatpush1.bf16.msra.mxu0 0
        %994 = vmatprep.mubr.bf16.mxu0 0
        %995 = vmatmul.mubr.bf16.gmra.mrb[0].mxu0 %v960
        %v996 = vpop.f32.mrb[0].mxu0
        %v997 = vadd.f32 %v911, %v996
        %v998 = vpop.f32.mrb[0].mxu0
        %v999 = vadd.f32 %v915, %v998
        %v1000 = vpop.f32.mrb[0].mxu0
        %v1001 = vpop.f32.mrb[0].mxu0
        %1002 = vdwg.mxu0
        %v1003 = vpack.c.bf16 %v997, %v997
        %v1004 = vpack.c.bf16 %v999, %v999
        %1006 = vrot.lane.b32.xlu0 %v1003, 64
        %v1007 = vpop.permute.xlu0 %1006
        %vm1008 = vcmask 64512
        %v1010 = vsel %vm1008, %v1003, 0
        %v1013 = vsel %vm1008, %v1007, 0
        %1015 = vmatprep.subr.bf16.mxu0 0
        %1016 = vmatpush1.bf16.xpose.msra.mxu0 %v1013
        %1017 = vmatprep.subr.bf16.mxu0 0
        %1018 = vmatpush1.bf16.xpose.msra.mxu0 0
        %1019 = vmatprep.subr.bf16.mxu0 0
        %1020 = vmatpush1.bf16.xpose.msra.mxu0 0
        %1021 = vmatprep.subr.bf16.mxu0 0
        %1022 = vmatpush1.bf16.xpose.msra.mxu0 0
        %1023 = vmatprep.subr.bf16.mxu0 0
        %1024 = vmatpush1.bf16.xpose.msra.mxu0 0
        %1025 = vmatprep.subr.bf16.mxu0 0
        %1026 = vmatpush1.bf16.xpose.msra.mxu0 0
        %1027 = vmatprep.subr.bf16.mxu0 0
        %1028 = vmatpush1.bf16.xpose.msra.mxu0 0
        %1029 = vmatprep.subr.bf16.mxu0 0
        %1030 = vmatpush1.bf16.xpose.msra.mxu0 0
        %1031 = vmatprep.subr.bf16.mxu0 0
        %1032 = vmatpush1.bf16.xpose.msra.mxu0 0
        %1033 = vmatprep.subr.bf16.mxu0 0
        %1034 = vmatpush1.bf16.xpose.msra.mxu0 0
        %1035 = vmatprep.subr.bf16.mxu0 0
        %1036 = vmatpush1.bf16.xpose.msra.mxu0 0
        %1037 = vmatprep.subr.bf16.mxu0 0
        %1038 = vmatpush1.bf16.xpose.msra.mxu0 0
        %1039 = vmatprep.subr.bf16.mxu0 0
        %1040 = vmatpush1.bf16.xpose.msra.mxu0 0
        %1041 = vmatprep.subr.bf16.mxu0 0
        %1042 = vmatpush1.bf16.xpose.msra.mxu0 0
        %1043 = vmatprep.subr.bf16.mxu0 0
        %1044 = vmatpush1.bf16.xpose.msra.mxu0 0
        %1045 = vmatprep.subr.bf16.mxu0 0
        %1046 = vmatpush1.bf16.xpose.msra.mxu0 0
        %1047 = vmatprep.mubr.bf16.mxu0 0
        %1048 = vmatmul.mubr.bf16.gmra.mrb[0].mxu0 %v1010
        %v1049 = vpop.f32.mrb[0].mxu0
        %v1050 = vadd.f32 0.0, %v1049
        %v1051 = vpop.f32.mrb[0].mxu0
        %v1052 = vpop.f32.mrb[0].mxu0
        %v1053 = vpop.f32.mrb[0].mxu0
        %1054 = vdwg.mxu0
        %v1055 = vmul.f32 %v1050, 0.35355338
        %vm1056 = vcmask 27648
        %v1057 = vsel %vm1056, %v1055, -inf
        %1058 = vmax.xlane.f32.xlu0 %v1057
        %v1059 = vpop.xlane.xlu0 %1058
        %v1060 = vsub.f32 %v1055, %v1059
        %v1061 = vmul.f32 %v1060, 1.442695
        %v1062 = vpow.pop %v1061
        %v1063 = vsel %vm1056, %v1062, 0.0
        %1064 = vadd.xlane.f32.xlu0 %v1063
        %v1065 = vpop.xlane.xlu0 %1064
        %v1066 = vrcp.pop %v1065
        %v1067 = vmul.f32 %v1062, %v1066
        %v1068 = vpack.c.bf16 %v1067, %v1067
        %vm1069 = vcmask 31744
        %v1071 = vsel %vm1069, %v1068, 0
        %vm1073 = vcmask 1041408
        %v1075 = vsel %vm1073, %v1004, 0
        %1077 = vmatprep.subr.bf16.mxu0 0
        %1078 = vmatpush1.bf16.msra.mxu0 %v1075
        %1079 = vmatprep.subr.bf16.mxu0 0
        %1080 = vmatpush1.bf16.msra.mxu0 0
        %1081 = vmatprep.subr.bf16.mxu0 0
        %1082 = vmatpush1.bf16.msra.mxu0 0
        %1083 = vmatprep.subr.bf16.mxu0 0
        %1084 = vmatpush1.bf16.msra.mxu0 0
        %1085 = vmatprep.subr.bf16.mxu0 0
        %1086 = vmatpush1.bf16.msra.mxu0 0
        %1087 = vmatprep.subr.bf16.mxu0 0
        %1088 = vmatpush1.bf16.msra.mxu0 0
        %1089 = vmatprep.subr.bf16.mxu0 0
        %1090 = vmatpush1.bf16.msra.mxu0 0
        %1091 = vmatprep.subr.bf16.mxu0 0
        %1092 = vmatpush1.bf16.msra.mxu0 0
        %1093 = vmatprep.subr.bf16.mxu0 0
        %1094 = vmatpush1.bf16.msra.mxu0 0
        %1095 = vmatprep.subr.bf16.mxu0 0
        %1096 = vmatpush1.bf16.msra.mxu0 0
        %1097 = vmatprep.subr.bf16.mxu0 0
        %1098 = vmatpush1.bf16.msra.mxu0 0
        %1099 = vmatprep.subr.bf16.mxu0 0
        %1100 = vmatpush1.bf16.msra.mxu0 0
        %1101 = vmatprep.subr.bf16.mxu0 0
        %1102 = vmatpush1.bf16.msra.mxu0 0
        %1103 = vmatprep.subr.bf16.mxu0 0
        %1104 = vmatpush1.bf16.msra.mxu0 0
        %1105 = vmatprep.subr.bf16.mxu0 0
        %1106 = vmatpush1.bf16.msra.mxu0 0
        %1107 = vmatprep.subr.bf16.mxu0 0
        %1108 = vmatpush1.bf16.msra.mxu0 0
        %1109 = vmatprep.mubr.bf16.mxu0 0
        %1110 = vmatmul.mubr.bf16.gmra.mrb[0].mxu0 %v1071
        %v1111 = vpop.f32.mrb[0].mxu0
        %v1112 = vadd.f32 0.0, %v1111
        %v1113 = vpop.f32.mrb[0].mxu0
        %v1114 = vpop.f32.mrb[0].mxu0
        %v1115 = vpop.f32.mrb[0].mxu0
        %1116 = vdwg.mxu0
        %v1117 = vpack.c.bf16 %v1112, %v1112
        %1118 = vrot.lane.b32.xlu0 %v1003, 120
        %v1119 = vpop.permute.xlu0 %1118
        %1120 = vrot.lane.b32.xlu0 %v1003, 56
        %v1121 = vpop.permute.xlu0 %1120
        %v1123 = vsel %vm1008, %v1119, 0
        %v1126 = vsel %vm1008, %v1121, 0
        %1128 = vmatprep.subr.bf16.mxu0 0
        %1129 = vmatpush1.bf16.xpose.msra.mxu0 %v1126
        %1130 = vmatprep.subr.bf16.mxu0 0
        %1131 = vmatpush1.bf16.xpose.msra.mxu0 0
        %1132 = vmatprep.subr.bf16.mxu0 0
        %1133 = vmatpush1.bf16.xpose.msra.mxu0 0
        %1134 = vmatprep.subr.bf16.mxu0 0
        %1135 = vmatpush1.bf16.xpose.msra.mxu0 0
        %1136 = vmatprep.subr.bf16.mxu0 0
        %1137 = vmatpush1.bf16.xpose.msra.mxu0 0
        %1138 = vmatprep.subr.bf16.mxu0 0
        %1139 = vmatpush1.bf16.xpose.msra.mxu0 0
        %1140 = vmatprep.subr.bf16.mxu0 0
        %1141 = vmatpush1.bf16.xpose.msra.mxu0 0
        %1142 = vmatprep.subr.bf16.mxu0 0
        %1143 = vmatpush1.bf16.xpose.msra.mxu0 0
        %1144 = vmatprep.subr.bf16.mxu0 0
        %1145 = vmatpush1.bf16.xpose.msra.mxu0 0
        %1146 = vmatprep.subr.bf16.mxu0 0
        %1147 = vmatpush1.bf16.xpose.msra.mxu0 0
        %1148 = vmatprep.subr.bf16.mxu0 0
        %1149 = vmatpush1.bf16.xpose.msra.mxu0 0
        %1150 = vmatprep.subr.bf16.mxu0 0
        %1151 = vmatpush1.bf16.xpose.msra.mxu0 0
        %1152 = vmatprep.subr.bf16.mxu0 0
        %1153 = vmatpush1.bf16.xpose.msra.mxu0 0
        %1154 = vmatprep.subr.bf16.mxu0 0
        %1155 = vmatpush1.bf16.xpose.msra.mxu0 0
        %1156 = vmatprep.subr.bf16.mxu0 0
        %1157 = vmatpush1.bf16.xpose.msra.mxu0 0
        %1158 = vmatprep.subr.bf16.mxu0 0
        %1159 = vmatpush1.bf16.xpose.msra.mxu0 0
        %1160 = vmatprep.mubr.bf16.mxu0 0
        %1161 = vmatmul.mubr.bf16.gmra.mrb[0].mxu0 %v1123
        %v1162 = vpop.f32.mrb[0].mxu0
        %v1163 = vadd.f32 0.0, %v1162
        %v1164 = vpop.f32.mrb[0].mxu0
        %v1165 = vpop.f32.mrb[0].mxu0
        %v1166 = vpop.f32.mrb[0].mxu0
        %1167 = vdwg.mxu0
        %v1168 = vmul.f32 %v1163, 0.35355338
        %v1169 = vsel %vm1056, %v1168, -inf
        %1170 = vmax.xlane.f32.xlu0 %v1169
        %v1171 = vpop.xlane.xlu0 %1170
        %v1172 = vsub.f32 %v1168, %v1171
        %v1173 = vmul.f32 %v1172, 1.442695
        %v1174 = vpow.pop %v1173
        %v1175 = vsel %vm1056, %v1174, 0.0
        %1176 = vadd.xlane.f32.xlu0 %v1175
        %v1177 = vpop.xlane.xlu0 %1176
        %v1178 = vrcp.pop %v1177
        %v1179 = vmul.f32 %v1174, %v1178
        %v1180 = vpack.c.bf16 %v1179, %v1179
        %1182 = vrot.lane.b32.xlu0 %v1004, 120
        %v1183 = vpop.permute.xlu0 %1182
        %v1185 = vsel %vm1069, %v1180, 0
        %v1188 = vsel %vm1073, %v1183, 0
        %1190 = vmatprep.subr.bf16.mxu0 0
        %1191 = vmatpush1.bf16.msra.mxu0 %v1188
        %1192 = vmatprep.subr.bf16.mxu0 0
        %1193 = vmatpush1.bf16.msra.mxu0 0
        %1194 = vmatprep.subr.bf16.mxu0 0
        %1195 = vmatpush1.bf16.msra.mxu0 0
        %1196 = vmatprep.subr.bf16.mxu0 0
        %1197 = vmatpush1.bf16.msra.mxu0 0
        %1198 = vmatprep.subr.bf16.mxu0 0
        %1199 = vmatpush1.bf16.msra.mxu0 0
        %1200 = vmatprep.subr.bf16.mxu0 0
        %1201 = vmatpush1.bf16.msra.mxu0 0
        %1202 = vmatprep.subr.bf16.mxu0 0
        %1203 = vmatpush1.bf16.msra.mxu0 0
        %1204 = vmatprep.subr.bf16.mxu0 0
        %1205 = vmatpush1.bf16.msra.mxu0 0
        %1206 = vmatprep.subr.bf16.mxu0 0
        %1207 = vmatpush1.bf16.msra.mxu0 0
        %1208 = vmatprep.subr.bf16.mxu0 0
        %1209 = vmatpush1.bf16.msra.mxu0 0
        %1210 = vmatprep.subr.bf16.mxu0 0
        %1211 = vmatpush1.bf16.msra.mxu0 0
        %1212 = vmatprep.subr.bf16.mxu0 0
        %1213 = vmatpush1.bf16.msra.mxu0 0
        %1214 = vmatprep.subr.bf16.mxu0 0
        %1215 = vmatpush1.bf16.msra.mxu0 0
        %1216 = vmatprep.subr.bf16.mxu0 0
        %1217 = vmatpush1.bf16.msra.mxu0 0
        %1218 = vmatprep.subr.bf16.mxu0 0
        %1219 = vmatpush1.bf16.msra.mxu0 0
        %1220 = vmatprep.subr.bf16.mxu0 0
        %1221 = vmatpush1.bf16.msra.mxu0 0
        %1222 = vmatprep.mubr.bf16.mxu0 0
        %1223 = vmatmul.mubr.bf16.gmra.mrb[0].mxu0 %v1185
        %v1224 = vpop.f32.mrb[0].mxu0
        %v1225 = vadd.f32 0.0, %v1224
        %v1226 = vpop.f32.mrb[0].mxu0
        %v1227 = vpop.f32.mrb[0].mxu0
        %v1228 = vpop.f32.mrb[0].mxu0
        %1229 = vdwg.mxu0
        %v1230 = vpack.c.bf16 %v1225, %v1225
        %v1232 = vsel %vm1008, %v1230, 0
        %vm1234 = vcmask 1043456
        %v1236 = vsel %vm1234, %v891, 0
        %1238 = vmatprep.subr.bf16.mxu0 0
        %1239 = vmatpush1.bf16.msra.mxu0 %v1236
        %1240 = vmatprep.subr.bf16.mxu0 0
        %1241 = vmatpush1.bf16.msra.mxu0 0
        %1242 = vmatprep.subr.bf16.mxu0 0
        %1243 = vmatpush1.bf16.msra.mxu0 0
        %1244 = vmatprep.subr.bf16.mxu0 0
        %1245 = vmatpush1.bf16.msra.mxu0 0
        %1246 = vmatprep.subr.bf16.mxu0 0
        %1247 = vmatpush1.bf16.msra.mxu0 0
        %1248 = vmatprep.subr.bf16.mxu0 0
        %1249 = vmatpush1.bf16.msra.mxu0 0
        %1250 = vmatprep.subr.bf16.mxu0 0
        %1251 = vmatpush1.bf16.msra.mxu0 0
        %1252 = vmatprep.subr.bf16.mxu0 0
        %1253 = vmatpush1.bf16.msra.mxu0 0
        %1254 = vmatprep.subr.bf16.mxu0 0
        %1255 = vmatpush1.bf16.msra.mxu0 0
        %1256 = vmatprep.subr.bf16.mxu0 0
        %1257 = vmatpush1.bf16.msra.mxu0 0
        %1258 = vmatprep.subr.bf16.mxu0 0
        %1259 = vmatpush1.bf16.msra.mxu0 0
        %1260 = vmatprep.subr.bf16.mxu0 0
        %1261 = vmatpush1.bf16.msra.mxu0 0
        %1262 = vmatprep.subr.bf16.mxu0 0
        %1263 = vmatpush1.bf16.msra.mxu0 0
        %1264 = vmatprep.subr.bf16.mxu0 0
        %1265 = vmatpush1.bf16.msra.mxu0 0
        %1266 = vmatprep.subr.bf16.mxu0 0
        %1267 = vmatpush1.bf16.msra.mxu0 0
        %1268 = vmatprep.subr.bf16.mxu0 0
        %1269 = vmatpush1.bf16.msra.mxu0 0
        %1270 = vmatprep.mubr.bf16.mxu0 0
        %1271 = vmatmul.mubr.bf16.gmra.mrb[0].mxu0 %v1232
        %v1272 = vpop.f32.mrb[0].mxu0
        %v1273 = vadd.f32 0.0, %v1272
        %v1274 = vpop.f32.mrb[0].mxu0
        %v1275 = vpop.f32.mrb[0].mxu0
        %v1276 = vpop.f32.mrb[0].mxu0
        %1277 = vdwg.mxu0
        %v1279 = vsel %vm1008, %v1117, 0
        %v1282 = vsel %vm1234, %v890, 0
        %1284 = vmatprep.subr.bf16.mxu0 0
        %1285 = vmatpush1.bf16.msra.mxu0 %v1282
        %1286 = vmatprep.subr.bf16.mxu0 0
        %1287 = vmatpush1.bf16.msra.mxu0 0
        %1288 = vmatprep.subr.bf16.mxu0 0
        %1289 = vmatpush1.bf16.msra.mxu0 0
        %1290 = vmatprep.subr.bf16.mxu0 0
        %1291 = vmatpush1.bf16.msra.mxu0 0
        %1292 = vmatprep.subr.bf16.mxu0 0
        %1293 = vmatpush1.bf16.msra.mxu0 0
        %1294 = vmatprep.subr.bf16.mxu0 0
        %1295 = vmatpush1.bf16.msra.mxu0 0
        %1296 = vmatprep.subr.bf16.mxu0 0
        %1297 = vmatpush1.bf16.msra.mxu0 0
        %1298 = vmatprep.subr.bf16.mxu0 0
        %1299 = vmatpush1.bf16.msra.mxu0 0
        %1300 = vmatprep.subr.bf16.mxu0 0
        %1301 = vmatpush1.bf16.msra.mxu0 0
        %1302 = vmatprep.subr.bf16.mxu0 0
        %1303 = vmatpush1.bf16.msra.mxu0 0
        %1304 = vmatprep.subr.bf16.mxu0 0
        %1305 = vmatpush1.bf16.msra.mxu0 0
        %1306 = vmatprep.subr.bf16.mxu0 0
        %1307 = vmatpush1.bf16.msra.mxu0 0
        %1308 = vmatprep.subr.bf16.mxu0 0
        %1309 = vmatpush1.bf16.msra.mxu0 0
        %1310 = vmatprep.subr.bf16.mxu0 0
        %1311 = vmatpush1.bf16.msra.mxu0 0
        %1312 = vmatprep.subr.bf16.mxu0 0
        %1313 = vmatpush1.bf16.msra.mxu0 0
        %1314 = vmatprep.subr.bf16.mxu0 0
        %1315 = vmatpush1.bf16.msra.mxu0 0
        %1316 = vmatprep.mubr.bf16.mxu0 0
        %1317 = vmatmul.mubr.bf16.gmra.mrb[0].mxu0 %v1279
        %v1318 = vpop.f32.mrb[0].mxu0
        %v1319 = vadd.f32 %v1273, %v1318
        %v1320 = vpop.f32.mrb[0].mxu0
        %v1321 = vpop.f32.mrb[0].mxu0
        %v1322 = vpop.f32.mrb[0].mxu0
        %1323 = vdwg.mxu0
        %1324 = vrot.lane.b32.xlu0 %v1003, 112
        %v1325 = vpop.permute.xlu0 %1324
        %1326 = vrot.lane.b32.xlu0 %v1003, 48
        %v1327 = vpop.permute.xlu0 %1326
        %v1329 = vsel %vm1008, %v1325, 0
        %v1332 = vsel %vm1008, %v1327, 0
        %1334 = vmatprep.subr.bf16.mxu0 0
        %1335 = vmatpush1.bf16.xpose.msra.mxu0 %v1332
        %1336 = vmatprep.subr.bf16.mxu0 0
        %1337 = vmatpush1.bf16.xpose.msra.mxu0 0
        %1338 = vmatprep.subr.bf16.mxu0 0
        %1339 = vmatpush1.bf16.xpose.msra.mxu0 0
        %1340 = vmatprep.subr.bf16.mxu0 0
        %1341 = vmatpush1.bf16.xpose.msra.mxu0 0
        %1342 = vmatprep.subr.bf16.mxu0 0
        %1343 = vmatpush1.bf16.xpose.msra.mxu0 0
        %1344 = vmatprep.subr.bf16.mxu0 0
        %1345 = vmatpush1.bf16.xpose.msra.mxu0 0
        %1346 = vmatprep.subr.bf16.mxu0 0
        %1347 = vmatpush1.bf16.xpose.msra.mxu0 0
        %1348 = vmatprep.subr.bf16.mxu0 0
        %1349 = vmatpush1.bf16.xpose.msra.mxu0 0
        %1350 = vmatprep.subr.bf16.mxu0 0
        %1351 = vmatpush1.bf16.xpose.msra.mxu0 0
        %1352 = vmatprep.subr.bf16.mxu0 0
        %1353 = vmatpush1.bf16.xpose.msra.mxu0 0
        %1354 = vmatprep.subr.bf16.mxu0 0
        %1355 = vmatpush1.bf16.xpose.msra.mxu0 0
        %1356 = vmatprep.subr.bf16.mxu0 0
        %1357 = vmatpush1.bf16.xpose.msra.mxu0 0
        %1358 = vmatprep.subr.bf16.mxu0 0
        %1359 = vmatpush1.bf16.xpose.msra.mxu0 0
        %1360 = vmatprep.subr.bf16.mxu0 0
        %1361 = vmatpush1.bf16.xpose.msra.mxu0 0
        %1362 = vmatprep.subr.bf16.mxu0 0
        %1363 = vmatpush1.bf16.xpose.msra.mxu0 0
        %1364 = vmatprep.subr.bf16.mxu0 0
        %1365 = vmatpush1.bf16.xpose.msra.mxu0 0
        %1366 = vmatprep.mubr.bf16.mxu0 0
        %1367 = vmatmul.mubr.bf16.gmra.mrb[0].mxu0 %v1329
        %v1368 = vpop.f32.mrb[0].mxu0
        %v1369 = vadd.f32 0.0, %v1368
        %v1370 = vpop.f32.mrb[0].mxu0
        %v1371 = vpop.f32.mrb[0].mxu0
        %v1372 = vpop.f32.mrb[0].mxu0
        %1373 = vdwg.mxu0
        %v1374 = vmul.f32 %v1369, 0.35355338
        %v1375 = vsel %vm1056, %v1374, -inf
        %1376 = vmax.xlane.f32.xlu0 %v1375
        %v1377 = vpop.xlane.xlu0 %1376
        %v1378 = vsub.f32 %v1374, %v1377
        %v1379 = vmul.f32 %v1378, 1.442695
        %v1380 = vpow.pop %v1379
        %v1381 = vsel %vm1056, %v1380, 0.0
        %1382 = vadd.xlane.f32.xlu0 %v1381
        %v1383 = vpop.xlane.xlu0 %1382
        %v1384 = vrcp.pop %v1383
        %v1385 = vmul.f32 %v1380, %v1384
        %v1386 = vpack.c.bf16 %v1385, %v1385
        %1387 = vrot.lane.b32.xlu0 %v1004, 112
        %v1388 = vpop.permute.xlu0 %1387
        %v1390 = vsel %vm1069, %v1386, 0
        %v1393 = vsel %vm1073, %v1388, 0
        %1395 = vmatprep.subr.bf16.mxu0 0
        %1396 = vmatpush1.bf16.msra.mxu0 %v1393
        %1397 = vmatprep.subr.bf16.mxu0 0
        %1398 = vmatpush1.bf16.msra.mxu0 0
        %1399 = vmatprep.subr.bf16.mxu0 0
        %1400 = vmatpush1.bf16.msra.mxu0 0
        %1401 = vmatprep.subr.bf16.mxu0 0
        %1402 = vmatpush1.bf16.msra.mxu0 0
        %1403 = vmatprep.subr.bf16.mxu0 0
        %1404 = vmatpush1.bf16.msra.mxu0 0
        %1405 = vmatprep.subr.bf16.mxu0 0
        %1406 = vmatpush1.bf16.msra.mxu0 0
        %1407 = vmatprep.subr.bf16.mxu0 0
        %1408 = vmatpush1.bf16.msra.mxu0 0
        %1409 = vmatprep.subr.bf16.mxu0 0
        %1410 = vmatpush1.bf16.msra.mxu0 0
        %1411 = vmatprep.subr.bf16.mxu0 0
        %1412 = vmatpush1.bf16.msra.mxu0 0
        %1413 = vmatprep.subr.bf16.mxu0 0
        %1414 = vmatpush1.bf16.msra.mxu0 0
        %1415 = vmatprep.subr.bf16.mxu0 0
        %1416 = vmatpush1.bf16.msra.mxu0 0
        %1417 = vmatprep.subr.bf16.mxu0 0
        %1418 = vmatpush1.bf16.msra.mxu0 0
        %1419 = vmatprep.subr.bf16.mxu0 0
        %1420 = vmatpush1.bf16.msra.mxu0 0
        %1421 = vmatprep.subr.bf16.mxu0 0
        %1422 = vmatpush1.bf16.msra.mxu0 0
        %1423 = vmatprep.subr.bf16.mxu0 0
        %1424 = vmatpush1.bf16.msra.mxu0 0
        %1425 = vmatprep.subr.bf16.mxu0 0
        %1426 = vmatpush1.bf16.msra.mxu0 0
        %1427 = vmatprep.mubr.bf16.mxu0 0
        %1428 = vmatmul.mubr.bf16.gmra.mrb[0].mxu0 %v1390
        %v1429 = vpop.f32.mrb[0].mxu0
        %v1430 = vadd.f32 0.0, %v1429
        %v1431 = vpop.f32.mrb[0].mxu0
        %v1432 = vpop.f32.mrb[0].mxu0
        %v1433 = vpop.f32.mrb[0].mxu0
        %1434 = vdwg.mxu0
        %v1435 = vpack.c.bf16 %v1430, %v1430
        %v1437 = vsel %vm1008, %v1435, 0
        %v1440 = vsel %vm1234, %v892, 0
        %1442 = vmatprep.subr.bf16.mxu0 0
        %1443 = vmatpush1.bf16.msra.mxu0 %v1440
        %1444 = vmatprep.subr.bf16.mxu0 0
        %1445 = vmatpush1.bf16.msra.mxu0 0
        %1446 = vmatprep.subr.bf16.mxu0 0
        %1447 = vmatpush1.bf16.msra.mxu0 0
        %1448 = vmatprep.subr.bf16.mxu0 0
        %1449 = vmatpush1.bf16.msra.mxu0 0
        %1450 = vmatprep.subr.bf16.mxu0 0
        %1451 = vmatpush1.bf16.msra.mxu0 0
        %1452 = vmatprep.subr.bf16.mxu0 0
        %1453 = vmatpush1.bf16.msra.mxu0 0
        %1454 = vmatprep.subr.bf16.mxu0 0
        %1455 = vmatpush1.bf16.msra.mxu0 0
        %1456 = vmatprep.subr.bf16.mxu0 0
        %1457 = vmatpush1.bf16.msra.mxu0 0
        %1458 = vmatprep.subr.bf16.mxu0 0
        %1459 = vmatpush1.bf16.msra.mxu0 0
        %1460 = vmatprep.subr.bf16.mxu0 0
        %1461 = vmatpush1.bf16.msra.mxu0 0
        %1462 = vmatprep.subr.bf16.mxu0 0
        %1463 = vmatpush1.bf16.msra.mxu0 0
        %1464 = vmatprep.subr.bf16.mxu0 0
        %1465 = vmatpush1.bf16.msra.mxu0 0
        %1466 = vmatprep.subr.bf16.mxu0 0
        %1467 = vmatpush1.bf16.msra.mxu0 0
        %1468 = vmatprep.subr.bf16.mxu0 0
        %1469 = vmatpush1.bf16.msra.mxu0 0
        %1470 = vmatprep.subr.bf16.mxu0 0
        %1471 = vmatpush1.bf16.msra.mxu0 0
        %1472 = vmatprep.subr.bf16.mxu0 0
        %1473 = vmatpush1.bf16.msra.mxu0 0
        %1474 = vmatprep.mubr.bf16.mxu0 0
        %1475 = vmatmul.mubr.bf16.gmra.mrb[0].mxu0 %v1437
        %v1476 = vpop.f32.mrb[0].mxu0
        %v1477 = vadd.f32 0.0, %v1476
        %v1478 = vpop.f32.mrb[0].mxu0
        %v1479 = vpop.f32.mrb[0].mxu0
        %v1480 = vpop.f32.mrb[0].mxu0
        %1481 = vdwg.mxu0
        %v1482 = vadd.f32 %v1319, %v1477
        %1483 = vrot.lane.b32.xlu0 %v1003, 104
        %v1484 = vpop.permute.xlu0 %1483
        %1485 = vrot.lane.b32.xlu0 %v1003, 40
        %v1486 = vpop.permute.xlu0 %1485
        %v1488 = vsel %vm1008, %v1484, 0
        %v1491 = vsel %vm1008, %v1486, 0
        %1493 = vmatprep.subr.bf16.mxu0 0
        %1494 = vmatpush1.bf16.xpose.msra.mxu0 %v1491
        %1495 = vmatprep.subr.bf16.mxu0 0
        %1496 = vmatpush1.bf16.xpose.msra.mxu0 0
        %1497 = vmatprep.subr.bf16.mxu0 0
        %1498 = vmatpush1.bf16.xpose.msra.mxu0 0
        %1499 = vmatprep.subr.bf16.mxu0 0
        %1500 = vmatpush1.bf16.xpose.msra.mxu0 0
        %1501 = vmatprep.subr.bf16.mxu0 0
        %1502 = vmatpush1.bf16.xpose.msra.mxu0 0
        %1503 = vmatprep.subr.bf16.mxu0 0
        %1504 = vmatpush1.bf16.xpose.msra.mxu0 0
        %1505 = vmatprep.subr.bf16.mxu0 0
        %1506 = vmatpush1.bf16.xpose.msra.mxu0 0
        %1507 = vmatprep.subr.bf16.mxu0 0
        %1508 = vmatpush1.bf16.xpose.msra.mxu0 0
        %1509 = vmatprep.subr.bf16.mxu0 0
        %1510 = vmatpush1.bf16.xpose.msra.mxu0 0
        %1511 = vmatprep.subr.bf16.mxu0 0
        %1512 = vmatpush1.bf16.xpose.msra.mxu0 0
        %1513 = vmatprep.subr.bf16.mxu0 0
        %1514 = vmatpush1.bf16.xpose.msra.mxu0 0
        %1515 = vmatprep.subr.bf16.mxu0 0
        %1516 = vmatpush1.bf16.xpose.msra.mxu0 0
        %1517 = vmatprep.subr.bf16.mxu0 0
        %1518 = vmatpush1.bf16.xpose.msra.mxu0 0
        %1519 = vmatprep.subr.bf16.mxu0 0
        %1520 = vmatpush1.bf16.xpose.msra.mxu0 0
        %1521 = vmatprep.subr.bf16.mxu0 0
        %1522 = vmatpush1.bf16.xpose.msra.mxu0 0
        %1523 = vmatprep.subr.bf16.mxu0 0
        %1524 = vmatpush1.bf16.xpose.msra.mxu0 0
        %1525 = vmatprep.mubr.bf16.mxu0 0
        %1526 = vmatmul.mubr.bf16.gmra.mrb[0].mxu0 %v1488
        %v1527 = vpop.f32.mrb[0].mxu0
        %v1528 = vadd.f32 0.0, %v1527
        %v1529 = vpop.f32.mrb[0].mxu0
        %v1530 = vpop.f32.mrb[0].mxu0
        %v1531 = vpop.f32.mrb[0].mxu0
        %1532 = vdwg.mxu0
        %v1533 = vmul.f32 %v1528, 0.35355338
        %v1534 = vsel %vm1056, %v1533, -inf
        %1535 = vmax.xlane.f32.xlu0 %v1534
        %v1536 = vpop.xlane.xlu0 %1535
        %v1537 = vsub.f32 %v1533, %v1536
        %v1538 = vmul.f32 %v1537, 1.442695
        %v1539 = vpow.pop %v1538
        %v1540 = vsel %vm1056, %v1539, 0.0
        %1541 = vadd.xlane.f32.xlu0 %v1540
        %v1542 = vpop.xlane.xlu0 %1541
        %v1543 = vrcp.pop %v1542
        %v1544 = vmul.f32 %v1539, %v1543
        %v1545 = vpack.c.bf16 %v1544, %v1544
        %1546 = vrot.lane.b32.xlu0 %v1004, 104
        %v1547 = vpop.permute.xlu0 %1546
        %v1549 = vsel %vm1069, %v1545, 0
        %v1552 = vsel %vm1073, %v1547, 0
        %1554 = vmatprep.subr.bf16.mxu0 0
        %1555 = vmatpush1.bf16.msra.mxu0 %v1552
        %1556 = vmatprep.subr.bf16.mxu0 0
        %1557 = vmatpush1.bf16.msra.mxu0 0
        %1558 = vmatprep.subr.bf16.mxu0 0
        %1559 = vmatpush1.bf16.msra.mxu0 0
        %1560 = vmatprep.subr.bf16.mxu0 0
        %1561 = vmatpush1.bf16.msra.mxu0 0
        %1562 = vmatprep.subr.bf16.mxu0 0
        %1563 = vmatpush1.bf16.msra.mxu0 0
        %1564 = vmatprep.subr.bf16.mxu0 0
        %1565 = vmatpush1.bf16.msra.mxu0 0
        %1566 = vmatprep.subr.bf16.mxu0 0
        %1567 = vmatpush1.bf16.msra.mxu0 0
        %1568 = vmatprep.subr.bf16.mxu0 0
        %1569 = vmatpush1.bf16.msra.mxu0 0
        %1570 = vmatprep.subr.bf16.mxu0 0
        %1571 = vmatpush1.bf16.msra.mxu0 0
        %1572 = vmatprep.subr.bf16.mxu0 0
        %1573 = vmatpush1.bf16.msra.mxu0 0
        %1574 = vmatprep.subr.bf16.mxu0 0
        %1575 = vmatpush1.bf16.msra.mxu0 0
        %1576 = vmatprep.subr.bf16.mxu0 0
        %1577 = vmatpush1.bf16.msra.mxu0 0
        %1578 = vmatprep.subr.bf16.mxu0 0
        %1579 = vmatpush1.bf16.msra.mxu0 0
        %1580 = vmatprep.subr.bf16.mxu0 0
        %1581 = vmatpush1.bf16.msra.mxu0 0
        %1582 = vmatprep.subr.bf16.mxu0 0
        %1583 = vmatpush1.bf16.msra.mxu0 0
        %1584 = vmatprep.subr.bf16.mxu0 0
        %1585 = vmatpush1.bf16.msra.mxu0 0
        %1586 = vmatprep.mubr.bf16.mxu0 0
        %1587 = vmatmul.mubr.bf16.gmra.mrb[0].mxu0 %v1549
        %v1588 = vpop.f32.mrb[0].mxu0
        %v1589 = vadd.f32 0.0, %v1588
        %v1590 = vpop.f32.mrb[0].mxu0
        %v1591 = vpop.f32.mrb[0].mxu0
        %v1592 = vpop.f32.mrb[0].mxu0
        %1593 = vdwg.mxu0
        %v1594 = vpack.c.bf16 %v1589, %v1589
        %v1596 = vsel %vm1008, %v1594, 0
        %v1599 = vsel %vm1234, %v893, 0
        %1601 = vmatprep.subr.bf16.mxu0 0
        %1602 = vmatpush1.bf16.msra.mxu0 %v1599
        %1603 = vmatprep.subr.bf16.mxu0 0
        %1604 = vmatpush1.bf16.msra.mxu0 0
        %1605 = vmatprep.subr.bf16.mxu0 0
        %1606 = vmatpush1.bf16.msra.mxu0 0
        %1607 = vmatprep.subr.bf16.mxu0 0
        %1608 = vmatpush1.bf16.msra.mxu0 0
        %1609 = vmatprep.subr.bf16.mxu0 0
        %1610 = vmatpush1.bf16.msra.mxu0 0
        %1611 = vmatprep.subr.bf16.mxu0 0
        %1612 = vmatpush1.bf16.msra.mxu0 0
        %1613 = vmatprep.subr.bf16.mxu0 0
        %1614 = vmatpush1.bf16.msra.mxu0 0
        %1615 = vmatprep.subr.bf16.mxu0 0
        %1616 = vmatpush1.bf16.msra.mxu0 0
        %1617 = vmatprep.subr.bf16.mxu0 0
        %1618 = vmatpush1.bf16.msra.mxu0 0
        %1619 = vmatprep.subr.bf16.mxu0 0
        %1620 = vmatpush1.bf16.msra.mxu0 0
        %1621 = vmatprep.subr.bf16.mxu0 0
        %1622 = vmatpush1.bf16.msra.mxu0 0
        %1623 = vmatprep.subr.bf16.mxu0 0
        %1624 = vmatpush1.bf16.msra.mxu0 0
        %1625 = vmatprep.subr.bf16.mxu0 0
        %1626 = vmatpush1.bf16.msra.mxu0 0
        %1627 = vmatprep.subr.bf16.mxu0 0
        %1628 = vmatpush1.bf16.msra.mxu0 0
        %1629 = vmatprep.subr.bf16.mxu0 0
        %1630 = vmatpush1.bf16.msra.mxu0 0
        %1631 = vmatprep.subr.bf16.mxu0 0
        %1632 = vmatpush1.bf16.msra.mxu0 0
        %1633 = vmatprep.mubr.bf16.mxu0 0
        %1634 = vmatmul.mubr.bf16.gmra.mrb[0].mxu0 %v1596
        %v1635 = vpop.f32.mrb[0].mxu0
        %v1636 = vadd.f32 0.0, %v1635
        %v1637 = vpop.f32.mrb[0].mxu0
        %v1638 = vpop.f32.mrb[0].mxu0
        %v1639 = vpop.f32.mrb[0].mxu0
        %1640 = vdwg.mxu0
        %v1641 = vadd.f32 %v1482, %v1636
        %1642 = vrot.lane.b32.xlu0 %v1003, 96
        %v1643 = vpop.permute.xlu0 %1642
        %1644 = vrot.lane.b32.xlu0 %v1003, 32
        %v1645 = vpop.permute.xlu0 %1644
        %v1647 = vsel %vm1008, %v1643, 0
        %v1650 = vsel %vm1008, %v1645, 0
        %1652 = vmatprep.subr.bf16.mxu0 0
        %1653 = vmatpush1.bf16.xpose.msra.mxu0 %v1650
        %1654 = vmatprep.subr.bf16.mxu0 0
        %1655 = vmatpush1.bf16.xpose.msra.mxu0 0
        %1656 = vmatprep.subr.bf16.mxu0 0
        %1657 = vmatpush1.bf16.xpose.msra.mxu0 0
        %1658 = vmatprep.subr.bf16.mxu0 0
        %1659 = vmatpush1.bf16.xpose.msra.mxu0 0
        %1660 = vmatprep.subr.bf16.mxu0 0
        %1661 = vmatpush1.bf16.xpose.msra.mxu0 0
        %1662 = vmatprep.subr.bf16.mxu0 0
        %1663 = vmatpush1.bf16.xpose.msra.mxu0 0
        %1664 = vmatprep.subr.bf16.mxu0 0
        %1665 = vmatpush1.bf16.xpose.msra.mxu0 0
        %1666 = vmatprep.subr.bf16.mxu0 0
        %1667 = vmatpush1.bf16.xpose.msra.mxu0 0
        %1668 = vmatprep.subr.bf16.mxu0 0
        %1669 = vmatpush1.bf16.xpose.msra.mxu0 0
        %1670 = vmatprep.subr.bf16.mxu0 0
        %1671 = vmatpush1.bf16.xpose.msra.mxu0 0
        %1672 = vmatprep.subr.bf16.mxu0 0
        %1673 = vmatpush1.bf16.xpose.msra.mxu0 0
        %1674 = vmatprep.subr.bf16.mxu0 0
        %1675 = vmatpush1.bf16.xpose.msra.mxu0 0
        %1676 = vmatprep.subr.bf16.mxu0 0
        %1677 = vmatpush1.bf16.xpose.msra.mxu0 0
        %1678 = vmatprep.subr.bf16.mxu0 0
        %1679 = vmatpush1.bf16.xpose.msra.mxu0 0
        %1680 = vmatprep.subr.bf16.mxu0 0
        %1681 = vmatpush1.bf16.xpose.msra.mxu0 0
        %1682 = vmatprep.subr.bf16.mxu0 0
        %1683 = vmatpush1.bf16.xpose.msra.mxu0 0
        %1684 = vmatprep.mubr.bf16.mxu0 0
        %1685 = vmatmul.mubr.bf16.gmra.mrb[0].mxu0 %v1647
        %v1686 = vpop.f32.mrb[0].mxu0
        %v1687 = vadd.f32 0.0, %v1686
        %v1688 = vpop.f32.mrb[0].mxu0
        %v1689 = vpop.f32.mrb[0].mxu0
        %v1690 = vpop.f32.mrb[0].mxu0
        %1691 = vdwg.mxu0
        %v1692 = vmul.f32 %v1687, 0.35355338
        %v1693 = vsel %vm1056, %v1692, -inf
        %1694 = vmax.xlane.f32.xlu0 %v1693
        %v1695 = vpop.xlane.xlu0 %1694
        %v1696 = vsub.f32 %v1692, %v1695
        %v1697 = vmul.f32 %v1696, 1.442695
        %v1698 = vpow.pop %v1697
        %v1699 = vsel %vm1056, %v1698, 0.0
        %1700 = vadd.xlane.f32.xlu0 %v1699
        %v1701 = vpop.xlane.xlu0 %1700
        %v1702 = vrcp.pop %v1701
        %v1703 = vmul.f32 %v1698, %v1702
        %v1704 = vpack.c.bf16 %v1703, %v1703
        %1705 = vrot.lane.b32.xlu0 %v1004, 96
        %v1706 = vpop.permute.xlu0 %1705
        %v1708 = vsel %vm1069, %v1704, 0
        %v1711 = vsel %vm1073, %v1706, 0
        %1713 = vmatprep.subr.bf16.mxu0 0
        %1714 = vmatpush1.bf16.msra.mxu0 %v1711
        %1715 = vmatprep.subr.bf16.mxu0 0
        %1716 = vmatpush1.bf16.msra.mxu0 0
        %1717 = vmatprep.subr.bf16.mxu0 0
        %1718 = vmatpush1.bf16.msra.mxu0 0
        %1719 = vmatprep.subr.bf16.mxu0 0
        %1720 = vmatpush1.bf16.msra.mxu0 0
        %1721 = vmatprep.subr.bf16.mxu0 0
        %1722 = vmatpush1.bf16.msra.mxu0 0
        %1723 = vmatprep.subr.bf16.mxu0 0
        %1724 = vmatpush1.bf16.msra.mxu0 0
        %1725 = vmatprep.subr.bf16.mxu0 0
        %1726 = vmatpush1.bf16.msra.mxu0 0
        %1727 = vmatprep.subr.bf16.mxu0 0
        %1728 = vmatpush1.bf16.msra.mxu0 0
        %1729 = vmatprep.subr.bf16.mxu0 0
        %1730 = vmatpush1.bf16.msra.mxu0 0
        %1731 = vmatprep.subr.bf16.mxu0 0
        %1732 = vmatpush1.bf16.msra.mxu0 0
        %1733 = vmatprep.subr.bf16.mxu0 0
        %1734 = vmatpush1.bf16.msra.mxu0 0
        %1735 = vmatprep.subr.bf16.mxu0 0
        %1736 = vmatpush1.bf16.msra.mxu0 0
        %1737 = vmatprep.subr.bf16.mxu0 0
        %1738 = vmatpush1.bf16.msra.mxu0 0
        %1739 = vmatprep.subr.bf16.mxu0 0
        %1740 = vmatpush1.bf16.msra.mxu0 0
        %1741 = vmatprep.subr.bf16.mxu0 0
        %1742 = vmatpush1.bf16.msra.mxu0 0
        %1743 = vmatprep.subr.bf16.mxu0 0
        %1744 = vmatpush1.bf16.msra.mxu0 0
        %1745 = vmatprep.mubr.bf16.mxu0 0
        %1746 = vmatmul.mubr.bf16.gmra.mrb[0].mxu0 %v1708
        %v1747 = vpop.f32.mrb[0].mxu0
        %v1748 = vadd.f32 0.0, %v1747
        %v1749 = vpop.f32.mrb[0].mxu0
        %v1750 = vpop.f32.mrb[0].mxu0
        %v1751 = vpop.f32.mrb[0].mxu0
        %1752 = vdwg.mxu0
        %v1753 = vpack.c.bf16 %v1748, %v1748
        %v1755 = vsel %vm1008, %v1753, 0
        %v1758 = vsel %vm1234, %v894, 0
        %1760 = vmatprep.subr.bf16.mxu0 0
        %1761 = vmatpush1.bf16.msra.mxu0 %v1758
        %1762 = vmatprep.subr.bf16.mxu0 0
        %1763 = vmatpush1.bf16.msra.mxu0 0
        %1764 = vmatprep.subr.bf16.mxu0 0
        %1765 = vmatpush1.bf16.msra.mxu0 0
        %1766 = vmatprep.subr.bf16.mxu0 0
        %1767 = vmatpush1.bf16.msra.mxu0 0
        %1768 = vmatprep.subr.bf16.mxu0 0
        %1769 = vmatpush1.bf16.msra.mxu0 0
        %1770 = vmatprep.subr.bf16.mxu0 0
        %1771 = vmatpush1.bf16.msra.mxu0 0
        %1772 = vmatprep.subr.bf16.mxu0 0
        %1773 = vmatpush1.bf16.msra.mxu0 0
        %1774 = vmatprep.subr.bf16.mxu0 0
        %1775 = vmatpush1.bf16.msra.mxu0 0
        %1776 = vmatprep.subr.bf16.mxu0 0
        %1777 = vmatpush1.bf16.msra.mxu0 0
        %1778 = vmatprep.subr.bf16.mxu0 0
        %1779 = vmatpush1.bf16.msra.mxu0 0
        %1780 = vmatprep.subr.bf16.mxu0 0
        %1781 = vmatpush1.bf16.msra.mxu0 0
        %1782 = vmatprep.subr.bf16.mxu0 0
        %1783 = vmatpush1.bf16.msra.mxu0 0
        %1784 = vmatprep.subr.bf16.mxu0 0
        %1785 = vmatpush1.bf16.msra.mxu0 0
        %1786 = vmatprep.subr.bf16.mxu0 0
        %1787 = vmatpush1.bf16.msra.mxu0 0
        %1788 = vmatprep.subr.bf16.mxu0 0
        %1789 = vmatpush1.bf16.msra.mxu0 0
        %1790 = vmatprep.subr.bf16.mxu0 0
        %1791 = vmatpush1.bf16.msra.mxu0 0
        %1792 = vmatprep.mubr.bf16.mxu0 0
        %1793 = vmatmul.mubr.bf16.gmra.mrb[0].mxu0 %v1755
        %v1794 = vpop.f32.mrb[0].mxu0
        %v1795 = vadd.f32 0.0, %v1794
        %v1796 = vpop.f32.mrb[0].mxu0
        %v1797 = vpop.f32.mrb[0].mxu0
        %v1798 = vpop.f32.mrb[0].mxu0
        %1799 = vdwg.mxu0
        %v1800 = vadd.f32 %v1641, %v1795
        %1801 = vrot.lane.b32.xlu0 %v1003, 88
        %v1802 = vpop.permute.xlu0 %1801
        %1803 = vrot.lane.b32.xlu0 %v1003, 24
        %v1804 = vpop.permute.xlu0 %1803
        %v1806 = vsel %vm1008, %v1802, 0
        %v1809 = vsel %vm1008, %v1804, 0
        %1811 = vmatprep.subr.bf16.mxu0 0
        %1812 = vmatpush1.bf16.xpose.msra.mxu0 %v1809
        %1813 = vmatprep.subr.bf16.mxu0 0
        %1814 = vmatpush1.bf16.xpose.msra.mxu0 0
        %1815 = vmatprep.subr.bf16.mxu0 0
        %1816 = vmatpush1.bf16.xpose.msra.mxu0 0
        %1817 = vmatprep.subr.bf16.mxu0 0
        %1818 = vmatpush1.bf16.xpose.msra.mxu0 0
        %1819 = vmatprep.subr.bf16.mxu0 0
        %1820 = vmatpush1.bf16.xpose.msra.mxu0 0
        %1821 = vmatprep.subr.bf16.mxu0 0
        %1822 = vmatpush1.bf16.xpose.msra.mxu0 0
        %1823 = vmatprep.subr.bf16.mxu0 0
        %1824 = vmatpush1.bf16.xpose.msra.mxu0 0
        %1825 = vmatprep.subr.bf16.mxu0 0
        %1826 = vmatpush1.bf16.xpose.msra.mxu0 0
        %1827 = vmatprep.subr.bf16.mxu0 0
        %1828 = vmatpush1.bf16.xpose.msra.mxu0 0
        %1829 = vmatprep.subr.bf16.mxu0 0
        %1830 = vmatpush1.bf16.xpose.msra.mxu0 0
        %1831 = vmatprep.subr.bf16.mxu0 0
        %1832 = vmatpush1.bf16.xpose.msra.mxu0 0
        %1833 = vmatprep.subr.bf16.mxu0 0
        %1834 = vmatpush1.bf16.xpose.msra.mxu0 0
        %1835 = vmatprep.subr.bf16.mxu0 0
        %1836 = vmatpush1.bf16.xpose.msra.mxu0 0
        %1837 = vmatprep.subr.bf16.mxu0 0
        %1838 = vmatpush1.bf16.xpose.msra.mxu0 0
        %1839 = vmatprep.subr.bf16.mxu0 0
        %1840 = vmatpush1.bf16.xpose.msra.mxu0 0
        %1841 = vmatprep.subr.bf16.mxu0 0
        %1842 = vmatpush1.bf16.xpose.msra.mxu0 0
        %1843 = vmatprep.mubr.bf16.mxu0 0
        %1844 = vmatmul.mubr.bf16.gmra.mrb[0].mxu0 %v1806
        %v1845 = vpop.f32.mrb[0].mxu0
        %v1846 = vadd.f32 0.0, %v1845
        %v1847 = vpop.f32.mrb[0].mxu0
        %v1848 = vpop.f32.mrb[0].mxu0
        %v1849 = vpop.f32.mrb[0].mxu0
        %1850 = vdwg.mxu0
        %v1851 = vmul.f32 %v1846, 0.35355338
        %v1852 = vsel %vm1056, %v1851, -inf
        %1853 = vmax.xlane.f32.xlu0 %v1852
        %v1854 = vpop.xlane.xlu0 %1853
        %v1855 = vsub.f32 %v1851, %v1854
        %v1856 = vmul.f32 %v1855, 1.442695
        %v1857 = vpow.pop %v1856
        %v1858 = vsel %vm1056, %v1857, 0.0
        %1859 = vadd.xlane.f32.xlu0 %v1858
        %v1860 = vpop.xlane.xlu0 %1859
        %v1861 = vrcp.pop %v1860
        %v1862 = vmul.f32 %v1857, %v1861
        %v1863 = vpack.c.bf16 %v1862, %v1862
        %1864 = vrot.lane.b32.xlu0 %v1004, 88
        %v1865 = vpop.permute.xlu0 %1864
        %v1867 = vsel %vm1069, %v1863, 0
        %v1870 = vsel %vm1073, %v1865, 0
        %1872 = vmatprep.subr.bf16.mxu0 0
        %1873 = vmatpush1.bf16.msra.mxu0 %v1870
        %1874 = vmatprep.subr.bf16.mxu0 0
        %1875 = vmatpush1.bf16.msra.mxu0 0
        %1876 = vmatprep.subr.bf16.mxu0 0
        %1877 = vmatpush1.bf16.msra.mxu0 0
        %1878 = vmatprep.subr.bf16.mxu0 0
        %1879 = vmatpush1.bf16.msra.mxu0 0
        %1880 = vmatprep.subr.bf16.mxu0 0
        %1881 = vmatpush1.bf16.msra.mxu0 0
        %1882 = vmatprep.subr.bf16.mxu0 0
        %1883 = vmatpush1.bf16.msra.mxu0 0
        %1884 = vmatprep.subr.bf16.mxu0 0
        %1885 = vmatpush1.bf16.msra.mxu0 0
        %1886 = vmatprep.subr.bf16.mxu0 0
        %1887 = vmatpush1.bf16.msra.mxu0 0
        %1888 = vmatprep.subr.bf16.mxu0 0
        %1889 = vmatpush1.bf16.msra.mxu0 0
        %1890 = vmatprep.subr.bf16.mxu0 0
        %1891 = vmatpush1.bf16.msra.mxu0 0
        %1892 = vmatprep.subr.bf16.mxu0 0
        %1893 = vmatpush1.bf16.msra.mxu0 0
        %1894 = vmatprep.subr.bf16.mxu0 0
        %1895 = vmatpush1.bf16.msra.mxu0 0
        %1896 = vmatprep.subr.bf16.mxu0 0
        %1897 = vmatpush1.bf16.msra.mxu0 0
        %1898 = vmatprep.subr.bf16.mxu0 0
        %1899 = vmatpush1.bf16.msra.mxu0 0
        %1900 = vmatprep.subr.bf16.mxu0 0
        %1901 = vmatpush1.bf16.msra.mxu0 0
        %1902 = vmatprep.subr.bf16.mxu0 0
        %1903 = vmatpush1.bf16.msra.mxu0 0
        %1904 = vmatprep.mubr.bf16.mxu0 0
        %1905 = vmatmul.mubr.bf16.gmra.mrb[0].mxu0 %v1867
        %v1906 = vpop.f32.mrb[0].mxu0
        %v1907 = vadd.f32 0.0, %v1906
        %v1908 = vpop.f32.mrb[0].mxu0
        %v1909 = vpop.f32.mrb[0].mxu0
        %v1910 = vpop.f32.mrb[0].mxu0
        %1911 = vdwg.mxu0
        %v1912 = vpack.c.bf16 %v1907, %v1907
        %v1914 = vsel %vm1008, %v1912, 0
        %v1917 = vsel %vm1234, %v895, 0
        %1919 = vmatprep.subr.bf16.mxu0 0
        %1920 = vmatpush1.bf16.msra.mxu0 %v1917
        %1921 = vmatprep.subr.bf16.mxu0 0
        %1922 = vmatpush1.bf16.msra.mxu0 0
        %1923 = vmatprep.subr.bf16.mxu0 0
        %1924 = vmatpush1.bf16.msra.mxu0 0
        %1925 = vmatprep.subr.bf16.mxu0 0
        %1926 = vmatpush1.bf16.msra.mxu0 0
        %1927 = vmatprep.subr.bf16.mxu0 0
        %1928 = vmatpush1.bf16.msra.mxu0 0
        %1929 = vmatprep.subr.bf16.mxu0 0
        %1930 = vmatpush1.bf16.msra.mxu0 0
        %1931 = vmatprep.subr.bf16.mxu0 0
        %1932 = vmatpush1.bf16.msra.mxu0 0
        %1933 = vmatprep.subr.bf16.mxu0 0
        %1934 = vmatpush1.bf16.msra.mxu0 0
        %1935 = vmatprep.subr.bf16.mxu0 0
        %1936 = vmatpush1.bf16.msra.mxu0 0
        %1937 = vmatprep.subr.bf16.mxu0 0
        %1938 = vmatpush1.bf16.msra.mxu0 0
        %1939 = vmatprep.subr.bf16.mxu0 0
        %1940 = vmatpush1.bf16.msra.mxu0 0
        %1941 = vmatprep.subr.bf16.mxu0 0
        %1942 = vmatpush1.bf16.msra.mxu0 0
        %1943 = vmatprep.subr.bf16.mxu0 0
        %1944 = vmatpush1.bf16.msra.mxu0 0
        %1945 = vmatprep.subr.bf16.mxu0 0
        %1946 = vmatpush1.bf16.msra.mxu0 0
        %1947 = vmatprep.subr.bf16.mxu0 0
        %1948 = vmatpush1.bf16.msra.mxu0 0
        %1949 = vmatprep.subr.bf16.mxu0 0
        %1950 = vmatpush1.bf16.msra.mxu0 0
        %1951 = vmatprep.mubr.bf16.mxu0 0
        %1952 = vmatmul.mubr.bf16.gmra.mrb[0].mxu0 %v1914
        %v1953 = vpop.f32.mrb[0].mxu0
        %v1954 = vadd.f32 0.0, %v1953
        %v1955 = vpop.f32.mrb[0].mxu0
        %v1956 = vpop.f32.mrb[0].mxu0
        %v1957 = vpop.f32.mrb[0].mxu0
        %1958 = vdwg.mxu0
        %v1959 = vadd.f32 %v1800, %v1954
        %1960 = vrot.lane.b32.xlu0 %v1003, 80
        %v1961 = vpop.permute.xlu0 %1960
        %1962 = vrot.lane.b32.xlu0 %v1003, 16
        %v1963 = vpop.permute.xlu0 %1962
        %v1965 = vsel %vm1008, %v1961, 0
        %v1968 = vsel %vm1008, %v1963, 0
        %1970 = vmatprep.subr.bf16.mxu0 0
        %1971 = vmatpush1.bf16.xpose.msra.mxu0 %v1968
        %1972 = vmatprep.subr.bf16.mxu0 0
        %1973 = vmatpush1.bf16.xpose.msra.mxu0 0
        %1974 = vmatprep.subr.bf16.mxu0 0
        %1975 = vmatpush1.bf16.xpose.msra.mxu0 0
        %1976 = vmatprep.subr.bf16.mxu0 0
        %1977 = vmatpush1.bf16.xpose.msra.mxu0 0
        %1978 = vmatprep.subr.bf16.mxu0 0
        %1979 = vmatpush1.bf16.xpose.msra.mxu0 0
        %1980 = vmatprep.subr.bf16.mxu0 0
        %1981 = vmatpush1.bf16.xpose.msra.mxu0 0
        %1982 = vmatprep.subr.bf16.mxu0 0
        %1983 = vmatpush1.bf16.xpose.msra.mxu0 0
        %1984 = vmatprep.subr.bf16.mxu0 0
        %1985 = vmatpush1.bf16.xpose.msra.mxu0 0
        %1986 = vmatprep.subr.bf16.mxu0 0
        %1987 = vmatpush1.bf16.xpose.msra.mxu0 0
        %1988 = vmatprep.subr.bf16.mxu0 0
        %1989 = vmatpush1.bf16.xpose.msra.mxu0 0
        %1990 = vmatprep.subr.bf16.mxu0 0
        %1991 = vmatpush1.bf16.xpose.msra.mxu0 0
        %1992 = vmatprep.subr.bf16.mxu0 0
        %1993 = vmatpush1.bf16.xpose.msra.mxu0 0
        %1994 = vmatprep.subr.bf16.mxu0 0
        %1995 = vmatpush1.bf16.xpose.msra.mxu0 0
        %1996 = vmatprep.subr.bf16.mxu0 0
        %1997 = vmatpush1.bf16.xpose.msra.mxu0 0
        %1998 = vmatprep.subr.bf16.mxu0 0
        %1999 = vmatpush1.bf16.xpose.msra.mxu0 0
        %2000 = vmatprep.subr.bf16.mxu0 0
        %2001 = vmatpush1.bf16.xpose.msra.mxu0 0
        %2002 = vmatprep.mubr.bf16.mxu0 0
        %2003 = vmatmul.mubr.bf16.gmra.mrb[0].mxu0 %v1965
        %v2004 = vpop.f32.mrb[0].mxu0
        %v2005 = vadd.f32 0.0, %v2004
        %v2006 = vpop.f32.mrb[0].mxu0
        %v2007 = vpop.f32.mrb[0].mxu0
        %v2008 = vpop.f32.mrb[0].mxu0
        %2009 = vdwg.mxu0
        %v2010 = vmul.f32 %v2005, 0.35355338
        %v2011 = vsel %vm1056, %v2010, -inf
        %2012 = vmax.xlane.f32.xlu0 %v2011
        %v2013 = vpop.xlane.xlu0 %2012
        %v2014 = vsub.f32 %v2010, %v2013
        %v2015 = vmul.f32 %v2014, 1.442695
        %v2016 = vpow.pop %v2015
        %v2017 = vsel %vm1056, %v2016, 0.0
        %2018 = vadd.xlane.f32.xlu0 %v2017
        %v2019 = vpop.xlane.xlu0 %2018
        %v2020 = vrcp.pop %v2019
        %v2021 = vmul.f32 %v2016, %v2020
        %v2022 = vpack.c.bf16 %v2021, %v2021
        %2023 = vrot.lane.b32.xlu0 %v1004, 80
        %v2024 = vpop.permute.xlu0 %2023
        %v2026 = vsel %vm1069, %v2022, 0
        %v2029 = vsel %vm1073, %v2024, 0
        %2031 = vmatprep.subr.bf16.mxu0 0
        %2032 = vmatpush1.bf16.msra.mxu0 %v2029
        %2033 = vmatprep.subr.bf16.mxu0 0
        %2034 = vmatpush1.bf16.msra.mxu0 0
        %2035 = vmatprep.subr.bf16.mxu0 0
        %2036 = vmatpush1.bf16.msra.mxu0 0
        %2037 = vmatprep.subr.bf16.mxu0 0
        %2038 = vmatpush1.bf16.msra.mxu0 0
        %2039 = vmatprep.subr.bf16.mxu0 0
        %2040 = vmatpush1.bf16.msra.mxu0 0
        %2041 = vmatprep.subr.bf16.mxu0 0
        %2042 = vmatpush1.bf16.msra.mxu0 0
        %2043 = vmatprep.subr.bf16.mxu0 0
        %2044 = vmatpush1.bf16.msra.mxu0 0
        %2045 = vmatprep.subr.bf16.mxu0 0
        %2046 = vmatpush1.bf16.msra.mxu0 0
        %2047 = vmatprep.subr.bf16.mxu0 0
        %2048 = vmatpush1.bf16.msra.mxu0 0
        %2049 = vmatprep.subr.bf16.mxu0 0
        %2050 = vmatpush1.bf16.msra.mxu0 0
        %2051 = vmatprep.subr.bf16.mxu0 0
        %2052 = vmatpush1.bf16.msra.mxu0 0
        %2053 = vmatprep.subr.bf16.mxu0 0
        %2054 = vmatpush1.bf16.msra.mxu0 0
        %2055 = vmatprep.subr.bf16.mxu0 0
        %2056 = vmatpush1.bf16.msra.mxu0 0
        %2057 = vmatprep.subr.bf16.mxu0 0
        %2058 = vmatpush1.bf16.msra.mxu0 0
        %2059 = vmatprep.subr.bf16.mxu0 0
        %2060 = vmatpush1.bf16.msra.mxu0 0
        %2061 = vmatprep.subr.bf16.mxu0 0
        %2062 = vmatpush1.bf16.msra.mxu0 0
        %2063 = vmatprep.mubr.bf16.mxu0 0
        %2064 = vmatmul.mubr.bf16.gmra.mrb[0].mxu0 %v2026
        %v2065 = vpop.f32.mrb[0].mxu0
        %v2066 = vadd.f32 0.0, %v2065
        %v2067 = vpop.f32.mrb[0].mxu0
        %v2068 = vpop.f32.mrb[0].mxu0
        %v2069 = vpop.f32.mrb[0].mxu0
        %2070 = vdwg.mxu0
        %v2071 = vpack.c.bf16 %v2066, %v2066
        %v2073 = vsel %vm1008, %v2071, 0
        %v2076 = vsel %vm1234, %v896, 0
        %2078 = vmatprep.subr.bf16.mxu0 0
        %2079 = vmatpush1.bf16.msra.mxu0 %v2076
        %2080 = vmatprep.subr.bf16.mxu0 0
        %2081 = vmatpush1.bf16.msra.mxu0 0
        %2082 = vmatprep.subr.bf16.mxu0 0
        %2083 = vmatpush1.bf16.msra.mxu0 0
        %2084 = vmatprep.subr.bf16.mxu0 0
        %2085 = vmatpush1.bf16.msra.mxu0 0
        %2086 = vmatprep.subr.bf16.mxu0 0
        %2087 = vmatpush1.bf16.msra.mxu0 0
        %2088 = vmatprep.subr.bf16.mxu0 0
        %2089 = vmatpush1.bf16.msra.mxu0 0
        %2090 = vmatprep.subr.bf16.mxu0 0
        %2091 = vmatpush1.bf16.msra.mxu0 0
        %2092 = vmatprep.subr.bf16.mxu0 0
        %2093 = vmatpush1.bf16.msra.mxu0 0
        %2094 = vmatprep.subr.bf16.mxu0 0
        %2095 = vmatpush1.bf16.msra.mxu0 0
        %2096 = vmatprep.subr.bf16.mxu0 0
        %2097 = vmatpush1.bf16.msra.mxu0 0
        %2098 = vmatprep.subr.bf16.mxu0 0
        %2099 = vmatpush1.bf16.msra.mxu0 0
        %2100 = vmatprep.subr.bf16.mxu0 0
        %2101 = vmatpush1.bf16.msra.mxu0 0
        %2102 = vmatprep.subr.bf16.mxu0 0
        %2103 = vmatpush1.bf16.msra.mxu0 0
        %2104 = vmatprep.subr.bf16.mxu0 0
        %2105 = vmatpush1.bf16.msra.mxu0 0
        %2106 = vmatprep.subr.bf16.mxu0 0
        %2107 = vmatpush1.bf16.msra.mxu0 0
        %2108 = vmatprep.subr.bf16.mxu0 0
        %2109 = vmatpush1.bf16.msra.mxu0 0
        %2110 = vmatprep.mubr.bf16.mxu0 0
        %2111 = vmatmul.mubr.bf16.gmra.mrb[0].mxu0 %v2073
        %v2112 = vpop.f32.mrb[0].mxu0
        %v2113 = vadd.f32 0.0, %v2112
        %v2114 = vpop.f32.mrb[0].mxu0
        %v2115 = vpop.f32.mrb[0].mxu0
        %v2116 = vpop.f32.mrb[0].mxu0
        %2117 = vdwg.mxu0
        %v2118 = vadd.f32 %v1959, %v2113
        %2119 = vrot.lane.b32.xlu0 %v1003, 72
        %v2120 = vpop.permute.xlu0 %2119
        %2121 = vrot.lane.b32.xlu0 %v1003, 8
        %v2122 = vpop.permute.xlu0 %2121
        %v2124 = vsel %vm1008, %v2120, 0
        %v2127 = vsel %vm1008, %v2122, 0
        %2129 = vmatprep.subr.bf16.mxu0 0
        %2130 = vmatpush1.bf16.xpose.msra.mxu0 %v2127
        %2131 = vmatprep.subr.bf16.mxu0 0
        %2132 = vmatpush1.bf16.xpose.msra.mxu0 0
        %2133 = vmatprep.subr.bf16.mxu0 0
        %2134 = vmatpush1.bf16.xpose.msra.mxu0 0
        %2135 = vmatprep.subr.bf16.mxu0 0
        %2136 = vmatpush1.bf16.xpose.msra.mxu0 0
        %2137 = vmatprep.subr.bf16.mxu0 0
        %2138 = vmatpush1.bf16.xpose.msra.mxu0 0
        %2139 = vmatprep.subr.bf16.mxu0 0
        %2140 = vmatpush1.bf16.xpose.msra.mxu0 0
        %2141 = vmatprep.subr.bf16.mxu0 0
        %2142 = vmatpush1.bf16.xpose.msra.mxu0 0
        %2143 = vmatprep.subr.bf16.mxu0 0
        %2144 = vmatpush1.bf16.xpose.msra.mxu0 0
        %2145 = vmatprep.subr.bf16.mxu0 0
        %2146 = vmatpush1.bf16.xpose.msra.mxu0 0
        %2147 = vmatprep.subr.bf16.mxu0 0
        %2148 = vmatpush1.bf16.xpose.msra.mxu0 0
        %2149 = vmatprep.subr.bf16.mxu0 0
        %2150 = vmatpush1.bf16.xpose.msra.mxu0 0
        %2151 = vmatprep.subr.bf16.mxu0 0
        %2152 = vmatpush1.bf16.xpose.msra.mxu0 0
        %2153 = vmatprep.subr.bf16.mxu0 0
        %2154 = vmatpush1.bf16.xpose.msra.mxu0 0
        %2155 = vmatprep.subr.bf16.mxu0 0
        %2156 = vmatpush1.bf16.xpose.msra.mxu0 0
        %2157 = vmatprep.subr.bf16.mxu0 0
        %2158 = vmatpush1.bf16.xpose.msra.mxu0 0
        %2159 = vmatprep.subr.bf16.mxu0 0
        %2160 = vmatpush1.bf16.xpose.msra.mxu0 0
        %2161 = vmatprep.mubr.bf16.mxu0 0
        %2162 = vmatmul.mubr.bf16.gmra.mrb[0].mxu0 %v2124
        %v2163 = vpop.f32.mrb[0].mxu0
        %v2164 = vadd.f32 0.0, %v2163
        %v2165 = vpop.f32.mrb[0].mxu0
        %v2166 = vpop.f32.mrb[0].mxu0
        %v2167 = vpop.f32.mrb[0].mxu0
        %2168 = vdwg.mxu0
        %v2169 = vmul.f32 %v2164, 0.35355338
        %v2170 = vsel %vm1056, %v2169, -inf
        %2171 = vmax.xlane.f32.xlu0 %v2170
        %v2172 = vpop.xlane.xlu0 %2171
        %v2173 = vsub.f32 %v2169, %v2172
        %v2174 = vmul.f32 %v2173, 1.442695
        %v2175 = vpow.pop %v2174
        %v2176 = vsel %vm1056, %v2175, 0.0
        %2177 = vadd.xlane.f32.xlu0 %v2176
        %v2178 = vpop.xlane.xlu0 %2177
        %v2179 = vrcp.pop %v2178
        %v2180 = vmul.f32 %v2175, %v2179
        %v2181 = vpack.c.bf16 %v2180, %v2180
        %2182 = vrot.lane.b32.xlu0 %v1004, 72
        %v2183 = vpop.permute.xlu0 %2182
        %v2185 = vsel %vm1069, %v2181, 0
        %v2188 = vsel %vm1073, %v2183, 0
        %2190 = vmatprep.subr.bf16.mxu0 0
        %2191 = vmatpush1.bf16.msra.mxu0 %v2188
        %2192 = vmatprep.subr.bf16.mxu0 0
        %2193 = vmatpush1.bf16.msra.mxu0 0
        %2194 = vmatprep.subr.bf16.mxu0 0
        %2195 = vmatpush1.bf16.msra.mxu0 0
        %2196 = vmatprep.subr.bf16.mxu0 0
        %2197 = vmatpush1.bf16.msra.mxu0 0
        %2198 = vmatprep.subr.bf16.mxu0 0
        %2199 = vmatpush1.bf16.msra.mxu0 0
        %2200 = vmatprep.subr.bf16.mxu0 0
        %2201 = vmatpush1.bf16.msra.mxu0 0
        %2202 = vmatprep.subr.bf16.mxu0 0
        %2203 = vmatpush1.bf16.msra.mxu0 0
        %2204 = vmatprep.subr.bf16.mxu0 0
        %2205 = vmatpush1.bf16.msra.mxu0 0
        %2206 = vmatprep.subr.bf16.mxu0 0
        %2207 = vmatpush1.bf16.msra.mxu0 0
        %2208 = vmatprep.subr.bf16.mxu0 0
        %2209 = vmatpush1.bf16.msra.mxu0 0
        %2210 = vmatprep.subr.bf16.mxu0 0
        %2211 = vmatpush1.bf16.msra.mxu0 0
        %2212 = vmatprep.subr.bf16.mxu0 0
        %2213 = vmatpush1.bf16.msra.mxu0 0
        %2214 = vmatprep.subr.bf16.mxu0 0
        %2215 = vmatpush1.bf16.msra.mxu0 0
        %2216 = vmatprep.subr.bf16.mxu0 0
        %2217 = vmatpush1.bf16.msra.mxu0 0
        %2218 = vmatprep.subr.bf16.mxu0 0
        %2219 = vmatpush1.bf16.msra.mxu0 0
        %2220 = vmatprep.subr.bf16.mxu0 0
        %2221 = vmatpush1.bf16.msra.mxu0 0
        %2222 = vmatprep.mubr.bf16.mxu0 0
        %2223 = vmatmul.mubr.bf16.gmra.mrb[0].mxu0 %v2185
        %v2224 = vpop.f32.mrb[0].mxu0
        %v2225 = vadd.f32 0.0, %v2224
        %v2226 = vpop.f32.mrb[0].mxu0
        %v2227 = vpop.f32.mrb[0].mxu0
        %v2228 = vpop.f32.mrb[0].mxu0
        %2229 = vdwg.mxu0
        %v2230 = vpack.c.bf16 %v2225, %v2225
        %v2232 = vsel %vm1008, %v2230, 0
        %v2235 = vsel %vm1234, %v897, 0
        %2237 = vmatprep.subr.bf16.mxu0 0
        %2238 = vmatpush1.bf16.msra.mxu0 %v2235
        %2239 = vmatprep.subr.bf16.mxu0 0
        %2240 = vmatpush1.bf16.msra.mxu0 0
        %2241 = vmatprep.subr.bf16.mxu0 0
        %2242 = vmatpush1.bf16.msra.mxu0 0
        %2243 = vmatprep.subr.bf16.mxu0 0
        %2244 = vmatpush1.bf16.msra.mxu0 0
        %2245 = vmatprep.subr.bf16.mxu0 0
        %2246 = vmatpush1.bf16.msra.mxu0 0
        %2247 = vmatprep.subr.bf16.mxu0 0
        %2248 = vmatpush1.bf16.msra.mxu0 0
        %2249 = vmatprep.subr.bf16.mxu0 0
        %2250 = vmatpush1.bf16.msra.mxu0 0
        %2251 = vmatprep.subr.bf16.mxu0 0
        %2252 = vmatpush1.bf16.msra.mxu0 0
        %2253 = vmatprep.subr.bf16.mxu0 0
        %2254 = vmatpush1.bf16.msra.mxu0 0
        %2255 = vmatprep.subr.bf16.mxu0 0
        %2256 = vmatpush1.bf16.msra.mxu0 0
        %2257 = vmatprep.subr.bf16.mxu0 0
        %2258 = vmatpush1.bf16.msra.mxu0 0
        %2259 = vmatprep.subr.bf16.mxu0 0
        %2260 = vmatpush1.bf16.msra.mxu0 0
        %2261 = vmatprep.subr.bf16.mxu0 0
        %2262 = vmatpush1.bf16.msra.mxu0 0
        %2263 = vmatprep.subr.bf16.mxu0 0
        %2264 = vmatpush1.bf16.msra.mxu0 0
        %2265 = vmatprep.subr.bf16.mxu0 0
        %2266 = vmatpush1.bf16.msra.mxu0 0
        %2267 = vmatprep.subr.bf16.mxu0 0
        %2268 = vmatpush1.bf16.msra.mxu0 0
        %2269 = vmatprep.mubr.bf16.mxu0 0
        %2270 = vmatmul.mubr.bf16.gmra.mrb[0].mxu0 %v2232
        %v2271 = vpop.f32.mrb[0].mxu0
        %v2272 = vadd.f32 0.0, %v2271
        %v2273 = vpop.f32.mrb[0].mxu0
        %v2274 = vpop.f32.mrb[0].mxu0
        %v2275 = vpop.f32.mrb[0].mxu0
        %2276 = vdwg.mxu0
        %v2277 = vadd.f32 %v2118, %v2272
        %v2278 = vld [vmem:[%s765] sm:$0x1]
        %v2280 = vlaneseq
        %v2281 = vshrl.u32 %v2280, 7
        %v2282 = vsub.s32 0, %v2281
        %v2283 = vrot.slane %v2278, %v2282
        %v2285 = vadd.f32 %v2277, %v2283
        %v2286 = vadd.f32 %v888, %v2285
        %v2287 = vld [vmem:[%s768] sm:$0x1]
        %v2288 = vld [vmem:[%s771] sm:$0x1]
        %vm2289 = vcmask 519168
        %v2290 = vsel %vm2289, %v2286, 0.0
        %2291 = vadd.xlane.f32.xlu0 %v2290
        %v2292 = vpop.xlane.xlu0 %2291
        %v2293 = vrcp.pop 64.0
        %v2294 = vmul.f32 %v2292, %v2293
        %v2295 = vsub.f32 %v2286, %v2294
        %v2296 = vmul.f32 %v2295, %v2295
        %v2297 = vsel %vm2289, %v2296, 0.0
        %2298 = vadd.xlane.f32.xlu0 %v2297
        %v2299 = vpop.xlane.xlu0 %2298
        %v2300 = vmul.f32 %v2299, %v2293
        %v2301 = vadd.f32 %v2300, 1e-12
        %v2302 = vrsqrt.pop %v2301
        %v2303 = vmul.f32 %v2295, %v2302
        %v2305 = vlaneseq
        %v2306 = vshrl.u32 %v2305, 7
        %v2307 = vsub.s32 0, %v2306
        %v2308 = vrot.slane %v2287, %v2307
        %v2310 = vmul.f32 %v2303, %v2308
        %v2312 = vlaneseq
        %v2313 = vshrl.u32 %v2312, 7
        %v2314 = vsub.s32 0, %v2313
        %v2315 = vrot.slane %v2288, %v2314
        %v2317 = vadd.f32 %v2310, %v2315
        %v2318 = vpack.c.bf16 %v2317, %v2317
        %v2319 = vld [vmem:[%s776] sm:$0xf]
        %v2320 = vld [vmem:[%s776 + $0x4] sm:$0xf]
        %v2321 = vld [vmem:[%s776 + $0x8] sm:$0xf]
        %v2322 = vld [vmem:[%s776 + $0xc] sm:$0xf]
        %v2323 = vld [vmem:[%s776 + $0x10] sm:$0xf]
        %v2324 = vld [vmem:[%s776 + $0x14] sm:$0xf]
        %v2325 = vld [vmem:[%s776 + $0x18] sm:$0xf]
        %v2326 = vld [vmem:[%s776 + $0x1c] sm:$0xf]
        %v2327 = vld [vmem:[%s779] sm:$0x1]
        %v2329 = vlaneseq
        %v2330 = vshrl.u32 %v2329, 7
        %v2331 = vsub.s32 0, %v2330
        %v2332 = vrot.slane %v2327, %v2331
        %v2342 = vunpack.c.l.b16 %v2319
        %v2343 = vunpack.c.l.b16 %v2320
        %v2344 = vunpack.c.l.b16 %v2321
        %v2345 = vunpack.c.l.b16 %v2322
        %v2346 = vunpack.c.l.b16 %v2323
        %v2347 = vunpack.c.l.b16 %v2324
        %v2348 = vunpack.c.l.b16 %v2325
        %v2349 = vunpack.c.l.b16 %v2326
        %v2350 = vpack.c.b16 %v2343, %v2342
        %v2351 = vpack.c.b16 %v2345, %v2344
        %v2352 = vpack.c.b16 %v2347, %v2346
        %v2353 = vpack.c.b16 %v2349, %v2348
        %v2359 = vsel %vm958, %v2318, 0
        %2361 = vmatprep.subr.bf16.mxu0 0
        %2362 = vmatpush1.bf16.msra.mxu0 %v2350
        %2363 = vmatprep.subr.bf16.mxu0 0
        %2364 = vmatpush1.bf16.msra.mxu0 %v2351
        %2365 = vmatprep.subr.bf16.mxu0 0
        %2366 = vmatpush1.bf16.msra.mxu0 %v2352
        %2367 = vmatprep.subr.bf16.mxu0 0
        %2368 = vmatpush1.bf16.msra.mxu0 %v2353
        %2369 = vmatprep.subr.bf16.mxu0 0
        %2370 = vmatpush1.bf16.msra.mxu0 0
        %2371 = vmatprep.subr.bf16.mxu0 0
        %2372 = vmatpush1.bf16.msra.mxu0 0
        %2373 = vmatprep.subr.bf16.mxu0 0
        %2374 = vmatpush1.bf16.msra.mxu0 0
        %2375 = vmatprep.subr.bf16.mxu0 0
        %2376 = vmatpush1.bf16.msra.mxu0 0
        %2377 = vmatprep.subr.bf16.mxu0 0
        %2378 = vmatpush1.bf16.msra.mxu0 0
        %2379 = vmatprep.subr.bf16.mxu0 0
        %2380 = vmatpush1.bf16.msra.mxu0 0
        %2381 = vmatprep.subr.bf16.mxu0 0
        %2382 = vmatpush1.bf16.msra.mxu0 0
        %2383 = vmatprep.subr.bf16.mxu0 0
        %2384 = vmatpush1.bf16.msra.mxu0 0
        %2385 = vmatprep.subr.bf16.mxu0 0
        %2386 = vmatpush1.bf16.msra.mxu0 0
        %2387 = vmatprep.subr.bf16.mxu0 0
        %2388 = vmatpush1.bf16.msra.mxu0 0
        %2389 = vmatprep.subr.bf16.mxu0 0
        %2390 = vmatpush1.bf16.msra.mxu0 0
        %2391 = vmatprep.subr.bf16.mxu0 0
        %2392 = vmatpush1.bf16.msra.mxu0 0
        %2393 = vmatprep.mubr.bf16.mxu0 0
        %2394 = vmatmul.mubr.bf16.gmra.mrb[0].mxu0 %v2359
        %v2395 = vpop.f32.mrb[0].mxu0
        %v2396 = vadd.f32 %v2332, %v2395
        %v2397 = vpop.f32.mrb[0].mxu0
        %v2398 = vpop.f32.mrb[0].mxu0
        %v2399 = vpop.f32.mrb[0].mxu0
        %2400 = vdwg.mxu0
        %v2401 = vmul.f32 %v2396, %v2396
        %v2402 = vmul.f32 %v2396, %v2401
        %v2403 = vmul.f32 %v2402, 0.044715
        %v2404 = vadd.f32 %v2396, %v2403
        %v2405 = vmul.f32 %v2404, 0.7978846
        %v2406 = vtanh.pop %v2405
        %v2407 = vadd.f32 %v2406, 1.0
        %v2408 = vmul.f32 %v2407, 0.5
        %v2409 = vmul.f32 %v2396, %v2408
        %v2410 = vpack.c.bf16 %v2409, %v2409
        %v2411 = vld [vmem:[%s784] sm:$0xf]
        %v2412 = vld [vmem:[%s784 + $0x4] sm:$0xf]
        %v2413 = vld [vmem:[%s784 + $0x8] sm:$0xf]
        %v2414 = vld [vmem:[%s784 + $0xc] sm:$0xf]
        %v2415 = vld [vmem:[%s784 + $0x10] sm:$0xf]
        %v2416 = vld [vmem:[%s784 + $0x14] sm:$0xf]
        %v2417 = vld [vmem:[%s784 + $0x18] sm:$0xf]
        %v2418 = vld [vmem:[%s784 + $0x1c] sm:$0xf]
        %v2419 = vld [vmem:[%s787] sm:$0x1]
        %v2421 = vlaneseq
        %v2422 = vshrl.u32 %v2421, 7
        %v2423 = vsub.s32 0, %v2422
        %v2424 = vrot.slane %v2419, %v2423
        %v2434 = vunpack.c.l.b16 %v2411
        %v2435 = vunpack.c.l.b16 %v2412
        %v2436 = vunpack.c.l.b16 %v2413
        %v2437 = vunpack.c.l.b16 %v2414
        %v2438 = vunpack.c.l.b16 %v2415
        %v2439 = vunpack.c.l.b16 %v2416
        %v2440 = vunpack.c.l.b16 %v2417
        %v2441 = vunpack.c.l.b16 %v2418
        %v2442 = vpack.c.b16 %v2435, %v2434
        %v2443 = vpack.c.b16 %v2437, %v2436
        %v2444 = vpack.c.b16 %v2439, %v2438
        %v2445 = vpack.c.b16 %v2441, %v2440
        %v2451 = vsel %vm958, %v2410, 0
        %2453 = vmatprep.subr.bf16.mxu0 0
        %2454 = vmatpush1.bf16.msra.mxu0 %v2442
        %2455 = vmatprep.subr.bf16.mxu0 0
        %2456 = vmatpush1.bf16.msra.mxu0 %v2443
        %2457 = vmatprep.subr.bf16.mxu0 0
        %2458 = vmatpush1.bf16.msra.mxu0 %v2444
        %2459 = vmatprep.subr.bf16.mxu0 0
        %2460 = vmatpush1.bf16.msra.mxu0 %v2445
        %2461 = vmatprep.subr.bf16.mxu0 0
        %2462 = vmatpush1.bf16.msra.mxu0 0
        %2463 = vmatprep.subr.bf16.mxu0 0
        %2464 = vmatpush1.bf16.msra.mxu0 0
        %2465 = vmatprep.subr.bf16.mxu0 0
        %2466 = vmatpush1.bf16.msra.mxu0 0
        %2467 = vmatprep.subr.bf16.mxu0 0
        %2468 = vmatpush1.bf16.msra.mxu0 0
        %2469 = vmatprep.subr.bf16.mxu0 0
        %2470 = vmatpush1.bf16.msra.mxu0 0
        %2471 = vmatprep.subr.bf16.mxu0 0
        %2472 = vmatpush1.bf16.msra.mxu0 0
        %2473 = vmatprep.subr.bf16.mxu0 0
        %2474 = vmatpush1.bf16.msra.mxu0 0
        %2475 = vmatprep.subr.bf16.mxu0 0
        %2476 = vmatpush1.bf16.msra.mxu0 0
        %2477 = vmatprep.subr.bf16.mxu0 0
        %2478 = vmatpush1.bf16.msra.mxu0 0
        %2479 = vmatprep.subr.bf16.mxu0 0
        %2480 = vmatpush1.bf16.msra.mxu0 0
        %2481 = vmatprep.subr.bf16.mxu0 0
        %2482 = vmatpush1.bf16.msra.mxu0 0
        %2483 = vmatprep.subr.bf16.mxu0 0
        %2484 = vmatpush1.bf16.msra.mxu0 0
        %2485 = vmatprep.mubr.bf16.mxu0 0
        %2486 = vmatmul.mubr.bf16.gmra.mrb[0].mxu0 %v2451
        %v2487 = vpop.f32.mrb[0].mxu0
        %v2488 = vadd.f32 %v2424, %v2487
        %v2489 = vpop.f32.mrb[0].mxu0
        %v2490 = vpop.f32.mrb[0].mxu0
        %v2491 = vpop.f32.mrb[0].mxu0
        %2492 = vdwg.mxu0
        %v2493 = vadd.f32 %v2317, %v2488
        %v2494 = vld [vmem:[%s790] sm:$0x1]
        %v2495 = vld [vmem:[%s793] sm:$0x1]
        %v2496 = vsel %vm2289, %v2493, 0.0
        %2497 = vadd.xlane.f32.xlu0 %v2496
        %v2498 = vpop.xlane.xlu0 %2497
        %v2499 = vmul.f32 %v2498, %v2293
        %v2500 = vsub.f32 %v2493, %v2499
        %v2501 = vmul.f32 %v2500, %v2500
        %v2502 = vsel %vm2289, %v2501, 0.0
        %2503 = vadd.xlane.f32.xlu0 %v2502
        %v2504 = vpop.xlane.xlu0 %2503
        %v2505 = vmul.f32 %v2504, %v2293
        %v2506 = vadd.f32 %v2505, 1e-12
        %v2507 = vrsqrt.pop %v2506
        %v2508 = vmul.f32 %v2500, %v2507
        %v2510 = vlaneseq
        %v2511 = vshrl.u32 %v2510, 7
        %v2512 = vsub.s32 0, %v2511
        %v2513 = vrot.slane %v2494, %v2512
        %v2515 = vmul.f32 %v2508, %v2513
        %v2517 = vlaneseq
        %v2518 = vshrl.u32 %v2517, 7
        %v2519 = vsub.s32 0, %v2518
        %v2520 = vrot.slane %v2495, %v2519
        %v2522 = vadd.f32 %v2515, %v2520
        %2523 = vst.msk [vmem:[#allocation2] sm:$0xf] %vm2289, %v2522
        %p2524 = scmp.eq.s32.totalorder %s37, 11
        // Predicated region
        $region97: #{trusformer_forward.19} parent=91 // pred_check
          %p2525 = pneg %p2524
        $region98: #{trusformer_forward.19} parent=91 // pred_check_branch
          %2527 = sbr.rel (%p2525) target = $region100
        $region99: #{trusformer_forward.19} parent=91 // pred_region
          %v2528 = vsel %vm2289, %v2522, 0.0
          %v2529 = vrot.slane %v2528, 4
          %v2530 = vadd.f32 %v2528, %v2529
          %v2531 = vrot.slane %v2530, 2
          %v2532 = vadd.f32 %v2530, %v2531
          %v2533 = vrot.slane %v2532, 1
          %v2534 = vadd.f32 %v2532, %v2533
          %v2535 = vrcp.pop 4.0
          %v2536 = vmul.f32 %v2534, %v2535
          %v2537 = vpack.c.bf16 %v2536, %v2536
          %v2538 = vld [vmem:[%s16] sm:$0xf]
          %v2539 = vld [vmem:[%s16 + $0x4] sm:$0xf]
          %v2540 = vld [vmem:[%s16 + $0x8] sm:$0xf]
          %v2541 = vld [vmem:[%s16 + $0xc] sm:$0xf]
          %v2542 = vld [vmem:[%s16 + $0x10] sm:$0xf]
          %v2543 = vld [vmem:[%s16 + $0x14] sm:$0xf]
          %v2544 = vld [vmem:[%s16 + $0x18] sm:$0xf]
          %v2545 = vld [vmem:[%s16 + $0x1c] sm:$0xf]
          %v2546 = vld [vmem:[%s17] sm:$0x1]
          %v2555 = vunpack.c.l.b16 %v2538
          %v2556 = vunpack.c.l.b16 %v2539
          %v2557 = vunpack.c.l.b16 %v2540
          %v2558 = vunpack.c.l.b16 %v2541
          %v2559 = vunpack.c.l.b16 %v2542
          %v2560 = vunpack.c.l.b16 %v2543
          %v2561 = vunpack.c.l.b16 %v2544
          %v2562 = vunpack.c.l.b16 %v2545
          %v2563 = vpack.c.b16 %v2556, %v2555
          %v2564 = vpack.c.b16 %v2558, %v2557
          %v2565 = vpack.c.b16 %v2560, %v2559
          %v2566 = vpack.c.b16 %v2562, %v2561
          %v2572 = vsel %vm958, %v2537, 0
          %2574 = vmatprep.subr.bf16.mxu0 0
          %2575 = vmatpush1.bf16.msra.mxu0 %v2563
          %2576 = vmatprep.subr.bf16.mxu0 0
          %2577 = vmatpush1.bf16.msra.mxu0 %v2564
          %2578 = vmatprep.subr.bf16.mxu0 0
          %2579 = vmatpush1.bf16.msra.mxu0 %v2565
          %2580 = vmatprep.subr.bf16.mxu0 0
          %2581 = vmatpush1.bf16.msra.mxu0 %v2566
          %2582 = vmatprep.subr.bf16.mxu0 0
          %2583 = vmatpush1.bf16.msra.mxu0 0
          %2584 = vmatprep.subr.bf16.mxu0 0
          %2585 = vmatpush1.bf16.msra.mxu0 0
          %2586 = vmatprep.subr.bf16.mxu0 0
          %2587 = vmatpush1.bf16.msra.mxu0 0
          %2588 = vmatprep.subr.bf16.mxu0 0
          %2589 = vmatpush1.bf16.msra.mxu0 0
          %2590 = vmatprep.subr.bf16.mxu0 0
          %2591 = vmatpush1.bf16.msra.mxu0 0
          %2592 = vmatprep.subr.bf16.mxu0 0
          %2593 = vmatpush1.bf16.msra.mxu0 0
          %2594 = vmatprep.subr.bf16.mxu0 0
          %2595 = vmatpush1.bf16.msra.mxu0 0
          %2596 = vmatprep.subr.bf16.mxu0 0
          %2597 = vmatpush1.bf16.msra.mxu0 0
          %2598 = vmatprep.subr.bf16.mxu0 0
          %2599 = vmatpush1.bf16.msra.mxu0 0
          %2600 = vmatprep.subr.bf16.mxu0 0
          %2601 = vmatpush1.bf16.msra.mxu0 0
          %2602 = vmatprep.subr.bf16.mxu0 0
          %2603 = vmatpush1.bf16.msra.mxu0 0
          %2604 = vmatprep.subr.bf16.mxu0 0
          %2605 = vmatpush1.bf16.msra.mxu0 0
          %2606 = vmatprep.mubr.bf16.mxu0 0
          %2607 = vmatmul.mubr.bf16.gmra.mrb[0].mxu0 %v2572
          %v2608 = vpop.f32.mrb[0].mxu0
          %v2609 = vadd.f32 %v2546, %v2608
          %v2610 = vpop.f32.mrb[0].mxu0
          %v2611 = vpop.f32.mrb[0].mxu0
          %v2612 = vpop.f32.mrb[0].mxu0
          %2613 = vdwg.mxu0
          %2614 = vst [vmem:[%s740] sm:$0x1] %v2609
        $region100: #{trusformer_forward.19} parent=91 // pred_fallthru
          _
        %s2615 = sand.u32 %s500, 1
        %s2616 = scalar_lea.sflag [#allocation4], %s2615
        %s2617 = sand.u32 %s500, 1
        %s2618 = scalar_lea.vmem [#allocation3], %s2617
        // Predicated region
        $region101: #{trusformer_forward.19} parent=91 // pred_check
          %p2619 = pneg %p510
        $region102: #{trusformer_forward.19} parent=91 // pred_check_branch
          %2621 = sbr.rel (%p2619) target = $region104
        $region103: #{trusformer_forward.19} parent=91 // pred_region
          %s2623 = ssub.s32 16, 16
          %2624 = vsyncadd %s2616, %s2623
          %s2625 = smul.addr %s36, 16
          %s2626 = scalar_lea.hbm %s18, %s2625
          %s2628 = sshll.u32 %s2618, 4
          %s2629 = int_to_ptr.vmem [resolvable:$true] %s2628
          %2631 = dma.vmem_to_hbm [thread:$0]  %s2629, 16, %s2626, %s2616
        $region104: #{trusformer_forward.19} parent=91 // pred_fallthru
          _
      $region92: #{trusformer_forward.19} parent=5 // pred_fallthru
        _
      %p2632 = scmp.le.s32.totalorder 2, %s27
      // Predicated region
      $region105: #{trusformer_forward.19} parent=5 // pred_check
        %p2633 = pneg %p2632
      $region106: #{trusformer_forward.19} parent=5 // pred_check_branch
        %2635 = sbr.rel (%p2633) target = $region108
      $region107: #{trusformer_forward.19} parent=5 // pred_region
        %s2636 = ssub.s32 %s27, 2
        // Predicated region
        $region109: #{trusformer_forward.19} parent=107 // pred_check
          %p2637 = pneg %p516
        $region110: #{trusformer_forward.19} parent=107 // pred_check_branch
          %2639 = sbr.rel (%p2637) target = $region112
        $region111: #{trusformer_forward.19} parent=107 // pred_region
          %s2640 = sand.u32 %s501, 1
          %s2641 = scalar_lea.sflag [#allocation4], %s2640
          %s2642 = sand.u32 %s501, 1
          %s2643 = scalar_lea.vmem [#allocation3], %s2642
          %2644 = dma.done %s2641, 16
        $region112: #{trusformer_forward.19} parent=107 // pred_fallthru
          _
      $region108: #{trusformer_forward.19} parent=5 // pred_fallthru
        _
    $region6: #{trusformer_forward.19} parent=1 // loop_footer
      %s31 = sadd.s32 1, %s27
    $region7: #{trusformer_forward.19} parent=1 // loop_footer_branch
      %26 = sbr.rel target = $region3
    $region8: #{trusformer_forward.19} parent=1 // loop_exit
      _
    %2645 = vsyncpa [#allocation4], 1
    %s2646 = scalar_lea.sflag [#allocation4], 1
    %2647 = vsyncpa %s2646, 1

</llo_original>
